<compile_context>
chip_gen: v5e
topology: v5e:2x2
jax: 0.10.0
libtpu: 0.0.40
codegen_flags: <defaults>
</compile_context>

<pallas_src>
import functools
import math

import jax
import jax.numpy as jnp
from jax.experimental import pallas as pl
from jax.experimental.pallas import tpu as pltpu

LANE = 128                      # TPU lane width
SUB = 8                         # sublane width
TC = 16                         # timesteps per recurrent grid step
ROW_TILE = 512                  # row tile for projection / head kernels
VMEM_LIMIT = 32 * 1024 * 1024   # explicit scoped-VMEM limit (safe on v5e/v7x)


def _round_up(x, m):
    return (x + m - 1) // m * m


def _pad_rows(x, n_pad):
    """Zero-pad axis -2 (the row axis) up to n_pad."""
    n = x.shape[-2]
    if n_pad == n:
        return x
    pad = [(0, 0)] * x.ndim
    pad[-2] = (0, n_pad - n)
    return jnp.pad(x, pad)


# ----------------------------------------------------------------------------
# Projection kernels: hoisted x @ W_ih + b for ALL timesteps, both directions.
# Row-tiled over N = Tp*Bp rows -> one big MXU-friendly GEMM per layer.
# Outputs are bf16 (HBM-traffic halved); accumulation is f32.
# ----------------------------------------------------------------------------
def _proj1_kernel(x_ref, wx_ref, b_ref, g_ref):
    x = x_ref[...]
    for d in range(2):
        g_ref[d] = (jnp.dot(x, wx_ref[d], preferred_element_type=jnp.float32)
                    + b_ref[d]).astype(g_ref.dtype)


def _proj2_kernel(y_ref, wf_ref, wb_ref, b_ref, g_ref):
    # Previous layer output stays as two direction halves: split-K dots.
    hf = y_ref[0].astype(jnp.float32)
    hb = y_ref[1].astype(jnp.float32)
    for d in range(2):
        g_ref[d] = (jnp.dot(hf, wf_ref[d], preferred_element_type=jnp.float32)
                    + jnp.dot(hb, wb_ref[d], preferred_element_type=jnp.float32)
                    + b_ref[d]).astype(g_ref.dtype)


def _input_proj(x3, w_x, b):
    # x3: (Tp, Bp, Dp) f32; w_x: (2, Dp, G) f32; b: (2, 1, G) f32
    Tp, Bp, Dp = x3.shape
    G = w_x.shape[-1]
    N = Tp * Bp
    tn = min(ROW_TILE, N)
    Np = _round_up(N, tn)
    xf = _pad_rows(x3.reshape(N, Dp), Np)
    g = pl.pallas_call(
        _proj1_kernel,
        out_shape=jax.ShapeDtypeStruct((2, Np, G), jnp.bfloat16),
        grid=(Np // tn,),
        in_specs=[
            pl.BlockSpec((tn, Dp), lambda i: (i, 0)),
            pl.BlockSpec((2, Dp, G), lambda i: (0, 0, 0)),
            pl.BlockSpec((2, 1, G), lambda i: (0, 0, 0)),
        ],
        out_specs=pl.BlockSpec((2, tn, G), lambda i: (0, i, 0)),
        compiler_params=pltpu.CompilerParams(
            dimension_semantics=("parallel",),
            vmem_limit_bytes=VMEM_LIMIT),
    )(xf, w_x, b)
    return g[:, :N].reshape(2, Tp, Bp, G)


def _hidden_proj(y4, w_f, w_b, b):
    # y4: (2, Tp, Bp, Hp) bf16; w_f/w_b: (2, Hp, G) f32; b: (2, 1, G) f32
    _, Tp, Bp, Hp = y4.shape
    G = w_f.shape[-1]
    N = Tp * Bp
    tn = min(ROW_TILE, N)
    Np = _round_up(N, tn)
    y = _pad_rows(y4.reshape(2, N, Hp), Np)
    g = pl.pallas_call(
        _proj2_kernel,
        out_shape=jax.ShapeDtypeStruct((2, Np, G), jnp.bfloat16),
        grid=(Np // tn,),
        in_specs=[
            pl.BlockSpec((2, tn, Hp), lambda i: (0, i, 0)),
            pl.BlockSpec((2, Hp, G), lambda i: (0, 0, 0)),
            pl.BlockSpec((2, Hp, G), lambda i: (0, 0, 0)),
            pl.BlockSpec((2, 1, G), lambda i: (0, 0, 0)),
        ],
        out_specs=pl.BlockSpec((2, tn, G), lambda i: (0, i, 0)),
        compiler_params=pltpu.CompilerParams(
            dimension_semantics=("parallel",),
            vmem_limit_bytes=VMEM_LIMIT),
    )(y, w_f, w_b, b)
    return g[:, :N].reshape(2, Tp, Bp, G)


# ----------------------------------------------------------------------------
# Bidirectional recurrent kernel.
# grid = (2 directions "parallel", Tp // TC "arbitrary").
# Gates already contain x @ W_ih + b; only h @ W_hh + gate math runs here.
# Backward direction: time-blocks reversed via index_map, local time reversed
# in-kernel.  pack_padded mask is built from `lengths` + the global timestep.
# ----------------------------------------------------------------------------
def _bilstm_kernel(hp, tc, n_chunks, len_ref, g_ref, wh_ref, y_ref, h_s, c_s):
    d = pl.program_id(0)
    t = pl.program_id(1)

    @pl.when(t == 0)
    def _():
        h_s[...] = jnp.zeros_like(h_s)
        c_s[...] = jnp.zeros_like(c_s)

    blk = t + d * (n_chunks - 1 - 2 * t)   # global time-chunk index (dir-aware)
    len_col = len_ref[...]                 # (Bp, 1) int32, loaded once
    wh = wh_ref[...]                       # (Hp, 4Hp) f32, loaded once

    def step(i, carry):
        j = i + d * (tc - 1 - 2 * i)       # local index: fwd = i, bwd = tc-1-i
        t_glob = blk * tc + j              # global timestep
        gates = (g_ref[j].astype(jnp.float32)
                 + jnp.dot(h_s[...], wh, preferred_element_type=jnp.float32))
        ig = jax.nn.sigmoid(gates[:, 0 * hp:1 * hp])
        fg = jax.nn.sigmoid(gates[:, 1 * hp:2 * hp])
        gg = jnp.tanh(gates[:, 2 * hp:3 * hp])
        og = jax.nn.sigmoid(gates[:, 3 * hp:4 * hp])
        # Mask emulates pack_padded_sequence: pad steps keep zero state/output.
        m = (t_glob < len_col).astype(jnp.float32)          # (Bp, 1)
        c_new = (fg * c_s[...] + ig * gg) * m
        h_new = (og * jnp.tanh(c_new)) * m
        c_s[...] = c_new
        h_s[...] = h_new
        y_ref[j] = h_new.astype(y_ref.dtype)
        return carry

    jax.lax.fori_loop(0, tc, step, 0, unroll=True)


def _bilstm(g, len2d, w_h, hp):
    # g: (2, Tp, Bp, G) bf16; len2d: (Bp, 1) int32; w_h: (2, Hp, G) f32
    _, Tp, Bp, G = g.shape
    n_chunks = Tp // TC
    kernel = functools.partial(_bilstm_kernel, hp, TC, n_chunks)
    y = pl.pallas_call(
        kernel,
        out_shape=jax.ShapeDtypeStruct((2, Tp, Bp, hp), jnp.bfloat16),
        grid=(2, n_chunks),
        in_specs=[
            pl.BlockSpec((Bp, 1), lambda d, t: (0, 0)),
            pl.BlockSpec((None, TC, Bp, G),
                         lambda d, t: (d, t + d * (n_chunks - 1 - 2 * t), 0, 0)),
            pl.BlockSpec((None, hp, G), lambda d, t: (d, 0, 0)),
        ],
        out_specs=pl.BlockSpec(
            (None, TC, Bp, hp),
            lambda d, t: (d, t + d * (n_chunks - 1 - 2 * t), 0, 0)),
        scratch_shapes=[pltpu.VMEM((Bp, hp), jnp.float32),
                        pltpu.VMEM((Bp, hp), jnp.float32)],
        compiler_params=pltpu.CompilerParams(
            dimension_semantics=("parallel", "arbitrary"),
            vmem_limit_bytes=VMEM_LIMIT),
    )(len2d, g, w_h)
    return y


# ----------------------------------------------------------------------------
# Head: Linear(2H->V) -> Linear(V->V) -> log_softmax, row-tiled ("parallel").
# Split-K over the two direction halves; padded vocab columns are excluded via
# the -1e30 baked into b2 at init (no iota/where in-kernel).
# ----------------------------------------------------------------------------
def _head_kernel(y_ref, w1_ref, b1_ref, w2_ref, b2_ref, o_ref):
    h0 = y_ref[0].astype(jnp.float32)
    h1 = y_ref[1].astype(jnp.float32)
    z = (jnp.dot(h0, w1_ref[0], preferred_element_type=jnp.float32)
         + jnp.dot(h1, w1_ref[1], preferred_element_type=jnp.float32)
         + b1_ref[...])
    z = jnp.dot(z, w2_ref[...], preferred_element_type=jnp.float32) + b2_ref[...]
    z = z - jnp.max(z, axis=-1, keepdims=True)
    lse = jnp.log(jnp.sum(jnp.exp(z), axis=-1, keepdims=True))
    o_ref[...] = z - lse


def _head(y4, w1, b1, w2, b2):
    # y4: (2, Tp, Bp, Hp) bf16; w1: (2, Hp, Vp); w2: (Vp, Vp)
    _, Tp, Bp, Hp = y4.shape
    Vp = w1.shape[-1]
    N = Tp * Bp
    tn = min(ROW_TILE, N)
    Np = _round_up(N, tn)
    y = _pad_rows(y4.reshape(2, N, Hp), Np)
    out = pl.pallas_call(
        _head_kernel,
        out_shape=jax.ShapeDtypeStruct((Np, Vp), jnp.float32),
        grid=(Np // tn,),
        in_specs=[
            pl.BlockSpec((2, tn, Hp), lambda i: (0, i, 0)),
            pl.BlockSpec((2, Hp, Vp), lambda i: (0, 0, 0)),
            pl.BlockSpec((1, Vp), lambda i: (0, 0)),
            pl.BlockSpec((Vp, Vp), lambda i: (0, 0)),
            pl.BlockSpec((1, Vp), lambda i: (0, 0)),
        ],
        out_specs=pl.BlockSpec((tn, Vp), lambda i: (i, 0)),
        compiler_params=pltpu.CompilerParams(
            dimension_semantics=("parallel",),
            vmem_limit_bytes=VMEM_LIMIT),
    )(y, w1, b1, w2, b2)
    return out[:N].reshape(Tp, Bp, Vp)


# ----------------------------------------------------------------------------
# Parameter init: PyTorch uniform(-1/sqrt(fan)) shapes, stored pre-transposed,
# direction-stacked, and zero-padded to lane-dense layouts (each gate padded to
# Hp lanes).  Padded hidden units stay exactly zero: zero weight columns + zero
# bias give gates 0 -> g=tanh(0)=0, c starts at 0, so c and h remain 0 forever.
# ----------------------------------------------------------------------------
def _pad_gate_weight_t(w, k_pad, h, hp):
    """(4h, k) PyTorch gate-stacked weight -> (k_pad, 4*hp) transposed."""
    k = w.shape[1]
    out = jnp.zeros((k_pad, 4 * hp), w.dtype)
    for g in range(4):
        out = out.at[:k, g * hp:g * hp + h].set(w[g * h:(g + 1) * h, :].T)
    return out


def _pad_gate_bias(b, h, hp):
    out = jnp.zeros((1, 4 * hp), b.dtype)
    for g in range(4):
        out = out.at[0, g * hp:g * hp + h].set(b[g * h:(g + 1) * h])
    return out


def _pad_plain_t(w, k_pad, n_pad):
    """(n, k) -> (k_pad, n_pad) transposed, zero-padded."""
    out = jnp.zeros((k_pad, n_pad), w.dtype)
    return out.at[:w.shape[1], :w.shape[0]].set(w.T)


def init_params(key, in_vocab, out_vocab, hidden, num_layers=5):
    H, D, V = hidden, in_vocab, out_vocab
    Hp, Dp, Vp = _round_up(H, LANE), _round_up(D, LANE), _round_up(V, LANE)
    k = 1.0 / math.sqrt(H)
    params = {"lstm": []}
    for layer in range(num_layers):
        d_in = D if layer == 0 else 2 * H
        wh_l, b_l, wx_l, wf_l, wb_l = [], [], [], [], []
        for _direction in range(2):
            key, k1, k2, k3, k4 = jax.random.split(key, 5)
            w_ih = jax.random.uniform(k1, (4 * H, d_in), jnp.float32, -k, k)
            w_hh = jax.random.uniform(k2, (4 * H, H), jnp.float32, -k, k)
            b_ih = jax.random.uniform(k3, (4 * H,), jnp.float32, -k, k)
            b_hh = jax.random.uniform(k4, (4 * H,), jnp.float32, -k, k)
            wh_l.append(_pad_gate_weight_t(w_hh, Hp, H, Hp))        # (Hp, 4Hp)
            b_l.append(_pad_gate_bias(b_ih + b_hh, H, Hp))          # (1, 4Hp)
            if layer == 0:
                wx_l.append(_pad_gate_weight_t(w_ih, Dp, H, Hp))    # (Dp, 4Hp)
            else:
                wf_l.append(_pad_gate_weight_t(w_ih[:, :H], Hp, H, Hp))
                wb_l.append(_pad_gate_weight_t(w_ih[:, H:], Hp, H, Hp))
        lp = {"w_h": jnp.stack(wh_l), "b": jnp.stack(b_l)}
        if layer == 0:
            lp["w_x"] = jnp.stack(wx_l)
        else:
            lp["w_f"] = jnp.stack(wf_l)
            lp["w_b"] = jnp.stack(wb_l)
        params["lstm"].append(lp)

    k_out = 1.0 / math.sqrt(2 * H)
    key, k1, k2 = jax.random.split(key, 3)
    w1 = jax.random.uniform(k1, (V, 2 * H), jnp.float32, -k_out, k_out)
    b1 = jax.random.uniform(k2, (V,), jnp.float32, -k_out, k_out)
    params["w1"] = jnp.stack([_pad_plain_t(w1[:, :H], Hp, Vp),
                              _pad_plain_t(w1[:, H:], Hp, Vp)])     # (2, Hp, Vp)
    params["b1"] = jnp.zeros((1, Vp), jnp.float32).at[0, :V].set(b1)

    k_lf = 1.0 / math.sqrt(V)
    key, k1, k2 = jax.random.split(key, 3)
    w2 = jax.random.uniform(k1, (V, V), jnp.float32, -k_lf, k_lf)
    b2 = jax.random.uniform(k2, (V,), jnp.float32, -k_lf, k_lf)
    params["w2"] = jnp.zeros((Vp, Vp), jnp.float32).at[:V, :V].set(w2.T)
    # Vocab-padding mask baked into b2: padded w2 columns are zero, so padded
    # logits == b2 == -1e30 and drop out of the softmax (safe in f32).
    params["b2"] = jnp.full((1, Vp), -1e30, jnp.float32).at[0, :V].set(b2)
    return params


# ----------------------------------------------------------------------------
# Full forward (= Model.forward).  x_padded is time-major (T, B, in_vocab),
# zero-padded (pad_sequence layout).  Returns (log_probs (T,B,out_vocab), lens).
# ----------------------------------------------------------------------------
@functools.partial(jax.jit, static_argnames=("hidden", "out_vocab"))
def model_forward(x_padded, lengths, params, *, hidden, out_vocab):
    T, B, D = x_padded.shape
    H, V = hidden, out_vocab
    Hp = _round_up(H, LANE)
    Dp = _round_up(D, LANE)
    Bp = _round_up(B, SUB)
    Tp = _round_up(T, TC)

    # Padded batch columns get length 0 (fully masked); padded timesteps are
    # masked by the in-kernel length comparison, so they contribute nothing.
    x_p = jnp.zeros((Tp, Bp, Dp), jnp.float32).at[:T, :B, :D].set(
        x_padded.astype(jnp.float32))
    len2d = jnp.zeros((Bp, 1), jnp.int32).at[:B, 0].set(lengths.astype(jnp.int32))

    y = None
    for li, lp in enumerate(params["lstm"]):
        if li == 0:
            g = _input_proj(x_p, lp["w_x"], lp["b"])
        else:
            g = _hidden_proj(y, lp["w_f"], lp["w_b"], lp["b"])
        y = _bilstm(g, len2d, lp["w_h"], Hp)

    out = _head(y, params["w1"], params["b1"], params["w2"], params["b2"])
    return out[:T, :B, :V], lengths


if __name__ == "__main__":
    IN_VOCAB, OUT_VOCAB, HIDDEN = 8, 8, 16
    T, B = 8, 4

    key = jax.random.PRNGKey(0)
    key, kx = jax.random.split(key)
    params = init_params(key, IN_VOCAB, OUT_VOCAB, HIDDEN, num_layers=5)

    lengths = jnp.array([8, 5, 7, 3], dtype=jnp.int32)          # unsorted is fine
    x_raw = jax.random.normal(kx, (T, B, IN_VOCAB), dtype=jnp.float32)
    pad_mask = (jnp.arange(T)[:, None] < lengths[None, :]).astype(jnp.float32)
    x_padded = x_raw * pad_mask[:, :, None]                     # pad_sequence(X)

    out, out_lens = model_forward(x_padded, lengths, params,
                                  hidden=HIDDEN, out_vocab=OUT_VOCAB)
    out = jax.block_until_ready(out)
    out_lens = jax.block_until_ready(out_lens)

    assert out.shape == (T, B, OUT_VOCAB)
    assert bool(jnp.all(jnp.isfinite(out)))
    # log_softmax rows sum to 1 in prob space
    assert bool(jnp.allclose(jnp.exp(out).sum(-1), 1.0, atol=1e-4))
    print("KERNEL_OK")
</pallas_src>

<mosaic_0001>
module attributes {stable_mosaic.version = 11 : i64} {
  func.func @_proj1_kernel(%arg0: i32, %arg1: memref<128x128xf32, #tpu.memory_space<vmem>>, %arg2: memref<2x128x512xf32, #tpu.memory_space<vmem>>, %arg3: memref<2x1x512xf32, #tpu.memory_space<vmem>>, %arg4: memref<2x128x512xbf16, #tpu.memory_space<vmem>>) attributes {dimension_semantics = [#tpu.dimension_semantics<parallel>], iteration_bounds = array<i64: 1>, scalar_prefetch = 0 : i64, scratch_operands = 0 : i64, tpu.core_type = #tpu.core_type<tc>, window_params = [{transform_indices = @transform_0, window_bounds = array<i64: 128, 128>}, {pipeline_mode = #tpu.pipeline_mode<synchronous>, transform_indices = @transform_1, window_bounds = array<i64: 2, 128, 512>}, {pipeline_mode = #tpu.pipeline_mode<synchronous>, transform_indices = @transform_2, window_bounds = array<i64: 2, 1, 512>}, {transform_indices = @transform_3, window_bounds = array<i64: 2, 128, 512>}]} {
    %c0 = arith.constant 0 : index
    %c0_0 = arith.constant 0 : index
    %0 = vector.load %arg1[%c0, %c0_0] : memref<128x128xf32, #tpu.memory_space<vmem>>, vector<128x128xf32>
    %c0_1 = arith.constant 0 : index
    %c0_2 = arith.constant 0 : index
    %c0_3 = arith.constant 0 : index
    %1 = vector.load %arg2[%c0_1, %c0_2, %c0_3] : memref<2x128x512xf32, #tpu.memory_space<vmem>>, vector<1x128x512xf32>
    %2 = vector.shape_cast %1 : vector<1x128x512xf32> to vector<128x512xf32>
    %cst = arith.constant dense<0.000000e+00> : vector<128x512xf32>
    %3 = tpu.matmul %0, %2, %cst {dimension_numbers = #tpu.dot_dimension_numbers<[1], [0], [0], [1], [0, 0, 1, 1], [], []>} : vector<128x128xf32>, vector<128x512xf32>, vector<128x512xf32> -> vector<128x512xf32>
    %c0_4 = arith.constant 0 : index
    %c0_5 = arith.constant 0 : index
    %c0_6 = arith.constant 0 : index
    %4 = vector.load %arg3[%c0_4, %c0_5, %c0_6] : memref<2x1x512xf32, #tpu.memory_space<vmem>>, vector<1x1x512xf32>
    %5 = vector.shape_cast %4 : vector<1x1x512xf32> to vector<1x512xf32>
    %6 = vector.broadcast %5 : vector<1x512xf32> to vector<128x512xf32>
    %7 = arith.addf %3, %6 : vector<128x512xf32>
    %8 = arith.truncf %7 : vector<128x512xf32> to vector<128x512xbf16>
    %c0_7 = arith.constant 0 : index
    %c0_8 = arith.constant 0 : index
    %c0_9 = arith.constant 0 : index
    %9 = vector.load %arg4[%c0_7, %c0_8, %c0_9] : memref<2x128x512xbf16, #tpu.memory_space<vmem>>, vector<1x128x512xbf16>
    %10 = vector.shape_cast %9 : vector<1x128x512xbf16> to vector<128x512xbf16>
    %11 = vector.shape_cast %8 : vector<128x512xbf16> to vector<1x128x512xbf16>
    tpu.vector_store %arg4[%c0_7, %c0_8, %c0_9], %11 {strides = array<i32>} : memref<2x128x512xbf16, #tpu.memory_space<vmem>>, vector<1x128x512xbf16>,
    %c1 = arith.constant 1 : index
    %c0_10 = arith.constant 0 : index
    %c0_11 = arith.constant 0 : index
    %12 = vector.load %arg2[%c1, %c0_10, %c0_11] : memref<2x128x512xf32, #tpu.memory_space<vmem>>, vector<1x128x512xf32>
    %13 = vector.shape_cast %12 : vector<1x128x512xf32> to vector<128x512xf32>
    %cst_12 = arith.constant dense<0.000000e+00> : vector<128x512xf32>
    %14 = tpu.matmul %0, %13, %cst_12 {dimension_numbers = #tpu.dot_dimension_numbers<[1], [0], [0], [1], [0, 0, 1, 1], [], []>} : vector<128x128xf32>, vector<128x512xf32>, vector<128x512xf32> -> vector<128x512xf32>
    %c1_13 = arith.constant 1 : index
    %c0_14 = arith.constant 0 : index
    %c0_15 = arith.constant 0 : index
    %15 = vector.load %arg3[%c1_13, %c0_14, %c0_15] : memref<2x1x512xf32, #tpu.memory_space<vmem>>, vector<1x1x512xf32>
    %16 = vector.shape_cast %15 : vector<1x1x512xf32> to vector<1x512xf32>
    %17 = vector.broadcast %16 : vector<1x512xf32> to vector<128x512xf32>
    %18 = arith.addf %14, %17 : vector<128x512xf32>
    %19 = arith.truncf %18 : vector<128x512xf32> to vector<128x512xbf16>
    %c1_16 = arith.constant 1 : index
    %c0_17 = arith.constant 0 : index
    %c0_18 = arith.constant 0 : index
    %20 = vector.load %arg4[%c1_16, %c0_17, %c0_18] : memref<2x128x512xbf16, #tpu.memory_space<vmem>>, vector<1x128x512xbf16>
    %21 = vector.shape_cast %20 : vector<1x128x512xbf16> to vector<128x512xbf16>
    %22 = vector.shape_cast %19 : vector<128x512xbf16> to vector<1x128x512xbf16>
    tpu.vector_store %arg4[%c1_16, %c0_17, %c0_18], %22 {strides = array<i32>} : memref<2x128x512xbf16, #tpu.memory_space<vmem>>, vector<1x128x512xbf16>,
    return
  }
  func.func @transform_0(%arg0: i32) -> (i32, i32) {
    %c0_i32 = arith.constant 0 : i32
    %c0_i32_0 = arith.constant 0 : i32
    return %arg0, %c0_i32 : i32, i32
  }
  func.func @transform_1(%arg0: i32) -> (i32, i32, i32) {
    %c0_i32 = arith.constant 0 : i32
    %c0_i32_0 = arith.constant 0 : i32
    %c0_i32_1 = arith.constant 0 : i32
    %c0_i32_2 = arith.constant 0 : i32
    return %c0_i32, %c0_i32_0, %c0_i32_1 : i32, i32, i32
  }
  func.func @transform_2(%arg0: i32) -> (i32, i32, i32) {
    %c0_i32 = arith.constant 0 : i32
    %c0_i32_0 = arith.constant 0 : i32
    %c0_i32_1 = arith.constant 0 : i32
    %c0_i32_2 = arith.constant 0 : i32
    return %c0_i32, %c0_i32_0, %c0_i32_1 : i32, i32, i32
  }
  func.func @transform_3(%arg0: i32) -> (i32, i32, i32) {
    %c0_i32 = arith.constant 0 : i32
    %c0_i32_0 = arith.constant 0 : i32
    %c0_i32_1 = arith.constant 0 : i32
    return %c0_i32, %arg0, %c0_i32_0 : i32, i32, i32
  }
}

module attributes {stable_mosaic.version = 11 : i64} {
  func.func @_proj2_kernel(%arg0: i32, %arg1: memref<2x128x128xbf16, #tpu.memory_space<vmem>>, %arg2: memref<2x128x512xf32, #tpu.memory_space<vmem>>, %arg3: memref<2x128x512xf32, #tpu.memory_space<vmem>>, %arg4: memref<2x1x512xf32, #tpu.memory_space<vmem>>, %arg5: memref<2x128x512xbf16, #tpu.memory_space<vmem>>) attributes {dimension_semantics = [#tpu.dimension_semantics<parallel>], iteration_bounds = array<i64: 1>, scalar_prefetch = 0 : i64, scratch_operands = 0 : i64, tpu.core_type = #tpu.core_type<tc>, window_params = [{transform_indices = @transform_0, window_bounds = array<i64: 2, 128, 128>}, {pipeline_mode = #tpu.pipeline_mode<synchronous>, transform_indices = @transform_1, window_bounds = array<i64: 2, 128, 512>}, {pipeline_mode = #tpu.pipeline_mode<synchronous>, transform_indices = @transform_2, window_bounds = array<i64: 2, 128, 512>}, {pipeline_mode = #tpu.pipeline_mode<synchronous>, transform_indices = @transform_3, window_bounds = array<i64: 2, 1, 512>}, {transform_indices = @transform_4, window_bounds = array<i64: 2, 128, 512>}]} {
    %c0 = arith.constant 0 : index
    %c0_0 = arith.constant 0 : index
    %c0_1 = arith.constant 0 : index
    %0 = vector.load %arg1[%c0, %c0_0, %c0_1] : memref<2x128x128xbf16, #tpu.memory_space<vmem>>, vector<1x128x128xbf16>
    %1 = vector.shape_cast %0 : vector<1x128x128xbf16> to vector<128x128xbf16>
    %2 = arith.extf %1 : vector<128x128xbf16> to vector<128x128xf32>
    %c1 = arith.constant 1 : index
    %c0_2 = arith.constant 0 : index
    %c0_3 = arith.constant 0 : index
    %3 = vector.load %arg1[%c1, %c0_2, %c0_3] : memref<2x128x128xbf16, #tpu.memory_space<vmem>>, vector<1x128x128xbf16>
    %4 = vector.shape_cast %3 : vector<1x128x128xbf16> to vector<128x128xbf16>
    %5 = arith.extf %4 : vector<128x128xbf16> to vector<128x128xf32>
    %c0_4 = arith.constant 0 : index
    %c0_5 = arith.constant 0 : index
    %c0_6 = arith.constant 0 : index
    %6 = vector.load %arg2[%c0_4, %c0_5, %c0_6] : memref<2x128x512xf32, #tpu.memory_space<vmem>>, vector<1x128x512xf32>
    %7 = vector.shape_cast %6 : vector<1x128x512xf32> to vector<128x512xf32>
    %cst = arith.constant dense<0.000000e+00> : vector<128x512xf32>
    %8 = tpu.matmul %2, %7, %cst {dimension_numbers = #tpu.dot_dimension_numbers<[1], [0], [0], [1], [0, 0, 1, 1], [], []>} : vector<128x128xf32>, vector<128x512xf32>, vector<128x512xf32> -> vector<128x512xf32>
    %c0_7 = arith.constant 0 : index
    %c0_8 = arith.constant 0 : index
    %c0_9 = arith.constant 0 : index
    %9 = vector.load %arg3[%c0_7, %c0_8, %c0_9] : memref<2x128x512xf32, #tpu.memory_space<vmem>>, vector<1x128x512xf32>
    %10 = vector.shape_cast %9 : vector<1x128x512xf32> to vector<128x512xf32>
    %cst_10 = arith.constant dense<0.000000e+00> : vector<128x512xf32>
    %11 = tpu.matmul %5, %10, %cst_10 {dimension_numbers = #tpu.dot_dimension_numbers<[1], [0], [0], [1], [0, 0, 1, 1], [], []>} : vector<128x128xf32>, vector<128x512xf32>, vector<128x512xf32> -> vector<128x512xf32>
    %12 = arith.addf %8, %11 : vector<128x512xf32>
    %c0_11 = arith.constant 0 : index
    %c0_12 = arith.constant 0 : index
    %c0_13 = arith.constant 0 : index
    %13 = vector.load %arg4[%c0_11, %c0_12, %c0_13] : memref<2x1x512xf32, #tpu.memory_space<vmem>>, vector<1x1x512xf32>
    %14 = vector.shape_cast %13 : vector<1x1x512xf32> to vector<1x512xf32>
    %15 = vector.broadcast %14 : vector<1x512xf32> to vector<128x512xf32>
    %16 = arith.addf %12, %15 : vector<128x512xf32>
    %17 = arith.truncf %16 : vector<128x512xf32> to vector<128x512xbf16>
    %c0_14 = arith.constant 0 : index
    %c0_15 = arith.constant 0 : index
    %c0_16 = arith.constant 0 : index
    %18 = vector.load %arg5[%c0_14, %c0_15, %c0_16] : memref<2x128x512xbf16, #tpu.memory_space<vmem>>, vector<1x128x512xbf16>
    %19 = vector.shape_cast %18 : vector<1x128x512xbf16> to vector<128x512xbf16>
    %20 = vector.shape_cast %17 : vector<128x512xbf16> to vector<1x128x512xbf16>
    tpu.vector_store %arg5[%c0_14, %c0_15, %c0_16], %20 {strides = array<i32>} : memref<2x128x512xbf16, #tpu.memory_space<vmem>>, vector<1x128x512xbf16>,
    %c1_17 = arith.constant 1 : index
    %c0_18 = arith.constant 0 : index
    %c0_19 = arith.constant 0 : index
    %21 = vector.load %arg2[%c1_17, %c0_18, %c0_19] : memref<2x128x512xf32, #tpu.memory_space<vmem>>, vector<1x128x512xf32>
    %22 = vector.shape_cast %21 : vector<1x128x512xf32> to vector<128x512xf32>
    %cst_20 = arith.constant dense<0.000000e+00> : vector<128x512xf32>
    %23 = tpu.matmul %2, %22, %cst_20 {dimension_numbers = #tpu.dot_dimension_numbers<[1], [0], [0], [1], [0, 0, 1, 1], [], []>} : vector<128x128xf32>, vector<128x512xf32>, vector<128x512xf32> -> vector<128x512xf32>
    %c1_21 = arith.constant 1 : index
    %c0_22 = arith.constant 0 : index
    %c0_23 = arith.constant 0 : index
    %24 = vector.load %arg3[%c1_21, %c0_22, %c0_23] : memref<2x128x512xf32, #tpu.memory_space<vmem>>, vector<1x128x512xf32>
    %25 = vector.shape_cast %24 : vector<1x128x512xf32> to vector<128x512xf32>
    %cst_24 = arith.constant dense<0.000000e+00> : vector<128x512xf32>
    %26 = tpu.matmul %5, %25, %cst_24 {dimension_numbers = #tpu.dot_dimension_numbers<[1], [0], [0], [1], [0, 0, 1, 1], [], []>} : vector<128x128xf32>, vector<128x512xf32>, vector<128x512xf32> -> vector<128x512xf32>
    %27 = arith.addf %23, %26 : vector<128x512xf32>
    %c1_25 = arith.constant 1 : index
    %c0_26 = arith.constant 0 : index
    %c0_27 = arith.constant 0 : index
    %28 = vector.load %arg4[%c1_25, %c0_26, %c0_27] : memref<2x1x512xf32, #tpu.memory_space<vmem>>, vector<1x1x512xf32>
    %29 = vector.shape_cast %28 : vector<1x1x512xf32> to vector<1x512xf32>
    %30 = vector.broadcast %29 : vector<1x512xf32> to vector<128x512xf32>
    %31 = arith.addf %27, %30 : vector<128x512xf32>
    %32 = arith.truncf %31 : vector<128x512xf32> to vector<128x512xbf16>
    %c1_28 = arith.constant 1 : index
    %c0_29 = arith.constant 0 : index
    %c0_30 = arith.constant 0 : index
    %33 = vector.load %arg5[%c1_28, %c0_29, %c0_30] : memref<2x128x512xbf16, #tpu.memory_space<vmem>>, vector<1x128x512xbf16>
    %34 = vector.shape_cast %33 : vector<1x128x512xbf16> to vector<128x512xbf16>
    %35 = vector.shape_cast %32 : vector<128x512xbf16> to vector<1x128x512xbf16>
    tpu.vector_store %arg5[%c1_28, %c0_29, %c0_30], %35 {strides = array<i32>} : memref<2x128x512xbf16, #tpu.memory_space<vmem>>, vector<1x128x512xbf16>,
    return
  }
  func.func @transform_0(%arg0: i32) -> (i32, i32, i32) {
    %c0_i32 = arith.constant 0 : i32
    %c0_i32_0 = arith.constant 0 : i32
    %c0_i32_1 = arith.constant 0 : i32
    return %c0_i32, %arg0, %c0_i32_0 : i32, i32, i32
  }
  func.func @transform_1(%arg0: i32) -> (i32, i32, i32) {
    %c0_i32 = arith.constant 0 : i32
    %c0_i32_0 = arith.constant 0 : i32
    %c0_i32_1 = arith.constant 0 : i32
    %c0_i32_2 = arith.constant 0 : i32
    return %c0_i32, %c0_i32_0, %c0_i32_1 : i32, i32, i32
  }
  func.func @transform_2(%arg0: i32) -> (i32, i32, i32) {
    %c0_i32 = arith.constant 0 : i32
    %c0_i32_0 = arith.constant 0 : i32
    %c0_i32_1 = arith.constant 0 : i32
    %c0_i32_2 = arith.constant 0 : i32
    return %c0_i32, %c0_i32_0, %c0_i32_1 : i32, i32, i32
  }
  func.func @transform_3(%arg0: i32) -> (i32, i32, i32) {
    %c0_i32 = arith.constant 0 : i32
    %c0_i32_0 = arith.constant 0 : i32
    %c0_i32_1 = arith.constant 0 : i32
    %c0_i32_2 = arith.constant 0 : i32
    return %c0_i32, %c0_i32_0, %c0_i32_1 : i32, i32, i32
  }
  func.func @transform_4(%arg0: i32) -> (i32, i32, i32) {
    %c0_i32 = arith.constant 0 : i32
    %c0_i32_0 = arith.constant 0 : i32
    %c0_i32_1 = arith.constant 0 : i32
    return %c0_i32, %arg0, %c0_i32_0 : i32, i32, i32
  }
}

module attributes {stable_mosaic.version = 11 : i64} {
  func.func @_head_kernel(%arg0: i32, %arg1: memref<2x128x128xbf16, #tpu.memory_space<vmem>>, %arg2: memref<2x128x128xf32, #tpu.memory_space<vmem>>, %arg3: memref<1x128xf32, #tpu.memory_space<vmem>>, %arg4: memref<128x128xf32, #tpu.memory_space<vmem>>, %arg5: memref<1x128xf32, #tpu.memory_space<vmem>>, %arg6: memref<128x128xf32, #tpu.memory_space<vmem>>) attributes {dimension_semantics = [#tpu.dimension_semantics<parallel>], iteration_bounds = array<i64: 1>, scalar_prefetch = 0 : i64, scratch_operands = 0 : i64, tpu.core_type = #tpu.core_type<tc>, window_params = [{transform_indices = @transform_0, window_bounds = array<i64: 2, 128, 128>}, {pipeline_mode = #tpu.pipeline_mode<synchronous>, transform_indices = @transform_1, window_bounds = array<i64: 2, 128, 128>}, {pipeline_mode = #tpu.pipeline_mode<synchronous>, transform_indices = @transform_2, window_bounds = array<i64: 1, 128>}, {pipeline_mode = #tpu.pipeline_mode<synchronous>, transform_indices = @transform_3, window_bounds = array<i64: 128, 128>}, {pipeline_mode = #tpu.pipeline_mode<synchronous>, transform_indices = @transform_4, window_bounds = array<i64: 1, 128>}, {transform_indices = @transform_5, window_bounds = array<i64: 128, 128>}]} {
    %c0 = arith.constant 0 : index
    %c0_0 = arith.constant 0 : index
    %c0_1 = arith.constant 0 : index
    %0 = vector.load %arg1[%c0, %c0_0, %c0_1] : memref<2x128x128xbf16, #tpu.memory_space<vmem>>, vector<1x128x128xbf16>
    %1 = vector.shape_cast %0 : vector<1x128x128xbf16> to vector<128x128xbf16>
    %2 = arith.extf %1 : vector<128x128xbf16> to vector<128x128xf32>
    %c1 = arith.constant 1 : index
    %c0_2 = arith.constant 0 : index
    %c0_3 = arith.constant 0 : index
    %3 = vector.load %arg1[%c1, %c0_2, %c0_3] : memref<2x128x128xbf16, #tpu.memory_space<vmem>>, vector<1x128x128xbf16>
    %4 = vector.shape_cast %3 : vector<1x128x128xbf16> to vector<128x128xbf16>
    %5 = arith.extf %4 : vector<128x128xbf16> to vector<128x128xf32>
    %c0_4 = arith.constant 0 : index
    %c0_5 = arith.constant 0 : index
    %c0_6 = arith.constant 0 : index
    %6 = vector.load %arg2[%c0_4, %c0_5, %c0_6] : memref<2x128x128xf32, #tpu.memory_space<vmem>>, vector<1x128x128xf32>
    %7 = vector.shape_cast %6 : vector<1x128x128xf32> to vector<128x128xf32>
    %cst = arith.constant dense<0.000000e+00> : vector<128x128xf32>
    %8 = tpu.matmul %2, %7, %cst {dimension_numbers = #tpu.dot_dimension_numbers<[1], [0], [0], [1], [0, 0, 1, 1], [], []>} : vector<128x128xf32>, vector<128x128xf32>, vector<128x128xf32> -> vector<128x128xf32>
    %c1_7 = arith.constant 1 : index
    %c0_8 = arith.constant 0 : index
    %c0_9 = arith.constant 0 : index
    %9 = vector.load %arg2[%c1_7, %c0_8, %c0_9] : memref<2x128x128xf32, #tpu.memory_space<vmem>>, vector<1x128x128xf32>
    %10 = vector.shape_cast %9 : vector<1x128x128xf32> to vector<128x128xf32>
    %cst_10 = arith.constant dense<0.000000e+00> : vector<128x128xf32>
    %11 = tpu.matmul %5, %10, %cst_10 {dimension_numbers = #tpu.dot_dimension_numbers<[1], [0], [0], [1], [0, 0, 1, 1], [], []>} : vector<128x128xf32>, vector<128x128xf32>, vector<128x128xf32> -> vector<128x128xf32>
    %12 = arith.addf %8, %11 : vector<128x128xf32>
    %c0_11 = arith.constant 0 : index
    %c0_12 = arith.constant 0 : index
    %13 = vector.load %arg3[%c0_11, %c0_12] : memref<1x128xf32, #tpu.memory_space<vmem>>, vector<1x128xf32>
    %14 = vector.broadcast %13 : vector<1x128xf32> to vector<128x128xf32>
    %15 = arith.addf %12, %14 : vector<128x128xf32>
    %c0_13 = arith.constant 0 : index
    %c0_14 = arith.constant 0 : index
    %16 = vector.load %arg4[%c0_13, %c0_14] : memref<128x128xf32, #tpu.memory_space<vmem>>, vector<128x128xf32>
    %cst_15 = arith.constant dense<0.000000e+00> : vector<128x128xf32>
    %17 = tpu.matmul %15, %16, %cst_15 {dimension_numbers = #tpu.dot_dimension_numbers<[1], [0], [0], [1], [0, 0, 1, 1], [], []>} : vector<128x128xf32>, vector<128x128xf32>, vector<128x128xf32> -> vector<128x128xf32>
    %c0_16 = arith.constant 0 : index
    %c0_17 = arith.constant 0 : index
    %18 = vector.load %arg5[%c0_16, %c0_17] : memref<1x128xf32, #tpu.memory_space<vmem>>, vector<1x128xf32>
    %19 = vector.broadcast %18 : vector<1x128xf32> to vector<128x128xf32>
    %20 = arith.addf %17, %19 : vector<128x128xf32>
    %cst_18 = arith.constant dense<0xFF800000> : vector<128xf32>
    %21 = vector.multi_reduction <maximumf>, %20, %cst_18 [1] : vector<128x128xf32> to vector<128xf32>
    %22 = vector.shape_cast %21 : vector<128xf32> to vector<128x1xf32>
    %23 = vector.broadcast %22 : vector<128x1xf32> to vector<128x128xf32>
    %24 = arith.subf %20, %23 : vector<128x128xf32>
    %25 = math.exp %24 : vector<128x128xf32>
    %cst_19 = arith.constant dense<0.000000e+00> : vector<128xf32>
    %26 = vector.multi_reduction <add>, %25, %cst_19 [1] : vector<128x128xf32> to vector<128xf32>
    %27 = vector.shape_cast %26 : vector<128xf32> to vector<128x1xf32>
    %28 = math.log %27 : vector<128x1xf32>
    %29 = vector.broadcast %28 : vector<128x1xf32> to vector<128x128xf32>
    %30 = arith.subf %24, %29 : vector<128x128xf32>
    %c0_20 = arith.constant 0 : index
    %c0_21 = arith.constant 0 : index
    %31 = vector.load %arg6[%c0_20, %c0_21] : memref<128x128xf32, #tpu.memory_space<vmem>>, vector<128x128xf32>
    tpu.vector_store %arg6[%c0_20, %c0_21], %30 {strides = array<i32>} : memref<128x128xf32, #tpu.memory_space<vmem>>, vector<128x128xf32>,
    return
  }
  func.func @transform_0(%arg0: i32) -> (i32, i32, i32) {
    %c0_i32 = arith.constant 0 : i32
    %c0_i32_0 = arith.constant 0 : i32
    %c0_i32_1 = arith.constant 0 : i32
    return %c0_i32, %arg0, %c0_i32_0 : i32, i32, i32
  }
  func.func @transform_1(%arg0: i32) -> (i32, i32, i32) {
    %c0_i32 = arith.constant 0 : i32
    %c0_i32_0 = arith.constant 0 : i32
    %c0_i32_1 = arith.constant 0 : i32
    %c0_i32_2 = arith.constant 0 : i32
    return %c0_i32, %c0_i32_0, %c0_i32_1 : i32, i32, i32
  }
  func.func @transform_2(%arg0: i32) -> (i32, i32) {
    %c0_i32 = arith.constant 0 : i32
    %c0_i32_0 = arith.constant 0 : i32
    %c0_i32_1 = arith.constant 0 : i32
    return %c0_i32, %c0_i32_0 : i32, i32
  }
  func.func @transform_3(%arg0: i32) -> (i32, i32) {
    %c0_i32 = arith.constant 0 : i32
    %c0_i32_0 = arith.constant 0 : i32
    %c0_i32_1 = arith.constant 0 : i32
    return %c0_i32, %c0_i32_0 : i32, i32
  }
  func.func @transform_4(%arg0: i32) -> (i32, i32) {
    %c0_i32 = arith.constant 0 : i32
    %c0_i32_0 = arith.constant 0 : i32
    %c0_i32_1 = arith.constant 0 : i32
    return %c0_i32, %c0_i32_0 : i32, i32
  }
  func.func @transform_5(%arg0: i32) -> (i32, i32) {
    %c0_i32 = arith.constant 0 : i32
    %c0_i32_0 = arith.constant 0 : i32
    return %arg0, %c0_i32 : i32, i32
  }
}

module attributes {stable_mosaic.version = 11 : i64} {
  func.func @_bilstm_kernel(%arg0: i32, %arg1: i32, %arg2: memref<8x1xi32, #tpu.memory_space<vmem>>, %arg3: memref<1x16x8x512xbf16, #tpu.memory_space<vmem>>, %arg4: memref<1x128x512xf32, #tpu.memory_space<vmem>>, %arg5: memref<1x16x8x128xbf16, #tpu.memory_space<vmem>>, %arg6: memref<8x128xf32, #tpu.memory_space<vmem>>, %arg7: memref<8x128xf32, #tpu.memory_space<vmem>>) attributes {dimension_semantics = [#tpu.dimension_semantics<parallel>, #tpu.dimension_semantics<arbitrary>], iteration_bounds = array<i64: 2, 1>, scalar_prefetch = 0 : i64, scratch_operands = 2 : i64, tpu.core_type = #tpu.core_type<tc>, window_params = [{pipeline_mode = #tpu.pipeline_mode<synchronous>, transform_indices = @transform_0, window_bounds = array<i64: 8, 1>}, {transform_indices = @transform_1, window_bounds = array<i64: 1, 16, 8, 512>}, {transform_indices = @transform_2, window_bounds = array<i64: 1, 128, 512>}, {transform_indices = @transform_3, window_bounds = array<i64: 1, 16, 8, 128>}]} {
    %c0_i32 = arith.constant 0 : i32
    %0 = arith.cmpi eq, %arg1, %c0_i32 : i32
    %1 = arith.extui %0 : i1 to i32
    %c0_i32_0 = arith.constant 0 : i32
    %2 = arith.cmpi ne, %1, %c0_i32_0 : i32
    scf.if %2 {
      %cst_343 = arith.constant 0.000000e+00 : f32
      %874 = vector.broadcast %cst_343 : f32 to vector<8x128xf32>
      %c0_344 = arith.constant 0 : index
      %c0_345 = arith.constant 0 : index
      %875 = vector.load %arg6[%c0_344, %c0_345] : memref<8x128xf32, #tpu.memory_space<vmem>>, vector<8x128xf32>
      tpu.vector_store %arg6[%c0_344, %c0_345], %874 {strides = array<i32>} : memref<8x128xf32, #tpu.memory_space<vmem>>, vector<8x128xf32>,
      %cst_346 = arith.constant 0.000000e+00 : f32
      %876 = vector.broadcast %cst_346 : f32 to vector<8x128xf32>
      %c0_347 = arith.constant 0 : index
      %c0_348 = arith.constant 0 : index
      %877 = vector.load %arg7[%c0_347, %c0_348] : memref<8x128xf32, #tpu.memory_space<vmem>>, vector<8x128xf32>
      tpu.vector_store %arg7[%c0_347, %c0_348], %876 {strides = array<i32>} : memref<8x128xf32, #tpu.memory_space<vmem>>, vector<8x128xf32>,
    } else {
    }
    %c2_i32 = arith.constant 2 : i32
    %3 = arith.muli %c2_i32, %arg1 : i32
    %c0_i32_1 = arith.constant 0 : i32
    %4 = arith.subi %c0_i32_1, %3 : i32
    %5 = arith.muli %arg0, %4 : i32
    %6 = arith.addi %arg1, %5 : i32
    %c0 = arith.constant 0 : index
    %c0_2 = arith.constant 0 : index
    %7 = vector.load %arg2[%c0, %c0_2] : memref<8x1xi32, #tpu.memory_space<vmem>>, vector<8x1xi32>
    %c0_3 = arith.constant 0 : index
    %c0_4 = arith.constant 0 : index
    %c0_5 = arith.constant 0 : index
    %8 = vector.load %arg4[%c0_3, %c0_4, %c0_5] : memref<1x128x512xf32, #tpu.memory_space<vmem>>, vector<1x128x512xf32>
    %9 = vector.shape_cast %8 : vector<1x128x512xf32> to vector<128x512xf32>
    %c0_i32_6 = arith.constant 0 : i32
    %c2_i32_7 = arith.constant 2 : i32
    %10 = arith.muli %c2_i32_7, %c0_i32_6 : i32
    %c15_i32 = arith.constant 15 : i32
    %11 = arith.subi %c15_i32, %10 : i32
    %12 = arith.muli %arg0, %11 : i32
    %13 = arith.addi %c0_i32_6, %12 : i32
    %c16_i32 = arith.constant 16 : i32
    %14 = arith.muli %6, %c16_i32 : i32
    %15 = arith.addi %14, %13 : i32
    %c0_8 = arith.constant 0 : index
    %16 = arith.index_cast %13 : i32 to index
    %c0_9 = arith.constant 0 : index
    %c0_10 = arith.constant 0 : index
    %17 = vector.load %arg3[%c0_8, %16, %c0_9, %c0_10] : memref<1x16x8x512xbf16, #tpu.memory_space<vmem>>, vector<1x1x8x512xbf16>
    %18 = vector.shape_cast %17 : vector<1x1x8x512xbf16> to vector<8x512xbf16>
    %19 = arith.extf %18 : vector<8x512xbf16> to vector<8x512xf32>
    %c0_11 = arith.constant 0 : index
    %c0_12 = arith.constant 0 : index
    %20 = vector.load %arg6[%c0_11, %c0_12] : memref<8x128xf32, #tpu.memory_space<vmem>>, vector<8x128xf32>
    %cst = arith.constant dense<0.000000e+00> : vector<8x512xf32>
    %21 = tpu.matmul %20, %9, %cst {dimension_numbers = #tpu.dot_dimension_numbers<[1], [0], [0], [1], [0, 0, 1, 1], [], []>} : vector<8x128xf32>, vector<128x512xf32>, vector<8x512xf32> -> vector<8x512xf32>
    %22 = arith.addf %19, %21 : vector<8x512xf32>
    %23 = vector.extract_strided_slice %22 {offsets = [0, 0], sizes = [8, 128], strides = [1, 1]} : vector<8x512xf32> to vector<8x128xf32>
    %24 = arith.negf %23 : vector<8x128xf32>
    %25 = math.exp %24 : vector<8x128xf32>
    %cst_13 = arith.constant 1.000000e+00 : f32
    %26 = vector.broadcast %cst_13 : f32 to vector<8x128xf32>
    %27 = arith.addf %26, %25 : vector<8x128xf32>
    %28 = arith.divf %26, %27 : vector<8x128xf32>
    %29 = vector.extract_strided_slice %22 {offsets = [0, 128], sizes = [8, 128], strides = [1, 1]} : vector<8x512xf32> to vector<8x128xf32>
    %30 = arith.negf %29 : vector<8x128xf32>
    %31 = math.exp %30 : vector<8x128xf32>
    %cst_14 = arith.constant 1.000000e+00 : f32
    %32 = vector.broadcast %cst_14 : f32 to vector<8x128xf32>
    %33 = arith.addf %32, %31 : vector<8x128xf32>
    %34 = arith.divf %32, %33 : vector<8x128xf32>
    %35 = vector.extract_strided_slice %22 {offsets = [0, 256], sizes = [8, 128], strides = [1, 1]} : vector<8x512xf32> to vector<8x128xf32>
    %36 = math.tanh %35 : vector<8x128xf32>
    %37 = vector.extract_strided_slice %22 {offsets = [0, 384], sizes = [8, 128], strides = [1, 1]} : vector<8x512xf32> to vector<8x128xf32>
    %38 = arith.negf %37 : vector<8x128xf32>
    %39 = math.exp %38 : vector<8x128xf32>
    %cst_15 = arith.constant 1.000000e+00 : f32
    %40 = vector.broadcast %cst_15 : f32 to vector<8x128xf32>
    %41 = arith.addf %40, %39 : vector<8x128xf32>
    %42 = arith.divf %40, %41 : vector<8x128xf32>
    %43 = vector.broadcast %15 : i32 to vector<8x1xi32>
    %44 = arith.cmpi slt, %43, %7 : vector<8x1xi32>
    %45 = arith.extui %44 : vector<8x1xi1> to vector<8x1xi32>
    %46 = arith.sitofp %45 : vector<8x1xi32> to vector<8x1xf32>
    %c0_16 = arith.constant 0 : index
    %c0_17 = arith.constant 0 : index
    %47 = vector.load %arg7[%c0_16, %c0_17] : memref<8x128xf32, #tpu.memory_space<vmem>>, vector<8x128xf32>
    %48 = arith.mulf %34, %47 : vector<8x128xf32>
    %49 = arith.mulf %28, %36 : vector<8x128xf32>
    %50 = arith.addf %48, %49 : vector<8x128xf32>
    %51 = vector.broadcast %46 : vector<8x1xf32> to vector<8x128xf32>
    %52 = arith.mulf %50, %51 : vector<8x128xf32>
    %53 = math.tanh %52 : vector<8x128xf32>
    %54 = arith.mulf %42, %53 : vector<8x128xf32>
    %55 = vector.broadcast %46 : vector<8x1xf32> to vector<8x128xf32>
    %56 = arith.mulf %54, %55 : vector<8x128xf32>
    %c0_18 = arith.constant 0 : index
    %c0_19 = arith.constant 0 : index
    %57 = vector.load %arg7[%c0_18, %c0_19] : memref<8x128xf32, #tpu.memory_space<vmem>>, vector<8x128xf32>
    tpu.vector_store %arg7[%c0_18, %c0_19], %52 {strides = array<i32>} : memref<8x128xf32, #tpu.memory_space<vmem>>, vector<8x128xf32>,
    %c0_20 = arith.constant 0 : index
    %c0_21 = arith.constant 0 : index
    %58 = vector.load %arg6[%c0_20, %c0_21] : memref<8x128xf32, #tpu.memory_space<vmem>>, vector<8x128xf32>
    tpu.vector_store %arg6[%c0_20, %c0_21], %56 {strides = array<i32>} : memref<8x128xf32, #tpu.memory_space<vmem>>, vector<8x128xf32>,
    %59 = arith.truncf %56 : vector<8x128xf32> to vector<8x128xbf16>
    %c0_22 = arith.constant 0 : index
    %60 = arith.index_cast %13 : i32 to index
    %c0_23 = arith.constant 0 : index
    %c0_24 = arith.constant 0 : index
    %61 = vector.load %arg5[%c0_22, %60, %c0_23, %c0_24] : memref<1x16x8x128xbf16, #tpu.memory_space<vmem>>, vector<1x1x8x128xbf16>
    %62 = vector.shape_cast %61 : vector<1x1x8x128xbf16> to vector<8x128xbf16>
    %63 = vector.shape_cast %59 : vector<8x128xbf16> to vector<1x1x8x128xbf16>
    tpu.vector_store %arg5[%c0_22, %60, %c0_23, %c0_24], %63 {strides = array<i32>} : memref<1x16x8x128xbf16, #tpu.memory_space<vmem>>, vector<1x1x8x128xbf16>,
    %c1_i32 = arith.constant 1 : i32
    %c2_i32_25 = arith.constant 2 : i32
    %64 = arith.muli %c2_i32_25, %c1_i32 : i32
    %c15_i32_26 = arith.constant 15 : i32
    %65 = arith.subi %c15_i32_26, %64 : i32
    %66 = arith.muli %arg0, %65 : i32
    %67 = arith.addi %c1_i32, %66 : i32
    %c16_i32_27 = arith.constant 16 : i32
    %68 = arith.muli %6, %c16_i32_27 : i32
    %69 = arith.addi %68, %67 : i32
    %c0_28 = arith.constant 0 : index
    %70 = arith.index_cast %67 : i32 to index
    %c0_29 = arith.constant 0 : index
    %c0_30 = arith.constant 0 : index
    %71 = vector.load %arg3[%c0_28, %70, %c0_29, %c0_30] : memref<1x16x8x512xbf16, #tpu.memory_space<vmem>>, vector<1x1x8x512xbf16>
    %72 = vector.shape_cast %71 : vector<1x1x8x512xbf16> to vector<8x512xbf16>
    %73 = arith.extf %72 : vector<8x512xbf16> to vector<8x512xf32>
    %c0_31 = arith.constant 0 : index
    %c0_32 = arith.constant 0 : index
    %74 = vector.load %arg6[%c0_31, %c0_32] : memref<8x128xf32, #tpu.memory_space<vmem>>, vector<8x128xf32>
    %cst_33 = arith.constant dense<0.000000e+00> : vector<8x512xf32>
    %75 = tpu.matmul %74, %9, %cst_33 {dimension_numbers = #tpu.dot_dimension_numbers<[1], [0], [0], [1], [0, 0, 1, 1], [], []>} : vector<8x128xf32>, vector<128x512xf32>, vector<8x512xf32> -> vector<8x512xf32>
    %76 = arith.addf %73, %75 : vector<8x512xf32>
    %77 = vector.extract_strided_slice %76 {offsets = [0, 0], sizes = [8, 128], strides = [1, 1]} : vector<8x512xf32> to vector<8x128xf32>
    %78 = arith.negf %77 : vector<8x128xf32>
    %79 = math.exp %78 : vector<8x128xf32>
    %cst_34 = arith.constant 1.000000e+00 : f32
    %80 = vector.broadcast %cst_34 : f32 to vector<8x128xf32>
    %81 = arith.addf %80, %79 : vector<8x128xf32>
    %82 = arith.divf %80, %81 : vector<8x128xf32>
    %83 = vector.extract_strided_slice %76 {offsets = [0, 128], sizes = [8, 128], strides = [1, 1]} : vector<8x512xf32> to vector<8x128xf32>
    %84 = arith.negf %83 : vector<8x128xf32>
    %85 = math.exp %84 : vector<8x128xf32>
    %cst_35 = arith.constant 1.000000e+00 : f32
    %86 = vector.broadcast %cst_35 : f32 to vector<8x128xf32>
    %87 = arith.addf %86, %85 : vector<8x128xf32>
    %88 = arith.divf %86, %87 : vector<8x128xf32>
    %89 = vector.extract_strided_slice %76 {offsets = [0, 256], sizes = [8, 128], strides = [1, 1]} : vector<8x512xf32> to vector<8x128xf32>
    %90 = math.tanh %89 : vector<8x128xf32>
    %91 = vector.extract_strided_slice %76 {offsets = [0, 384], sizes = [8, 128], strides = [1, 1]} : vector<8x512xf32> to vector<8x128xf32>
    %92 = arith.negf %91 : vector<8x128xf32>
    %93 = math.exp %92 : vector<8x128xf32>
    %cst_36 = arith.constant 1.000000e+00 : f32
    %94 = vector.broadcast %cst_36 : f32 to vector<8x128xf32>
    %95 = arith.addf %94, %93 : vector<8x128xf32>
    %96 = arith.divf %94, %95 : vector<8x128xf32>
    %97 = vector.broadcast %69 : i32 to vector<8x1xi32>
    %98 = arith.cmpi slt, %97, %7 : vector<8x1xi32>
    %99 = arith.extui %98 : vector<8x1xi1> to vector<8x1xi32>
    %100 = arith.sitofp %99 : vector<8x1xi32> to vector<8x1xf32>
    %c0_37 = arith.constant 0 : index
    %c0_38 = arith.constant 0 : index
    %101 = vector.load %arg7[%c0_37, %c0_38] : memref<8x128xf32, #tpu.memory_space<vmem>>, vector<8x128xf32>
    %102 = arith.mulf %88, %101 : vector<8x128xf32>
    %103 = arith.mulf %82, %90 : vector<8x128xf32>
    %104 = arith.addf %102, %103 : vector<8x128xf32>
    %105 = vector.broadcast %100 : vector<8x1xf32> to vector<8x128xf32>
    %106 = arith.mulf %104, %105 : vector<8x128xf32>
    %107 = math.tanh %106 : vector<8x128xf32>
    %108 = arith.mulf %96, %107 : vector<8x128xf32>
    %109 = vector.broadcast %100 : vector<8x1xf32> to vector<8x128xf32>
    %110 = arith.mulf %108, %109 : vector<8x128xf32>
    %c0_39 = arith.constant 0 : index
    %c0_40 = arith.constant 0 : index
    %111 = vector.load %arg7[%c0_39, %c0_40] : memref<8x128xf32, #tpu.memory_space<vmem>>, vector<8x128xf32>
    tpu.vector_store %arg7[%c0_39, %c0_40], %106 {strides = array<i32>} : memref<8x128xf32, #tpu.memory_space<vmem>>, vector<8x128xf32>,
    %c0_41 = arith.constant 0 : index
    %c0_42 = arith.constant 0 : index
    %112 = vector.load %arg6[%c0_41, %c0_42] : memref<8x128xf32, #tpu.memory_space<vmem>>, vector<8x128xf32>
    tpu.vector_store %arg6[%c0_41, %c0_42], %110 {strides = array<i32>} : memref<8x128xf32, #tpu.memory_space<vmem>>, vector<8x128xf32>,
    %113 = arith.truncf %110 : vector<8x128xf32> to vector<8x128xbf16>
    %c0_43 = arith.constant 0 : index
    %114 = arith.index_cast %67 : i32 to index
    %c0_44 = arith.constant 0 : index
    %c0_45 = arith.constant 0 : index
    %115 = vector.load %arg5[%c0_43, %114, %c0_44, %c0_45] : memref<1x16x8x128xbf16, #tpu.memory_space<vmem>>, vector<1x1x8x128xbf16>
    %116 = vector.shape_cast %115 : vector<1x1x8x128xbf16> to vector<8x128xbf16>
    %117 = vector.shape_cast %113 : vector<8x128xbf16> to vector<1x1x8x128xbf16>
    tpu.vector_store %arg5[%c0_43, %114, %c0_44, %c0_45], %117 {strides = array<i32>} : memref<1x16x8x128xbf16, #tpu.memory_space<vmem>>, vector<1x1x8x128xbf16>,
    %c2_i32_46 = arith.constant 2 : i32
    %c2_i32_47 = arith.constant 2 : i32
    %118 = arith.muli %c2_i32_47, %c2_i32_46 : i32
    %c15_i32_48 = arith.constant 15 : i32
    %119 = arith.subi %c15_i32_48, %118 : i32
    %120 = arith.muli %arg0, %119 : i32
    %121 = arith.addi %c2_i32_46, %120 : i32
    %c16_i32_49 = arith.constant 16 : i32
    %122 = arith.muli %6, %c16_i32_49 : i32
    %123 = arith.addi %122, %121 : i32
    %c0_50 = arith.constant 0 : index
    %124 = arith.index_cast %121 : i32 to index
    %c0_51 = arith.constant 0 : index
    %c0_52 = arith.constant 0 : index
    %125 = vector.load %arg3[%c0_50, %124, %c0_51, %c0_52] : memref<1x16x8x512xbf16, #tpu.memory_space<vmem>>, vector<1x1x8x512xbf16>
    %126 = vector.shape_cast %125 : vector<1x1x8x512xbf16> to vector<8x512xbf16>
    %127 = arith.extf %126 : vector<8x512xbf16> to vector<8x512xf32>
    %c0_53 = arith.constant 0 : index
    %c0_54 = arith.constant 0 : index
    %128 = vector.load %arg6[%c0_53, %c0_54] : memref<8x128xf32, #tpu.memory_space<vmem>>, vector<8x128xf32>
    %cst_55 = arith.constant dense<0.000000e+00> : vector<8x512xf32>
    %129 = tpu.matmul %128, %9, %cst_55 {dimension_numbers = #tpu.dot_dimension_numbers<[1], [0], [0], [1], [0, 0, 1, 1], [], []>} : vector<8x128xf32>, vector<128x512xf32>, vector<8x512xf32> -> vector<8x512xf32>
    %130 = arith.addf %127, %129 : vector<8x512xf32>
    %131 = vector.extract_strided_slice %130 {offsets = [0, 0], sizes = [8, 128], strides = [1, 1]} : vector<8x512xf32> to vector<8x128xf32>
    %132 = arith.negf %131 : vector<8x128xf32>
    %133 = math.exp %132 : vector<8x128xf32>
    %cst_56 = arith.constant 1.000000e+00 : f32
    %134 = vector.broadcast %cst_56 : f32 to vector<8x128xf32>
    %135 = arith.addf %134, %133 : vector<8x128xf32>
    %136 = arith.divf %134, %135 : vector<8x128xf32>
    %137 = vector.extract_strided_slice %130 {offsets = [0, 128], sizes = [8, 128], strides = [1, 1]} : vector<8x512xf32> to vector<8x128xf32>
    %138 = arith.negf %137 : vector<8x128xf32>
    %139 = math.exp %138 : vector<8x128xf32>
    %cst_57 = arith.constant 1.000000e+00 : f32
    %140 = vector.broadcast %cst_57 : f32 to vector<8x128xf32>
    %141 = arith.addf %140, %139 : vector<8x128xf32>
    %142 = arith.divf %140, %141 : vector<8x128xf32>
    %143 = vector.extract_strided_slice %130 {offsets = [0, 256], sizes = [8, 128], strides = [1, 1]} : vector<8x512xf32> to vector<8x128xf32>
    %144 = math.tanh %143 : vector<8x128xf32>
    %145 = vector.extract_strided_slice %130 {offsets = [0, 384], sizes = [8, 128], strides = [1, 1]} : vector<8x512xf32> to vector<8x128xf32>
    %146 = arith.negf %145 : vector<8x128xf32>
    %147 = math.exp %146 : vector<8x128xf32>
    %cst_58 = arith.constant 1.000000e+00 : f32
    %148 = vector.broadcast %cst_58 : f32 to vector<8x128xf32>
    %149 = arith.addf %148, %147 : vector<8x128xf32>
    %150 = arith.divf %148, %149 : vector<8x128xf32>
    %151 = vector.broadcast %123 : i32 to vector<8x1xi32>
    %152 = arith.cmpi slt, %151, %7 : vector<8x1xi32>
    %153 = arith.extui %152 : vector<8x1xi1> to vector<8x1xi32>
    %154 = arith.sitofp %153 : vector<8x1xi32> to vector<8x1xf32>
    %c0_59 = arith.constant 0 : index
    %c0_60 = arith.constant 0 : index
    %155 = vector.load %arg7[%c0_59, %c0_60] : memref<8x128xf32, #tpu.memory_space<vmem>>, vector<8x128xf32>
    %156 = arith.mulf %142, %155 : vector<8x128xf32>
    %157 = arith.mulf %136, %144 : vector<8x128xf32>
    %158 = arith.addf %156, %157 : vector<8x128xf32>
    %159 = vector.broadcast %154 : vector<8x1xf32> to vector<8x128xf32>
    %160 = arith.mulf %158, %159 : vector<8x128xf32>
    %161 = math.tanh %160 : vector<8x128xf32>
    %162 = arith.mulf %150, %161 : vector<8x128xf32>
    %163 = vector.broadcast %154 : vector<8x1xf32> to vector<8x128xf32>
    %164 = arith.mulf %162, %163 : vector<8x128xf32>
    %c0_61 = arith.constant 0 : index
    %c0_62 = arith.constant 0 : index
    %165 = vector.load %arg7[%c0_61, %c0_62] : memref<8x128xf32, #tpu.memory_space<vmem>>, vector<8x128xf32>
    tpu.vector_store %arg7[%c0_61, %c0_62], %160 {strides = array<i32>} : memref<8x128xf32, #tpu.memory_space<vmem>>, vector<8x128xf32>,
    %c0_63 = arith.constant 0 : index
    %c0_64 = arith.constant 0 : index
    %166 = vector.load %arg6[%c0_63, %c0_64] : memref<8x128xf32, #tpu.memory_space<vmem>>, vector<8x128xf32>
    tpu.vector_store %arg6[%c0_63, %c0_64], %164 {strides = array<i32>} : memref<8x128xf32, #tpu.memory_space<vmem>>, vector<8x128xf32>,
    %167 = arith.truncf %164 : vector<8x128xf32> to vector<8x128xbf16>
    %c0_65 = arith.constant 0 : index
    %168 = arith.index_cast %121 : i32 to index
    %c0_66 = arith.constant 0 : index
    %c0_67 = arith.constant 0 : index
    %169 = vector.load %arg5[%c0_65, %168, %c0_66, %c0_67] : memref<1x16x8x128xbf16, #tpu.memory_space<vmem>>, vector<1x1x8x128xbf16>
    %170 = vector.shape_cast %169 : vector<1x1x8x128xbf16> to vector<8x128xbf16>
    %171 = vector.shape_cast %167 : vector<8x128xbf16> to vector<1x1x8x128xbf16>
    tpu.vector_store %arg5[%c0_65, %168, %c0_66, %c0_67], %171 {strides = array<i32>} : memref<1x16x8x128xbf16, #tpu.memory_space<vmem>>, vector<1x1x8x128xbf16>,
    %c3_i32 = arith.constant 3 : i32
    %c2_i32_68 = arith.constant 2 : i32
    %172 = arith.muli %c2_i32_68, %c3_i32 : i32
    %c15_i32_69 = arith.constant 15 : i32
    %173 = arith.subi %c15_i32_69, %172 : i32
    %174 = arith.muli %arg0, %173 : i32
    %175 = arith.addi %c3_i32, %174 : i32
    %c16_i32_70 = arith.constant 16 : i32
    %176 = arith.muli %6, %c16_i32_70 : i32
    %177 = arith.addi %176, %175 : i32
    %c0_71 = arith.constant 0 : index
    %178 = arith.index_cast %175 : i32 to index
    %c0_72 = arith.constant 0 : index
    %c0_73 = arith.constant 0 : index
    %179 = vector.load %arg3[%c0_71, %178, %c0_72, %c0_73] : memref<1x16x8x512xbf16, #tpu.memory_space<vmem>>, vector<1x1x8x512xbf16>
    %180 = vector.shape_cast %179 : vector<1x1x8x512xbf16> to vector<8x512xbf16>
    %181 = arith.extf %180 : vector<8x512xbf16> to vector<8x512xf32>
    %c0_74 = arith.constant 0 : index
    %c0_75 = arith.constant 0 : index
    %182 = vector.load %arg6[%c0_74, %c0_75] : memref<8x128xf32, #tpu.memory_space<vmem>>, vector<8x128xf32>
    %cst_76 = arith.constant dense<0.000000e+00> : vector<8x512xf32>
    %183 = tpu.matmul %182, %9, %cst_76 {dimension_numbers = #tpu.dot_dimension_numbers<[1], [0], [0], [1], [0, 0, 1, 1], [], []>} : vector<8x128xf32>, vector<128x512xf32>, vector<8x512xf32> -> vector<8x512xf32>
    %184 = arith.addf %181, %183 : vector<8x512xf32>
    %185 = vector.extract_strided_slice %184 {offsets = [0, 0], sizes = [8, 128], strides = [1, 1]} : vector<8x512xf32> to vector<8x128xf32>
    %186 = arith.negf %185 : vector<8x128xf32>
    %187 = math.exp %186 : vector<8x128xf32>
    %cst_77 = arith.constant 1.000000e+00 : f32
    %188 = vector.broadcast %cst_77 : f32 to vector<8x128xf32>
    %189 = arith.addf %188, %187 : vector<8x128xf32>
    %190 = arith.divf %188, %189 : vector<8x128xf32>
    %191 = vector.extract_strided_slice %184 {offsets = [0, 128], sizes = [8, 128], strides = [1, 1]} : vector<8x512xf32> to vector<8x128xf32>
    %192 = arith.negf %191 : vector<8x128xf32>
    %193 = math.exp %192 : vector<8x128xf32>
    %cst_78 = arith.constant 1.000000e+00 : f32
    %194 = vector.broadcast %cst_78 : f32 to vector<8x128xf32>
    %195 = arith.addf %194, %193 : vector<8x128xf32>
    %196 = arith.divf %194, %195 : vector<8x128xf32>
    %197 = vector.extract_strided_slice %184 {offsets = [0, 256], sizes = [8, 128], strides = [1, 1]} : vector<8x512xf32> to vector<8x128xf32>
    %198 = math.tanh %197 : vector<8x128xf32>
    %199 = vector.extract_strided_slice %184 {offsets = [0, 384], sizes = [8, 128], strides = [1, 1]} : vector<8x512xf32> to vector<8x128xf32>
    %200 = arith.negf %199 : vector<8x128xf32>
    %201 = math.exp %200 : vector<8x128xf32>
    %cst_79 = arith.constant 1.000000e+00 : f32
    %202 = vector.broadcast %cst_79 : f32 to vector<8x128xf32>
    %203 = arith.addf %202, %201 : vector<8x128xf32>
    %204 = arith.divf %202, %203 : vector<8x128xf32>
    %205 = vector.broadcast %177 : i32 to vector<8x1xi32>
    %206 = arith.cmpi slt, %205, %7 : vector<8x1xi32>
    %207 = arith.extui %206 : vector<8x1xi1> to vector<8x1xi32>
    %208 = arith.sitofp %207 : vector<8x1xi32> to vector<8x1xf32>
    %c0_80 = arith.constant 0 : index
    %c0_81 = arith.constant 0 : index
    %209 = vector.load %arg7[%c0_80, %c0_81] : memref<8x128xf32, #tpu.memory_space<vmem>>, vector<8x128xf32>
    %210 = arith.mulf %196, %209 : vector<8x128xf32>
    %211 = arith.mulf %190, %198 : vector<8x128xf32>
    %212 = arith.addf %210, %211 : vector<8x128xf32>
    %213 = vector.broadcast %208 : vector<8x1xf32> to vector<8x128xf32>
    %214 = arith.mulf %212, %213 : vector<8x128xf32>
    %215 = math.tanh %214 : vector<8x128xf32>
    %216 = arith.mulf %204, %215 : vector<8x128xf32>
    %217 = vector.broadcast %208 : vector<8x1xf32> to vector<8x128xf32>
    %218 = arith.mulf %216, %217 : vector<8x128xf32>
    %c0_82 = arith.constant 0 : index
    %c0_83 = arith.constant 0 : index
    %219 = vector.load %arg7[%c0_82, %c0_83] : memref<8x128xf32, #tpu.memory_space<vmem>>, vector<8x128xf32>
    tpu.vector_store %arg7[%c0_82, %c0_83], %214 {strides = array<i32>} : memref<8x128xf32, #tpu.memory_space<vmem>>, vector<8x128xf32>,
    %c0_84 = arith.constant 0 : index
    %c0_85 = arith.constant 0 : index
    %220 = vector.load %arg6[%c0_84, %c0_85] : memref<8x128xf32, #tpu.memory_space<vmem>>, vector<8x128xf32>
    tpu.vector_store %arg6[%c0_84, %c0_85], %218 {strides = array<i32>} : memref<8x128xf32, #tpu.memory_space<vmem>>, vector<8x128xf32>,
    %221 = arith.truncf %218 : vector<8x128xf32> to vector<8x128xbf16>
    %c0_86 = arith.constant 0 : index
    %222 = arith.index_cast %175 : i32 to index
    %c0_87 = arith.constant 0 : index
    %c0_88 = arith.constant 0 : index
    %223 = vector.load %arg5[%c0_86, %222, %c0_87, %c0_88] : memref<1x16x8x128xbf16, #tpu.memory_space<vmem>>, vector<1x1x8x128xbf16>
    %224 = vector.shape_cast %223 : vector<1x1x8x128xbf16> to vector<8x128xbf16>
    %225 = vector.shape_cast %221 : vector<8x128xbf16> to vector<1x1x8x128xbf16>
    tpu.vector_store %arg5[%c0_86, %222, %c0_87, %c0_88], %225 {strides = array<i32>} : memref<1x16x8x128xbf16, #tpu.memory_space<vmem>>, vector<1x1x8x128xbf16>,
    %c4_i32 = arith.constant 4 : i32
    %c2_i32_89 = arith.constant 2 : i32
    %226 = arith.muli %c2_i32_89, %c4_i32 : i32
    %c15_i32_90 = arith.constant 15 : i32
    %227 = arith.subi %c15_i32_90, %226 : i32
    %228 = arith.muli %arg0, %227 : i32
    %229 = arith.addi %c4_i32, %228 : i32
    %c16_i32_91 = arith.constant 16 : i32
    %230 = arith.muli %6, %c16_i32_91 : i32
    %231 = arith.addi %230, %229 : i32
    %c0_92 = arith.constant 0 : index
    %232 = arith.index_cast %229 : i32 to index
    %c0_93 = arith.constant 0 : index
    %c0_94 = arith.constant 0 : index
    %233 = vector.load %arg3[%c0_92, %232, %c0_93, %c0_94] : memref<1x16x8x512xbf16, #tpu.memory_space<vmem>>, vector<1x1x8x512xbf16>
    %234 = vector.shape_cast %233 : vector<1x1x8x512xbf16> to vector<8x512xbf16>
    %235 = arith.extf %234 : vector<8x512xbf16> to vector<8x512xf32>
    %c0_95 = arith.constant 0 : index
    %c0_96 = arith.constant 0 : index
    %236 = vector.load %arg6[%c0_95, %c0_96] : memref<8x128xf32, #tpu.memory_space<vmem>>, vector<8x128xf32>
    %cst_97 = arith.constant dense<0.000000e+00> : vector<8x512xf32>
    %237 = tpu.matmul %236, %9, %cst_97 {dimension_numbers = #tpu.dot_dimension_numbers<[1], [0], [0], [1], [0, 0, 1, 1], [], []>} : vector<8x128xf32>, vector<128x512xf32>, vector<8x512xf32> -> vector<8x512xf32>
    %238 = arith.addf %235, %237 : vector<8x512xf32>
    %239 = vector.extract_strided_slice %238 {offsets = [0, 0], sizes = [8, 128], strides = [1, 1]} : vector<8x512xf32> to vector<8x128xf32>
    %240 = arith.negf %239 : vector<8x128xf32>
    %241 = math.exp %240 : vector<8x128xf32>
    %cst_98 = arith.constant 1.000000e+00 : f32
    %242 = vector.broadcast %cst_98 : f32 to vector<8x128xf32>
    %243 = arith.addf %242, %241 : vector<8x128xf32>
    %244 = arith.divf %242, %243 : vector<8x128xf32>
    %245 = vector.extract_strided_slice %238 {offsets = [0, 128], sizes = [8, 128], strides = [1, 1]} : vector<8x512xf32> to vector<8x128xf32>
    %246 = arith.negf %245 : vector<8x128xf32>
    %247 = math.exp %246 : vector<8x128xf32>
    %cst_99 = arith.constant 1.000000e+00 : f32
    %248 = vector.broadcast %cst_99 : f32 to vector<8x128xf32>
    %249 = arith.addf %248, %247 : vector<8x128xf32>
    %250 = arith.divf %248, %249 : vector<8x128xf32>
    %251 = vector.extract_strided_slice %238 {offsets = [0, 256], sizes = [8, 128], strides = [1, 1]} : vector<8x512xf32> to vector<8x128xf32>
    %252 = math.tanh %251 : vector<8x128xf32>
    %253 = vector.extract_strided_slice %238 {offsets = [0, 384], sizes = [8, 128], strides = [1, 1]} : vector<8x512xf32> to vector<8x128xf32>
    %254 = arith.negf %253 : vector<8x128xf32>
    %255 = math.exp %254 : vector<8x128xf32>
    %cst_100 = arith.constant 1.000000e+00 : f32
    %256 = vector.broadcast %cst_100 : f32 to vector<8x128xf32>
    %257 = arith.addf %256, %255 : vector<8x128xf32>
    %258 = arith.divf %256, %257 : vector<8x128xf32>
    %259 = vector.broadcast %231 : i32 to vector<8x1xi32>
    %260 = arith.cmpi slt, %259, %7 : vector<8x1xi32>
    %261 = arith.extui %260 : vector<8x1xi1> to vector<8x1xi32>
    %262 = arith.sitofp %261 : vector<8x1xi32> to vector<8x1xf32>
    %c0_101 = arith.constant 0 : index
    %c0_102 = arith.constant 0 : index
    %263 = vector.load %arg7[%c0_101, %c0_102] : memref<8x128xf32, #tpu.memory_space<vmem>>, vector<8x128xf32>
    %264 = arith.mulf %250, %263 : vector<8x128xf32>
    %265 = arith.mulf %244, %252 : vector<8x128xf32>
    %266 = arith.addf %264, %265 : vector<8x128xf32>
    %267 = vector.broadcast %262 : vector<8x1xf32> to vector<8x128xf32>
    %268 = arith.mulf %266, %267 : vector<8x128xf32>
    %269 = math.tanh %268 : vector<8x128xf32>
    %270 = arith.mulf %258, %269 : vector<8x128xf32>
    %271 = vector.broadcast %262 : vector<8x1xf32> to vector<8x128xf32>
    %272 = arith.mulf %270, %271 : vector<8x128xf32>
    %c0_103 = arith.constant 0 : index
    %c0_104 = arith.constant 0 : index
    %273 = vector.load %arg7[%c0_103, %c0_104] : memref<8x128xf32, #tpu.memory_space<vmem>>, vector<8x128xf32>
    tpu.vector_store %arg7[%c0_103, %c0_104], %268 {strides = array<i32>} : memref<8x128xf32, #tpu.memory_space<vmem>>, vector<8x128xf32>,
    %c0_105 = arith.constant 0 : index
    %c0_106 = arith.constant 0 : index
    %274 = vector.load %arg6[%c0_105, %c0_106] : memref<8x128xf32, #tpu.memory_space<vmem>>, vector<8x128xf32>
    tpu.vector_store %arg6[%c0_105, %c0_106], %272 {strides = array<i32>} : memref<8x128xf32, #tpu.memory_space<vmem>>, vector<8x128xf32>,
    %275 = arith.truncf %272 : vector<8x128xf32> to vector<8x128xbf16>
    %c0_107 = arith.constant 0 : index
    %276 = arith.index_cast %229 : i32 to index
    %c0_108 = arith.constant 0 : index
    %c0_109 = arith.constant 0 : index
    %277 = vector.load %arg5[%c0_107, %276, %c0_108, %c0_109] : memref<1x16x8x128xbf16, #tpu.memory_space<vmem>>, vector<1x1x8x128xbf16>
    %278 = vector.shape_cast %277 : vector<1x1x8x128xbf16> to vector<8x128xbf16>
    %279 = vector.shape_cast %275 : vector<8x128xbf16> to vector<1x1x8x128xbf16>
    tpu.vector_store %arg5[%c0_107, %276, %c0_108, %c0_109], %279 {strides = array<i32>} : memref<1x16x8x128xbf16, #tpu.memory_space<vmem>>, vector<1x1x8x128xbf16>,
    %c5_i32 = arith.constant 5 : i32
    %c2_i32_110 = arith.constant 2 : i32
    %280 = arith.muli %c2_i32_110, %c5_i32 : i32
    %c15_i32_111 = arith.constant 15 : i32
    %281 = arith.subi %c15_i32_111, %280 : i32
    %282 = arith.muli %arg0, %281 : i32
    %283 = arith.addi %c5_i32, %282 : i32
    %c16_i32_112 = arith.constant 16 : i32
    %284 = arith.muli %6, %c16_i32_112 : i32
    %285 = arith.addi %284, %283 : i32
    %c0_113 = arith.constant 0 : index
    %286 = arith.index_cast %283 : i32 to index
    %c0_114 = arith.constant 0 : index
    %c0_115 = arith.constant 0 : index
    %287 = vector.load %arg3[%c0_113, %286, %c0_114, %c0_115] : memref<1x16x8x512xbf16, #tpu.memory_space<vmem>>, vector<1x1x8x512xbf16>
    %288 = vector.shape_cast %287 : vector<1x1x8x512xbf16> to vector<8x512xbf16>
    %289 = arith.extf %288 : vector<8x512xbf16> to vector<8x512xf32>
    %c0_116 = arith.constant 0 : index
    %c0_117 = arith.constant 0 : index
    %290 = vector.load %arg6[%c0_116, %c0_117] : memref<8x128xf32, #tpu.memory_space<vmem>>, vector<8x128xf32>
    %cst_118 = arith.constant dense<0.000000e+00> : vector<8x512xf32>
    %291 = tpu.matmul %290, %9, %cst_118 {dimension_numbers = #tpu.dot_dimension_numbers<[1], [0], [0], [1], [0, 0, 1, 1], [], []>} : vector<8x128xf32>, vector<128x512xf32>, vector<8x512xf32> -> vector<8x512xf32>
    %292 = arith.addf %289, %291 : vector<8x512xf32>
    %293 = vector.extract_strided_slice %292 {offsets = [0, 0], sizes = [8, 128], strides = [1, 1]} : vector<8x512xf32> to vector<8x128xf32>
    %294 = arith.negf %293 : vector<8x128xf32>
    %295 = math.exp %294 : vector<8x128xf32>
    %cst_119 = arith.constant 1.000000e+00 : f32
    %296 = vector.broadcast %cst_119 : f32 to vector<8x128xf32>
    %297 = arith.addf %296, %295 : vector<8x128xf32>
    %298 = arith.divf %296, %297 : vector<8x128xf32>
    %299 = vector.extract_strided_slice %292 {offsets = [0, 128], sizes = [8, 128], strides = [1, 1]} : vector<8x512xf32> to vector<8x128xf32>
    %300 = arith.negf %299 : vector<8x128xf32>
    %301 = math.exp %300 : vector<8x128xf32>
    %cst_120 = arith.constant 1.000000e+00 : f32
    %302 = vector.broadcast %cst_120 : f32 to vector<8x128xf32>
    %303 = arith.addf %302, %301 : vector<8x128xf32>
    %304 = arith.divf %302, %303 : vector<8x128xf32>
    %305 = vector.extract_strided_slice %292 {offsets = [0, 256], sizes = [8, 128], strides = [1, 1]} : vector<8x512xf32> to vector<8x128xf32>
    %306 = math.tanh %305 : vector<8x128xf32>
    %307 = vector.extract_strided_slice %292 {offsets = [0, 384], sizes = [8, 128], strides = [1, 1]} : vector<8x512xf32> to vector<8x128xf32>
    %308 = arith.negf %307 : vector<8x128xf32>
    %309 = math.exp %308 : vector<8x128xf32>
    %cst_121 = arith.constant 1.000000e+00 : f32
    %310 = vector.broadcast %cst_121 : f32 to vector<8x128xf32>
    %311 = arith.addf %310, %309 : vector<8x128xf32>
    %312 = arith.divf %310, %311 : vector<8x128xf32>
    %313 = vector.broadcast %285 : i32 to vector<8x1xi32>
    %314 = arith.cmpi slt, %313, %7 : vector<8x1xi32>
    %315 = arith.extui %314 : vector<8x1xi1> to vector<8x1xi32>
    %316 = arith.sitofp %315 : vector<8x1xi32> to vector<8x1xf32>
    %c0_122 = arith.constant 0 : index
    %c0_123 = arith.constant 0 : index
    %317 = vector.load %arg7[%c0_122, %c0_123] : memref<8x128xf32, #tpu.memory_space<vmem>>, vector<8x128xf32>
    %318 = arith.mulf %304, %317 : vector<8x128xf32>
    %319 = arith.mulf %298, %306 : vector<8x128xf32>
    %320 = arith.addf %318, %319 : vector<8x128xf32>
    %321 = vector.broadcast %316 : vector<8x1xf32> to vector<8x128xf32>
    %322 = arith.mulf %320, %321 : vector<8x128xf32>
    %323 = math.tanh %322 : vector<8x128xf32>
    %324 = arith.mulf %312, %323 : vector<8x128xf32>
    %325 = vector.broadcast %316 : vector<8x1xf32> to vector<8x128xf32>
    %326 = arith.mulf %324, %325 : vector<8x128xf32>
    %c0_124 = arith.constant 0 : index
    %c0_125 = arith.constant 0 : index
    %327 = vector.load %arg7[%c0_124, %c0_125] : memref<8x128xf32, #tpu.memory_space<vmem>>, vector<8x128xf32>
    tpu.vector_store %arg7[%c0_124, %c0_125], %322 {strides = array<i32>} : memref<8x128xf32, #tpu.memory_space<vmem>>, vector<8x128xf32>,
    %c0_126 = arith.constant 0 : index
    %c0_127 = arith.constant 0 : index
    %328 = vector.load %arg6[%c0_126, %c0_127] : memref<8x128xf32, #tpu.memory_space<vmem>>, vector<8x128xf32>
    tpu.vector_store %arg6[%c0_126, %c0_127], %326 {strides = array<i32>} : memref<8x128xf32, #tpu.memory_space<vmem>>, vector<8x128xf32>,
    %329 = arith.truncf %326 : vector<8x128xf32> to vector<8x128xbf16>
    %c0_128 = arith.constant 0 : index
    %330 = arith.index_cast %283 : i32 to index
    %c0_129 = arith.constant 0 : index
    %c0_130 = arith.constant 0 : index
    %331 = vector.load %arg5[%c0_128, %330, %c0_129, %c0_130] : memref<1x16x8x128xbf16, #tpu.memory_space<vmem>>, vector<1x1x8x128xbf16>
    %332 = vector.shape_cast %331 : vector<1x1x8x128xbf16> to vector<8x128xbf16>
    %333 = vector.shape_cast %329 : vector<8x128xbf16> to vector<1x1x8x128xbf16>
    tpu.vector_store %arg5[%c0_128, %330, %c0_129, %c0_130], %333 {strides = array<i32>} : memref<1x16x8x128xbf16, #tpu.memory_space<vmem>>, vector<1x1x8x128xbf16>,
    %c6_i32 = arith.constant 6 : i32
    %c2_i32_131 = arith.constant 2 : i32
    %334 = arith.muli %c2_i32_131, %c6_i32 : i32
    %c15_i32_132 = arith.constant 15 : i32
    %335 = arith.subi %c15_i32_132, %334 : i32
    %336 = arith.muli %arg0, %335 : i32
    %337 = arith.addi %c6_i32, %336 : i32
    %c16_i32_133 = arith.constant 16 : i32
    %338 = arith.muli %6, %c16_i32_133 : i32
    %339 = arith.addi %338, %337 : i32
    %c0_134 = arith.constant 0 : index
    %340 = arith.index_cast %337 : i32 to index
    %c0_135 = arith.constant 0 : index
    %c0_136 = arith.constant 0 : index
    %341 = vector.load %arg3[%c0_134, %340, %c0_135, %c0_136] : memref<1x16x8x512xbf16, #tpu.memory_space<vmem>>, vector<1x1x8x512xbf16>
    %342 = vector.shape_cast %341 : vector<1x1x8x512xbf16> to vector<8x512xbf16>
    %343 = arith.extf %342 : vector<8x512xbf16> to vector<8x512xf32>
    %c0_137 = arith.constant 0 : index
    %c0_138 = arith.constant 0 : index
    %344 = vector.load %arg6[%c0_137, %c0_138] : memref<8x128xf32, #tpu.memory_space<vmem>>, vector<8x128xf32>
    %cst_139 = arith.constant dense<0.000000e+00> : vector<8x512xf32>
    %345 = tpu.matmul %344, %9, %cst_139 {dimension_numbers = #tpu.dot_dimension_numbers<[1], [0], [0], [1], [0, 0, 1, 1], [], []>} : vector<8x128xf32>, vector<128x512xf32>, vector<8x512xf32> -> vector<8x512xf32>
    %346 = arith.addf %343, %345 : vector<8x512xf32>
    %347 = vector.extract_strided_slice %346 {offsets = [0, 0], sizes = [8, 128], strides = [1, 1]} : vector<8x512xf32> to vector<8x128xf32>
    %348 = arith.negf %347 : vector<8x128xf32>
    %349 = math.exp %348 : vector<8x128xf32>
    %cst_140 = arith.constant 1.000000e+00 : f32
    %350 = vector.broadcast %cst_140 : f32 to vector<8x128xf32>
    %351 = arith.addf %350, %349 : vector<8x128xf32>
    %352 = arith.divf %350, %351 : vector<8x128xf32>
    %353 = vector.extract_strided_slice %346 {offsets = [0, 128], sizes = [8, 128], strides = [1, 1]} : vector<8x512xf32> to vector<8x128xf32>
    %354 = arith.negf %353 : vector<8x128xf32>
    %355 = math.exp %354 : vector<8x128xf32>
    %cst_141 = arith.constant 1.000000e+00 : f32
    %356 = vector.broadcast %cst_141 : f32 to vector<8x128xf32>
    %357 = arith.addf %356, %355 : vector<8x128xf32>
    %358 = arith.divf %356, %357 : vector<8x128xf32>
    %359 = vector.extract_strided_slice %346 {offsets = [0, 256], sizes = [8, 128], strides = [1, 1]} : vector<8x512xf32> to vector<8x128xf32>
    %360 = math.tanh %359 : vector<8x128xf32>
    %361 = vector.extract_strided_slice %346 {offsets = [0, 384], sizes = [8, 128], strides = [1, 1]} : vector<8x512xf32> to vector<8x128xf32>
    %362 = arith.negf %361 : vector<8x128xf32>
    %363 = math.exp %362 : vector<8x128xf32>
    %cst_142 = arith.constant 1.000000e+00 : f32
    %364 = vector.broadcast %cst_142 : f32 to vector<8x128xf32>
    %365 = arith.addf %364, %363 : vector<8x128xf32>
    %366 = arith.divf %364, %365 : vector<8x128xf32>
    %367 = vector.broadcast %339 : i32 to vector<8x1xi32>
    %368 = arith.cmpi slt, %367, %7 : vector<8x1xi32>
    %369 = arith.extui %368 : vector<8x1xi1> to vector<8x1xi32>
    %370 = arith.sitofp %369 : vector<8x1xi32> to vector<8x1xf32>
    %c0_143 = arith.constant 0 : index
    %c0_144 = arith.constant 0 : index
    %371 = vector.load %arg7[%c0_143, %c0_144] : memref<8x128xf32, #tpu.memory_space<vmem>>, vector<8x128xf32>
    %372 = arith.mulf %358, %371 : vector<8x128xf32>
    %373 = arith.mulf %352, %360 : vector<8x128xf32>
    %374 = arith.addf %372, %373 : vector<8x128xf32>
    %375 = vector.broadcast %370 : vector<8x1xf32> to vector<8x128xf32>
    %376 = arith.mulf %374, %375 : vector<8x128xf32>
    %377 = math.tanh %376 : vector<8x128xf32>
    %378 = arith.mulf %366, %377 : vector<8x128xf32>
    %379 = vector.broadcast %370 : vector<8x1xf32> to vector<8x128xf32>
    %380 = arith.mulf %378, %379 : vector<8x128xf32>
    %c0_145 = arith.constant 0 : index
    %c0_146 = arith.constant 0 : index
    %381 = vector.load %arg7[%c0_145, %c0_146] : memref<8x128xf32, #tpu.memory_space<vmem>>, vector<8x128xf32>
    tpu.vector_store %arg7[%c0_145, %c0_146], %376 {strides = array<i32>} : memref<8x128xf32, #tpu.memory_space<vmem>>, vector<8x128xf32>,
    %c0_147 = arith.constant 0 : index
    %c0_148 = arith.constant 0 : index
    %382 = vector.load %arg6[%c0_147, %c0_148] : memref<8x128xf32, #tpu.memory_space<vmem>>, vector<8x128xf32>
    tpu.vector_store %arg6[%c0_147, %c0_148], %380 {strides = array<i32>} : memref<8x128xf32, #tpu.memory_space<vmem>>, vector<8x128xf32>,
    %383 = arith.truncf %380 : vector<8x128xf32> to vector<8x128xbf16>
    %c0_149 = arith.constant 0 : index
    %384 = arith.index_cast %337 : i32 to index
    %c0_150 = arith.constant 0 : index
    %c0_151 = arith.constant 0 : index
    %385 = vector.load %arg5[%c0_149, %384, %c0_150, %c0_151] : memref<1x16x8x128xbf16, #tpu.memory_space<vmem>>, vector<1x1x8x128xbf16>
    %386 = vector.shape_cast %385 : vector<1x1x8x128xbf16> to vector<8x128xbf16>
    %387 = vector.shape_cast %383 : vector<8x128xbf16> to vector<1x1x8x128xbf16>
    tpu.vector_store %arg5[%c0_149, %384, %c0_150, %c0_151], %387 {strides = array<i32>} : memref<1x16x8x128xbf16, #tpu.memory_space<vmem>>, vector<1x1x8x128xbf16>,
    %c7_i32 = arith.constant 7 : i32
    %c2_i32_152 = arith.constant 2 : i32
    %388 = arith.muli %c2_i32_152, %c7_i32 : i32
    %c15_i32_153 = arith.constant 15 : i32
    %389 = arith.subi %c15_i32_153, %388 : i32
    %390 = arith.muli %arg0, %389 : i32
    %391 = arith.addi %c7_i32, %390 : i32
    %c16_i32_154 = arith.constant 16 : i32
    %392 = arith.muli %6, %c16_i32_154 : i32
    %393 = arith.addi %392, %391 : i32
    %c0_155 = arith.constant 0 : index
    %394 = arith.index_cast %391 : i32 to index
    %c0_156 = arith.constant 0 : index
    %c0_157 = arith.constant 0 : index
    %395 = vector.load %arg3[%c0_155, %394, %c0_156, %c0_157] : memref<1x16x8x512xbf16, #tpu.memory_space<vmem>>, vector<1x1x8x512xbf16>
    %396 = vector.shape_cast %395 : vector<1x1x8x512xbf16> to vector<8x512xbf16>
    %397 = arith.extf %396 : vector<8x512xbf16> to vector<8x512xf32>
    %c0_158 = arith.constant 0 : index
    %c0_159 = arith.constant 0 : index
    %398 = vector.load %arg6[%c0_158, %c0_159] : memref<8x128xf32, #tpu.memory_space<vmem>>, vector<8x128xf32>
    %cst_160 = arith.constant dense<0.000000e+00> : vector<8x512xf32>
    %399 = tpu.matmul %398, %9, %cst_160 {dimension_numbers = #tpu.dot_dimension_numbers<[1], [0], [0], [1], [0, 0, 1, 1], [], []>} : vector<8x128xf32>, vector<128x512xf32>, vector<8x512xf32> -> vector<8x512xf32>
    %400 = arith.addf %397, %399 : vector<8x512xf32>
    %401 = vector.extract_strided_slice %400 {offsets = [0, 0], sizes = [8, 128], strides = [1, 1]} : vector<8x512xf32> to vector<8x128xf32>
    %402 = arith.negf %401 : vector<8x128xf32>
    %403 = math.exp %402 : vector<8x128xf32>
    %cst_161 = arith.constant 1.000000e+00 : f32
    %404 = vector.broadcast %cst_161 : f32 to vector<8x128xf32>
    %405 = arith.addf %404, %403 : vector<8x128xf32>
    %406 = arith.divf %404, %405 : vector<8x128xf32>
    %407 = vector.extract_strided_slice %400 {offsets = [0, 128], sizes = [8, 128], strides = [1, 1]} : vector<8x512xf32> to vector<8x128xf32>
    %408 = arith.negf %407 : vector<8x128xf32>
    %409 = math.exp %408 : vector<8x128xf32>
    %cst_162 = arith.constant 1.000000e+00 : f32
    %410 = vector.broadcast %cst_162 : f32 to vector<8x128xf32>
    %411 = arith.addf %410, %409 : vector<8x128xf32>
    %412 = arith.divf %410, %411 : vector<8x128xf32>
    %413 = vector.extract_strided_slice %400 {offsets = [0, 256], sizes = [8, 128], strides = [1, 1]} : vector<8x512xf32> to vector<8x128xf32>
    %414 = math.tanh %413 : vector<8x128xf32>
    %415 = vector.extract_strided_slice %400 {offsets = [0, 384], sizes = [8, 128], strides = [1, 1]} : vector<8x512xf32> to vector<8x128xf32>
    %416 = arith.negf %415 : vector<8x128xf32>
    %417 = math.exp %416 : vector<8x128xf32>
    %cst_163 = arith.constant 1.000000e+00 : f32
    %418 = vector.broadcast %cst_163 : f32 to vector<8x128xf32>
    %419 = arith.addf %418, %417 : vector<8x128xf32>
    %420 = arith.divf %418, %419 : vector<8x128xf32>
    %421 = vector.broadcast %393 : i32 to vector<8x1xi32>
    %422 = arith.cmpi slt, %421, %7 : vector<8x1xi32>
    %423 = arith.extui %422 : vector<8x1xi1> to vector<8x1xi32>
    %424 = arith.sitofp %423 : vector<8x1xi32> to vector<8x1xf32>
    %c0_164 = arith.constant 0 : index
    %c0_165 = arith.constant 0 : index
    %425 = vector.load %arg7[%c0_164, %c0_165] : memref<8x128xf32, #tpu.memory_space<vmem>>, vector<8x128xf32>
    %426 = arith.mulf %412, %425 : vector<8x128xf32>
    %427 = arith.mulf %406, %414 : vector<8x128xf32>
    %428 = arith.addf %426, %427 : vector<8x128xf32>
    %429 = vector.broadcast %424 : vector<8x1xf32> to vector<8x128xf32>
    %430 = arith.mulf %428, %429 : vector<8x128xf32>
    %431 = math.tanh %430 : vector<8x128xf32>
    %432 = arith.mulf %420, %431 : vector<8x128xf32>
    %433 = vector.broadcast %424 : vector<8x1xf32> to vector<8x128xf32>
    %434 = arith.mulf %432, %433 : vector<8x128xf32>
    %c0_166 = arith.constant 0 : index
    %c0_167 = arith.constant 0 : index
    %435 = vector.load %arg7[%c0_166, %c0_167] : memref<8x128xf32, #tpu.memory_space<vmem>>, vector<8x128xf32>
    tpu.vector_store %arg7[%c0_166, %c0_167], %430 {strides = array<i32>} : memref<8x128xf32, #tpu.memory_space<vmem>>, vector<8x128xf32>,
    %c0_168 = arith.constant 0 : index
    %c0_169 = arith.constant 0 : index
    %436 = vector.load %arg6[%c0_168, %c0_169] : memref<8x128xf32, #tpu.memory_space<vmem>>, vector<8x128xf32>
    tpu.vector_store %arg6[%c0_168, %c0_169], %434 {strides = array<i32>} : memref<8x128xf32, #tpu.memory_space<vmem>>, vector<8x128xf32>,
    %437 = arith.truncf %434 : vector<8x128xf32> to vector<8x128xbf16>
    %c0_170 = arith.constant 0 : index
    %438 = arith.index_cast %391 : i32 to index
    %c0_171 = arith.constant 0 : index
    %c0_172 = arith.constant 0 : index
    %439 = vector.load %arg5[%c0_170, %438, %c0_171, %c0_172] : memref<1x16x8x128xbf16, #tpu.memory_space<vmem>>, vector<1x1x8x128xbf16>
    %440 = vector.shape_cast %439 : vector<1x1x8x128xbf16> to vector<8x128xbf16>
    %441 = vector.shape_cast %437 : vector<8x128xbf16> to vector<1x1x8x128xbf16>
    tpu.vector_store %arg5[%c0_170, %438, %c0_171, %c0_172], %441 {strides = array<i32>} : memref<1x16x8x128xbf16, #tpu.memory_space<vmem>>, vector<1x1x8x128xbf16>,
    %c8_i32 = arith.constant 8 : i32
    %c2_i32_173 = arith.constant 2 : i32
    %442 = arith.muli %c2_i32_173, %c8_i32 : i32
    %c15_i32_174 = arith.constant 15 : i32
    %443 = arith.subi %c15_i32_174, %442 : i32
    %444 = arith.muli %arg0, %443 : i32
    %445 = arith.addi %c8_i32, %444 : i32
    %c16_i32_175 = arith.constant 16 : i32
    %446 = arith.muli %6, %c16_i32_175 : i32
    %447 = arith.addi %446, %445 : i32
    %c0_176 = arith.constant 0 : index
    %448 = arith.index_cast %445 : i32 to index
    %c0_177 = arith.constant 0 : index
    %c0_178 = arith.constant 0 : index
    %449 = vector.load %arg3[%c0_176, %448, %c0_177, %c0_178] : memref<1x16x8x512xbf16, #tpu.memory_space<vmem>>, vector<1x1x8x512xbf16>
    %450 = vector.shape_cast %449 : vector<1x1x8x512xbf16> to vector<8x512xbf16>
    %451 = arith.extf %450 : vector<8x512xbf16> to vector<8x512xf32>
    %c0_179 = arith.constant 0 : index
    %c0_180 = arith.constant 0 : index
    %452 = vector.load %arg6[%c0_179, %c0_180] : memref<8x128xf32, #tpu.memory_space<vmem>>, vector<8x128xf32>
    %cst_181 = arith.constant dense<0.000000e+00> : vector<8x512xf32>
    %453 = tpu.matmul %452, %9, %cst_181 {dimension_numbers = #tpu.dot_dimension_numbers<[1], [0], [0], [1], [0, 0, 1, 1], [], []>} : vector<8x128xf32>, vector<128x512xf32>, vector<8x512xf32> -> vector<8x512xf32>
    %454 = arith.addf %451, %453 : vector<8x512xf32>
    %455 = vector.extract_strided_slice %454 {offsets = [0, 0], sizes = [8, 128], strides = [1, 1]} : vector<8x512xf32> to vector<8x128xf32>
    %456 = arith.negf %455 : vector<8x128xf32>
    %457 = math.exp %456 : vector<8x128xf32>
    %cst_182 = arith.constant 1.000000e+00 : f32
    %458 = vector.broadcast %cst_182 : f32 to vector<8x128xf32>
    %459 = arith.addf %458, %457 : vector<8x128xf32>
    %460 = arith.divf %458, %459 : vector<8x128xf32>
    %461 = vector.extract_strided_slice %454 {offsets = [0, 128], sizes = [8, 128], strides = [1, 1]} : vector<8x512xf32> to vector<8x128xf32>
    %462 = arith.negf %461 : vector<8x128xf32>
    %463 = math.exp %462 : vector<8x128xf32>
    %cst_183 = arith.constant 1.000000e+00 : f32
    %464 = vector.broadcast %cst_183 : f32 to vector<8x128xf32>
    %465 = arith.addf %464, %463 : vector<8x128xf32>
    %466 = arith.divf %464, %465 : vector<8x128xf32>
    %467 = vector.extract_strided_slice %454 {offsets = [0, 256], sizes = [8, 128], strides = [1, 1]} : vector<8x512xf32> to vector<8x128xf32>
    %468 = math.tanh %467 : vector<8x128xf32>
    %469 = vector.extract_strided_slice %454 {offsets = [0, 384], sizes = [8, 128], strides = [1, 1]} : vector<8x512xf32> to vector<8x128xf32>
    %470 = arith.negf %469 : vector<8x128xf32>
    %471 = math.exp %470 : vector<8x128xf32>
    %cst_184 = arith.constant 1.000000e+00 : f32
    %472 = vector.broadcast %cst_184 : f32 to vector<8x128xf32>
    %473 = arith.addf %472, %471 : vector<8x128xf32>
    %474 = arith.divf %472, %473 : vector<8x128xf32>
    %475 = vector.broadcast %447 : i32 to vector<8x1xi32>
    %476 = arith.cmpi slt, %475, %7 : vector<8x1xi32>
    %477 = arith.extui %476 : vector<8x1xi1> to vector<8x1xi32>
    %478 = arith.sitofp %477 : vector<8x1xi32> to vector<8x1xf32>
    %c0_185 = arith.constant 0 : index
    %c0_186 = arith.constant 0 : index
    %479 = vector.load %arg7[%c0_185, %c0_186] : memref<8x128xf32, #tpu.memory_space<vmem>>, vector<8x128xf32>
    %480 = arith.mulf %466, %479 : vector<8x128xf32>
    %481 = arith.mulf %460, %468 : vector<8x128xf32>
    %482 = arith.addf %480, %481 : vector<8x128xf32>
    %483 = vector.broadcast %478 : vector<8x1xf32> to vector<8x128xf32>
    %484 = arith.mulf %482, %483 : vector<8x128xf32>
    %485 = math.tanh %484 : vector<8x128xf32>
    %486 = arith.mulf %474, %485 : vector<8x128xf32>
    %487 = vector.broadcast %478 : vector<8x1xf32> to vector<8x128xf32>
    %488 = arith.mulf %486, %487 : vector<8x128xf32>
    %c0_187 = arith.constant 0 : index
    %c0_188 = arith.constant 0 : index
    %489 = vector.load %arg7[%c0_187, %c0_188] : memref<8x128xf32, #tpu.memory_space<vmem>>, vector<8x128xf32>
    tpu.vector_store %arg7[%c0_187, %c0_188], %484 {strides = array<i32>} : memref<8x128xf32, #tpu.memory_space<vmem>>, vector<8x128xf32>,
    %c0_189 = arith.constant 0 : index
    %c0_190 = arith.constant 0 : index
    %490 = vector.load %arg6[%c0_189, %c0_190] : memref<8x128xf32, #tpu.memory_space<vmem>>, vector<8x128xf32>
    tpu.vector_store %arg6[%c0_189, %c0_190], %488 {strides = array<i32>} : memref<8x128xf32, #tpu.memory_space<vmem>>, vector<8x128xf32>,
    %491 = arith.truncf %488 : vector<8x128xf32> to vector<8x128xbf16>
    %c0_191 = arith.constant 0 : index
    %492 = arith.index_cast %445 : i32 to index
    %c0_192 = arith.constant 0 : index
    %c0_193 = arith.constant 0 : index
    %493 = vector.load %arg5[%c0_191, %492, %c0_192, %c0_193] : memref<1x16x8x128xbf16, #tpu.memory_space<vmem>>, vector<1x1x8x128xbf16>
    %494 = vector.shape_cast %493 : vector<1x1x8x128xbf16> to vector<8x128xbf16>
    %495 = vector.shape_cast %491 : vector<8x128xbf16> to vector<1x1x8x128xbf16>
    tpu.vector_store %arg5[%c0_191, %492, %c0_192, %c0_193], %495 {strides = array<i32>} : memref<1x16x8x128xbf16, #tpu.memory_space<vmem>>, vector<1x1x8x128xbf16>,
    %c9_i32 = arith.constant 9 : i32
    %c2_i32_194 = arith.constant 2 : i32
    %496 = arith.muli %c2_i32_194, %c9_i32 : i32
    %c15_i32_195 = arith.constant 15 : i32
    %497 = arith.subi %c15_i32_195, %496 : i32
    %498 = arith.muli %arg0, %497 : i32
    %499 = arith.addi %c9_i32, %498 : i32
    %c16_i32_196 = arith.constant 16 : i32
    %500 = arith.muli %6, %c16_i32_196 : i32
    %501 = arith.addi %500, %499 : i32
    %c0_197 = arith.constant 0 : index
    %502 = arith.index_cast %499 : i32 to index
    %c0_198 = arith.constant 0 : index
    %c0_199 = arith.constant 0 : index
    %503 = vector.load %arg3[%c0_197, %502, %c0_198, %c0_199] : memref<1x16x8x512xbf16, #tpu.memory_space<vmem>>, vector<1x1x8x512xbf16>
    %504 = vector.shape_cast %503 : vector<1x1x8x512xbf16> to vector<8x512xbf16>
    %505 = arith.extf %504 : vector<8x512xbf16> to vector<8x512xf32>
    %c0_200 = arith.constant 0 : index
    %c0_201 = arith.constant 0 : index
    %506 = vector.load %arg6[%c0_200, %c0_201] : memref<8x128xf32, #tpu.memory_space<vmem>>, vector<8x128xf32>
    %cst_202 = arith.constant dense<0.000000e+00> : vector<8x512xf32>
    %507 = tpu.matmul %506, %9, %cst_202 {dimension_numbers = #tpu.dot_dimension_numbers<[1], [0], [0], [1], [0, 0, 1, 1], [], []>} : vector<8x128xf32>, vector<128x512xf32>, vector<8x512xf32> -> vector<8x512xf32>
    %508 = arith.addf %505, %507 : vector<8x512xf32>
    %509 = vector.extract_strided_slice %508 {offsets = [0, 0], sizes = [8, 128], strides = [1, 1]} : vector<8x512xf32> to vector<8x128xf32>
    %510 = arith.negf %509 : vector<8x128xf32>
    %511 = math.exp %510 : vector<8x128xf32>
    %cst_203 = arith.constant 1.000000e+00 : f32
    %512 = vector.broadcast %cst_203 : f32 to vector<8x128xf32>
    %513 = arith.addf %512, %511 : vector<8x128xf32>
    %514 = arith.divf %512, %513 : vector<8x128xf32>
    %515 = vector.extract_strided_slice %508 {offsets = [0, 128], sizes = [8, 128], strides = [1, 1]} : vector<8x512xf32> to vector<8x128xf32>
    %516 = arith.negf %515 : vector<8x128xf32>
    %517 = math.exp %516 : vector<8x128xf32>
    %cst_204 = arith.constant 1.000000e+00 : f32
    %518 = vector.broadcast %cst_204 : f32 to vector<8x128xf32>
    %519 = arith.addf %518, %517 : vector<8x128xf32>
    %520 = arith.divf %518, %519 : vector<8x128xf32>
    %521 = vector.extract_strided_slice %508 {offsets = [0, 256], sizes = [8, 128], strides = [1, 1]} : vector<8x512xf32> to vector<8x128xf32>
    %522 = math.tanh %521 : vector<8x128xf32>
    %523 = vector.extract_strided_slice %508 {offsets = [0, 384], sizes = [8, 128], strides = [1, 1]} : vector<8x512xf32> to vector<8x128xf32>
    %524 = arith.negf %523 : vector<8x128xf32>
    %525 = math.exp %524 : vector<8x128xf32>
    %cst_205 = arith.constant 1.000000e+00 : f32
    %526 = vector.broadcast %cst_205 : f32 to vector<8x128xf32>
    %527 = arith.addf %526, %525 : vector<8x128xf32>
    %528 = arith.divf %526, %527 : vector<8x128xf32>
    %529 = vector.broadcast %501 : i32 to vector<8x1xi32>
    %530 = arith.cmpi slt, %529, %7 : vector<8x1xi32>
    %531 = arith.extui %530 : vector<8x1xi1> to vector<8x1xi32>
    %532 = arith.sitofp %531 : vector<8x1xi32> to vector<8x1xf32>
    %c0_206 = arith.constant 0 : index
    %c0_207 = arith.constant 0 : index
    %533 = vector.load %arg7[%c0_206, %c0_207] : memref<8x128xf32, #tpu.memory_space<vmem>>, vector<8x128xf32>
    %534 = arith.mulf %520, %533 : vector<8x128xf32>
    %535 = arith.mulf %514, %522 : vector<8x128xf32>
    %536 = arith.addf %534, %535 : vector<8x128xf32>
    %537 = vector.broadcast %532 : vector<8x1xf32> to vector<8x128xf32>
    %538 = arith.mulf %536, %537 : vector<8x128xf32>
    %539 = math.tanh %538 : vector<8x128xf32>
    %540 = arith.mulf %528, %539 : vector<8x128xf32>
    %541 = vector.broadcast %532 : vector<8x1xf32> to vector<8x128xf32>
    %542 = arith.mulf %540, %541 : vector<8x128xf32>
    %c0_208 = arith.constant 0 : index
    %c0_209 = arith.constant 0 : index
    %543 = vector.load %arg7[%c0_208, %c0_209] : memref<8x128xf32, #tpu.memory_space<vmem>>, vector<8x128xf32>
    tpu.vector_store %arg7[%c0_208, %c0_209], %538 {strides = array<i32>} : memref<8x128xf32, #tpu.memory_space<vmem>>, vector<8x128xf32>,
    %c0_210 = arith.constant 0 : index
    %c0_211 = arith.constant 0 : index
    %544 = vector.load %arg6[%c0_210, %c0_211] : memref<8x128xf32, #tpu.memory_space<vmem>>, vector<8x128xf32>
    tpu.vector_store %arg6[%c0_210, %c0_211], %542 {strides = array<i32>} : memref<8x128xf32, #tpu.memory_space<vmem>>, vector<8x128xf32>,
    %545 = arith.truncf %542 : vector<8x128xf32> to vector<8x128xbf16>
    %c0_212 = arith.constant 0 : index
    %546 = arith.index_cast %499 : i32 to index
    %c0_213 = arith.constant 0 : index
    %c0_214 = arith.constant 0 : index
    %547 = vector.load %arg5[%c0_212, %546, %c0_213, %c0_214] : memref<1x16x8x128xbf16, #tpu.memory_space<vmem>>, vector<1x1x8x128xbf16>
    %548 = vector.shape_cast %547 : vector<1x1x8x128xbf16> to vector<8x128xbf16>
    %549 = vector.shape_cast %545 : vector<8x128xbf16> to vector<1x1x8x128xbf16>
    tpu.vector_store %arg5[%c0_212, %546, %c0_213, %c0_214], %549 {strides = array<i32>} : memref<1x16x8x128xbf16, #tpu.memory_space<vmem>>, vector<1x1x8x128xbf16>,
    %c10_i32 = arith.constant 10 : i32
    %c2_i32_215 = arith.constant 2 : i32
    %550 = arith.muli %c2_i32_215, %c10_i32 : i32
    %c15_i32_216 = arith.constant 15 : i32
    %551 = arith.subi %c15_i32_216, %550 : i32
    %552 = arith.muli %arg0, %551 : i32
    %553 = arith.addi %c10_i32, %552 : i32
    %c16_i32_217 = arith.constant 16 : i32
    %554 = arith.muli %6, %c16_i32_217 : i32
    %555 = arith.addi %554, %553 : i32
    %c0_218 = arith.constant 0 : index
    %556 = arith.index_cast %553 : i32 to index
    %c0_219 = arith.constant 0 : index
    %c0_220 = arith.constant 0 : index
    %557 = vector.load %arg3[%c0_218, %556, %c0_219, %c0_220] : memref<1x16x8x512xbf16, #tpu.memory_space<vmem>>, vector<1x1x8x512xbf16>
    %558 = vector.shape_cast %557 : vector<1x1x8x512xbf16> to vector<8x512xbf16>
    %559 = arith.extf %558 : vector<8x512xbf16> to vector<8x512xf32>
    %c0_221 = arith.constant 0 : index
    %c0_222 = arith.constant 0 : index
    %560 = vector.load %arg6[%c0_221, %c0_222] : memref<8x128xf32, #tpu.memory_space<vmem>>, vector<8x128xf32>
    %cst_223 = arith.constant dense<0.000000e+00> : vector<8x512xf32>
    %561 = tpu.matmul %560, %9, %cst_223 {dimension_numbers = #tpu.dot_dimension_numbers<[1], [0], [0], [1], [0, 0, 1, 1], [], []>} : vector<8x128xf32>, vector<128x512xf32>, vector<8x512xf32> -> vector<8x512xf32>
    %562 = arith.addf %559, %561 : vector<8x512xf32>
    %563 = vector.extract_strided_slice %562 {offsets = [0, 0], sizes = [8, 128], strides = [1, 1]} : vector<8x512xf32> to vector<8x128xf32>
    %564 = arith.negf %563 : vector<8x128xf32>
    %565 = math.exp %564 : vector<8x128xf32>
    %cst_224 = arith.constant 1.000000e+00 : f32
    %566 = vector.broadcast %cst_224 : f32 to vector<8x128xf32>
    %567 = arith.addf %566, %565 : vector<8x128xf32>
    %568 = arith.divf %566, %567 : vector<8x128xf32>
    %569 = vector.extract_strided_slice %562 {offsets = [0, 128], sizes = [8, 128], strides = [1, 1]} : vector<8x512xf32> to vector<8x128xf32>
    %570 = arith.negf %569 : vector<8x128xf32>
    %571 = math.exp %570 : vector<8x128xf32>
    %cst_225 = arith.constant 1.000000e+00 : f32
    %572 = vector.broadcast %cst_225 : f32 to vector<8x128xf32>
    %573 = arith.addf %572, %571 : vector<8x128xf32>
    %574 = arith.divf %572, %573 : vector<8x128xf32>
    %575 = vector.extract_strided_slice %562 {offsets = [0, 256], sizes = [8, 128], strides = [1, 1]} : vector<8x512xf32> to vector<8x128xf32>
    %576 = math.tanh %575 : vector<8x128xf32>
    %577 = vector.extract_strided_slice %562 {offsets = [0, 384], sizes = [8, 128], strides = [1, 1]} : vector<8x512xf32> to vector<8x128xf32>
    %578 = arith.negf %577 : vector<8x128xf32>
    %579 = math.exp %578 : vector<8x128xf32>
    %cst_226 = arith.constant 1.000000e+00 : f32
    %580 = vector.broadcast %cst_226 : f32 to vector<8x128xf32>
    %581 = arith.addf %580, %579 : vector<8x128xf32>
    %582 = arith.divf %580, %581 : vector<8x128xf32>
    %583 = vector.broadcast %555 : i32 to vector<8x1xi32>
    %584 = arith.cmpi slt, %583, %7 : vector<8x1xi32>
    %585 = arith.extui %584 : vector<8x1xi1> to vector<8x1xi32>
    %586 = arith.sitofp %585 : vector<8x1xi32> to vector<8x1xf32>
    %c0_227 = arith.constant 0 : index
    %c0_228 = arith.constant 0 : index
    %587 = vector.load %arg7[%c0_227, %c0_228] : memref<8x128xf32, #tpu.memory_space<vmem>>, vector<8x128xf32>
    %588 = arith.mulf %574, %587 : vector<8x128xf32>
    %589 = arith.mulf %568, %576 : vector<8x128xf32>
    %590 = arith.addf %588, %589 : vector<8x128xf32>
    %591 = vector.broadcast %586 : vector<8x1xf32> to vector<8x128xf32>
    %592 = arith.mulf %590, %591 : vector<8x128xf32>
    %593 = math.tanh %592 : vector<8x128xf32>
    %594 = arith.mulf %582, %593 : vector<8x128xf32>
    %595 = vector.broadcast %586 : vector<8x1xf32> to vector<8x128xf32>
    %596 = arith.mulf %594, %595 : vector<8x128xf32>
    %c0_229 = arith.constant 0 : index
    %c0_230 = arith.constant 0 : index
    %597 = vector.load %arg7[%c0_229, %c0_230] : memref<8x128xf32, #tpu.memory_space<vmem>>, vector<8x128xf32>
    tpu.vector_store %arg7[%c0_229, %c0_230], %592 {strides = array<i32>} : memref<8x128xf32, #tpu.memory_space<vmem>>, vector<8x128xf32>,
    %c0_231 = arith.constant 0 : index
    %c0_232 = arith.constant 0 : index
    %598 = vector.load %arg6[%c0_231, %c0_232] : memref<8x128xf32, #tpu.memory_space<vmem>>, vector<8x128xf32>
    tpu.vector_store %arg6[%c0_231, %c0_232], %596 {strides = array<i32>} : memref<8x128xf32, #tpu.memory_space<vmem>>, vector<8x128xf32>,
    %599 = arith.truncf %596 : vector<8x128xf32> to vector<8x128xbf16>
    %c0_233 = arith.constant 0 : index
    %600 = arith.index_cast %553 : i32 to index
    %c0_234 = arith.constant 0 : index
    %c0_235 = arith.constant 0 : index
    %601 = vector.load %arg5[%c0_233, %600, %c0_234, %c0_235] : memref<1x16x8x128xbf16, #tpu.memory_space<vmem>>, vector<1x1x8x128xbf16>
    %602 = vector.shape_cast %601 : vector<1x1x8x128xbf16> to vector<8x128xbf16>
    %603 = vector.shape_cast %599 : vector<8x128xbf16> to vector<1x1x8x128xbf16>
    tpu.vector_store %arg5[%c0_233, %600, %c0_234, %c0_235], %603 {strides = array<i32>} : memref<1x16x8x128xbf16, #tpu.memory_space<vmem>>, vector<1x1x8x128xbf16>,
    %c11_i32 = arith.constant 11 : i32
    %c2_i32_236 = arith.constant 2 : i32
    %604 = arith.muli %c2_i32_236, %c11_i32 : i32
    %c15_i32_237 = arith.constant 15 : i32
    %605 = arith.subi %c15_i32_237, %604 : i32
    %606 = arith.muli %arg0, %605 : i32
    %607 = arith.addi %c11_i32, %606 : i32
    %c16_i32_238 = arith.constant 16 : i32
    %608 = arith.muli %6, %c16_i32_238 : i32
    %609 = arith.addi %608, %607 : i32
    %c0_239 = arith.constant 0 : index
    %610 = arith.index_cast %607 : i32 to index
    %c0_240 = arith.constant 0 : index
    %c0_241 = arith.constant 0 : index
    %611 = vector.load %arg3[%c0_239, %610, %c0_240, %c0_241] : memref<1x16x8x512xbf16, #tpu.memory_space<vmem>>, vector<1x1x8x512xbf16>
    %612 = vector.shape_cast %611 : vector<1x1x8x512xbf16> to vector<8x512xbf16>
    %613 = arith.extf %612 : vector<8x512xbf16> to vector<8x512xf32>
    %c0_242 = arith.constant 0 : index
    %c0_243 = arith.constant 0 : index
    %614 = vector.load %arg6[%c0_242, %c0_243] : memref<8x128xf32, #tpu.memory_space<vmem>>, vector<8x128xf32>
    %cst_244 = arith.constant dense<0.000000e+00> : vector<8x512xf32>
    %615 = tpu.matmul %614, %9, %cst_244 {dimension_numbers = #tpu.dot_dimension_numbers<[1], [0], [0], [1], [0, 0, 1, 1], [], []>} : vector<8x128xf32>, vector<128x512xf32>, vector<8x512xf32> -> vector<8x512xf32>
    %616 = arith.addf %613, %615 : vector<8x512xf32>
    %617 = vector.extract_strided_slice %616 {offsets = [0, 0], sizes = [8, 128], strides = [1, 1]} : vector<8x512xf32> to vector<8x128xf32>
    %618 = arith.negf %617 : vector<8x128xf32>
    %619 = math.exp %618 : vector<8x128xf32>
    %cst_245 = arith.constant 1.000000e+00 : f32
    %620 = vector.broadcast %cst_245 : f32 to vector<8x128xf32>
    %621 = arith.addf %620, %619 : vector<8x128xf32>
    %622 = arith.divf %620, %621 : vector<8x128xf32>
    %623 = vector.extract_strided_slice %616 {offsets = [0, 128], sizes = [8, 128], strides = [1, 1]} : vector<8x512xf32> to vector<8x128xf32>
    %624 = arith.negf %623 : vector<8x128xf32>
    %625 = math.exp %624 : vector<8x128xf32>
    %cst_246 = arith.constant 1.000000e+00 : f32
    %626 = vector.broadcast %cst_246 : f32 to vector<8x128xf32>
    %627 = arith.addf %626, %625 : vector<8x128xf32>
    %628 = arith.divf %626, %627 : vector<8x128xf32>
    %629 = vector.extract_strided_slice %616 {offsets = [0, 256], sizes = [8, 128], strides = [1, 1]} : vector<8x512xf32> to vector<8x128xf32>
    %630 = math.tanh %629 : vector<8x128xf32>
    %631 = vector.extract_strided_slice %616 {offsets = [0, 384], sizes = [8, 128], strides = [1, 1]} : vector<8x512xf32> to vector<8x128xf32>
    %632 = arith.negf %631 : vector<8x128xf32>
    %633 = math.exp %632 : vector<8x128xf32>
    %cst_247 = arith.constant 1.000000e+00 : f32
    %634 = vector.broadcast %cst_247 : f32 to vector<8x128xf32>
    %635 = arith.addf %634, %633 : vector<8x128xf32>
    %636 = arith.divf %634, %635 : vector<8x128xf32>
    %637 = vector.broadcast %609 : i32 to vector<8x1xi32>
    %638 = arith.cmpi slt, %637, %7 : vector<8x1xi32>
    %639 = arith.extui %638 : vector<8x1xi1> to vector<8x1xi32>
    %640 = arith.sitofp %639 : vector<8x1xi32> to vector<8x1xf32>
    %c0_248 = arith.constant 0 : index
    %c0_249 = arith.constant 0 : index
    %641 = vector.load %arg7[%c0_248, %c0_249] : memref<8x128xf32, #tpu.memory_space<vmem>>, vector<8x128xf32>
    %642 = arith.mulf %628, %641 : vector<8x128xf32>
    %643 = arith.mulf %622, %630 : vector<8x128xf32>
    %644 = arith.addf %642, %643 : vector<8x128xf32>
    %645 = vector.broadcast %640 : vector<8x1xf32> to vector<8x128xf32>
    %646 = arith.mulf %644, %645 : vector<8x128xf32>
    %647 = math.tanh %646 : vector<8x128xf32>
    %648 = arith.mulf %636, %647 : vector<8x128xf32>
    %649 = vector.broadcast %640 : vector<8x1xf32> to vector<8x128xf32>
    %650 = arith.mulf %648, %649 : vector<8x128xf32>
    %c0_250 = arith.constant 0 : index
    %c0_251 = arith.constant 0 : index
    %651 = vector.load %arg7[%c0_250, %c0_251] : memref<8x128xf32, #tpu.memory_space<vmem>>, vector<8x128xf32>
    tpu.vector_store %arg7[%c0_250, %c0_251], %646 {strides = array<i32>} : memref<8x128xf32, #tpu.memory_space<vmem>>, vector<8x128xf32>,
    %c0_252 = arith.constant 0 : index
    %c0_253 = arith.constant 0 : index
    %652 = vector.load %arg6[%c0_252, %c0_253] : memref<8x128xf32, #tpu.memory_space<vmem>>, vector<8x128xf32>
    tpu.vector_store %arg6[%c0_252, %c0_253], %650 {strides = array<i32>} : memref<8x128xf32, #tpu.memory_space<vmem>>, vector<8x128xf32>,
    %653 = arith.truncf %650 : vector<8x128xf32> to vector<8x128xbf16>
    %c0_254 = arith.constant 0 : index
    %654 = arith.index_cast %607 : i32 to index
    %c0_255 = arith.constant 0 : index
    %c0_256 = arith.constant 0 : index
    %655 = vector.load %arg5[%c0_254, %654, %c0_255, %c0_256] : memref<1x16x8x128xbf16, #tpu.memory_space<vmem>>, vector<1x1x8x128xbf16>
    %656 = vector.shape_cast %655 : vector<1x1x8x128xbf16> to vector<8x128xbf16>
    %657 = vector.shape_cast %653 : vector<8x128xbf16> to vector<1x1x8x128xbf16>
    tpu.vector_store %arg5[%c0_254, %654, %c0_255, %c0_256], %657 {strides = array<i32>} : memref<1x16x8x128xbf16, #tpu.memory_space<vmem>>, vector<1x1x8x128xbf16>,
    %c12_i32 = arith.constant 12 : i32
    %c2_i32_257 = arith.constant 2 : i32
    %658 = arith.muli %c2_i32_257, %c12_i32 : i32
    %c15_i32_258 = arith.constant 15 : i32
    %659 = arith.subi %c15_i32_258, %658 : i32
    %660 = arith.muli %arg0, %659 : i32
    %661 = arith.addi %c12_i32, %660 : i32
    %c16_i32_259 = arith.constant 16 : i32
    %662 = arith.muli %6, %c16_i32_259 : i32
    %663 = arith.addi %662, %661 : i32
    %c0_260 = arith.constant 0 : index
    %664 = arith.index_cast %661 : i32 to index
    %c0_261 = arith.constant 0 : index
    %c0_262 = arith.constant 0 : index
    %665 = vector.load %arg3[%c0_260, %664, %c0_261, %c0_262] : memref<1x16x8x512xbf16, #tpu.memory_space<vmem>>, vector<1x1x8x512xbf16>
    %666 = vector.shape_cast %665 : vector<1x1x8x512xbf16> to vector<8x512xbf16>
    %667 = arith.extf %666 : vector<8x512xbf16> to vector<8x512xf32>
    %c0_263 = arith.constant 0 : index
    %c0_264 = arith.constant 0 : index
    %668 = vector.load %arg6[%c0_263, %c0_264] : memref<8x128xf32, #tpu.memory_space<vmem>>, vector<8x128xf32>
    %cst_265 = arith.constant dense<0.000000e+00> : vector<8x512xf32>
    %669 = tpu.matmul %668, %9, %cst_265 {dimension_numbers = #tpu.dot_dimension_numbers<[1], [0], [0], [1], [0, 0, 1, 1], [], []>} : vector<8x128xf32>, vector<128x512xf32>, vector<8x512xf32> -> vector<8x512xf32>
    %670 = arith.addf %667, %669 : vector<8x512xf32>
    %671 = vector.extract_strided_slice %670 {offsets = [0, 0], sizes = [8, 128], strides = [1, 1]} : vector<8x512xf32> to vector<8x128xf32>
    %672 = arith.negf %671 : vector<8x128xf32>
    %673 = math.exp %672 : vector<8x128xf32>
    %cst_266 = arith.constant 1.000000e+00 : f32
    %674 = vector.broadcast %cst_266 : f32 to vector<8x128xf32>
    %675 = arith.addf %674, %673 : vector<8x128xf32>
    %676 = arith.divf %674, %675 : vector<8x128xf32>
    %677 = vector.extract_strided_slice %670 {offsets = [0, 128], sizes = [8, 128], strides = [1, 1]} : vector<8x512xf32> to vector<8x128xf32>
    %678 = arith.negf %677 : vector<8x128xf32>
    %679 = math.exp %678 : vector<8x128xf32>
    %cst_267 = arith.constant 1.000000e+00 : f32
    %680 = vector.broadcast %cst_267 : f32 to vector<8x128xf32>
    %681 = arith.addf %680, %679 : vector<8x128xf32>
    %682 = arith.divf %680, %681 : vector<8x128xf32>
    %683 = vector.extract_strided_slice %670 {offsets = [0, 256], sizes = [8, 128], strides = [1, 1]} : vector<8x512xf32> to vector<8x128xf32>
    %684 = math.tanh %683 : vector<8x128xf32>
    %685 = vector.extract_strided_slice %670 {offsets = [0, 384], sizes = [8, 128], strides = [1, 1]} : vector<8x512xf32> to vector<8x128xf32>
    %686 = arith.negf %685 : vector<8x128xf32>
    %687 = math.exp %686 : vector<8x128xf32>
    %cst_268 = arith.constant 1.000000e+00 : f32
    %688 = vector.broadcast %cst_268 : f32 to vector<8x128xf32>
    %689 = arith.addf %688, %687 : vector<8x128xf32>
    %690 = arith.divf %688, %689 : vector<8x128xf32>
    %691 = vector.broadcast %663 : i32 to vector<8x1xi32>
    %692 = arith.cmpi slt, %691, %7 : vector<8x1xi32>
    %693 = arith.extui %692 : vector<8x1xi1> to vector<8x1xi32>
    %694 = arith.sitofp %693 : vector<8x1xi32> to vector<8x1xf32>
    %c0_269 = arith.constant 0 : index
    %c0_270 = arith.constant 0 : index
    %695 = vector.load %arg7[%c0_269, %c0_270] : memref<8x128xf32, #tpu.memory_space<vmem>>, vector<8x128xf32>
    %696 = arith.mulf %682, %695 : vector<8x128xf32>
    %697 = arith.mulf %676, %684 : vector<8x128xf32>
    %698 = arith.addf %696, %697 : vector<8x128xf32>
    %699 = vector.broadcast %694 : vector<8x1xf32> to vector<8x128xf32>
    %700 = arith.mulf %698, %699 : vector<8x128xf32>
    %701 = math.tanh %700 : vector<8x128xf32>
    %702 = arith.mulf %690, %701 : vector<8x128xf32>
    %703 = vector.broadcast %694 : vector<8x1xf32> to vector<8x128xf32>
    %704 = arith.mulf %702, %703 : vector<8x128xf32>
    %c0_271 = arith.constant 0 : index
    %c0_272 = arith.constant 0 : index
    %705 = vector.load %arg7[%c0_271, %c0_272] : memref<8x128xf32, #tpu.memory_space<vmem>>, vector<8x128xf32>
    tpu.vector_store %arg7[%c0_271, %c0_272], %700 {strides = array<i32>} : memref<8x128xf32, #tpu.memory_space<vmem>>, vector<8x128xf32>,
    %c0_273 = arith.constant 0 : index
    %c0_274 = arith.constant 0 : index
    %706 = vector.load %arg6[%c0_273, %c0_274] : memref<8x128xf32, #tpu.memory_space<vmem>>, vector<8x128xf32>
    tpu.vector_store %arg6[%c0_273, %c0_274], %704 {strides = array<i32>} : memref<8x128xf32, #tpu.memory_space<vmem>>, vector<8x128xf32>,
    %707 = arith.truncf %704 : vector<8x128xf32> to vector<8x128xbf16>
    %c0_275 = arith.constant 0 : index
    %708 = arith.index_cast %661 : i32 to index
    %c0_276 = arith.constant 0 : index
    %c0_277 = arith.constant 0 : index
    %709 = vector.load %arg5[%c0_275, %708, %c0_276, %c0_277] : memref<1x16x8x128xbf16, #tpu.memory_space<vmem>>, vector<1x1x8x128xbf16>
    %710 = vector.shape_cast %709 : vector<1x1x8x128xbf16> to vector<8x128xbf16>
    %711 = vector.shape_cast %707 : vector<8x128xbf16> to vector<1x1x8x128xbf16>
    tpu.vector_store %arg5[%c0_275, %708, %c0_276, %c0_277], %711 {strides = array<i32>} : memref<1x16x8x128xbf16, #tpu.memory_space<vmem>>, vector<1x1x8x128xbf16>,
    %c13_i32 = arith.constant 13 : i32
    %c2_i32_278 = arith.constant 2 : i32
    %712 = arith.muli %c2_i32_278, %c13_i32 : i32
    %c15_i32_279 = arith.constant 15 : i32
    %713 = arith.subi %c15_i32_279, %712 : i32
    %714 = arith.muli %arg0, %713 : i32
    %715 = arith.addi %c13_i32, %714 : i32
    %c16_i32_280 = arith.constant 16 : i32
    %716 = arith.muli %6, %c16_i32_280 : i32
    %717 = arith.addi %716, %715 : i32
    %c0_281 = arith.constant 0 : index
    %718 = arith.index_cast %715 : i32 to index
    %c0_282 = arith.constant 0 : index
    %c0_283 = arith.constant 0 : index
    %719 = vector.load %arg3[%c0_281, %718, %c0_282, %c0_283] : memref<1x16x8x512xbf16, #tpu.memory_space<vmem>>, vector<1x1x8x512xbf16>
    %720 = vector.shape_cast %719 : vector<1x1x8x512xbf16> to vector<8x512xbf16>
    %721 = arith.extf %720 : vector<8x512xbf16> to vector<8x512xf32>
    %c0_284 = arith.constant 0 : index
    %c0_285 = arith.constant 0 : index
    %722 = vector.load %arg6[%c0_284, %c0_285] : memref<8x128xf32, #tpu.memory_space<vmem>>, vector<8x128xf32>
    %cst_286 = arith.constant dense<0.000000e+00> : vector<8x512xf32>
    %723 = tpu.matmul %722, %9, %cst_286 {dimension_numbers = #tpu.dot_dimension_numbers<[1], [0], [0], [1], [0, 0, 1, 1], [], []>} : vector<8x128xf32>, vector<128x512xf32>, vector<8x512xf32> -> vector<8x512xf32>
    %724 = arith.addf %721, %723 : vector<8x512xf32>
    %725 = vector.extract_strided_slice %724 {offsets = [0, 0], sizes = [8, 128], strides = [1, 1]} : vector<8x512xf32> to vector<8x128xf32>
    %726 = arith.negf %725 : vector<8x128xf32>
    %727 = math.exp %726 : vector<8x128xf32>
    %cst_287 = arith.constant 1.000000e+00 : f32
    %728 = vector.broadcast %cst_287 : f32 to vector<8x128xf32>
    %729 = arith.addf %728, %727 : vector<8x128xf32>
    %730 = arith.divf %728, %729 : vector<8x128xf32>
    %731 = vector.extract_strided_slice %724 {offsets = [0, 128], sizes = [8, 128], strides = [1, 1]} : vector<8x512xf32> to vector<8x128xf32>
    %732 = arith.negf %731 : vector<8x128xf32>
    %733 = math.exp %732 : vector<8x128xf32>
    %cst_288 = arith.constant 1.000000e+00 : f32
    %734 = vector.broadcast %cst_288 : f32 to vector<8x128xf32>
    %735 = arith.addf %734, %733 : vector<8x128xf32>
    %736 = arith.divf %734, %735 : vector<8x128xf32>
    %737 = vector.extract_strided_slice %724 {offsets = [0, 256], sizes = [8, 128], strides = [1, 1]} : vector<8x512xf32> to vector<8x128xf32>
    %738 = math.tanh %737 : vector<8x128xf32>
    %739 = vector.extract_strided_slice %724 {offsets = [0, 384], sizes = [8, 128], strides = [1, 1]} : vector<8x512xf32> to vector<8x128xf32>
    %740 = arith.negf %739 : vector<8x128xf32>
    %741 = math.exp %740 : vector<8x128xf32>
    %cst_289 = arith.constant 1.000000e+00 : f32
    %742 = vector.broadcast %cst_289 : f32 to vector<8x128xf32>
    %743 = arith.addf %742, %741 : vector<8x128xf32>
    %744 = arith.divf %742, %743 : vector<8x128xf32>
    %745 = vector.broadcast %717 : i32 to vector<8x1xi32>
    %746 = arith.cmpi slt, %745, %7 : vector<8x1xi32>
    %747 = arith.extui %746 : vector<8x1xi1> to vector<8x1xi32>
    %748 = arith.sitofp %747 : vector<8x1xi32> to vector<8x1xf32>
    %c0_290 = arith.constant 0 : index
    %c0_291 = arith.constant 0 : index
    %749 = vector.load %arg7[%c0_290, %c0_291] : memref<8x128xf32, #tpu.memory_space<vmem>>, vector<8x128xf32>
    %750 = arith.mulf %736, %749 : vector<8x128xf32>
    %751 = arith.mulf %730, %738 : vector<8x128xf32>
    %752 = arith.addf %750, %751 : vector<8x128xf32>
    %753 = vector.broadcast %748 : vector<8x1xf32> to vector<8x128xf32>
    %754 = arith.mulf %752, %753 : vector<8x128xf32>
    %755 = math.tanh %754 : vector<8x128xf32>
    %756 = arith.mulf %744, %755 : vector<8x128xf32>
    %757 = vector.broadcast %748 : vector<8x1xf32> to vector<8x128xf32>
    %758 = arith.mulf %756, %757 : vector<8x128xf32>
    %c0_292 = arith.constant 0 : index
    %c0_293 = arith.constant 0 : index
    %759 = vector.load %arg7[%c0_292, %c0_293] : memref<8x128xf32, #tpu.memory_space<vmem>>, vector<8x128xf32>
    tpu.vector_store %arg7[%c0_292, %c0_293], %754 {strides = array<i32>} : memref<8x128xf32, #tpu.memory_space<vmem>>, vector<8x128xf32>,
    %c0_294 = arith.constant 0 : index
    %c0_295 = arith.constant 0 : index
    %760 = vector.load %arg6[%c0_294, %c0_295] : memref<8x128xf32, #tpu.memory_space<vmem>>, vector<8x128xf32>
    tpu.vector_store %arg6[%c0_294, %c0_295], %758 {strides = array<i32>} : memref<8x128xf32, #tpu.memory_space<vmem>>, vector<8x128xf32>,
    %761 = arith.truncf %758 : vector<8x128xf32> to vector<8x128xbf16>
    %c0_296 = arith.constant 0 : index
    %762 = arith.index_cast %715 : i32 to index
    %c0_297 = arith.constant 0 : index
    %c0_298 = arith.constant 0 : index
    %763 = vector.load %arg5[%c0_296, %762, %c0_297, %c0_298] : memref<1x16x8x128xbf16, #tpu.memory_space<vmem>>, vector<1x1x8x128xbf16>
    %764 = vector.shape_cast %763 : vector<1x1x8x128xbf16> to vector<8x128xbf16>
    %765 = vector.shape_cast %761 : vector<8x128xbf16> to vector<1x1x8x128xbf16>
    tpu.vector_store %arg5[%c0_296, %762, %c0_297, %c0_298], %765 {strides = array<i32>} : memref<1x16x8x128xbf16, #tpu.memory_space<vmem>>, vector<1x1x8x128xbf16>,
    %c14_i32 = arith.constant 14 : i32
    %c2_i32_299 = arith.constant 2 : i32
    %766 = arith.muli %c2_i32_299, %c14_i32 : i32
    %c15_i32_300 = arith.constant 15 : i32
    %767 = arith.subi %c15_i32_300, %766 : i32
    %768 = arith.muli %arg0, %767 : i32
    %769 = arith.addi %c14_i32, %768 : i32
    %c16_i32_301 = arith.constant 16 : i32
    %770 = arith.muli %6, %c16_i32_301 : i32
    %771 = arith.addi %770, %769 : i32
    %c0_302 = arith.constant 0 : index
    %772 = arith.index_cast %769 : i32 to index
    %c0_303 = arith.constant 0 : index
    %c0_304 = arith.constant 0 : index
    %773 = vector.load %arg3[%c0_302, %772, %c0_303, %c0_304] : memref<1x16x8x512xbf16, #tpu.memory_space<vmem>>, vector<1x1x8x512xbf16>
    %774 = vector.shape_cast %773 : vector<1x1x8x512xbf16> to vector<8x512xbf16>
    %775 = arith.extf %774 : vector<8x512xbf16> to vector<8x512xf32>
    %c0_305 = arith.constant 0 : index
    %c0_306 = arith.constant 0 : index
    %776 = vector.load %arg6[%c0_305, %c0_306] : memref<8x128xf32, #tpu.memory_space<vmem>>, vector<8x128xf32>
    %cst_307 = arith.constant dense<0.000000e+00> : vector<8x512xf32>
    %777 = tpu.matmul %776, %9, %cst_307 {dimension_numbers = #tpu.dot_dimension_numbers<[1], [0], [0], [1], [0, 0, 1, 1], [], []>} : vector<8x128xf32>, vector<128x512xf32>, vector<8x512xf32> -> vector<8x512xf32>
    %778 = arith.addf %775, %777 : vector<8x512xf32>
    %779 = vector.extract_strided_slice %778 {offsets = [0, 0], sizes = [8, 128], strides = [1, 1]} : vector<8x512xf32> to vector<8x128xf32>
    %780 = arith.negf %779 : vector<8x128xf32>
    %781 = math.exp %780 : vector<8x128xf32>
    %cst_308 = arith.constant 1.000000e+00 : f32
    %782 = vector.broadcast %cst_308 : f32 to vector<8x128xf32>
    %783 = arith.addf %782, %781 : vector<8x128xf32>
    %784 = arith.divf %782, %783 : vector<8x128xf32>
    %785 = vector.extract_strided_slice %778 {offsets = [0, 128], sizes = [8, 128], strides = [1, 1]} : vector<8x512xf32> to vector<8x128xf32>
    %786 = arith.negf %785 : vector<8x128xf32>
    %787 = math.exp %786 : vector<8x128xf32>
    %cst_309 = arith.constant 1.000000e+00 : f32
    %788 = vector.broadcast %cst_309 : f32 to vector<8x128xf32>
    %789 = arith.addf %788, %787 : vector<8x128xf32>
    %790 = arith.divf %788, %789 : vector<8x128xf32>
    %791 = vector.extract_strided_slice %778 {offsets = [0, 256], sizes = [8, 128], strides = [1, 1]} : vector<8x512xf32> to vector<8x128xf32>
    %792 = math.tanh %791 : vector<8x128xf32>
    %793 = vector.extract_strided_slice %778 {offsets = [0, 384], sizes = [8, 128], strides = [1, 1]} : vector<8x512xf32> to vector<8x128xf32>
    %794 = arith.negf %793 : vector<8x128xf32>
    %795 = math.exp %794 : vector<8x128xf32>
    %cst_310 = arith.constant 1.000000e+00 : f32
    %796 = vector.broadcast %cst_310 : f32 to vector<8x128xf32>
    %797 = arith.addf %796, %795 : vector<8x128xf32>
    %798 = arith.divf %796, %797 : vector<8x128xf32>
    %799 = vector.broadcast %771 : i32 to vector<8x1xi32>
    %800 = arith.cmpi slt, %799, %7 : vector<8x1xi32>
    %801 = arith.extui %800 : vector<8x1xi1> to vector<8x1xi32>
    %802 = arith.sitofp %801 : vector<8x1xi32> to vector<8x1xf32>
    %c0_311 = arith.constant 0 : index
    %c0_312 = arith.constant 0 : index
    %803 = vector.load %arg7[%c0_311, %c0_312] : memref<8x128xf32, #tpu.memory_space<vmem>>, vector<8x128xf32>
    %804 = arith.mulf %790, %803 : vector<8x128xf32>
    %805 = arith.mulf %784, %792 : vector<8x128xf32>
    %806 = arith.addf %804, %805 : vector<8x128xf32>
    %807 = vector.broadcast %802 : vector<8x1xf32> to vector<8x128xf32>
    %808 = arith.mulf %806, %807 : vector<8x128xf32>
    %809 = math.tanh %808 : vector<8x128xf32>
    %810 = arith.mulf %798, %809 : vector<8x128xf32>
    %811 = vector.broadcast %802 : vector<8x1xf32> to vector<8x128xf32>
    %812 = arith.mulf %810, %811 : vector<8x128xf32>
    %c0_313 = arith.constant 0 : index
    %c0_314 = arith.constant 0 : index
    %813 = vector.load %arg7[%c0_313, %c0_314] : memref<8x128xf32, #tpu.memory_space<vmem>>, vector<8x128xf32>
    tpu.vector_store %arg7[%c0_313, %c0_314], %808 {strides = array<i32>} : memref<8x128xf32, #tpu.memory_space<vmem>>, vector<8x128xf32>,
    %c0_315 = arith.constant 0 : index
    %c0_316 = arith.constant 0 : index
    %814 = vector.load %arg6[%c0_315, %c0_316] : memref<8x128xf32, #tpu.memory_space<vmem>>, vector<8x128xf32>
    tpu.vector_store %arg6[%c0_315, %c0_316], %812 {strides = array<i32>} : memref<8x128xf32, #tpu.memory_space<vmem>>, vector<8x128xf32>,
    %815 = arith.truncf %812 : vector<8x128xf32> to vector<8x128xbf16>
    %c0_317 = arith.constant 0 : index
    %816 = arith.index_cast %769 : i32 to index
    %c0_318 = arith.constant 0 : index
    %c0_319 = arith.constant 0 : index
    %817 = vector.load %arg5[%c0_317, %816, %c0_318, %c0_319] : memref<1x16x8x128xbf16, #tpu.memory_space<vmem>>, vector<1x1x8x128xbf16>
    %818 = vector.shape_cast %817 : vector<1x1x8x128xbf16> to vector<8x128xbf16>
    %819 = vector.shape_cast %815 : vector<8x128xbf16> to vector<1x1x8x128xbf16>
    tpu.vector_store %arg5[%c0_317, %816, %c0_318, %c0_319], %819 {strides = array<i32>} : memref<1x16x8x128xbf16, #tpu.memory_space<vmem>>, vector<1x1x8x128xbf16>,
    %c15_i32_320 = arith.constant 15 : i32
    %c2_i32_321 = arith.constant 2 : i32
    %820 = arith.muli %c2_i32_321, %c15_i32_320 : i32
    %c15_i32_322 = arith.constant 15 : i32
    %821 = arith.subi %c15_i32_322, %820 : i32
    %822 = arith.muli %arg0, %821 : i32
    %823 = arith.addi %c15_i32_320, %822 : i32
    %c16_i32_323 = arith.constant 16 : i32
    %824 = arith.muli %6, %c16_i32_323 : i32
    %825 = arith.addi %824, %823 : i32
    %c0_324 = arith.constant 0 : index
    %826 = arith.index_cast %823 : i32 to index
    %c0_325 = arith.constant 0 : index
    %c0_326 = arith.constant 0 : index
    %827 = vector.load %arg3[%c0_324, %826, %c0_325, %c0_326] : memref<1x16x8x512xbf16, #tpu.memory_space<vmem>>, vector<1x1x8x512xbf16>
    %828 = vector.shape_cast %827 : vector<1x1x8x512xbf16> to vector<8x512xbf16>
    %829 = arith.extf %828 : vector<8x512xbf16> to vector<8x512xf32>
    %c0_327 = arith.constant 0 : index
    %c0_328 = arith.constant 0 : index
    %830 = vector.load %arg6[%c0_327, %c0_328] : memref<8x128xf32, #tpu.memory_space<vmem>>, vector<8x128xf32>
    %cst_329 = arith.constant dense<0.000000e+00> : vector<8x512xf32>
    %831 = tpu.matmul %830, %9, %cst_329 {dimension_numbers = #tpu.dot_dimension_numbers<[1], [0], [0], [1], [0, 0, 1, 1], [], []>} : vector<8x128xf32>, vector<128x512xf32>, vector<8x512xf32> -> vector<8x512xf32>
    %832 = arith.addf %829, %831 : vector<8x512xf32>
    %833 = vector.extract_strided_slice %832 {offsets = [0, 0], sizes = [8, 128], strides = [1, 1]} : vector<8x512xf32> to vector<8x128xf32>
    %834 = arith.negf %833 : vector<8x128xf32>
    %835 = math.exp %834 : vector<8x128xf32>
    %cst_330 = arith.constant 1.000000e+00 : f32
    %836 = vector.broadcast %cst_330 : f32 to vector<8x128xf32>
    %837 = arith.addf %836, %835 : vector<8x128xf32>
    %838 = arith.divf %836, %837 : vector<8x128xf32>
    %839 = vector.extract_strided_slice %832 {offsets = [0, 128], sizes = [8, 128], strides = [1, 1]} : vector<8x512xf32> to vector<8x128xf32>
    %840 = arith.negf %839 : vector<8x128xf32>
    %841 = math.exp %840 : vector<8x128xf32>
    %cst_331 = arith.constant 1.000000e+00 : f32
    %842 = vector.broadcast %cst_331 : f32 to vector<8x128xf32>
    %843 = arith.addf %842, %841 : vector<8x128xf32>
    %844 = arith.divf %842, %843 : vector<8x128xf32>
    %845 = vector.extract_strided_slice %832 {offsets = [0, 256], sizes = [8, 128], strides = [1, 1]} : vector<8x512xf32> to vector<8x128xf32>
    %846 = math.tanh %845 : vector<8x128xf32>
    %847 = vector.extract_strided_slice %832 {offsets = [0, 384], sizes = [8, 128], strides = [1, 1]} : vector<8x512xf32> to vector<8x128xf32>
    %848 = arith.negf %847 : vector<8x128xf32>
    %849 = math.exp %848 : vector<8x128xf32>
    %cst_332 = arith.constant 1.000000e+00 : f32
    %850 = vector.broadcast %cst_332 : f32 to vector<8x128xf32>
    %851 = arith.addf %850, %849 : vector<8x128xf32>
    %852 = arith.divf %850, %851 : vector<8x128xf32>
    %853 = vector.broadcast %825 : i32 to vector<8x1xi32>
    %854 = arith.cmpi slt, %853, %7 : vector<8x1xi32>
    %855 = arith.extui %854 : vector<8x1xi1> to vector<8x1xi32>
    %856 = arith.sitofp %855 : vector<8x1xi32> to vector<8x1xf32>
    %c0_333 = arith.constant 0 : index
    %c0_334 = arith.constant 0 : index
    %857 = vector.load %arg7[%c0_333, %c0_334] : memref<8x128xf32, #tpu.memory_space<vmem>>, vector<8x128xf32>
    %858 = arith.mulf %844, %857 : vector<8x128xf32>
    %859 = arith.mulf %838, %846 : vector<8x128xf32>
    %860 = arith.addf %858, %859 : vector<8x128xf32>
    %861 = vector.broadcast %856 : vector<8x1xf32> to vector<8x128xf32>
    %862 = arith.mulf %860, %861 : vector<8x128xf32>
    %863 = math.tanh %862 : vector<8x128xf32>
    %864 = arith.mulf %852, %863 : vector<8x128xf32>
    %865 = vector.broadcast %856 : vector<8x1xf32> to vector<8x128xf32>
    %866 = arith.mulf %864, %865 : vector<8x128xf32>
    %c0_335 = arith.constant 0 : index
    %c0_336 = arith.constant 0 : index
    %867 = vector.load %arg7[%c0_335, %c0_336] : memref<8x128xf32, #tpu.memory_space<vmem>>, vector<8x128xf32>
    tpu.vector_store %arg7[%c0_335, %c0_336], %862 {strides = array<i32>} : memref<8x128xf32, #tpu.memory_space<vmem>>, vector<8x128xf32>,
    %c0_337 = arith.constant 0 : index
    %c0_338 = arith.constant 0 : index
    %868 = vector.load %arg6[%c0_337, %c0_338] : memref<8x128xf32, #tpu.memory_space<vmem>>, vector<8x128xf32>
    tpu.vector_store %arg6[%c0_337, %c0_338], %866 {strides = array<i32>} : memref<8x128xf32, #tpu.memory_space<vmem>>, vector<8x128xf32>,
    %869 = arith.truncf %866 : vector<8x128xf32> to vector<8x128xbf16>
    %c0_339 = arith.constant 0 : index
    %870 = arith.index_cast %823 : i32 to index
    %c0_340 = arith.constant 0 : index
    %c0_341 = arith.constant 0 : index
    %871 = vector.load %arg5[%c0_339, %870, %c0_340, %c0_341] : memref<1x16x8x128xbf16, #tpu.memory_space<vmem>>, vector<1x1x8x128xbf16>
    %872 = vector.shape_cast %871 : vector<1x1x8x128xbf16> to vector<8x128xbf16>
    %873 = vector.shape_cast %869 : vector<8x128xbf16> to vector<1x1x8x128xbf16>
    tpu.vector_store %arg5[%c0_339, %870, %c0_340, %c0_341], %873 {strides = array<i32>} : memref<1x16x8x128xbf16, #tpu.memory_space<vmem>>, vector<1x1x8x128xbf16>,
    %c16_i32_342 = arith.constant 16 : i32
    return
  }
  func.func @transform_0(%arg0: i32, %arg1: i32) -> (i32, i32) {
    %c0_i32 = arith.constant 0 : i32
    %c0_i32_0 = arith.constant 0 : i32
    %c0_i32_1 = arith.constant 0 : i32
    return %c0_i32, %c0_i32_0 : i32, i32
  }
  func.func @transform_1(%arg0: i32, %arg1: i32) -> (i32, i32, i32, i32) {
    %c2_i32 = arith.constant 2 : i32
    %0 = arith.muli %c2_i32, %arg1 : i32
    %c0_i32 = arith.constant 0 : i32
    %1 = arith.subi %c0_i32, %0 : i32
    %2 = arith.muli %arg0, %1 : i32
    %3 = arith.addi %arg1, %2 : i32
    %c0_i32_0 = arith.constant 0 : i32
    %c0_i32_1 = arith.constant 0 : i32
    %c0_i32_2 = arith.constant 0 : i32
    return %arg0, %3, %c0_i32_0, %c0_i32_1 : i32, i32, i32, i32
  }
  func.func @transform_2(%arg0: i32, %arg1: i32) -> (i32, i32, i32) {
    %c0_i32 = arith.constant 0 : i32
    %c0_i32_0 = arith.constant 0 : i32
    %c0_i32_1 = arith.constant 0 : i32
    return %arg0, %c0_i32, %c0_i32_0 : i32, i32, i32
  }
  func.func @transform_3(%arg0: i32, %arg1: i32) -> (i32, i32, i32, i32) {
    %c2_i32 = arith.constant 2 : i32
    %0 = arith.muli %c2_i32, %arg1 : i32
    %c0_i32 = arith.constant 0 : i32
    %1 = arith.subi %c0_i32, %0 : i32
    %2 = arith.muli %arg0, %1 : i32
    %3 = arith.addi %arg1, %2 : i32
    %c0_i32_0 = arith.constant 0 : i32
    %c0_i32_1 = arith.constant 0 : i32
    %c0_i32_2 = arith.constant 0 : i32
    return %arg0, %3, %c0_i32_0, %c0_i32_1 : i32, i32, i32, i32
  }
}

</mosaic_0001>

<llo_original>
// kernel: model_forward.21
$region0: #{model_forward.21}
  #allocation0 [shape = 'u32[]', space=smem, size = 0x4, offset = 0x4, fixed_abs, tag = 'smem constant byte address 0x4 - core index']
  #allocation1 [shape = 'u32[72,128]{1,0:T(1,128)}', space=vmem, size = 0x9000, scoped, tag = 'internal scratch']
  %s0 = inlined_call_operand.vmem [shape: bf16[2,128,128], index: 0, kind: input, shape index: {}]
  %s1 = inlined_call_operand.hbm [shape: f32[2,128,128], index: 1, kind: input, shape index: {}]
  %s2 = inlined_call_operand.vmem [shape: f32[1,128], index: 2, kind: input, shape index: {}]
  %s3 = inlined_call_operand.vmem [shape: f32[128,128], index: 3, kind: input, shape index: {}]
  %s4 = inlined_call_operand.vmem [shape: f32[1,128], index: 4, kind: input, shape index: {}]
  %s5 = inlined_call_operand.vmem [shape: f32[128,128], index: 5, kind: output, shape index: {}]
  %s6 = sld [smem:[#allocation0]]
  $region34: #{model_forward.21} parent=0
    _
  %s8 = ssub.s32 1, %s6
  %s9 = scalar_select 0, %s8, %s6
  $region1: #{model_forward.21} parent=0
    #allocation2 [shape = 'u8[131072]{0}', space=vmem, size = 0x20000, scoped, tag = 'input window, operand 1, single buffered']
    #allocation3 [shape = 's32[1]{0}', space=sflag, size = 0x4, scoped, tag = 'scoped memory for model_forward.21']
    %10 = vsyncpa [#allocation3], 0
    // Predicated region
    $region2: #{model_forward.21} parent=1 // pred_check
      _
    $region3: #{model_forward.21} parent=1 // pred_check_branch
      %12 = sbr.rel (0) target = $region5
    $region4: #{model_forward.21} parent=1 // pred_region
      _
    $region5: #{model_forward.21} parent=1 // pred_fallthru
      _
    // Predicated region
    $region6: #{model_forward.21} parent=1 // pred_check
      _
    $region7: #{model_forward.21} parent=1 // pred_check_branch
      %14 = sbr.rel (0) target = $region9
    $region8: #{model_forward.21} parent=1 // pred_region
      %16 = vsyncadd [#allocation3], 0
      %s17 = sshll.u32 %s1, 4
      %s18 = int_to_ptr.hbm [resolvable:$true] %s17
      %s19 = sshll.u32 [#allocation2], 4
      %s20 = int_to_ptr.vmem [resolvable:$true] %s19
      %25 = dma.hbm_to_vmem [thread:$0]  %s18, 4096, %s20, [#allocation3], 128, 128, 8
    $region9: #{model_forward.21} parent=1 // pred_fallthru
      _
    // Predicated region
    $region10: #{model_forward.21} parent=1 // pred_check
      _
    $region11: #{model_forward.21} parent=1 // pred_check_branch
      %27 = sbr.rel (0) target = $region13
    $region12: #{model_forward.21} parent=1 // pred_region
      _
    $region13: #{model_forward.21} parent=1 // pred_fallthru
      _
    // Predicated region
    $region14: #{model_forward.21} parent=1 // pred_check
      _
    $region15: #{model_forward.21} parent=1 // pred_check_branch
      %29 = sbr.rel (0) target = $region17
    $region16: #{model_forward.21} parent=1 // pred_region
      _
    $region17: #{model_forward.21} parent=1 // pred_fallthru
      _
    // Predicated region
    $region18: #{model_forward.21} parent=1 // pred_check
      _
    $region19: #{model_forward.21} parent=1 // pred_check_branch
      %31 = sbr.rel (0) target = $region21
    $region20: #{model_forward.21} parent=1 // pred_region
      _
    $region21: #{model_forward.21} parent=1 // pred_fallthru
      _
    // Predicated region
    $region22: #{model_forward.21} parent=1 // pred_check
      _
    $region23: #{model_forward.21} parent=1 // pred_check_branch
      %33 = sbr.rel (0) target = $region25
    $region24: #{model_forward.21} parent=1 // pred_region
      %35 = dma.done [#allocation3], 4096
    $region25: #{model_forward.21} parent=1 // pred_fallthru
      _
    %v36 = vld [vmem:[%s0] sm:$0xf]
    %v37 = vld [vmem:[%s0 + $0x4] sm:$0xf]
    %v38 = vld [vmem:[%s0 + $0x8] sm:$0xf]
    %v39 = vld [vmem:[%s0 + $0xc] sm:$0xf]
    %v40 = vld [vmem:[%s0 + $0x10] sm:$0xf]
    %v41 = vld [vmem:[%s0 + $0x14] sm:$0xf]
    %v42 = vld [vmem:[%s0 + $0x18] sm:$0xf]
    %v43 = vld [vmem:[%s0 + $0x1c] sm:$0xf]
    %v44 = vld [vmem:[%s0 + $0x20] sm:$0xf]
    %v45 = vld [vmem:[%s0 + $0x24] sm:$0xf]
    %v46 = vld [vmem:[%s0 + $0x28] sm:$0xf]
    %v47 = vld [vmem:[%s0 + $0x2c] sm:$0xf]
    %v48 = vld [vmem:[%s0 + $0x30] sm:$0xf]
    %v49 = vld [vmem:[%s0 + $0x34] sm:$0xf]
    %v50 = vld [vmem:[%s0 + $0x38] sm:$0xf]
    %v51 = vld [vmem:[%s0 + $0x3c] sm:$0xf]
    %v52 = vunpack.c.l.bf16 %v36
    %v53 = vunpack.c.l.bf16 %v37
    %v54 = vunpack.c.l.bf16 %v38
    %v55 = vunpack.c.l.bf16 %v39
    %v56 = vunpack.c.l.bf16 %v40
    %v57 = vunpack.c.l.bf16 %v41
    %v58 = vunpack.c.l.bf16 %v42
    %v59 = vunpack.c.l.bf16 %v43
    %v60 = vunpack.c.l.bf16 %v44
    %v61 = vunpack.c.l.bf16 %v45
    %v62 = vunpack.c.l.bf16 %v46
    %v63 = vunpack.c.l.bf16 %v47
    %v64 = vunpack.c.l.bf16 %v48
    %v65 = vunpack.c.l.bf16 %v49
    %v66 = vunpack.c.l.bf16 %v50
    %v67 = vunpack.c.l.bf16 %v51
    %s68 = scalar_lea.vmem %s0, 64
    %v69 = vld [vmem:[%s68] sm:$0xf]
    %v70 = vld [vmem:[%s68 + $0x4] sm:$0xf]
    %v71 = vld [vmem:[%s68 + $0x8] sm:$0xf]
    %v72 = vld [vmem:[%s68 + $0xc] sm:$0xf]
    %v73 = vld [vmem:[%s68 + $0x10] sm:$0xf]
    %v74 = vld [vmem:[%s68 + $0x14] sm:$0xf]
    %v75 = vld [vmem:[%s68 + $0x18] sm:$0xf]
    %v76 = vld [vmem:[%s68 + $0x1c] sm:$0xf]
    %v77 = vld [vmem:[%s68 + $0x20] sm:$0xf]
    %v78 = vld [vmem:[%s68 + $0x24] sm:$0xf]
    %v79 = vld [vmem:[%s68 + $0x28] sm:$0xf]
    %v80 = vld [vmem:[%s68 + $0x2c] sm:$0xf]
    %v81 = vld [vmem:[%s68 + $0x30] sm:$0xf]
    %v82 = vld [vmem:[%s68 + $0x34] sm:$0xf]
    %v83 = vld [vmem:[%s68 + $0x38] sm:$0xf]
    %v84 = vld [vmem:[%s68 + $0x3c] sm:$0xf]
    %v85 = vunpack.c.l.bf16 %v69
    %v86 = vunpack.c.l.bf16 %v70
    %v87 = vunpack.c.l.bf16 %v71
    %v88 = vunpack.c.l.bf16 %v72
    %v89 = vunpack.c.l.bf16 %v73
    %v90 = vunpack.c.l.bf16 %v74
    %v91 = vunpack.c.l.bf16 %v75
    %v92 = vunpack.c.l.bf16 %v76
    %v93 = vunpack.c.l.bf16 %v77
    %v94 = vunpack.c.l.bf16 %v78
    %v95 = vunpack.c.l.bf16 %v79
    %v96 = vunpack.c.l.bf16 %v80
    %v97 = vunpack.c.l.bf16 %v81
    %v98 = vunpack.c.l.bf16 %v82
    %v99 = vunpack.c.l.bf16 %v83
    %v100 = vunpack.c.l.bf16 %v84
    %v101 = vld [vmem:[#allocation2] sm:$0xff]
    %v102 = vld [vmem:[#allocation2 + $0x8] sm:$0xff]
    %v103 = vld [vmem:[#allocation2 + $0x10] sm:$0xff]
    %v104 = vld [vmem:[#allocation2 + $0x18] sm:$0xff]
    %v105 = vld [vmem:[#allocation2 + $0x20] sm:$0xff]
    %v106 = vld [vmem:[#allocation2 + $0x28] sm:$0xff]
    %v107 = vld [vmem:[#allocation2 + $0x30] sm:$0xff]
    %v108 = vld [vmem:[#allocation2 + $0x38] sm:$0xff]
    %v109 = vld [vmem:[#allocation2 + $0x40] sm:$0xff]
    %v110 = vld [vmem:[#allocation2 + $0x48] sm:$0xff]
    %v111 = vld [vmem:[#allocation2 + $0x50] sm:$0xff]
    %v112 = vld [vmem:[#allocation2 + $0x58] sm:$0xff]
    %v113 = vld [vmem:[#allocation2 + $0x60] sm:$0xff]
    %v114 = vld [vmem:[#allocation2 + $0x68] sm:$0xff]
    %v115 = vld [vmem:[#allocation2 + $0x70] sm:$0xff]
    %v116 = vld [vmem:[#allocation2 + $0x78] sm:$0xff]
    %s117 = scalar_lea.vmem [#allocation2], 128
    %v118 = vld [vmem:[%s117] sm:$0xff]
    %v119 = vld [vmem:[%s117 + $0x8] sm:$0xff]
    %v120 = vld [vmem:[%s117 + $0x10] sm:$0xff]
    %v121 = vld [vmem:[%s117 + $0x18] sm:$0xff]
    %v122 = vld [vmem:[%s117 + $0x20] sm:$0xff]
    %v123 = vld [vmem:[%s117 + $0x28] sm:$0xff]
    %v124 = vld [vmem:[%s117 + $0x30] sm:$0xff]
    %v125 = vld [vmem:[%s117 + $0x38] sm:$0xff]
    %v126 = vld [vmem:[%s117 + $0x40] sm:$0xff]
    %v127 = vld [vmem:[%s117 + $0x48] sm:$0xff]
    %v128 = vld [vmem:[%s117 + $0x50] sm:$0xff]
    %v129 = vld [vmem:[%s117 + $0x58] sm:$0xff]
    %v130 = vld [vmem:[%s117 + $0x60] sm:$0xff]
    %v131 = vld [vmem:[%s117 + $0x68] sm:$0xff]
    %v132 = vld [vmem:[%s117 + $0x70] sm:$0xff]
    %v133 = vld [vmem:[%s117 + $0x78] sm:$0xff]
    %134 = vmatpush.msra.mxu0 %v133
    %135 = vmatpush.msra.mxu0 %v132
    %136 = vmatpush.msra.mxu0 %v131
    %137 = vmatpush.msra.mxu0 %v130
    %138 = vmatpush.msra.mxu0 %v129
    %139 = vmatpush.msra.mxu0 %v128
    %140 = vmatpush.msra.mxu0 %v127
    %141 = vmatpush.msra.mxu0 %v126
    %142 = vmatpush.msra.mxu0 %v125
    %143 = vmatpush.msra.mxu0 %v124
    %144 = vmatpush.msra.mxu0 %v123
    %145 = vmatpush.msra.mxu0 %v122
    %146 = vmatpush.msra.mxu0 %v121
    %147 = vmatpush.msra.mxu0 %v120
    %148 = vmatpush.msra.mxu0 %v119
    %149 = vmatpush.msra.mxu0 %v118
    %150 = vmatmul.f32.gmra.mxu0 %v85
    %v151 = vpop.f32.mrf.mxu0
    %v152 = vadd.f32 0.0, %v151
    %153 = vmatmul.f32.gmra.mxu0 %v86
    %v154 = vpop.f32.mrf.mxu0
    %v155 = vadd.f32 0.0, %v154
    %156 = vmatmul.f32.gmra.mxu0 %v87
    %v157 = vpop.f32.mrf.mxu0
    %v158 = vadd.f32 0.0, %v157
    %159 = vmatmul.f32.gmra.mxu0 %v88
    %v160 = vpop.f32.mrf.mxu0
    %v161 = vadd.f32 0.0, %v160
    %162 = vmatmul.f32.gmra.mxu0 %v89
    %v163 = vpop.f32.mrf.mxu0
    %v164 = vadd.f32 0.0, %v163
    %165 = vmatmul.f32.gmra.mxu0 %v90
    %v166 = vpop.f32.mrf.mxu0
    %v167 = vadd.f32 0.0, %v166
    %168 = vmatmul.f32.gmra.mxu0 %v91
    %v169 = vpop.f32.mrf.mxu0
    %v170 = vadd.f32 0.0, %v169
    %171 = vmatmul.f32.gmra.mxu0 %v92
    %v172 = vpop.f32.mrf.mxu0
    %v173 = vadd.f32 0.0, %v172
    %174 = vmatmul.f32.gmra.mxu0 %v93
    %v175 = vpop.f32.mrf.mxu0
    %v176 = vadd.f32 0.0, %v175
    %177 = vmatmul.f32.gmra.mxu0 %v94
    %v178 = vpop.f32.mrf.mxu0
    %v179 = vadd.f32 0.0, %v178
    %180 = vmatmul.f32.gmra.mxu0 %v95
    %v181 = vpop.f32.mrf.mxu0
    %v182 = vadd.f32 0.0, %v181
    %183 = vmatmul.f32.gmra.mxu0 %v96
    %v184 = vpop.f32.mrf.mxu0
    %v185 = vadd.f32 0.0, %v184
    %186 = vmatmul.f32.gmra.mxu0 %v97
    %v187 = vpop.f32.mrf.mxu0
    %v188 = vadd.f32 0.0, %v187
    %189 = vmatmul.f32.gmra.mxu0 %v98
    %v190 = vpop.f32.mrf.mxu0
    %v191 = vadd.f32 0.0, %v190
    %192 = vmatmul.f32.gmra.mxu0 %v99
    %v193 = vpop.f32.mrf.mxu0
    %v194 = vadd.f32 0.0, %v193
    %195 = vmatmul.f32.gmra.mxu0 %v100
    %v196 = vpop.f32.mrf.mxu0
    %v197 = vadd.f32 0.0, %v196
    %198 = vdwg.mxu0
    %199 = vmatpush.msra.mxu0 %v116
    %200 = vmatpush.msra.mxu0 %v115
    %201 = vmatpush.msra.mxu0 %v114
    %202 = vmatpush.msra.mxu0 %v113
    %203 = vmatpush.msra.mxu0 %v112
    %204 = vmatpush.msra.mxu0 %v111
    %205 = vmatpush.msra.mxu0 %v110
    %206 = vmatpush.msra.mxu0 %v109
    %207 = vmatpush.msra.mxu0 %v108
    %208 = vmatpush.msra.mxu0 %v107
    %209 = vmatpush.msra.mxu0 %v106
    %210 = vmatpush.msra.mxu0 %v105
    %211 = vmatpush.msra.mxu0 %v104
    %212 = vmatpush.msra.mxu0 %v103
    %213 = vmatpush.msra.mxu0 %v102
    %214 = vmatpush.msra.mxu0 %v101
    %215 = vmatmul.f32.gmra.mxu0 %v52
    %v216 = vpop.f32.mrf.mxu0
    %v217 = vadd.f32 %v152, %v216
    %218 = vmatmul.f32.gmra.mxu0 %v53
    %v219 = vpop.f32.mrf.mxu0
    %v220 = vadd.f32 %v155, %v219
    %221 = vmatmul.f32.gmra.mxu0 %v54
    %v222 = vpop.f32.mrf.mxu0
    %v223 = vadd.f32 %v158, %v222
    %224 = vmatmul.f32.gmra.mxu0 %v55
    %v225 = vpop.f32.mrf.mxu0
    %v226 = vadd.f32 %v161, %v225
    %227 = vmatmul.f32.gmra.mxu0 %v56
    %v228 = vpop.f32.mrf.mxu0
    %v229 = vadd.f32 %v164, %v228
    %230 = vmatmul.f32.gmra.mxu0 %v57
    %v231 = vpop.f32.mrf.mxu0
    %v232 = vadd.f32 %v167, %v231
    %233 = vmatmul.f32.gmra.mxu0 %v58
    %v234 = vpop.f32.mrf.mxu0
    %v235 = vadd.f32 %v170, %v234
    %236 = vmatmul.f32.gmra.mxu0 %v59
    %v237 = vpop.f32.mrf.mxu0
    %v238 = vadd.f32 %v173, %v237
    %239 = vmatmul.f32.gmra.mxu0 %v60
    %v240 = vpop.f32.mrf.mxu0
    %v241 = vadd.f32 %v176, %v240
    %242 = vmatmul.f32.gmra.mxu0 %v61
    %v243 = vpop.f32.mrf.mxu0
    %v244 = vadd.f32 %v179, %v243
    %245 = vmatmul.f32.gmra.mxu0 %v62
    %v246 = vpop.f32.mrf.mxu0
    %v247 = vadd.f32 %v182, %v246
    %248 = vmatmul.f32.gmra.mxu0 %v63
    %v249 = vpop.f32.mrf.mxu0
    %v250 = vadd.f32 %v185, %v249
    %251 = vmatmul.f32.gmra.mxu0 %v64
    %v252 = vpop.f32.mrf.mxu0
    %v253 = vadd.f32 %v188, %v252
    %254 = vmatmul.f32.gmra.mxu0 %v65
    %v255 = vpop.f32.mrf.mxu0
    %v256 = vadd.f32 %v191, %v255
    %257 = vmatmul.f32.gmra.mxu0 %v66
    %v258 = vpop.f32.mrf.mxu0
    %v259 = vadd.f32 %v194, %v258
    %260 = vmatmul.f32.gmra.mxu0 %v67
    %v261 = vpop.f32.mrf.mxu0
    %v262 = vadd.f32 %v197, %v261
    %263 = vdwg.mxu0
    %v264 = vld [vmem:[%s2] sm:$0x1]
    %v266 = vperm.slane %v264, 0
    %v268 = vadd.f32 %v217, %v266
    %v269 = vadd.f32 %v220, %v266
    %v270 = vadd.f32 %v223, %v266
    %v271 = vadd.f32 %v226, %v266
    %v272 = vadd.f32 %v229, %v266
    %v273 = vadd.f32 %v232, %v266
    %v274 = vadd.f32 %v235, %v266
    %v275 = vadd.f32 %v238, %v266
    %v276 = vadd.f32 %v241, %v266
    %v277 = vadd.f32 %v244, %v266
    %v278 = vadd.f32 %v247, %v266
    %v279 = vadd.f32 %v250, %v266
    %v280 = vadd.f32 %v253, %v266
    %v281 = vadd.f32 %v256, %v266
    %v282 = vadd.f32 %v259, %v266
    %v283 = vadd.f32 %v262, %v266
    %v284 = vld [vmem:[%s3] sm:$0xff]
    %v285 = vld [vmem:[%s3 + $0x8] sm:$0xff]
    %v286 = vld [vmem:[%s3 + $0x10] sm:$0xff]
    %v287 = vld [vmem:[%s3 + $0x18] sm:$0xff]
    %v288 = vld [vmem:[%s3 + $0x20] sm:$0xff]
    %v289 = vld [vmem:[%s3 + $0x28] sm:$0xff]
    %v290 = vld [vmem:[%s3 + $0x30] sm:$0xff]
    %v291 = vld [vmem:[%s3 + $0x38] sm:$0xff]
    %v292 = vld [vmem:[%s3 + $0x40] sm:$0xff]
    %v293 = vld [vmem:[%s3 + $0x48] sm:$0xff]
    %v294 = vld [vmem:[%s3 + $0x50] sm:$0xff]
    %v295 = vld [vmem:[%s3 + $0x58] sm:$0xff]
    %v296 = vld [vmem:[%s3 + $0x60] sm:$0xff]
    %v297 = vld [vmem:[%s3 + $0x68] sm:$0xff]
    %v298 = vld [vmem:[%s3 + $0x70] sm:$0xff]
    %v299 = vld [vmem:[%s3 + $0x78] sm:$0xff]
    %v300 = vld [vmem:[%s4] sm:$0x1]
    %v302 = vperm.slane %v300, 0
    %304 = vmatpush.msra.mxu0 %v299
    %305 = vmatpush.msra.mxu0 %v298
    %306 = vmatpush.msra.mxu0 %v297
    %307 = vmatpush.msra.mxu0 %v296
    %308 = vmatpush.msra.mxu0 %v295
    %309 = vmatpush.msra.mxu0 %v294
    %310 = vmatpush.msra.mxu0 %v293
    %311 = vmatpush.msra.mxu0 %v292
    %312 = vmatpush.msra.mxu0 %v291
    %313 = vmatpush.msra.mxu0 %v290
    %314 = vmatpush.msra.mxu0 %v289
    %315 = vmatpush.msra.mxu0 %v288
    %316 = vmatpush.msra.mxu0 %v287
    %317 = vmatpush.msra.mxu0 %v286
    %318 = vmatpush.msra.mxu0 %v285
    %319 = vmatpush.msra.mxu0 %v284
    %320 = vmatmul.f32.gmra.mxu0 %v268
    %v321 = vpop.f32.mrf.mxu0
    %v322 = vadd.f32 %v302, %v321
    %323 = vmatmul.f32.gmra.mxu0 %v269
    %v324 = vpop.f32.mrf.mxu0
    %v325 = vadd.f32 %v302, %v324
    %326 = vmatmul.f32.gmra.mxu0 %v270
    %v327 = vpop.f32.mrf.mxu0
    %v328 = vadd.f32 %v302, %v327
    %329 = vmatmul.f32.gmra.mxu0 %v271
    %v330 = vpop.f32.mrf.mxu0
    %v331 = vadd.f32 %v302, %v330
    %332 = vmatmul.f32.gmra.mxu0 %v272
    %v333 = vpop.f32.mrf.mxu0
    %v334 = vadd.f32 %v302, %v333
    %335 = vmatmul.f32.gmra.mxu0 %v273
    %v336 = vpop.f32.mrf.mxu0
    %v337 = vadd.f32 %v302, %v336
    %338 = vmatmul.f32.gmra.mxu0 %v274
    %v339 = vpop.f32.mrf.mxu0
    %v340 = vadd.f32 %v302, %v339
    %341 = vmatmul.f32.gmra.mxu0 %v275
    %v342 = vpop.f32.mrf.mxu0
    %v343 = vadd.f32 %v302, %v342
    %344 = vmatmul.f32.gmra.mxu0 %v276
    %v345 = vpop.f32.mrf.mxu0
    %v346 = vadd.f32 %v302, %v345
    %347 = vmatmul.f32.gmra.mxu0 %v277
    %v348 = vpop.f32.mrf.mxu0
    %v349 = vadd.f32 %v302, %v348
    %350 = vmatmul.f32.gmra.mxu0 %v278
    %v351 = vpop.f32.mrf.mxu0
    %v352 = vadd.f32 %v302, %v351
    %353 = vmatmul.f32.gmra.mxu0 %v279
    %v354 = vpop.f32.mrf.mxu0
    %v355 = vadd.f32 %v302, %v354
    %356 = vmatmul.f32.gmra.mxu0 %v280
    %v357 = vpop.f32.mrf.mxu0
    %v358 = vadd.f32 %v302, %v357
    %359 = vmatmul.f32.gmra.mxu0 %v281
    %v360 = vpop.f32.mrf.mxu0
    %v361 = vadd.f32 %v302, %v360
    %362 = vmatmul.f32.gmra.mxu0 %v282
    %v363 = vpop.f32.mrf.mxu0
    %v364 = vadd.f32 %v302, %v363
    %365 = vmatmul.f32.gmra.mxu0 %v283
    %v366 = vpop.f32.mrf.mxu0
    %v367 = vadd.f32 %v302, %v366
    %368 = vdwg.mxu0
    %369 = vmax.xlane.f32.xlu0 %v322
    %v370 = vpop.xlane.xlu0 %369
    %371 = vmax.xlane.f32.xlu0 %v325
    %v372 = vpop.xlane.xlu0 %371
    %373 = vmax.xlane.f32.xlu0 %v328
    %v374 = vpop.xlane.xlu0 %373
    %375 = vmax.xlane.f32.xlu0 %v331
    %v376 = vpop.xlane.xlu0 %375
    %377 = vmax.xlane.f32.xlu0 %v334
    %v378 = vpop.xlane.xlu0 %377
    %379 = vmax.xlane.f32.xlu0 %v337
    %v380 = vpop.xlane.xlu0 %379
    %381 = vmax.xlane.f32.xlu0 %v340
    %v382 = vpop.xlane.xlu0 %381
    %383 = vmax.xlane.f32.xlu0 %v343
    %v384 = vpop.xlane.xlu0 %383
    %385 = vmax.xlane.f32.xlu0 %v346
    %v386 = vpop.xlane.xlu0 %385
    %387 = vmax.xlane.f32.xlu0 %v349
    %v388 = vpop.xlane.xlu0 %387
    %389 = vmax.xlane.f32.xlu0 %v352
    %v390 = vpop.xlane.xlu0 %389
    %391 = vmax.xlane.f32.xlu0 %v355
    %v392 = vpop.xlane.xlu0 %391
    %393 = vmax.xlane.f32.xlu0 %v358
    %v394 = vpop.xlane.xlu0 %393
    %395 = vmax.xlane.f32.xlu0 %v361
    %v396 = vpop.xlane.xlu0 %395
    %397 = vmax.xlane.f32.xlu0 %v364
    %v398 = vpop.xlane.xlu0 %397
    %399 = vmax.xlane.f32.xlu0 %v367
    %v400 = vpop.xlane.xlu0 %399
    %v401 = vsub.f32 %v322, %v370
    %v402 = vsub.f32 %v325, %v372
    %v403 = vsub.f32 %v328, %v374
    %v404 = vsub.f32 %v331, %v376
    %v405 = vsub.f32 %v334, %v378
    %v406 = vsub.f32 %v337, %v380
    %v407 = vsub.f32 %v340, %v382
    %v408 = vsub.f32 %v343, %v384
    %v409 = vsub.f32 %v346, %v386
    %v410 = vsub.f32 %v349, %v388
    %v411 = vsub.f32 %v352, %v390
    %v412 = vsub.f32 %v355, %v392
    %v413 = vsub.f32 %v358, %v394
    %v414 = vsub.f32 %v361, %v396
    %v415 = vsub.f32 %v364, %v398
    %v416 = vsub.f32 %v367, %v400
    %v417 = vmul.f32 %v401, 1.442695
    %v418 = vpow.pop %v417
    %v419 = vmul.f32 %v402, 1.442695
    %v420 = vpow.pop %v419
    %v421 = vmul.f32 %v403, 1.442695
    %v422 = vpow.pop %v421
    %v423 = vmul.f32 %v404, 1.442695
    %v424 = vpow.pop %v423
    %v425 = vmul.f32 %v405, 1.442695
    %v426 = vpow.pop %v425
    %v427 = vmul.f32 %v406, 1.442695
    %v428 = vpow.pop %v427
    %v429 = vmul.f32 %v407, 1.442695
    %v430 = vpow.pop %v429
    %v431 = vmul.f32 %v408, 1.442695
    %v432 = vpow.pop %v431
    %v433 = vmul.f32 %v409, 1.442695
    %v434 = vpow.pop %v433
    %v435 = vmul.f32 %v410, 1.442695
    %v436 = vpow.pop %v435
    %v437 = vmul.f32 %v411, 1.442695
    %v438 = vpow.pop %v437
    %v439 = vmul.f32 %v412, 1.442695
    %v440 = vpow.pop %v439
    %v441 = vmul.f32 %v413, 1.442695
    %v442 = vpow.pop %v441
    %v443 = vmul.f32 %v414, 1.442695
    %v444 = vpow.pop %v443
    %v445 = vmul.f32 %v415, 1.442695
    %v446 = vpow.pop %v445
    %v447 = vmul.f32 %v416, 1.442695
    %v448 = vpow.pop %v447
    %449 = vadd.xlane.f32.xlu0 %v418
    %v450 = vpop.xlane.xlu0 %449
    %451 = vadd.xlane.f32.xlu0 %v420
    %v452 = vpop.xlane.xlu0 %451
    %453 = vadd.xlane.f32.xlu0 %v422
    %v454 = vpop.xlane.xlu0 %453
    %455 = vadd.xlane.f32.xlu0 %v424
    %v456 = vpop.xlane.xlu0 %455
    %457 = vadd.xlane.f32.xlu0 %v426
    %v458 = vpop.xlane.xlu0 %457
    %459 = vadd.xlane.f32.xlu0 %v428
    %v460 = vpop.xlane.xlu0 %459
    %461 = vadd.xlane.f32.xlu0 %v430
    %v462 = vpop.xlane.xlu0 %461
    %463 = vadd.xlane.f32.xlu0 %v432
    %v464 = vpop.xlane.xlu0 %463
    %465 = vadd.xlane.f32.xlu0 %v434
    %v466 = vpop.xlane.xlu0 %465
    %467 = vadd.xlane.f32.xlu0 %v436
    %v468 = vpop.xlane.xlu0 %467
    %469 = vadd.xlane.f32.xlu0 %v438
    %v470 = vpop.xlane.xlu0 %469
    %471 = vadd.xlane.f32.xlu0 %v440
    %v472 = vpop.xlane.xlu0 %471
    %473 = vadd.xlane.f32.xlu0 %v442
    %v474 = vpop.xlane.xlu0 %473
    %475 = vadd.xlane.f32.xlu0 %v444
    %v476 = vpop.xlane.xlu0 %475
    %477 = vadd.xlane.f32.xlu0 %v446
    %v478 = vpop.xlane.xlu0 %477
    %479 = vadd.xlane.f32.xlu0 %v448
    %v480 = vpop.xlane.xlu0 %479
    %v481 = vlog2.pop %v450
    %v482 = vmul.f32 %v481, 0.6931472
    %v483 = vlog2.pop %v452
    %v484 = vmul.f32 %v483, 0.6931472
    %v485 = vlog2.pop %v454
    %v486 = vmul.f32 %v485, 0.6931472
    %v487 = vlog2.pop %v456
    %v488 = vmul.f32 %v487, 0.6931472
    %v489 = vlog2.pop %v458
    %v490 = vmul.f32 %v489, 0.6931472
    %v491 = vlog2.pop %v460
    %v492 = vmul.f32 %v491, 0.6931472
    %v493 = vlog2.pop %v462
    %v494 = vmul.f32 %v493, 0.6931472
    %v495 = vlog2.pop %v464
    %v496 = vmul.f32 %v495, 0.6931472
    %v497 = vlog2.pop %v466
    %v498 = vmul.f32 %v497, 0.6931472
    %v499 = vlog2.pop %v468
    %v500 = vmul.f32 %v499, 0.6931472
    %v501 = vlog2.pop %v470
    %v502 = vmul.f32 %v501, 0.6931472
    %v503 = vlog2.pop %v472
    %v504 = vmul.f32 %v503, 0.6931472
    %v505 = vlog2.pop %v474
    %v506 = vmul.f32 %v505, 0.6931472
    %v507 = vlog2.pop %v476
    %v508 = vmul.f32 %v507, 0.6931472
    %v509 = vlog2.pop %v478
    %v510 = vmul.f32 %v509, 0.6931472
    %v511 = vlog2.pop %v480
    %v512 = vmul.f32 %v511, 0.6931472
    %v513 = vsub.f32 %v401, %v482
    %v514 = vsub.f32 %v402, %v484
    %v515 = vsub.f32 %v403, %v486
    %v516 = vsub.f32 %v404, %v488
    %v517 = vsub.f32 %v405, %v490
    %v518 = vsub.f32 %v406, %v492
    %v519 = vsub.f32 %v407, %v494
    %v520 = vsub.f32 %v408, %v496
    %v521 = vsub.f32 %v409, %v498
    %v522 = vsub.f32 %v410, %v500
    %v523 = vsub.f32 %v411, %v502
    %v524 = vsub.f32 %v412, %v504
    %v525 = vsub.f32 %v413, %v506
    %v526 = vsub.f32 %v414, %v508
    %v527 = vsub.f32 %v415, %v510
    %v528 = vsub.f32 %v416, %v512
    %529 = vst [vmem:[%s5] sm:$0xff] %v513
    %530 = vst [vmem:[%s5 + $0x8] sm:$0xff] %v514
    %531 = vst [vmem:[%s5 + $0x10] sm:$0xff] %v515
    %532 = vst [vmem:[%s5 + $0x18] sm:$0xff] %v516
    %533 = vst [vmem:[%s5 + $0x20] sm:$0xff] %v517
    %534 = vst [vmem:[%s5 + $0x28] sm:$0xff] %v518
    %535 = vst [vmem:[%s5 + $0x30] sm:$0xff] %v519
    %536 = vst [vmem:[%s5 + $0x38] sm:$0xff] %v520
    %537 = vst [vmem:[%s5 + $0x40] sm:$0xff] %v521
    %538 = vst [vmem:[%s5 + $0x48] sm:$0xff] %v522
    %539 = vst [vmem:[%s5 + $0x50] sm:$0xff] %v523
    %540 = vst [vmem:[%s5 + $0x58] sm:$0xff] %v524
    %541 = vst [vmem:[%s5 + $0x60] sm:$0xff] %v525
    %542 = vst [vmem:[%s5 + $0x68] sm:$0xff] %v526
    %543 = vst [vmem:[%s5 + $0x70] sm:$0xff] %v527
    %544 = vst [vmem:[%s5 + $0x78] sm:$0xff] %v528
    // Predicated region
    $region26: #{model_forward.21} parent=1 // pred_check
      _
    $region27: #{model_forward.21} parent=1 // pred_check_branch
      %546 = sbr.rel (0) target = $region29
    $region28: #{model_forward.21} parent=1 // pred_region
      _
    $region29: #{model_forward.21} parent=1 // pred_fallthru
      _
    // Predicated region
    $region30: #{model_forward.21} parent=1 // pred_check
      _
    $region31: #{model_forward.21} parent=1 // pred_check_branch
      %548 = sbr.rel (0) target = $region33
    $region32: #{model_forward.21} parent=1 // pred_region
      _
    $region33: #{model_forward.21} parent=1 // pred_fallthru
      _
    %549 = vsyncpa [#allocation3], 1

// kernel: model_forward.11
$region0: #{model_forward.11}
  #allocation0 [shape = 'u32[]', space=smem, size = 0x4, offset = 0x4, fixed_abs, tag = 'smem constant byte address 0x4 - core index']
  #allocation1 [shape = 'u32[72,128]{1,0:T(1,128)}', space=vmem, size = 0x9000, scoped, tag = 'internal scratch']
  %s0 = inlined_call_operand.vmem [shape: f32[128,128], index: 0, kind: input, shape index: {}]
  %s1 = inlined_call_operand.hbm [shape: f32[2,128,512], index: 1, kind: input, shape index: {}]
  %s2 = inlined_call_operand.vmem [shape: f32[2,1,512], index: 2, kind: input, shape index: {}]
  %s3 = inlined_call_operand.vmem [shape: bf16[2,128,512], index: 3, kind: output, shape index: {}]
  %s4 = sld [smem:[#allocation0]]
  $region26: #{model_forward.11} parent=0
    _
  %s6 = ssub.s32 1, %s4
  %s7 = scalar_select 0, %s6, %s4
  $region1: #{model_forward.11} parent=0
    #allocation2 [shape = 'u8[524288]{0}', space=vmem, size = 0x80000, scoped, tag = 'input window, operand 1, single buffered']
    #allocation3 [shape = 's32[1]{0}', space=sflag, size = 0x4, scoped, tag = 'scoped memory for model_forward.11']
    %8 = vsyncpa [#allocation3], 0
    // Predicated region
    $region2: #{model_forward.11} parent=1 // pred_check
      _
    $region3: #{model_forward.11} parent=1 // pred_check_branch
      %10 = sbr.rel (0) target = $region5
    $region4: #{model_forward.11} parent=1 // pred_region
      _
    $region5: #{model_forward.11} parent=1 // pred_fallthru
      _
    // Predicated region
    $region6: #{model_forward.11} parent=1 // pred_check
      _
    $region7: #{model_forward.11} parent=1 // pred_check_branch
      %12 = sbr.rel (0) target = $region9
    $region8: #{model_forward.11} parent=1 // pred_region
      %14 = vsyncadd [#allocation3], 0
      %s15 = sshll.u32 %s1, 4
      %s16 = int_to_ptr.hbm [resolvable:$true] %s15
      %s17 = sshll.u32 [#allocation2], 4
      %s18 = int_to_ptr.vmem [resolvable:$true] %s17
      %23 = dma.hbm_to_vmem [thread:$0]  %s16, 16384, %s18, [#allocation3], 512, 512, 32
    $region9: #{model_forward.11} parent=1 // pred_fallthru
      _
    // Predicated region
    $region10: #{model_forward.11} parent=1 // pred_check
      _
    $region11: #{model_forward.11} parent=1 // pred_check_branch
      %25 = sbr.rel (0) target = $region13
    $region12: #{model_forward.11} parent=1 // pred_region
      _
    $region13: #{model_forward.11} parent=1 // pred_fallthru
      _
    // Predicated region
    $region14: #{model_forward.11} parent=1 // pred_check
      _
    $region15: #{model_forward.11} parent=1 // pred_check_branch
      %27 = sbr.rel (0) target = $region17
    $region16: #{model_forward.11} parent=1 // pred_region
      %29 = dma.done [#allocation3], 16384
    $region17: #{model_forward.11} parent=1 // pred_fallthru
      _
    %v30 = vld [vmem:[%s0] sm:$0xff]
    %v31 = vld [vmem:[%s0 + $0x8] sm:$0xff]
    %v32 = vld [vmem:[%s0 + $0x10] sm:$0xff]
    %v33 = vld [vmem:[%s0 + $0x18] sm:$0xff]
    %v34 = vld [vmem:[%s0 + $0x20] sm:$0xff]
    %v35 = vld [vmem:[%s0 + $0x28] sm:$0xff]
    %v36 = vld [vmem:[%s0 + $0x30] sm:$0xff]
    %v37 = vld [vmem:[%s0 + $0x38] sm:$0xff]
    %v38 = vld [vmem:[%s0 + $0x40] sm:$0xff]
    %v39 = vld [vmem:[%s0 + $0x48] sm:$0xff]
    %v40 = vld [vmem:[%s0 + $0x50] sm:$0xff]
    %v41 = vld [vmem:[%s0 + $0x58] sm:$0xff]
    %v42 = vld [vmem:[%s0 + $0x60] sm:$0xff]
    %v43 = vld [vmem:[%s0 + $0x68] sm:$0xff]
    %v44 = vld [vmem:[%s0 + $0x70] sm:$0xff]
    %v45 = vld [vmem:[%s0 + $0x78] sm:$0xff]
    %v46 = vld [vmem:[#allocation2] sm:$0xff]
    %v47 = vld [vmem:[#allocation2 + $0x8] sm:$0xff]
    %v48 = vld [vmem:[#allocation2 + $0x10] sm:$0xff]
    %v49 = vld [vmem:[#allocation2 + $0x18] sm:$0xff]
    %v50 = vld [vmem:[#allocation2 + $0x20] sm:$0xff]
    %v51 = vld [vmem:[#allocation2 + $0x28] sm:$0xff]
    %v52 = vld [vmem:[#allocation2 + $0x30] sm:$0xff]
    %v53 = vld [vmem:[#allocation2 + $0x38] sm:$0xff]
    %v54 = vld [vmem:[#allocation2 + $0x40] sm:$0xff]
    %v55 = vld [vmem:[#allocation2 + $0x48] sm:$0xff]
    %v56 = vld [vmem:[#allocation2 + $0x50] sm:$0xff]
    %v57 = vld [vmem:[#allocation2 + $0x58] sm:$0xff]
    %v58 = vld [vmem:[#allocation2 + $0x60] sm:$0xff]
    %v59 = vld [vmem:[#allocation2 + $0x68] sm:$0xff]
    %v60 = vld [vmem:[#allocation2 + $0x70] sm:$0xff]
    %v61 = vld [vmem:[#allocation2 + $0x78] sm:$0xff]
    %v62 = vld [vmem:[#allocation2 + $0x80] sm:$0xff]
    %v63 = vld [vmem:[#allocation2 + $0x88] sm:$0xff]
    %v64 = vld [vmem:[#allocation2 + $0x90] sm:$0xff]
    %v65 = vld [vmem:[#allocation2 + $0x98] sm:$0xff]
    %v66 = vld [vmem:[#allocation2 + $0xa0] sm:$0xff]
    %v67 = vld [vmem:[#allocation2 + $0xa8] sm:$0xff]
    %v68 = vld [vmem:[#allocation2 + $0xb0] sm:$0xff]
    %v69 = vld [vmem:[#allocation2 + $0xb8] sm:$0xff]
    %v70 = vld [vmem:[#allocation2 + $0xc0] sm:$0xff]
    %v71 = vld [vmem:[#allocation2 + $0xc8] sm:$0xff]
    %v72 = vld [vmem:[#allocation2 + $0xd0] sm:$0xff]
    %v73 = vld [vmem:[#allocation2 + $0xd8] sm:$0xff]
    %v74 = vld [vmem:[#allocation2 + $0xe0] sm:$0xff]
    %v75 = vld [vmem:[#allocation2 + $0xe8] sm:$0xff]
    %v76 = vld [vmem:[#allocation2 + $0xf0] sm:$0xff]
    %v77 = vld [vmem:[#allocation2 + $0xf8] sm:$0xff]
    %v78 = vld [vmem:[#allocation2 + $0x100] sm:$0xff]
    %v79 = vld [vmem:[#allocation2 + $0x108] sm:$0xff]
    %v80 = vld [vmem:[#allocation2 + $0x110] sm:$0xff]
    %v81 = vld [vmem:[#allocation2 + $0x118] sm:$0xff]
    %v82 = vld [vmem:[#allocation2 + $0x120] sm:$0xff]
    %v83 = vld [vmem:[#allocation2 + $0x128] sm:$0xff]
    %v84 = vld [vmem:[#allocation2 + $0x130] sm:$0xff]
    %v85 = vld [vmem:[#allocation2 + $0x138] sm:$0xff]
    %v86 = vld [vmem:[#allocation2 + $0x140] sm:$0xff]
    %v87 = vld [vmem:[#allocation2 + $0x148] sm:$0xff]
    %v88 = vld [vmem:[#allocation2 + $0x150] sm:$0xff]
    %v89 = vld [vmem:[#allocation2 + $0x158] sm:$0xff]
    %v90 = vld [vmem:[#allocation2 + $0x160] sm:$0xff]
    %v91 = vld [vmem:[#allocation2 + $0x168] sm:$0xff]
    %v92 = vld [vmem:[#allocation2 + $0x170] sm:$0xff]
    %v93 = vld [vmem:[#allocation2 + $0x178] sm:$0xff]
    %v94 = vld [vmem:[#allocation2 + $0x180] sm:$0xff]
    %v95 = vld [vmem:[#allocation2 + $0x188] sm:$0xff]
    %v96 = vld [vmem:[#allocation2 + $0x190] sm:$0xff]
    %v97 = vld [vmem:[#allocation2 + $0x198] sm:$0xff]
    %v98 = vld [vmem:[#allocation2 + $0x1a0] sm:$0xff]
    %v99 = vld [vmem:[#allocation2 + $0x1a8] sm:$0xff]
    %v100 = vld [vmem:[#allocation2 + $0x1b0] sm:$0xff]
    %v101 = vld [vmem:[#allocation2 + $0x1b8] sm:$0xff]
    %v102 = vld [vmem:[#allocation2 + $0x1c0] sm:$0xff]
    %v103 = vld [vmem:[#allocation2 + $0x1c8] sm:$0xff]
    %v104 = vld [vmem:[#allocation2 + $0x1d0] sm:$0xff]
    %v105 = vld [vmem:[#allocation2 + $0x1d8] sm:$0xff]
    %v106 = vld [vmem:[#allocation2 + $0x1e0] sm:$0xff]
    %v107 = vld [vmem:[#allocation2 + $0x1e8] sm:$0xff]
    %v108 = vld [vmem:[#allocation2 + $0x1f0] sm:$0xff]
    %v109 = vld [vmem:[#allocation2 + $0x1f8] sm:$0xff]
    %v110 = vld [vmem:[%s2] sm:$0xf]
    %v112 = vperm.slane %v110, 0
    %v113 = vperm.slane %v110, 1
    %v114 = vperm.slane %v110, 2
    %v115 = vperm.slane %v110, 3
    %120 = vmatpush.msra.mxu0 %v106
    %121 = vmatpush.msra.mxu0 %v102
    %122 = vmatpush.msra.mxu0 %v98
    %123 = vmatpush.msra.mxu0 %v94
    %124 = vmatpush.msra.mxu0 %v90
    %125 = vmatpush.msra.mxu0 %v86
    %126 = vmatpush.msra.mxu0 %v82
    %127 = vmatpush.msra.mxu0 %v78
    %128 = vmatpush.msra.mxu0 %v74
    %129 = vmatpush.msra.mxu0 %v70
    %130 = vmatpush.msra.mxu0 %v66
    %131 = vmatpush.msra.mxu0 %v62
    %132 = vmatpush.msra.mxu0 %v58
    %133 = vmatpush.msra.mxu0 %v54
    %134 = vmatpush.msra.mxu0 %v50
    %135 = vmatpush.msra.mxu0 %v46
    %136 = vmatmul.f32.gmra.mxu0 %v30
    %v137 = vpop.f32.mrf.mxu0
    %v138 = vadd.f32 %v112, %v137
    %139 = vmatmul.f32.gmra.mxu0 %v31
    %v140 = vpop.f32.mrf.mxu0
    %v141 = vadd.f32 %v112, %v140
    %142 = vmatmul.f32.gmra.mxu0 %v32
    %v143 = vpop.f32.mrf.mxu0
    %v144 = vadd.f32 %v112, %v143
    %145 = vmatmul.f32.gmra.mxu0 %v33
    %v146 = vpop.f32.mrf.mxu0
    %v147 = vadd.f32 %v112, %v146
    %148 = vmatmul.f32.gmra.mxu0 %v34
    %v149 = vpop.f32.mrf.mxu0
    %v150 = vadd.f32 %v112, %v149
    %151 = vmatmul.f32.gmra.mxu0 %v35
    %v152 = vpop.f32.mrf.mxu0
    %v153 = vadd.f32 %v112, %v152
    %154 = vmatmul.f32.gmra.mxu0 %v36
    %v155 = vpop.f32.mrf.mxu0
    %v156 = vadd.f32 %v112, %v155
    %157 = vmatmul.f32.gmra.mxu0 %v37
    %v158 = vpop.f32.mrf.mxu0
    %v159 = vadd.f32 %v112, %v158
    %160 = vmatmul.f32.gmra.mxu0 %v38
    %v161 = vpop.f32.mrf.mxu0
    %v162 = vadd.f32 %v112, %v161
    %163 = vmatmul.f32.gmra.mxu0 %v39
    %v164 = vpop.f32.mrf.mxu0
    %v165 = vadd.f32 %v112, %v164
    %166 = vmatmul.f32.gmra.mxu0 %v40
    %v167 = vpop.f32.mrf.mxu0
    %v168 = vadd.f32 %v112, %v167
    %169 = vmatmul.f32.gmra.mxu0 %v41
    %v170 = vpop.f32.mrf.mxu0
    %v171 = vadd.f32 %v112, %v170
    %172 = vmatmul.f32.gmra.mxu0 %v42
    %v173 = vpop.f32.mrf.mxu0
    %v174 = vadd.f32 %v112, %v173
    %175 = vmatmul.f32.gmra.mxu0 %v43
    %v176 = vpop.f32.mrf.mxu0
    %v177 = vadd.f32 %v112, %v176
    %178 = vmatmul.f32.gmra.mxu0 %v44
    %v179 = vpop.f32.mrf.mxu0
    %v180 = vadd.f32 %v112, %v179
    %181 = vmatmul.f32.gmra.mxu0 %v45
    %v182 = vpop.f32.mrf.mxu0
    %v183 = vadd.f32 %v112, %v182
    %184 = vdwg.mxu0
    %185 = vmatpush.msra.mxu0 %v107
    %186 = vmatpush.msra.mxu0 %v103
    %187 = vmatpush.msra.mxu0 %v99
    %188 = vmatpush.msra.mxu0 %v95
    %189 = vmatpush.msra.mxu0 %v91
    %190 = vmatpush.msra.mxu0 %v87
    %191 = vmatpush.msra.mxu0 %v83
    %192 = vmatpush.msra.mxu0 %v79
    %193 = vmatpush.msra.mxu0 %v75
    %194 = vmatpush.msra.mxu0 %v71
    %195 = vmatpush.msra.mxu0 %v67
    %196 = vmatpush.msra.mxu0 %v63
    %197 = vmatpush.msra.mxu0 %v59
    %198 = vmatpush.msra.mxu0 %v55
    %199 = vmatpush.msra.mxu0 %v51
    %200 = vmatpush.msra.mxu0 %v47
    %201 = vmatmul.f32.gmra.mxu0 %v30
    %v202 = vpop.f32.mrf.mxu0
    %v203 = vadd.f32 %v113, %v202
    %204 = vmatmul.f32.gmra.mxu0 %v31
    %v205 = vpop.f32.mrf.mxu0
    %v206 = vadd.f32 %v113, %v205
    %207 = vmatmul.f32.gmra.mxu0 %v32
    %v208 = vpop.f32.mrf.mxu0
    %v209 = vadd.f32 %v113, %v208
    %210 = vmatmul.f32.gmra.mxu0 %v33
    %v211 = vpop.f32.mrf.mxu0
    %v212 = vadd.f32 %v113, %v211
    %213 = vmatmul.f32.gmra.mxu0 %v34
    %v214 = vpop.f32.mrf.mxu0
    %v215 = vadd.f32 %v113, %v214
    %216 = vmatmul.f32.gmra.mxu0 %v35
    %v217 = vpop.f32.mrf.mxu0
    %v218 = vadd.f32 %v113, %v217
    %219 = vmatmul.f32.gmra.mxu0 %v36
    %v220 = vpop.f32.mrf.mxu0
    %v221 = vadd.f32 %v113, %v220
    %222 = vmatmul.f32.gmra.mxu0 %v37
    %v223 = vpop.f32.mrf.mxu0
    %v224 = vadd.f32 %v113, %v223
    %225 = vmatmul.f32.gmra.mxu0 %v38
    %v226 = vpop.f32.mrf.mxu0
    %v227 = vadd.f32 %v113, %v226
    %228 = vmatmul.f32.gmra.mxu0 %v39
    %v229 = vpop.f32.mrf.mxu0
    %v230 = vadd.f32 %v113, %v229
    %231 = vmatmul.f32.gmra.mxu0 %v40
    %v232 = vpop.f32.mrf.mxu0
    %v233 = vadd.f32 %v113, %v232
    %234 = vmatmul.f32.gmra.mxu0 %v41
    %v235 = vpop.f32.mrf.mxu0
    %v236 = vadd.f32 %v113, %v235
    %237 = vmatmul.f32.gmra.mxu0 %v42
    %v238 = vpop.f32.mrf.mxu0
    %v239 = vadd.f32 %v113, %v238
    %240 = vmatmul.f32.gmra.mxu0 %v43
    %v241 = vpop.f32.mrf.mxu0
    %v242 = vadd.f32 %v113, %v241
    %243 = vmatmul.f32.gmra.mxu0 %v44
    %v244 = vpop.f32.mrf.mxu0
    %v245 = vadd.f32 %v113, %v244
    %246 = vmatmul.f32.gmra.mxu0 %v45
    %v247 = vpop.f32.mrf.mxu0
    %v248 = vadd.f32 %v113, %v247
    %249 = vdwg.mxu0
    %250 = vmatpush.msra.mxu0 %v108
    %251 = vmatpush.msra.mxu0 %v104
    %252 = vmatpush.msra.mxu0 %v100
    %253 = vmatpush.msra.mxu0 %v96
    %254 = vmatpush.msra.mxu0 %v92
    %255 = vmatpush.msra.mxu0 %v88
    %256 = vmatpush.msra.mxu0 %v84
    %257 = vmatpush.msra.mxu0 %v80
    %258 = vmatpush.msra.mxu0 %v76
    %259 = vmatpush.msra.mxu0 %v72
    %260 = vmatpush.msra.mxu0 %v68
    %261 = vmatpush.msra.mxu0 %v64
    %262 = vmatpush.msra.mxu0 %v60
    %263 = vmatpush.msra.mxu0 %v56
    %264 = vmatpush.msra.mxu0 %v52
    %265 = vmatpush.msra.mxu0 %v48
    %266 = vmatmul.f32.gmra.mxu0 %v30
    %v267 = vpop.f32.mrf.mxu0
    %v268 = vadd.f32 %v114, %v267
    %269 = vmatmul.f32.gmra.mxu0 %v31
    %v270 = vpop.f32.mrf.mxu0
    %v271 = vadd.f32 %v114, %v270
    %272 = vmatmul.f32.gmra.mxu0 %v32
    %v273 = vpop.f32.mrf.mxu0
    %v274 = vadd.f32 %v114, %v273
    %275 = vmatmul.f32.gmra.mxu0 %v33
    %v276 = vpop.f32.mrf.mxu0
    %v277 = vadd.f32 %v114, %v276
    %278 = vmatmul.f32.gmra.mxu0 %v34
    %v279 = vpop.f32.mrf.mxu0
    %v280 = vadd.f32 %v114, %v279
    %281 = vmatmul.f32.gmra.mxu0 %v35
    %v282 = vpop.f32.mrf.mxu0
    %v283 = vadd.f32 %v114, %v282
    %284 = vmatmul.f32.gmra.mxu0 %v36
    %v285 = vpop.f32.mrf.mxu0
    %v286 = vadd.f32 %v114, %v285
    %287 = vmatmul.f32.gmra.mxu0 %v37
    %v288 = vpop.f32.mrf.mxu0
    %v289 = vadd.f32 %v114, %v288
    %290 = vmatmul.f32.gmra.mxu0 %v38
    %v291 = vpop.f32.mrf.mxu0
    %v292 = vadd.f32 %v114, %v291
    %293 = vmatmul.f32.gmra.mxu0 %v39
    %v294 = vpop.f32.mrf.mxu0
    %v295 = vadd.f32 %v114, %v294
    %296 = vmatmul.f32.gmra.mxu0 %v40
    %v297 = vpop.f32.mrf.mxu0
    %v298 = vadd.f32 %v114, %v297
    %299 = vmatmul.f32.gmra.mxu0 %v41
    %v300 = vpop.f32.mrf.mxu0
    %v301 = vadd.f32 %v114, %v300
    %302 = vmatmul.f32.gmra.mxu0 %v42
    %v303 = vpop.f32.mrf.mxu0
    %v304 = vadd.f32 %v114, %v303
    %305 = vmatmul.f32.gmra.mxu0 %v43
    %v306 = vpop.f32.mrf.mxu0
    %v307 = vadd.f32 %v114, %v306
    %308 = vmatmul.f32.gmra.mxu0 %v44
    %v309 = vpop.f32.mrf.mxu0
    %v310 = vadd.f32 %v114, %v309
    %311 = vmatmul.f32.gmra.mxu0 %v45
    %v312 = vpop.f32.mrf.mxu0
    %v313 = vadd.f32 %v114, %v312
    %314 = vdwg.mxu0
    %315 = vmatpush.msra.mxu0 %v109
    %316 = vmatpush.msra.mxu0 %v105
    %317 = vmatpush.msra.mxu0 %v101
    %318 = vmatpush.msra.mxu0 %v97
    %319 = vmatpush.msra.mxu0 %v93
    %320 = vmatpush.msra.mxu0 %v89
    %321 = vmatpush.msra.mxu0 %v85
    %322 = vmatpush.msra.mxu0 %v81
    %323 = vmatpush.msra.mxu0 %v77
    %324 = vmatpush.msra.mxu0 %v73
    %325 = vmatpush.msra.mxu0 %v69
    %326 = vmatpush.msra.mxu0 %v65
    %327 = vmatpush.msra.mxu0 %v61
    %328 = vmatpush.msra.mxu0 %v57
    %329 = vmatpush.msra.mxu0 %v53
    %330 = vmatpush.msra.mxu0 %v49
    %331 = vmatmul.f32.gmra.mxu0 %v30
    %v332 = vpop.f32.mrf.mxu0
    %v333 = vadd.f32 %v115, %v332
    %334 = vmatmul.f32.gmra.mxu0 %v31
    %v335 = vpop.f32.mrf.mxu0
    %v336 = vadd.f32 %v115, %v335
    %337 = vmatmul.f32.gmra.mxu0 %v32
    %v338 = vpop.f32.mrf.mxu0
    %v339 = vadd.f32 %v115, %v338
    %340 = vmatmul.f32.gmra.mxu0 %v33
    %v341 = vpop.f32.mrf.mxu0
    %v342 = vadd.f32 %v115, %v341
    %343 = vmatmul.f32.gmra.mxu0 %v34
    %v344 = vpop.f32.mrf.mxu0
    %v345 = vadd.f32 %v115, %v344
    %346 = vmatmul.f32.gmra.mxu0 %v35
    %v347 = vpop.f32.mrf.mxu0
    %v348 = vadd.f32 %v115, %v347
    %349 = vmatmul.f32.gmra.mxu0 %v36
    %v350 = vpop.f32.mrf.mxu0
    %v351 = vadd.f32 %v115, %v350
    %352 = vmatmul.f32.gmra.mxu0 %v37
    %v353 = vpop.f32.mrf.mxu0
    %v354 = vadd.f32 %v115, %v353
    %355 = vmatmul.f32.gmra.mxu0 %v38
    %v356 = vpop.f32.mrf.mxu0
    %v357 = vadd.f32 %v115, %v356
    %358 = vmatmul.f32.gmra.mxu0 %v39
    %v359 = vpop.f32.mrf.mxu0
    %v360 = vadd.f32 %v115, %v359
    %361 = vmatmul.f32.gmra.mxu0 %v40
    %v362 = vpop.f32.mrf.mxu0
    %v363 = vadd.f32 %v115, %v362
    %364 = vmatmul.f32.gmra.mxu0 %v41
    %v365 = vpop.f32.mrf.mxu0
    %v366 = vadd.f32 %v115, %v365
    %367 = vmatmul.f32.gmra.mxu0 %v42
    %v368 = vpop.f32.mrf.mxu0
    %v369 = vadd.f32 %v115, %v368
    %370 = vmatmul.f32.gmra.mxu0 %v43
    %v371 = vpop.f32.mrf.mxu0
    %v372 = vadd.f32 %v115, %v371
    %373 = vmatmul.f32.gmra.mxu0 %v44
    %v374 = vpop.f32.mrf.mxu0
    %v375 = vadd.f32 %v115, %v374
    %376 = vmatmul.f32.gmra.mxu0 %v45
    %v377 = vpop.f32.mrf.mxu0
    %v378 = vadd.f32 %v115, %v377
    %379 = vdwg.mxu0
    %v380 = vpack.c.bf16 %v203, %v138
    %v381 = vpack.c.bf16 %v333, %v268
    %v382 = vpack.c.bf16 %v206, %v141
    %v383 = vpack.c.bf16 %v336, %v271
    %v384 = vpack.c.bf16 %v209, %v144
    %v385 = vpack.c.bf16 %v339, %v274
    %v386 = vpack.c.bf16 %v212, %v147
    %v387 = vpack.c.bf16 %v342, %v277
    %v388 = vpack.c.bf16 %v215, %v150
    %v389 = vpack.c.bf16 %v345, %v280
    %v390 = vpack.c.bf16 %v218, %v153
    %v391 = vpack.c.bf16 %v348, %v283
    %v392 = vpack.c.bf16 %v221, %v156
    %v393 = vpack.c.bf16 %v351, %v286
    %v394 = vpack.c.bf16 %v224, %v159
    %v395 = vpack.c.bf16 %v354, %v289
    %v396 = vpack.c.bf16 %v227, %v162
    %v397 = vpack.c.bf16 %v357, %v292
    %v398 = vpack.c.bf16 %v230, %v165
    %v399 = vpack.c.bf16 %v360, %v295
    %v400 = vpack.c.bf16 %v233, %v168
    %v401 = vpack.c.bf16 %v363, %v298
    %v402 = vpack.c.bf16 %v236, %v171
    %v403 = vpack.c.bf16 %v366, %v301
    %v404 = vpack.c.bf16 %v239, %v174
    %v405 = vpack.c.bf16 %v369, %v304
    %v406 = vpack.c.bf16 %v242, %v177
    %v407 = vpack.c.bf16 %v372, %v307
    %v408 = vpack.c.bf16 %v245, %v180
    %v409 = vpack.c.bf16 %v375, %v310
    %v410 = vpack.c.bf16 %v248, %v183
    %v411 = vpack.c.bf16 %v378, %v313
    %412 = vst [vmem:[%s3] sm:$0xff] %v380
    %413 = vst [vmem:[%s3 + $0x8] sm:$0xff] %v381
    %414 = vst [vmem:[%s3 + $0x10] sm:$0xff] %v382
    %415 = vst [vmem:[%s3 + $0x18] sm:$0xff] %v383
    %416 = vst [vmem:[%s3 + $0x20] sm:$0xff] %v384
    %417 = vst [vmem:[%s3 + $0x28] sm:$0xff] %v385
    %418 = vst [vmem:[%s3 + $0x30] sm:$0xff] %v386
    %419 = vst [vmem:[%s3 + $0x38] sm:$0xff] %v387
    %420 = vst [vmem:[%s3 + $0x40] sm:$0xff] %v388
    %421 = vst [vmem:[%s3 + $0x48] sm:$0xff] %v389
    %422 = vst [vmem:[%s3 + $0x50] sm:$0xff] %v390
    %423 = vst [vmem:[%s3 + $0x58] sm:$0xff] %v391
    %424 = vst [vmem:[%s3 + $0x60] sm:$0xff] %v392
    %425 = vst [vmem:[%s3 + $0x68] sm:$0xff] %v393
    %426 = vst [vmem:[%s3 + $0x70] sm:$0xff] %v394
    %427 = vst [vmem:[%s3 + $0x78] sm:$0xff] %v395
    %428 = vst [vmem:[%s3 + $0x80] sm:$0xff] %v396
    %429 = vst [vmem:[%s3 + $0x88] sm:$0xff] %v397
    %430 = vst [vmem:[%s3 + $0x90] sm:$0xff] %v398
    %431 = vst [vmem:[%s3 + $0x98] sm:$0xff] %v399
    %432 = vst [vmem:[%s3 + $0xa0] sm:$0xff] %v400
    %433 = vst [vmem:[%s3 + $0xa8] sm:$0xff] %v401
    %434 = vst [vmem:[%s3 + $0xb0] sm:$0xff] %v402
    %435 = vst [vmem:[%s3 + $0xb8] sm:$0xff] %v403
    %436 = vst [vmem:[%s3 + $0xc0] sm:$0xff] %v404
    %437 = vst [vmem:[%s3 + $0xc8] sm:$0xff] %v405
    %438 = vst [vmem:[%s3 + $0xd0] sm:$0xff] %v406
    %439 = vst [vmem:[%s3 + $0xd8] sm:$0xff] %v407
    %440 = vst [vmem:[%s3 + $0xe0] sm:$0xff] %v408
    %441 = vst [vmem:[%s3 + $0xe8] sm:$0xff] %v409
    %442 = vst [vmem:[%s3 + $0xf0] sm:$0xff] %v410
    %443 = vst [vmem:[%s3 + $0xf8] sm:$0xff] %v411
    %s444 = scalar_lea.vmem [#allocation2], 512
    %v445 = vld [vmem:[%s444] sm:$0xff]
    %v446 = vld [vmem:[%s444 + $0x8] sm:$0xff]
    %v447 = vld [vmem:[%s444 + $0x10] sm:$0xff]
    %v448 = vld [vmem:[%s444 + $0x18] sm:$0xff]
    %v449 = vld [vmem:[%s444 + $0x20] sm:$0xff]
    %v450 = vld [vmem:[%s444 + $0x28] sm:$0xff]
    %v451 = vld [vmem:[%s444 + $0x30] sm:$0xff]
    %v452 = vld [vmem:[%s444 + $0x38] sm:$0xff]
    %v453 = vld [vmem:[%s444 + $0x40] sm:$0xff]
    %v454 = vld [vmem:[%s444 + $0x48] sm:$0xff]
    %v455 = vld [vmem:[%s444 + $0x50] sm:$0xff]
    %v456 = vld [vmem:[%s444 + $0x58] sm:$0xff]
    %v457 = vld [vmem:[%s444 + $0x60] sm:$0xff]
    %v458 = vld [vmem:[%s444 + $0x68] sm:$0xff]
    %v459 = vld [vmem:[%s444 + $0x70] sm:$0xff]
    %v460 = vld [vmem:[%s444 + $0x78] sm:$0xff]
    %v461 = vld [vmem:[%s444 + $0x80] sm:$0xff]
    %v462 = vld [vmem:[%s444 + $0x88] sm:$0xff]
    %v463 = vld [vmem:[%s444 + $0x90] sm:$0xff]
    %v464 = vld [vmem:[%s444 + $0x98] sm:$0xff]
    %v465 = vld [vmem:[%s444 + $0xa0] sm:$0xff]
    %v466 = vld [vmem:[%s444 + $0xa8] sm:$0xff]
    %v467 = vld [vmem:[%s444 + $0xb0] sm:$0xff]
    %v468 = vld [vmem:[%s444 + $0xb8] sm:$0xff]
    %v469 = vld [vmem:[%s444 + $0xc0] sm:$0xff]
    %v470 = vld [vmem:[%s444 + $0xc8] sm:$0xff]
    %v471 = vld [vmem:[%s444 + $0xd0] sm:$0xff]
    %v472 = vld [vmem:[%s444 + $0xd8] sm:$0xff]
    %v473 = vld [vmem:[%s444 + $0xe0] sm:$0xff]
    %v474 = vld [vmem:[%s444 + $0xe8] sm:$0xff]
    %v475 = vld [vmem:[%s444 + $0xf0] sm:$0xff]
    %v476 = vld [vmem:[%s444 + $0xf8] sm:$0xff]
    %v477 = vld [vmem:[%s444 + $0x100] sm:$0xff]
    %v478 = vld [vmem:[%s444 + $0x108] sm:$0xff]
    %v479 = vld [vmem:[%s444 + $0x110] sm:$0xff]
    %v480 = vld [vmem:[%s444 + $0x118] sm:$0xff]
    %v481 = vld [vmem:[%s444 + $0x120] sm:$0xff]
    %v482 = vld [vmem:[%s444 + $0x128] sm:$0xff]
    %v483 = vld [vmem:[%s444 + $0x130] sm:$0xff]
    %v484 = vld [vmem:[%s444 + $0x138] sm:$0xff]
    %v485 = vld [vmem:[%s444 + $0x140] sm:$0xff]
    %v486 = vld [vmem:[%s444 + $0x148] sm:$0xff]
    %v487 = vld [vmem:[%s444 + $0x150] sm:$0xff]
    %v488 = vld [vmem:[%s444 + $0x158] sm:$0xff]
    %v489 = vld [vmem:[%s444 + $0x160] sm:$0xff]
    %v490 = vld [vmem:[%s444 + $0x168] sm:$0xff]
    %v491 = vld [vmem:[%s444 + $0x170] sm:$0xff]
    %v492 = vld [vmem:[%s444 + $0x178] sm:$0xff]
    %v493 = vld [vmem:[%s444 + $0x180] sm:$0xff]
    %v494 = vld [vmem:[%s444 + $0x188] sm:$0xff]
    %v495 = vld [vmem:[%s444 + $0x190] sm:$0xff]
    %v496 = vld [vmem:[%s444 + $0x198] sm:$0xff]
    %v497 = vld [vmem:[%s444 + $0x1a0] sm:$0xff]
    %v498 = vld [vmem:[%s444 + $0x1a8] sm:$0xff]
    %v499 = vld [vmem:[%s444 + $0x1b0] sm:$0xff]
    %v500 = vld [vmem:[%s444 + $0x1b8] sm:$0xff]
    %v501 = vld [vmem:[%s444 + $0x1c0] sm:$0xff]
    %v502 = vld [vmem:[%s444 + $0x1c8] sm:$0xff]
    %v503 = vld [vmem:[%s444 + $0x1d0] sm:$0xff]
    %v504 = vld [vmem:[%s444 + $0x1d8] sm:$0xff]
    %v505 = vld [vmem:[%s444 + $0x1e0] sm:$0xff]
    %v506 = vld [vmem:[%s444 + $0x1e8] sm:$0xff]
    %v507 = vld [vmem:[%s444 + $0x1f0] sm:$0xff]
    %v508 = vld [vmem:[%s444 + $0x1f8] sm:$0xff]
    %s509 = scalar_lea.vmem %s2, 4
    %v510 = vld [vmem:[%s509] sm:$0xf]
    %v512 = vperm.slane %v510, 0
    %v513 = vperm.slane %v510, 1
    %v514 = vperm.slane %v510, 2
    %v515 = vperm.slane %v510, 3
    %520 = vmatpush.msra.mxu0 %v505
    %521 = vmatpush.msra.mxu0 %v501
    %522 = vmatpush.msra.mxu0 %v497
    %523 = vmatpush.msra.mxu0 %v493
    %524 = vmatpush.msra.mxu0 %v489
    %525 = vmatpush.msra.mxu0 %v485
    %526 = vmatpush.msra.mxu0 %v481
    %527 = vmatpush.msra.mxu0 %v477
    %528 = vmatpush.msra.mxu0 %v473
    %529 = vmatpush.msra.mxu0 %v469
    %530 = vmatpush.msra.mxu0 %v465
    %531 = vmatpush.msra.mxu0 %v461
    %532 = vmatpush.msra.mxu0 %v457
    %533 = vmatpush.msra.mxu0 %v453
    %534 = vmatpush.msra.mxu0 %v449
    %535 = vmatpush.msra.mxu0 %v445
    %536 = vmatmul.f32.gmra.mxu0 %v30
    %v537 = vpop.f32.mrf.mxu0
    %v538 = vadd.f32 %v512, %v537
    %539 = vmatmul.f32.gmra.mxu0 %v31
    %v540 = vpop.f32.mrf.mxu0
    %v541 = vadd.f32 %v512, %v540
    %542 = vmatmul.f32.gmra.mxu0 %v32
    %v543 = vpop.f32.mrf.mxu0
    %v544 = vadd.f32 %v512, %v543
    %545 = vmatmul.f32.gmra.mxu0 %v33
    %v546 = vpop.f32.mrf.mxu0
    %v547 = vadd.f32 %v512, %v546
    %548 = vmatmul.f32.gmra.mxu0 %v34
    %v549 = vpop.f32.mrf.mxu0
    %v550 = vadd.f32 %v512, %v549
    %551 = vmatmul.f32.gmra.mxu0 %v35
    %v552 = vpop.f32.mrf.mxu0
    %v553 = vadd.f32 %v512, %v552
    %554 = vmatmul.f32.gmra.mxu0 %v36
    %v555 = vpop.f32.mrf.mxu0
    %v556 = vadd.f32 %v512, %v555
    %557 = vmatmul.f32.gmra.mxu0 %v37
    %v558 = vpop.f32.mrf.mxu0
    %v559 = vadd.f32 %v512, %v558
    %560 = vmatmul.f32.gmra.mxu0 %v38
    %v561 = vpop.f32.mrf.mxu0
    %v562 = vadd.f32 %v512, %v561
    %563 = vmatmul.f32.gmra.mxu0 %v39
    %v564 = vpop.f32.mrf.mxu0
    %v565 = vadd.f32 %v512, %v564
    %566 = vmatmul.f32.gmra.mxu0 %v40
    %v567 = vpop.f32.mrf.mxu0
    %v568 = vadd.f32 %v512, %v567
    %569 = vmatmul.f32.gmra.mxu0 %v41
    %v570 = vpop.f32.mrf.mxu0
    %v571 = vadd.f32 %v512, %v570
    %572 = vmatmul.f32.gmra.mxu0 %v42
    %v573 = vpop.f32.mrf.mxu0
    %v574 = vadd.f32 %v512, %v573
    %575 = vmatmul.f32.gmra.mxu0 %v43
    %v576 = vpop.f32.mrf.mxu0
    %v577 = vadd.f32 %v512, %v576
    %578 = vmatmul.f32.gmra.mxu0 %v44
    %v579 = vpop.f32.mrf.mxu0
    %v580 = vadd.f32 %v512, %v579
    %581 = vmatmul.f32.gmra.mxu0 %v45
    %v582 = vpop.f32.mrf.mxu0
    %v583 = vadd.f32 %v512, %v582
    %584 = vdwg.mxu0
    %585 = vmatpush.msra.mxu0 %v506
    %586 = vmatpush.msra.mxu0 %v502
    %587 = vmatpush.msra.mxu0 %v498
    %588 = vmatpush.msra.mxu0 %v494
    %589 = vmatpush.msra.mxu0 %v490
    %590 = vmatpush.msra.mxu0 %v486
    %591 = vmatpush.msra.mxu0 %v482
    %592 = vmatpush.msra.mxu0 %v478
    %593 = vmatpush.msra.mxu0 %v474
    %594 = vmatpush.msra.mxu0 %v470
    %595 = vmatpush.msra.mxu0 %v466
    %596 = vmatpush.msra.mxu0 %v462
    %597 = vmatpush.msra.mxu0 %v458
    %598 = vmatpush.msra.mxu0 %v454
    %599 = vmatpush.msra.mxu0 %v450
    %600 = vmatpush.msra.mxu0 %v446
    %601 = vmatmul.f32.gmra.mxu0 %v30
    %v602 = vpop.f32.mrf.mxu0
    %v603 = vadd.f32 %v513, %v602
    %604 = vmatmul.f32.gmra.mxu0 %v31
    %v605 = vpop.f32.mrf.mxu0
    %v606 = vadd.f32 %v513, %v605
    %607 = vmatmul.f32.gmra.mxu0 %v32
    %v608 = vpop.f32.mrf.mxu0
    %v609 = vadd.f32 %v513, %v608
    %610 = vmatmul.f32.gmra.mxu0 %v33
    %v611 = vpop.f32.mrf.mxu0
    %v612 = vadd.f32 %v513, %v611
    %613 = vmatmul.f32.gmra.mxu0 %v34
    %v614 = vpop.f32.mrf.mxu0
    %v615 = vadd.f32 %v513, %v614
    %616 = vmatmul.f32.gmra.mxu0 %v35
    %v617 = vpop.f32.mrf.mxu0
    %v618 = vadd.f32 %v513, %v617
    %619 = vmatmul.f32.gmra.mxu0 %v36
    %v620 = vpop.f32.mrf.mxu0
    %v621 = vadd.f32 %v513, %v620
    %622 = vmatmul.f32.gmra.mxu0 %v37
    %v623 = vpop.f32.mrf.mxu0
    %v624 = vadd.f32 %v513, %v623
    %625 = vmatmul.f32.gmra.mxu0 %v38
    %v626 = vpop.f32.mrf.mxu0
    %v627 = vadd.f32 %v513, %v626
    %628 = vmatmul.f32.gmra.mxu0 %v39
    %v629 = vpop.f32.mrf.mxu0
    %v630 = vadd.f32 %v513, %v629
    %631 = vmatmul.f32.gmra.mxu0 %v40
    %v632 = vpop.f32.mrf.mxu0
    %v633 = vadd.f32 %v513, %v632
    %634 = vmatmul.f32.gmra.mxu0 %v41
    %v635 = vpop.f32.mrf.mxu0
    %v636 = vadd.f32 %v513, %v635
    %637 = vmatmul.f32.gmra.mxu0 %v42
    %v638 = vpop.f32.mrf.mxu0
    %v639 = vadd.f32 %v513, %v638
    %640 = vmatmul.f32.gmra.mxu0 %v43
    %v641 = vpop.f32.mrf.mxu0
    %v642 = vadd.f32 %v513, %v641
    %643 = vmatmul.f32.gmra.mxu0 %v44
    %v644 = vpop.f32.mrf.mxu0
    %v645 = vadd.f32 %v513, %v644
    %646 = vmatmul.f32.gmra.mxu0 %v45
    %v647 = vpop.f32.mrf.mxu0
    %v648 = vadd.f32 %v513, %v647
    %649 = vdwg.mxu0
    %650 = vmatpush.msra.mxu0 %v507
    %651 = vmatpush.msra.mxu0 %v503
    %652 = vmatpush.msra.mxu0 %v499
    %653 = vmatpush.msra.mxu0 %v495
    %654 = vmatpush.msra.mxu0 %v491
    %655 = vmatpush.msra.mxu0 %v487
    %656 = vmatpush.msra.mxu0 %v483
    %657 = vmatpush.msra.mxu0 %v479
    %658 = vmatpush.msra.mxu0 %v475
    %659 = vmatpush.msra.mxu0 %v471
    %660 = vmatpush.msra.mxu0 %v467
    %661 = vmatpush.msra.mxu0 %v463
    %662 = vmatpush.msra.mxu0 %v459
    %663 = vmatpush.msra.mxu0 %v455
    %664 = vmatpush.msra.mxu0 %v451
    %665 = vmatpush.msra.mxu0 %v447
    %666 = vmatmul.f32.gmra.mxu0 %v30
    %v667 = vpop.f32.mrf.mxu0
    %v668 = vadd.f32 %v514, %v667
    %669 = vmatmul.f32.gmra.mxu0 %v31
    %v670 = vpop.f32.mrf.mxu0
    %v671 = vadd.f32 %v514, %v670
    %672 = vmatmul.f32.gmra.mxu0 %v32
    %v673 = vpop.f32.mrf.mxu0
    %v674 = vadd.f32 %v514, %v673
    %675 = vmatmul.f32.gmra.mxu0 %v33
    %v676 = vpop.f32.mrf.mxu0
    %v677 = vadd.f32 %v514, %v676
    %678 = vmatmul.f32.gmra.mxu0 %v34
    %v679 = vpop.f32.mrf.mxu0
    %v680 = vadd.f32 %v514, %v679
    %681 = vmatmul.f32.gmra.mxu0 %v35
    %v682 = vpop.f32.mrf.mxu0
    %v683 = vadd.f32 %v514, %v682
    %684 = vmatmul.f32.gmra.mxu0 %v36
    %v685 = vpop.f32.mrf.mxu0
    %v686 = vadd.f32 %v514, %v685
    %687 = vmatmul.f32.gmra.mxu0 %v37
    %v688 = vpop.f32.mrf.mxu0
    %v689 = vadd.f32 %v514, %v688
    %690 = vmatmul.f32.gmra.mxu0 %v38
    %v691 = vpop.f32.mrf.mxu0
    %v692 = vadd.f32 %v514, %v691
    %693 = vmatmul.f32.gmra.mxu0 %v39
    %v694 = vpop.f32.mrf.mxu0
    %v695 = vadd.f32 %v514, %v694
    %696 = vmatmul.f32.gmra.mxu0 %v40
    %v697 = vpop.f32.mrf.mxu0
    %v698 = vadd.f32 %v514, %v697
    %699 = vmatmul.f32.gmra.mxu0 %v41
    %v700 = vpop.f32.mrf.mxu0
    %v701 = vadd.f32 %v514, %v700
    %702 = vmatmul.f32.gmra.mxu0 %v42
    %v703 = vpop.f32.mrf.mxu0
    %v704 = vadd.f32 %v514, %v703
    %705 = vmatmul.f32.gmra.mxu0 %v43
    %v706 = vpop.f32.mrf.mxu0
    %v707 = vadd.f32 %v514, %v706
    %708 = vmatmul.f32.gmra.mxu0 %v44
    %v709 = vpop.f32.mrf.mxu0
    %v710 = vadd.f32 %v514, %v709
    %711 = vmatmul.f32.gmra.mxu0 %v45
    %v712 = vpop.f32.mrf.mxu0
    %v713 = vadd.f32 %v514, %v712
    %714 = vdwg.mxu0
    %715 = vmatpush.msra.mxu0 %v508
    %716 = vmatpush.msra.mxu0 %v504
    %717 = vmatpush.msra.mxu0 %v500
    %718 = vmatpush.msra.mxu0 %v496
    %719 = vmatpush.msra.mxu0 %v492
    %720 = vmatpush.msra.mxu0 %v488
    %721 = vmatpush.msra.mxu0 %v484
    %722 = vmatpush.msra.mxu0 %v480
    %723 = vmatpush.msra.mxu0 %v476
    %724 = vmatpush.msra.mxu0 %v472
    %725 = vmatpush.msra.mxu0 %v468
    %726 = vmatpush.msra.mxu0 %v464
    %727 = vmatpush.msra.mxu0 %v460
    %728 = vmatpush.msra.mxu0 %v456
    %729 = vmatpush.msra.mxu0 %v452
    %730 = vmatpush.msra.mxu0 %v448
    %731 = vmatmul.f32.gmra.mxu0 %v30
    %v732 = vpop.f32.mrf.mxu0
    %v733 = vadd.f32 %v515, %v732
    %734 = vmatmul.f32.gmra.mxu0 %v31
    %v735 = vpop.f32.mrf.mxu0
    %v736 = vadd.f32 %v515, %v735
    %737 = vmatmul.f32.gmra.mxu0 %v32
    %v738 = vpop.f32.mrf.mxu0
    %v739 = vadd.f32 %v515, %v738
    %740 = vmatmul.f32.gmra.mxu0 %v33
    %v741 = vpop.f32.mrf.mxu0
    %v742 = vadd.f32 %v515, %v741
    %743 = vmatmul.f32.gmra.mxu0 %v34
    %v744 = vpop.f32.mrf.mxu0
    %v745 = vadd.f32 %v515, %v744
    %746 = vmatmul.f32.gmra.mxu0 %v35
    %v747 = vpop.f32.mrf.mxu0
    %v748 = vadd.f32 %v515, %v747
    %749 = vmatmul.f32.gmra.mxu0 %v36
    %v750 = vpop.f32.mrf.mxu0
    %v751 = vadd.f32 %v515, %v750
    %752 = vmatmul.f32.gmra.mxu0 %v37
    %v753 = vpop.f32.mrf.mxu0
    %v754 = vadd.f32 %v515, %v753
    %755 = vmatmul.f32.gmra.mxu0 %v38
    %v756 = vpop.f32.mrf.mxu0
    %v757 = vadd.f32 %v515, %v756
    %758 = vmatmul.f32.gmra.mxu0 %v39
    %v759 = vpop.f32.mrf.mxu0
    %v760 = vadd.f32 %v515, %v759
    %761 = vmatmul.f32.gmra.mxu0 %v40
    %v762 = vpop.f32.mrf.mxu0
    %v763 = vadd.f32 %v515, %v762
    %764 = vmatmul.f32.gmra.mxu0 %v41
    %v765 = vpop.f32.mrf.mxu0
    %v766 = vadd.f32 %v515, %v765
    %767 = vmatmul.f32.gmra.mxu0 %v42
    %v768 = vpop.f32.mrf.mxu0
    %v769 = vadd.f32 %v515, %v768
    %770 = vmatmul.f32.gmra.mxu0 %v43
    %v771 = vpop.f32.mrf.mxu0
    %v772 = vadd.f32 %v515, %v771
    %773 = vmatmul.f32.gmra.mxu0 %v44
    %v774 = vpop.f32.mrf.mxu0
    %v775 = vadd.f32 %v515, %v774
    %776 = vmatmul.f32.gmra.mxu0 %v45
    %v777 = vpop.f32.mrf.mxu0
    %v778 = vadd.f32 %v515, %v777
    %779 = vdwg.mxu0
    %v780 = vpack.c.bf16 %v603, %v538
    %v781 = vpack.c.bf16 %v733, %v668
    %v782 = vpack.c.bf16 %v606, %v541
    %v783 = vpack.c.bf16 %v736, %v671
    %v784 = vpack.c.bf16 %v609, %v544
    %v785 = vpack.c.bf16 %v739, %v674
    %v786 = vpack.c.bf16 %v612, %v547
    %v787 = vpack.c.bf16 %v742, %v677
    %v788 = vpack.c.bf16 %v615, %v550
    %v789 = vpack.c.bf16 %v745, %v680
    %v790 = vpack.c.bf16 %v618, %v553
    %v791 = vpack.c.bf16 %v748, %v683
    %v792 = vpack.c.bf16 %v621, %v556
    %v793 = vpack.c.bf16 %v751, %v686
    %v794 = vpack.c.bf16 %v624, %v559
    %v795 = vpack.c.bf16 %v754, %v689
    %v796 = vpack.c.bf16 %v627, %v562
    %v797 = vpack.c.bf16 %v757, %v692
    %v798 = vpack.c.bf16 %v630, %v565
    %v799 = vpack.c.bf16 %v760, %v695
    %v800 = vpack.c.bf16 %v633, %v568
    %v801 = vpack.c.bf16 %v763, %v698
    %v802 = vpack.c.bf16 %v636, %v571
    %v803 = vpack.c.bf16 %v766, %v701
    %v804 = vpack.c.bf16 %v639, %v574
    %v805 = vpack.c.bf16 %v769, %v704
    %v806 = vpack.c.bf16 %v642, %v577
    %v807 = vpack.c.bf16 %v772, %v707
    %v808 = vpack.c.bf16 %v645, %v580
    %v809 = vpack.c.bf16 %v775, %v710
    %v810 = vpack.c.bf16 %v648, %v583
    %v811 = vpack.c.bf16 %v778, %v713
    %s812 = scalar_lea.vmem %s3, 256
    %813 = vst [vmem:[%s812] sm:$0xff] %v780
    %814 = vst [vmem:[%s812 + $0x8] sm:$0xff] %v781
    %815 = vst [vmem:[%s812 + $0x10] sm:$0xff] %v782
    %816 = vst [vmem:[%s812 + $0x18] sm:$0xff] %v783
    %817 = vst [vmem:[%s812 + $0x20] sm:$0xff] %v784
    %818 = vst [vmem:[%s812 + $0x28] sm:$0xff] %v785
    %819 = vst [vmem:[%s812 + $0x30] sm:$0xff] %v786
    %820 = vst [vmem:[%s812 + $0x38] sm:$0xff] %v787
    %821 = vst [vmem:[%s812 + $0x40] sm:$0xff] %v788
    %822 = vst [vmem:[%s812 + $0x48] sm:$0xff] %v789
    %823 = vst [vmem:[%s812 + $0x50] sm:$0xff] %v790
    %824 = vst [vmem:[%s812 + $0x58] sm:$0xff] %v791
    %825 = vst [vmem:[%s812 + $0x60] sm:$0xff] %v792
    %826 = vst [vmem:[%s812 + $0x68] sm:$0xff] %v793
    %827 = vst [vmem:[%s812 + $0x70] sm:$0xff] %v794
    %828 = vst [vmem:[%s812 + $0x78] sm:$0xff] %v795
    %829 = vst [vmem:[%s812 + $0x80] sm:$0xff] %v796
    %830 = vst [vmem:[%s812 + $0x88] sm:$0xff] %v797
    %831 = vst [vmem:[%s812 + $0x90] sm:$0xff] %v798
    %832 = vst [vmem:[%s812 + $0x98] sm:$0xff] %v799
    %833 = vst [vmem:[%s812 + $0xa0] sm:$0xff] %v800
    %834 = vst [vmem:[%s812 + $0xa8] sm:$0xff] %v801
    %835 = vst [vmem:[%s812 + $0xb0] sm:$0xff] %v802
    %836 = vst [vmem:[%s812 + $0xb8] sm:$0xff] %v803
    %837 = vst [vmem:[%s812 + $0xc0] sm:$0xff] %v804
    %838 = vst [vmem:[%s812 + $0xc8] sm:$0xff] %v805
    %839 = vst [vmem:[%s812 + $0xd0] sm:$0xff] %v806
    %840 = vst [vmem:[%s812 + $0xd8] sm:$0xff] %v807
    %841 = vst [vmem:[%s812 + $0xe0] sm:$0xff] %v808
    %842 = vst [vmem:[%s812 + $0xe8] sm:$0xff] %v809
    %843 = vst [vmem:[%s812 + $0xf0] sm:$0xff] %v810
    %844 = vst [vmem:[%s812 + $0xf8] sm:$0xff] %v811
    // Predicated region
    $region18: #{model_forward.11} parent=1 // pred_check
      _
    $region19: #{model_forward.11} parent=1 // pred_check_branch
      %846 = sbr.rel (0) target = $region21
    $region20: #{model_forward.11} parent=1 // pred_region
      _
    $region21: #{model_forward.11} parent=1 // pred_fallthru
      _
    // Predicated region
    $region22: #{model_forward.11} parent=1 // pred_check
      _
    $region23: #{model_forward.11} parent=1 // pred_check_branch
      %848 = sbr.rel (0) target = $region25
    $region24: #{model_forward.11} parent=1 // pred_region
      _
    $region25: #{model_forward.11} parent=1 // pred_fallthru
      _
    %849 = vsyncpa [#allocation3], 1

// kernel: model_forward.13
$region0: #{model_forward.13}
  #allocation0 [shape = 'u32[]', space=smem, size = 0x4, offset = 0x4, fixed_abs, tag = 'smem constant byte address 0x4 - core index']
  #allocation1 [shape = 'u32[72,128]{1,0:T(1,128)}', space=vmem, size = 0x9000, scoped, tag = 'internal scratch']
  %s0 = inlined_call_operand.vmem [shape: bf16[2,128,128], index: 0, kind: input, shape index: {}]
  %s1 = inlined_call_operand.hbm [shape: f32[2,128,512], index: 1, kind: input, shape index: {}]
  %s2 = inlined_call_operand.hbm [shape: f32[2,128,512], index: 2, kind: input, shape index: {}]
  %s3 = inlined_call_operand.vmem [shape: f32[2,1,512], index: 3, kind: input, shape index: {}]
  %s4 = inlined_call_operand.vmem [shape: bf16[2,128,512], index: 4, kind: output, shape index: {}]
  %s5 = sld [smem:[#allocation0]]
  $region34: #{model_forward.13} parent=0
    _
  %s7 = ssub.s32 1, %s5
  %s8 = scalar_select 0, %s7, %s5
  $region1: #{model_forward.13} parent=0
    #allocation2 [shape = 'u8[524288]{0}', space=vmem, size = 0x80000, scoped, tag = 'input window, operand 1, single buffered']
    #allocation3 [shape = 's32[1]{0}', space=sflag, size = 0x4, scoped, tag = 'scoped memory for model_forward.13']
    #allocation4 [shape = 'u8[524288]{0}', space=vmem, size = 0x80000, scoped, tag = 'input window, operand 2, single buffered']
    #allocation5 [shape = 's32[1]{0}', space=sflag, size = 0x4, scoped, tag = 'scoped memory for model_forward.13']
    %9 = vsyncpa [#allocation3], 0
    %10 = vsyncpa [#allocation5], 0
    // Predicated region
    $region2: #{model_forward.13} parent=1 // pred_check
      _
    $region3: #{model_forward.13} parent=1 // pred_check_branch
      %12 = sbr.rel (0) target = $region5
    $region4: #{model_forward.13} parent=1 // pred_region
      _
    $region5: #{model_forward.13} parent=1 // pred_fallthru
      _
    // Predicated region
    $region6: #{model_forward.13} parent=1 // pred_check
      _
    $region7: #{model_forward.13} parent=1 // pred_check_branch
      %14 = sbr.rel (0) target = $region9
    $region8: #{model_forward.13} parent=1 // pred_region
      %16 = vsyncadd [#allocation3], 0
      %s17 = sshll.u32 %s1, 4
      %s18 = int_to_ptr.hbm [resolvable:$true] %s17
      %s19 = sshll.u32 [#allocation2], 4
      %s20 = int_to_ptr.vmem [resolvable:$true] %s19
      %25 = dma.hbm_to_vmem [thread:$0]  %s18, 16384, %s20, [#allocation3], 512, 512, 32
    $region9: #{model_forward.13} parent=1 // pred_fallthru
      _
    // Predicated region
    $region10: #{model_forward.13} parent=1 // pred_check
      _
    $region11: #{model_forward.13} parent=1 // pred_check_branch
      %27 = sbr.rel (0) target = $region13
    $region12: #{model_forward.13} parent=1 // pred_region
      %29 = vsyncadd [#allocation5], 0
      %s30 = sshll.u32 %s2, 4
      %s31 = int_to_ptr.hbm [resolvable:$true] %s30
      %s32 = sshll.u32 [#allocation4], 4
      %s33 = int_to_ptr.vmem [resolvable:$true] %s32
      %38 = dma.hbm_to_vmem [thread:$0]  %s31, 16384, %s33, [#allocation5], 512, 512, 32
    $region13: #{model_forward.13} parent=1 // pred_fallthru
      _
    // Predicated region
    $region14: #{model_forward.13} parent=1 // pred_check
      _
    $region15: #{model_forward.13} parent=1 // pred_check_branch
      %40 = sbr.rel (0) target = $region17
    $region16: #{model_forward.13} parent=1 // pred_region
      _
    $region17: #{model_forward.13} parent=1 // pred_fallthru
      _
    // Predicated region
    $region18: #{model_forward.13} parent=1 // pred_check
      _
    $region19: #{model_forward.13} parent=1 // pred_check_branch
      %42 = sbr.rel (0) target = $region21
    $region20: #{model_forward.13} parent=1 // pred_region
      %44 = dma.done [#allocation3], 16384
    $region21: #{model_forward.13} parent=1 // pred_fallthru
      _
    // Predicated region
    $region22: #{model_forward.13} parent=1 // pred_check
      _
    $region23: #{model_forward.13} parent=1 // pred_check_branch
      %46 = sbr.rel (0) target = $region25
    $region24: #{model_forward.13} parent=1 // pred_region
      %48 = dma.done [#allocation5], 16384
    $region25: #{model_forward.13} parent=1 // pred_fallthru
      _
    %v49 = vld [vmem:[%s0] sm:$0xf]
    %v50 = vld [vmem:[%s0 + $0x4] sm:$0xf]
    %v51 = vld [vmem:[%s0 + $0x8] sm:$0xf]
    %v52 = vld [vmem:[%s0 + $0xc] sm:$0xf]
    %v53 = vld [vmem:[%s0 + $0x10] sm:$0xf]
    %v54 = vld [vmem:[%s0 + $0x14] sm:$0xf]
    %v55 = vld [vmem:[%s0 + $0x18] sm:$0xf]
    %v56 = vld [vmem:[%s0 + $0x1c] sm:$0xf]
    %v57 = vld [vmem:[%s0 + $0x20] sm:$0xf]
    %v58 = vld [vmem:[%s0 + $0x24] sm:$0xf]
    %v59 = vld [vmem:[%s0 + $0x28] sm:$0xf]
    %v60 = vld [vmem:[%s0 + $0x2c] sm:$0xf]
    %v61 = vld [vmem:[%s0 + $0x30] sm:$0xf]
    %v62 = vld [vmem:[%s0 + $0x34] sm:$0xf]
    %v63 = vld [vmem:[%s0 + $0x38] sm:$0xf]
    %v64 = vld [vmem:[%s0 + $0x3c] sm:$0xf]
    %v65 = vunpack.c.l.bf16 %v49
    %v66 = vunpack.c.l.bf16 %v50
    %v67 = vunpack.c.l.bf16 %v51
    %v68 = vunpack.c.l.bf16 %v52
    %v69 = vunpack.c.l.bf16 %v53
    %v70 = vunpack.c.l.bf16 %v54
    %v71 = vunpack.c.l.bf16 %v55
    %v72 = vunpack.c.l.bf16 %v56
    %v73 = vunpack.c.l.bf16 %v57
    %v74 = vunpack.c.l.bf16 %v58
    %v75 = vunpack.c.l.bf16 %v59
    %v76 = vunpack.c.l.bf16 %v60
    %v77 = vunpack.c.l.bf16 %v61
    %v78 = vunpack.c.l.bf16 %v62
    %v79 = vunpack.c.l.bf16 %v63
    %v80 = vunpack.c.l.bf16 %v64
    %s81 = scalar_lea.vmem %s0, 64
    %v82 = vld [vmem:[%s81] sm:$0xf]
    %v83 = vld [vmem:[%s81 + $0x4] sm:$0xf]
    %v84 = vld [vmem:[%s81 + $0x8] sm:$0xf]
    %v85 = vld [vmem:[%s81 + $0xc] sm:$0xf]
    %v86 = vld [vmem:[%s81 + $0x10] sm:$0xf]
    %v87 = vld [vmem:[%s81 + $0x14] sm:$0xf]
    %v88 = vld [vmem:[%s81 + $0x18] sm:$0xf]
    %v89 = vld [vmem:[%s81 + $0x1c] sm:$0xf]
    %v90 = vld [vmem:[%s81 + $0x20] sm:$0xf]
    %v91 = vld [vmem:[%s81 + $0x24] sm:$0xf]
    %v92 = vld [vmem:[%s81 + $0x28] sm:$0xf]
    %v93 = vld [vmem:[%s81 + $0x2c] sm:$0xf]
    %v94 = vld [vmem:[%s81 + $0x30] sm:$0xf]
    %v95 = vld [vmem:[%s81 + $0x34] sm:$0xf]
    %v96 = vld [vmem:[%s81 + $0x38] sm:$0xf]
    %v97 = vld [vmem:[%s81 + $0x3c] sm:$0xf]
    %v98 = vunpack.c.l.bf16 %v82
    %v99 = vunpack.c.l.bf16 %v83
    %v100 = vunpack.c.l.bf16 %v84
    %v101 = vunpack.c.l.bf16 %v85
    %v102 = vunpack.c.l.bf16 %v86
    %v103 = vunpack.c.l.bf16 %v87
    %v104 = vunpack.c.l.bf16 %v88
    %v105 = vunpack.c.l.bf16 %v89
    %v106 = vunpack.c.l.bf16 %v90
    %v107 = vunpack.c.l.bf16 %v91
    %v108 = vunpack.c.l.bf16 %v92
    %v109 = vunpack.c.l.bf16 %v93
    %v110 = vunpack.c.l.bf16 %v94
    %v111 = vunpack.c.l.bf16 %v95
    %v112 = vunpack.c.l.bf16 %v96
    %v113 = vunpack.c.l.bf16 %v97
    %v114 = vld [vmem:[#allocation2] sm:$0xff]
    %v115 = vld [vmem:[#allocation2 + $0x8] sm:$0xff]
    %v116 = vld [vmem:[#allocation2 + $0x10] sm:$0xff]
    %v117 = vld [vmem:[#allocation2 + $0x18] sm:$0xff]
    %v118 = vld [vmem:[#allocation2 + $0x20] sm:$0xff]
    %v119 = vld [vmem:[#allocation2 + $0x28] sm:$0xff]
    %v120 = vld [vmem:[#allocation2 + $0x30] sm:$0xff]
    %v121 = vld [vmem:[#allocation2 + $0x38] sm:$0xff]
    %v122 = vld [vmem:[#allocation2 + $0x40] sm:$0xff]
    %v123 = vld [vmem:[#allocation2 + $0x48] sm:$0xff]
    %v124 = vld [vmem:[#allocation2 + $0x50] sm:$0xff]
    %v125 = vld [vmem:[#allocation2 + $0x58] sm:$0xff]
    %v126 = vld [vmem:[#allocation2 + $0x60] sm:$0xff]
    %v127 = vld [vmem:[#allocation2 + $0x68] sm:$0xff]
    %v128 = vld [vmem:[#allocation2 + $0x70] sm:$0xff]
    %v129 = vld [vmem:[#allocation2 + $0x78] sm:$0xff]
    %v130 = vld [vmem:[#allocation2 + $0x80] sm:$0xff]
    %v131 = vld [vmem:[#allocation2 + $0x88] sm:$0xff]
    %v132 = vld [vmem:[#allocation2 + $0x90] sm:$0xff]
    %v133 = vld [vmem:[#allocation2 + $0x98] sm:$0xff]
    %v134 = vld [vmem:[#allocation2 + $0xa0] sm:$0xff]
    %v135 = vld [vmem:[#allocation2 + $0xa8] sm:$0xff]
    %v136 = vld [vmem:[#allocation2 + $0xb0] sm:$0xff]
    %v137 = vld [vmem:[#allocation2 + $0xb8] sm:$0xff]
    %v138 = vld [vmem:[#allocation2 + $0xc0] sm:$0xff]
    %v139 = vld [vmem:[#allocation2 + $0xc8] sm:$0xff]
    %v140 = vld [vmem:[#allocation2 + $0xd0] sm:$0xff]
    %v141 = vld [vmem:[#allocation2 + $0xd8] sm:$0xff]
    %v142 = vld [vmem:[#allocation2 + $0xe0] sm:$0xff]
    %v143 = vld [vmem:[#allocation2 + $0xe8] sm:$0xff]
    %v144 = vld [vmem:[#allocation2 + $0xf0] sm:$0xff]
    %v145 = vld [vmem:[#allocation2 + $0xf8] sm:$0xff]
    %v146 = vld [vmem:[#allocation2 + $0x100] sm:$0xff]
    %v147 = vld [vmem:[#allocation2 + $0x108] sm:$0xff]
    %v148 = vld [vmem:[#allocation2 + $0x110] sm:$0xff]
    %v149 = vld [vmem:[#allocation2 + $0x118] sm:$0xff]
    %v150 = vld [vmem:[#allocation2 + $0x120] sm:$0xff]
    %v151 = vld [vmem:[#allocation2 + $0x128] sm:$0xff]
    %v152 = vld [vmem:[#allocation2 + $0x130] sm:$0xff]
    %v153 = vld [vmem:[#allocation2 + $0x138] sm:$0xff]
    %v154 = vld [vmem:[#allocation2 + $0x140] sm:$0xff]
    %v155 = vld [vmem:[#allocation2 + $0x148] sm:$0xff]
    %v156 = vld [vmem:[#allocation2 + $0x150] sm:$0xff]
    %v157 = vld [vmem:[#allocation2 + $0x158] sm:$0xff]
    %v158 = vld [vmem:[#allocation2 + $0x160] sm:$0xff]
    %v159 = vld [vmem:[#allocation2 + $0x168] sm:$0xff]
    %v160 = vld [vmem:[#allocation2 + $0x170] sm:$0xff]
    %v161 = vld [vmem:[#allocation2 + $0x178] sm:$0xff]
    %v162 = vld [vmem:[#allocation2 + $0x180] sm:$0xff]
    %v163 = vld [vmem:[#allocation2 + $0x188] sm:$0xff]
    %v164 = vld [vmem:[#allocation2 + $0x190] sm:$0xff]
    %v165 = vld [vmem:[#allocation2 + $0x198] sm:$0xff]
    %v166 = vld [vmem:[#allocation2 + $0x1a0] sm:$0xff]
    %v167 = vld [vmem:[#allocation2 + $0x1a8] sm:$0xff]
    %v168 = vld [vmem:[#allocation2 + $0x1b0] sm:$0xff]
    %v169 = vld [vmem:[#allocation2 + $0x1b8] sm:$0xff]
    %v170 = vld [vmem:[#allocation2 + $0x1c0] sm:$0xff]
    %v171 = vld [vmem:[#allocation2 + $0x1c8] sm:$0xff]
    %v172 = vld [vmem:[#allocation2 + $0x1d0] sm:$0xff]
    %v173 = vld [vmem:[#allocation2 + $0x1d8] sm:$0xff]
    %v174 = vld [vmem:[#allocation2 + $0x1e0] sm:$0xff]
    %v175 = vld [vmem:[#allocation2 + $0x1e8] sm:$0xff]
    %v176 = vld [vmem:[#allocation2 + $0x1f0] sm:$0xff]
    %v177 = vld [vmem:[#allocation2 + $0x1f8] sm:$0xff]
    %v178 = vld [vmem:[#allocation4] sm:$0xff]
    %v179 = vld [vmem:[#allocation4 + $0x8] sm:$0xff]
    %v180 = vld [vmem:[#allocation4 + $0x10] sm:$0xff]
    %v181 = vld [vmem:[#allocation4 + $0x18] sm:$0xff]
    %v182 = vld [vmem:[#allocation4 + $0x20] sm:$0xff]
    %v183 = vld [vmem:[#allocation4 + $0x28] sm:$0xff]
    %v184 = vld [vmem:[#allocation4 + $0x30] sm:$0xff]
    %v185 = vld [vmem:[#allocation4 + $0x38] sm:$0xff]
    %v186 = vld [vmem:[#allocation4 + $0x40] sm:$0xff]
    %v187 = vld [vmem:[#allocation4 + $0x48] sm:$0xff]
    %v188 = vld [vmem:[#allocation4 + $0x50] sm:$0xff]
    %v189 = vld [vmem:[#allocation4 + $0x58] sm:$0xff]
    %v190 = vld [vmem:[#allocation4 + $0x60] sm:$0xff]
    %v191 = vld [vmem:[#allocation4 + $0x68] sm:$0xff]
    %v192 = vld [vmem:[#allocation4 + $0x70] sm:$0xff]
    %v193 = vld [vmem:[#allocation4 + $0x78] sm:$0xff]
    %v194 = vld [vmem:[#allocation4 + $0x80] sm:$0xff]
    %v195 = vld [vmem:[#allocation4 + $0x88] sm:$0xff]
    %v196 = vld [vmem:[#allocation4 + $0x90] sm:$0xff]
    %v197 = vld [vmem:[#allocation4 + $0x98] sm:$0xff]
    %v198 = vld [vmem:[#allocation4 + $0xa0] sm:$0xff]
    %v199 = vld [vmem:[#allocation4 + $0xa8] sm:$0xff]
    %v200 = vld [vmem:[#allocation4 + $0xb0] sm:$0xff]
    %v201 = vld [vmem:[#allocation4 + $0xb8] sm:$0xff]
    %v202 = vld [vmem:[#allocation4 + $0xc0] sm:$0xff]
    %v203 = vld [vmem:[#allocation4 + $0xc8] sm:$0xff]
    %v204 = vld [vmem:[#allocation4 + $0xd0] sm:$0xff]
    %v205 = vld [vmem:[#allocation4 + $0xd8] sm:$0xff]
    %v206 = vld [vmem:[#allocation4 + $0xe0] sm:$0xff]
    %v207 = vld [vmem:[#allocation4 + $0xe8] sm:$0xff]
    %v208 = vld [vmem:[#allocation4 + $0xf0] sm:$0xff]
    %v209 = vld [vmem:[#allocation4 + $0xf8] sm:$0xff]
    %v210 = vld [vmem:[#allocation4 + $0x100] sm:$0xff]
    %v211 = vld [vmem:[#allocation4 + $0x108] sm:$0xff]
    %v212 = vld [vmem:[#allocation4 + $0x110] sm:$0xff]
    %v213 = vld [vmem:[#allocation4 + $0x118] sm:$0xff]
    %v214 = vld [vmem:[#allocation4 + $0x120] sm:$0xff]
    %v215 = vld [vmem:[#allocation4 + $0x128] sm:$0xff]
    %v216 = vld [vmem:[#allocation4 + $0x130] sm:$0xff]
    %v217 = vld [vmem:[#allocation4 + $0x138] sm:$0xff]
    %v218 = vld [vmem:[#allocation4 + $0x140] sm:$0xff]
    %v219 = vld [vmem:[#allocation4 + $0x148] sm:$0xff]
    %v220 = vld [vmem:[#allocation4 + $0x150] sm:$0xff]
    %v221 = vld [vmem:[#allocation4 + $0x158] sm:$0xff]
    %v222 = vld [vmem:[#allocation4 + $0x160] sm:$0xff]
    %v223 = vld [vmem:[#allocation4 + $0x168] sm:$0xff]
    %v224 = vld [vmem:[#allocation4 + $0x170] sm:$0xff]
    %v225 = vld [vmem:[#allocation4 + $0x178] sm:$0xff]
    %v226 = vld [vmem:[#allocation4 + $0x180] sm:$0xff]
    %v227 = vld [vmem:[#allocation4 + $0x188] sm:$0xff]
    %v228 = vld [vmem:[#allocation4 + $0x190] sm:$0xff]
    %v229 = vld [vmem:[#allocation4 + $0x198] sm:$0xff]
    %v230 = vld [vmem:[#allocation4 + $0x1a0] sm:$0xff]
    %v231 = vld [vmem:[#allocation4 + $0x1a8] sm:$0xff]
    %v232 = vld [vmem:[#allocation4 + $0x1b0] sm:$0xff]
    %v233 = vld [vmem:[#allocation4 + $0x1b8] sm:$0xff]
    %v234 = vld [vmem:[#allocation4 + $0x1c0] sm:$0xff]
    %v235 = vld [vmem:[#allocation4 + $0x1c8] sm:$0xff]
    %v236 = vld [vmem:[#allocation4 + $0x1d0] sm:$0xff]
    %v237 = vld [vmem:[#allocation4 + $0x1d8] sm:$0xff]
    %v238 = vld [vmem:[#allocation4 + $0x1e0] sm:$0xff]
    %v239 = vld [vmem:[#allocation4 + $0x1e8] sm:$0xff]
    %v240 = vld [vmem:[#allocation4 + $0x1f0] sm:$0xff]
    %v241 = vld [vmem:[#allocation4 + $0x1f8] sm:$0xff]
    %242 = vmatpush.msra.mxu0 %v238
    %243 = vmatpush.msra.mxu0 %v234
    %244 = vmatpush.msra.mxu0 %v230
    %245 = vmatpush.msra.mxu0 %v226
    %246 = vmatpush.msra.mxu0 %v222
    %247 = vmatpush.msra.mxu0 %v218
    %248 = vmatpush.msra.mxu0 %v214
    %249 = vmatpush.msra.mxu0 %v210
    %250 = vmatpush.msra.mxu0 %v206
    %251 = vmatpush.msra.mxu0 %v202
    %252 = vmatpush.msra.mxu0 %v198
    %253 = vmatpush.msra.mxu0 %v194
    %254 = vmatpush.msra.mxu0 %v190
    %255 = vmatpush.msra.mxu0 %v186
    %256 = vmatpush.msra.mxu0 %v182
    %257 = vmatpush.msra.mxu0 %v178
    %258 = vmatmul.f32.gmra.mxu0 %v98
    %v259 = vpop.f32.mrf.mxu0
    %v260 = vadd.f32 0.0, %v259
    %261 = vmatmul.f32.gmra.mxu0 %v99
    %v262 = vpop.f32.mrf.mxu0
    %v263 = vadd.f32 0.0, %v262
    %264 = vmatmul.f32.gmra.mxu0 %v100
    %v265 = vpop.f32.mrf.mxu0
    %v266 = vadd.f32 0.0, %v265
    %267 = vmatmul.f32.gmra.mxu0 %v101
    %v268 = vpop.f32.mrf.mxu0
    %v269 = vadd.f32 0.0, %v268
    %270 = vmatmul.f32.gmra.mxu0 %v102
    %v271 = vpop.f32.mrf.mxu0
    %v272 = vadd.f32 0.0, %v271
    %273 = vmatmul.f32.gmra.mxu0 %v103
    %v274 = vpop.f32.mrf.mxu0
    %v275 = vadd.f32 0.0, %v274
    %276 = vmatmul.f32.gmra.mxu0 %v104
    %v277 = vpop.f32.mrf.mxu0
    %v278 = vadd.f32 0.0, %v277
    %279 = vmatmul.f32.gmra.mxu0 %v105
    %v280 = vpop.f32.mrf.mxu0
    %v281 = vadd.f32 0.0, %v280
    %282 = vmatmul.f32.gmra.mxu0 %v106
    %v283 = vpop.f32.mrf.mxu0
    %v284 = vadd.f32 0.0, %v283
    %285 = vmatmul.f32.gmra.mxu0 %v107
    %v286 = vpop.f32.mrf.mxu0
    %v287 = vadd.f32 0.0, %v286
    %288 = vmatmul.f32.gmra.mxu0 %v108
    %v289 = vpop.f32.mrf.mxu0
    %v290 = vadd.f32 0.0, %v289
    %291 = vmatmul.f32.gmra.mxu0 %v109
    %v292 = vpop.f32.mrf.mxu0
    %v293 = vadd.f32 0.0, %v292
    %294 = vmatmul.f32.gmra.mxu0 %v110
    %v295 = vpop.f32.mrf.mxu0
    %v296 = vadd.f32 0.0, %v295
    %297 = vmatmul.f32.gmra.mxu0 %v111
    %v298 = vpop.f32.mrf.mxu0
    %v299 = vadd.f32 0.0, %v298
    %300 = vmatmul.f32.gmra.mxu0 %v112
    %v301 = vpop.f32.mrf.mxu0
    %v302 = vadd.f32 0.0, %v301
    %303 = vmatmul.f32.gmra.mxu0 %v113
    %v304 = vpop.f32.mrf.mxu0
    %v305 = vadd.f32 0.0, %v304
    %306 = vdwg.mxu0
    %307 = vmatpush.msra.mxu0 %v239
    %308 = vmatpush.msra.mxu0 %v235
    %309 = vmatpush.msra.mxu0 %v231
    %310 = vmatpush.msra.mxu0 %v227
    %311 = vmatpush.msra.mxu0 %v223
    %312 = vmatpush.msra.mxu0 %v219
    %313 = vmatpush.msra.mxu0 %v215
    %314 = vmatpush.msra.mxu0 %v211
    %315 = vmatpush.msra.mxu0 %v207
    %316 = vmatpush.msra.mxu0 %v203
    %317 = vmatpush.msra.mxu0 %v199
    %318 = vmatpush.msra.mxu0 %v195
    %319 = vmatpush.msra.mxu0 %v191
    %320 = vmatpush.msra.mxu0 %v187
    %321 = vmatpush.msra.mxu0 %v183
    %322 = vmatpush.msra.mxu0 %v179
    %323 = vmatmul.f32.gmra.mxu0 %v98
    %v324 = vpop.f32.mrf.mxu0
    %v325 = vadd.f32 0.0, %v324
    %326 = vmatmul.f32.gmra.mxu0 %v99
    %v327 = vpop.f32.mrf.mxu0
    %v328 = vadd.f32 0.0, %v327
    %329 = vmatmul.f32.gmra.mxu0 %v100
    %v330 = vpop.f32.mrf.mxu0
    %v331 = vadd.f32 0.0, %v330
    %332 = vmatmul.f32.gmra.mxu0 %v101
    %v333 = vpop.f32.mrf.mxu0
    %v334 = vadd.f32 0.0, %v333
    %335 = vmatmul.f32.gmra.mxu0 %v102
    %v336 = vpop.f32.mrf.mxu0
    %v337 = vadd.f32 0.0, %v336
    %338 = vmatmul.f32.gmra.mxu0 %v103
    %v339 = vpop.f32.mrf.mxu0
    %v340 = vadd.f32 0.0, %v339
    %341 = vmatmul.f32.gmra.mxu0 %v104
    %v342 = vpop.f32.mrf.mxu0
    %v343 = vadd.f32 0.0, %v342
    %344 = vmatmul.f32.gmra.mxu0 %v105
    %v345 = vpop.f32.mrf.mxu0
    %v346 = vadd.f32 0.0, %v345
    %347 = vmatmul.f32.gmra.mxu0 %v106
    %v348 = vpop.f32.mrf.mxu0
    %v349 = vadd.f32 0.0, %v348
    %350 = vmatmul.f32.gmra.mxu0 %v107
    %v351 = vpop.f32.mrf.mxu0
    %v352 = vadd.f32 0.0, %v351
    %353 = vmatmul.f32.gmra.mxu0 %v108
    %v354 = vpop.f32.mrf.mxu0
    %v355 = vadd.f32 0.0, %v354
    %356 = vmatmul.f32.gmra.mxu0 %v109
    %v357 = vpop.f32.mrf.mxu0
    %v358 = vadd.f32 0.0, %v357
    %359 = vmatmul.f32.gmra.mxu0 %v110
    %v360 = vpop.f32.mrf.mxu0
    %v361 = vadd.f32 0.0, %v360
    %362 = vmatmul.f32.gmra.mxu0 %v111
    %v363 = vpop.f32.mrf.mxu0
    %v364 = vadd.f32 0.0, %v363
    %365 = vmatmul.f32.gmra.mxu0 %v112
    %v366 = vpop.f32.mrf.mxu0
    %v367 = vadd.f32 0.0, %v366
    %368 = vmatmul.f32.gmra.mxu0 %v113
    %v369 = vpop.f32.mrf.mxu0
    %v370 = vadd.f32 0.0, %v369
    %371 = vdwg.mxu0
    %372 = vmatpush.msra.mxu0 %v240
    %373 = vmatpush.msra.mxu0 %v236
    %374 = vmatpush.msra.mxu0 %v232
    %375 = vmatpush.msra.mxu0 %v228
    %376 = vmatpush.msra.mxu0 %v224
    %377 = vmatpush.msra.mxu0 %v220
    %378 = vmatpush.msra.mxu0 %v216
    %379 = vmatpush.msra.mxu0 %v212
    %380 = vmatpush.msra.mxu0 %v208
    %381 = vmatpush.msra.mxu0 %v204
    %382 = vmatpush.msra.mxu0 %v200
    %383 = vmatpush.msra.mxu0 %v196
    %384 = vmatpush.msra.mxu0 %v192
    %385 = vmatpush.msra.mxu0 %v188
    %386 = vmatpush.msra.mxu0 %v184
    %387 = vmatpush.msra.mxu0 %v180
    %388 = vmatmul.f32.gmra.mxu0 %v98
    %v389 = vpop.f32.mrf.mxu0
    %v390 = vadd.f32 0.0, %v389
    %391 = vmatmul.f32.gmra.mxu0 %v99
    %v392 = vpop.f32.mrf.mxu0
    %v393 = vadd.f32 0.0, %v392
    %394 = vmatmul.f32.gmra.mxu0 %v100
    %v395 = vpop.f32.mrf.mxu0
    %v396 = vadd.f32 0.0, %v395
    %397 = vmatmul.f32.gmra.mxu0 %v101
    %v398 = vpop.f32.mrf.mxu0
    %v399 = vadd.f32 0.0, %v398
    %400 = vmatmul.f32.gmra.mxu0 %v102
    %v401 = vpop.f32.mrf.mxu0
    %v402 = vadd.f32 0.0, %v401
    %403 = vmatmul.f32.gmra.mxu0 %v103
    %v404 = vpop.f32.mrf.mxu0
    %v405 = vadd.f32 0.0, %v404
    %406 = vmatmul.f32.gmra.mxu0 %v104
    %v407 = vpop.f32.mrf.mxu0
    %v408 = vadd.f32 0.0, %v407
    %409 = vmatmul.f32.gmra.mxu0 %v105
    %v410 = vpop.f32.mrf.mxu0
    %v411 = vadd.f32 0.0, %v410
    %412 = vmatmul.f32.gmra.mxu0 %v106
    %v413 = vpop.f32.mrf.mxu0
    %v414 = vadd.f32 0.0, %v413
    %415 = vmatmul.f32.gmra.mxu0 %v107
    %v416 = vpop.f32.mrf.mxu0
    %v417 = vadd.f32 0.0, %v416
    %418 = vmatmul.f32.gmra.mxu0 %v108
    %v419 = vpop.f32.mrf.mxu0
    %v420 = vadd.f32 0.0, %v419
    %421 = vmatmul.f32.gmra.mxu0 %v109
    %v422 = vpop.f32.mrf.mxu0
    %v423 = vadd.f32 0.0, %v422
    %424 = vmatmul.f32.gmra.mxu0 %v110
    %v425 = vpop.f32.mrf.mxu0
    %v426 = vadd.f32 0.0, %v425
    %427 = vmatmul.f32.gmra.mxu0 %v111
    %v428 = vpop.f32.mrf.mxu0
    %v429 = vadd.f32 0.0, %v428
    %430 = vmatmul.f32.gmra.mxu0 %v112
    %v431 = vpop.f32.mrf.mxu0
    %v432 = vadd.f32 0.0, %v431
    %433 = vmatmul.f32.gmra.mxu0 %v113
    %v434 = vpop.f32.mrf.mxu0
    %v435 = vadd.f32 0.0, %v434
    %436 = vdwg.mxu0
    %437 = vmatpush.msra.mxu0 %v241
    %438 = vmatpush.msra.mxu0 %v237
    %439 = vmatpush.msra.mxu0 %v233
    %440 = vmatpush.msra.mxu0 %v229
    %441 = vmatpush.msra.mxu0 %v225
    %442 = vmatpush.msra.mxu0 %v221
    %443 = vmatpush.msra.mxu0 %v217
    %444 = vmatpush.msra.mxu0 %v213
    %445 = vmatpush.msra.mxu0 %v209
    %446 = vmatpush.msra.mxu0 %v205
    %447 = vmatpush.msra.mxu0 %v201
    %448 = vmatpush.msra.mxu0 %v197
    %449 = vmatpush.msra.mxu0 %v193
    %450 = vmatpush.msra.mxu0 %v189
    %451 = vmatpush.msra.mxu0 %v185
    %452 = vmatpush.msra.mxu0 %v181
    %453 = vmatmul.f32.gmra.mxu0 %v98
    %v454 = vpop.f32.mrf.mxu0
    %v455 = vadd.f32 0.0, %v454
    %456 = vmatmul.f32.gmra.mxu0 %v99
    %v457 = vpop.f32.mrf.mxu0
    %v458 = vadd.f32 0.0, %v457
    %459 = vmatmul.f32.gmra.mxu0 %v100
    %v460 = vpop.f32.mrf.mxu0
    %v461 = vadd.f32 0.0, %v460
    %462 = vmatmul.f32.gmra.mxu0 %v101
    %v463 = vpop.f32.mrf.mxu0
    %v464 = vadd.f32 0.0, %v463
    %465 = vmatmul.f32.gmra.mxu0 %v102
    %v466 = vpop.f32.mrf.mxu0
    %v467 = vadd.f32 0.0, %v466
    %468 = vmatmul.f32.gmra.mxu0 %v103
    %v469 = vpop.f32.mrf.mxu0
    %v470 = vadd.f32 0.0, %v469
    %471 = vmatmul.f32.gmra.mxu0 %v104
    %v472 = vpop.f32.mrf.mxu0
    %v473 = vadd.f32 0.0, %v472
    %474 = vmatmul.f32.gmra.mxu0 %v105
    %v475 = vpop.f32.mrf.mxu0
    %v476 = vadd.f32 0.0, %v475
    %477 = vmatmul.f32.gmra.mxu0 %v106
    %v478 = vpop.f32.mrf.mxu0
    %v479 = vadd.f32 0.0, %v478
    %480 = vmatmul.f32.gmra.mxu0 %v107
    %v481 = vpop.f32.mrf.mxu0
    %v482 = vadd.f32 0.0, %v481
    %483 = vmatmul.f32.gmra.mxu0 %v108
    %v484 = vpop.f32.mrf.mxu0
    %v485 = vadd.f32 0.0, %v484
    %486 = vmatmul.f32.gmra.mxu0 %v109
    %v487 = vpop.f32.mrf.mxu0
    %v488 = vadd.f32 0.0, %v487
    %489 = vmatmul.f32.gmra.mxu0 %v110
    %v490 = vpop.f32.mrf.mxu0
    %v491 = vadd.f32 0.0, %v490
    %492 = vmatmul.f32.gmra.mxu0 %v111
    %v493 = vpop.f32.mrf.mxu0
    %v494 = vadd.f32 0.0, %v493
    %495 = vmatmul.f32.gmra.mxu0 %v112
    %v496 = vpop.f32.mrf.mxu0
    %v497 = vadd.f32 0.0, %v496
    %498 = vmatmul.f32.gmra.mxu0 %v113
    %v499 = vpop.f32.mrf.mxu0
    %v500 = vadd.f32 0.0, %v499
    %501 = vdwg.mxu0
    %502 = vmatpush.msra.mxu0 %v174
    %503 = vmatpush.msra.mxu0 %v170
    %504 = vmatpush.msra.mxu0 %v166
    %505 = vmatpush.msra.mxu0 %v162
    %506 = vmatpush.msra.mxu0 %v158
    %507 = vmatpush.msra.mxu0 %v154
    %508 = vmatpush.msra.mxu0 %v150
    %509 = vmatpush.msra.mxu0 %v146
    %510 = vmatpush.msra.mxu0 %v142
    %511 = vmatpush.msra.mxu0 %v138
    %512 = vmatpush.msra.mxu0 %v134
    %513 = vmatpush.msra.mxu0 %v130
    %514 = vmatpush.msra.mxu0 %v126
    %515 = vmatpush.msra.mxu0 %v122
    %516 = vmatpush.msra.mxu0 %v118
    %517 = vmatpush.msra.mxu0 %v114
    %518 = vmatmul.f32.gmra.mxu0 %v65
    %v519 = vpop.f32.mrf.mxu0
    %v520 = vadd.f32 %v260, %v519
    %521 = vmatmul.f32.gmra.mxu0 %v66
    %v522 = vpop.f32.mrf.mxu0
    %v523 = vadd.f32 %v263, %v522
    %524 = vmatmul.f32.gmra.mxu0 %v67
    %v525 = vpop.f32.mrf.mxu0
    %v526 = vadd.f32 %v266, %v525
    %527 = vmatmul.f32.gmra.mxu0 %v68
    %v528 = vpop.f32.mrf.mxu0
    %v529 = vadd.f32 %v269, %v528
    %530 = vmatmul.f32.gmra.mxu0 %v69
    %v531 = vpop.f32.mrf.mxu0
    %v532 = vadd.f32 %v272, %v531
    %533 = vmatmul.f32.gmra.mxu0 %v70
    %v534 = vpop.f32.mrf.mxu0
    %v535 = vadd.f32 %v275, %v534
    %536 = vmatmul.f32.gmra.mxu0 %v71
    %v537 = vpop.f32.mrf.mxu0
    %v538 = vadd.f32 %v278, %v537
    %539 = vmatmul.f32.gmra.mxu0 %v72
    %v540 = vpop.f32.mrf.mxu0
    %v541 = vadd.f32 %v281, %v540
    %542 = vmatmul.f32.gmra.mxu0 %v73
    %v543 = vpop.f32.mrf.mxu0
    %v544 = vadd.f32 %v284, %v543
    %545 = vmatmul.f32.gmra.mxu0 %v74
    %v546 = vpop.f32.mrf.mxu0
    %v547 = vadd.f32 %v287, %v546
    %548 = vmatmul.f32.gmra.mxu0 %v75
    %v549 = vpop.f32.mrf.mxu0
    %v550 = vadd.f32 %v290, %v549
    %551 = vmatmul.f32.gmra.mxu0 %v76
    %v552 = vpop.f32.mrf.mxu0
    %v553 = vadd.f32 %v293, %v552
    %554 = vmatmul.f32.gmra.mxu0 %v77
    %v555 = vpop.f32.mrf.mxu0
    %v556 = vadd.f32 %v296, %v555
    %557 = vmatmul.f32.gmra.mxu0 %v78
    %v558 = vpop.f32.mrf.mxu0
    %v559 = vadd.f32 %v299, %v558
    %560 = vmatmul.f32.gmra.mxu0 %v79
    %v561 = vpop.f32.mrf.mxu0
    %v562 = vadd.f32 %v302, %v561
    %563 = vmatmul.f32.gmra.mxu0 %v80
    %v564 = vpop.f32.mrf.mxu0
    %v565 = vadd.f32 %v305, %v564
    %566 = vdwg.mxu0
    %567 = vmatpush.msra.mxu0 %v175
    %568 = vmatpush.msra.mxu0 %v171
    %569 = vmatpush.msra.mxu0 %v167
    %570 = vmatpush.msra.mxu0 %v163
    %571 = vmatpush.msra.mxu0 %v159
    %572 = vmatpush.msra.mxu0 %v155
    %573 = vmatpush.msra.mxu0 %v151
    %574 = vmatpush.msra.mxu0 %v147
    %575 = vmatpush.msra.mxu0 %v143
    %576 = vmatpush.msra.mxu0 %v139
    %577 = vmatpush.msra.mxu0 %v135
    %578 = vmatpush.msra.mxu0 %v131
    %579 = vmatpush.msra.mxu0 %v127
    %580 = vmatpush.msra.mxu0 %v123
    %581 = vmatpush.msra.mxu0 %v119
    %582 = vmatpush.msra.mxu0 %v115
    %583 = vmatmul.f32.gmra.mxu0 %v65
    %v584 = vpop.f32.mrf.mxu0
    %v585 = vadd.f32 %v325, %v584
    %586 = vmatmul.f32.gmra.mxu0 %v66
    %v587 = vpop.f32.mrf.mxu0
    %v588 = vadd.f32 %v328, %v587
    %589 = vmatmul.f32.gmra.mxu0 %v67
    %v590 = vpop.f32.mrf.mxu0
    %v591 = vadd.f32 %v331, %v590
    %592 = vmatmul.f32.gmra.mxu0 %v68
    %v593 = vpop.f32.mrf.mxu0
    %v594 = vadd.f32 %v334, %v593
    %595 = vmatmul.f32.gmra.mxu0 %v69
    %v596 = vpop.f32.mrf.mxu0
    %v597 = vadd.f32 %v337, %v596
    %598 = vmatmul.f32.gmra.mxu0 %v70
    %v599 = vpop.f32.mrf.mxu0
    %v600 = vadd.f32 %v340, %v599
    %601 = vmatmul.f32.gmra.mxu0 %v71
    %v602 = vpop.f32.mrf.mxu0
    %v603 = vadd.f32 %v343, %v602
    %604 = vmatmul.f32.gmra.mxu0 %v72
    %v605 = vpop.f32.mrf.mxu0
    %v606 = vadd.f32 %v346, %v605
    %607 = vmatmul.f32.gmra.mxu0 %v73
    %v608 = vpop.f32.mrf.mxu0
    %v609 = vadd.f32 %v349, %v608
    %610 = vmatmul.f32.gmra.mxu0 %v74
    %v611 = vpop.f32.mrf.mxu0
    %v612 = vadd.f32 %v352, %v611
    %613 = vmatmul.f32.gmra.mxu0 %v75
    %v614 = vpop.f32.mrf.mxu0
    %v615 = vadd.f32 %v355, %v614
    %616 = vmatmul.f32.gmra.mxu0 %v76
    %v617 = vpop.f32.mrf.mxu0
    %v618 = vadd.f32 %v358, %v617
    %619 = vmatmul.f32.gmra.mxu0 %v77
    %v620 = vpop.f32.mrf.mxu0
    %v621 = vadd.f32 %v361, %v620
    %622 = vmatmul.f32.gmra.mxu0 %v78
    %v623 = vpop.f32.mrf.mxu0
    %v624 = vadd.f32 %v364, %v623
    %625 = vmatmul.f32.gmra.mxu0 %v79
    %v626 = vpop.f32.mrf.mxu0
    %v627 = vadd.f32 %v367, %v626
    %628 = vmatmul.f32.gmra.mxu0 %v80
    %v629 = vpop.f32.mrf.mxu0
    %v630 = vadd.f32 %v370, %v629
    %631 = vdwg.mxu0
    %632 = vmatpush.msra.mxu0 %v176
    %633 = vmatpush.msra.mxu0 %v172
    %634 = vmatpush.msra.mxu0 %v168
    %635 = vmatpush.msra.mxu0 %v164
    %636 = vmatpush.msra.mxu0 %v160
    %637 = vmatpush.msra.mxu0 %v156
    %638 = vmatpush.msra.mxu0 %v152
    %639 = vmatpush.msra.mxu0 %v148
    %640 = vmatpush.msra.mxu0 %v144
    %641 = vmatpush.msra.mxu0 %v140
    %642 = vmatpush.msra.mxu0 %v136
    %643 = vmatpush.msra.mxu0 %v132
    %644 = vmatpush.msra.mxu0 %v128
    %645 = vmatpush.msra.mxu0 %v124
    %646 = vmatpush.msra.mxu0 %v120
    %647 = vmatpush.msra.mxu0 %v116
    %648 = vmatmul.f32.gmra.mxu0 %v65
    %v649 = vpop.f32.mrf.mxu0
    %v650 = vadd.f32 %v390, %v649
    %651 = vmatmul.f32.gmra.mxu0 %v66
    %v652 = vpop.f32.mrf.mxu0
    %v653 = vadd.f32 %v393, %v652
    %654 = vmatmul.f32.gmra.mxu0 %v67
    %v655 = vpop.f32.mrf.mxu0
    %v656 = vadd.f32 %v396, %v655
    %657 = vmatmul.f32.gmra.mxu0 %v68
    %v658 = vpop.f32.mrf.mxu0
    %v659 = vadd.f32 %v399, %v658
    %660 = vmatmul.f32.gmra.mxu0 %v69
    %v661 = vpop.f32.mrf.mxu0
    %v662 = vadd.f32 %v402, %v661
    %663 = vmatmul.f32.gmra.mxu0 %v70
    %v664 = vpop.f32.mrf.mxu0
    %v665 = vadd.f32 %v405, %v664
    %666 = vmatmul.f32.gmra.mxu0 %v71
    %v667 = vpop.f32.mrf.mxu0
    %v668 = vadd.f32 %v408, %v667
    %669 = vmatmul.f32.gmra.mxu0 %v72
    %v670 = vpop.f32.mrf.mxu0
    %v671 = vadd.f32 %v411, %v670
    %672 = vmatmul.f32.gmra.mxu0 %v73
    %v673 = vpop.f32.mrf.mxu0
    %v674 = vadd.f32 %v414, %v673
    %675 = vmatmul.f32.gmra.mxu0 %v74
    %v676 = vpop.f32.mrf.mxu0
    %v677 = vadd.f32 %v417, %v676
    %678 = vmatmul.f32.gmra.mxu0 %v75
    %v679 = vpop.f32.mrf.mxu0
    %v680 = vadd.f32 %v420, %v679
    %681 = vmatmul.f32.gmra.mxu0 %v76
    %v682 = vpop.f32.mrf.mxu0
    %v683 = vadd.f32 %v423, %v682
    %684 = vmatmul.f32.gmra.mxu0 %v77
    %v685 = vpop.f32.mrf.mxu0
    %v686 = vadd.f32 %v426, %v685
    %687 = vmatmul.f32.gmra.mxu0 %v78
    %v688 = vpop.f32.mrf.mxu0
    %v689 = vadd.f32 %v429, %v688
    %690 = vmatmul.f32.gmra.mxu0 %v79
    %v691 = vpop.f32.mrf.mxu0
    %v692 = vadd.f32 %v432, %v691
    %693 = vmatmul.f32.gmra.mxu0 %v80
    %v694 = vpop.f32.mrf.mxu0
    %v695 = vadd.f32 %v435, %v694
    %696 = vdwg.mxu0
    %697 = vmatpush.msra.mxu0 %v177
    %698 = vmatpush.msra.mxu0 %v173
    %699 = vmatpush.msra.mxu0 %v169
    %700 = vmatpush.msra.mxu0 %v165
    %701 = vmatpush.msra.mxu0 %v161
    %702 = vmatpush.msra.mxu0 %v157
    %703 = vmatpush.msra.mxu0 %v153
    %704 = vmatpush.msra.mxu0 %v149
    %705 = vmatpush.msra.mxu0 %v145
    %706 = vmatpush.msra.mxu0 %v141
    %707 = vmatpush.msra.mxu0 %v137
    %708 = vmatpush.msra.mxu0 %v133
    %709 = vmatpush.msra.mxu0 %v129
    %710 = vmatpush.msra.mxu0 %v125
    %711 = vmatpush.msra.mxu0 %v121
    %712 = vmatpush.msra.mxu0 %v117
    %713 = vmatmul.f32.gmra.mxu0 %v65
    %v714 = vpop.f32.mrf.mxu0
    %v715 = vadd.f32 %v455, %v714
    %716 = vmatmul.f32.gmra.mxu0 %v66
    %v717 = vpop.f32.mrf.mxu0
    %v718 = vadd.f32 %v458, %v717
    %719 = vmatmul.f32.gmra.mxu0 %v67
    %v720 = vpop.f32.mrf.mxu0
    %v721 = vadd.f32 %v461, %v720
    %722 = vmatmul.f32.gmra.mxu0 %v68
    %v723 = vpop.f32.mrf.mxu0
    %v724 = vadd.f32 %v464, %v723
    %725 = vmatmul.f32.gmra.mxu0 %v69
    %v726 = vpop.f32.mrf.mxu0
    %v727 = vadd.f32 %v467, %v726
    %728 = vmatmul.f32.gmra.mxu0 %v70
    %v729 = vpop.f32.mrf.mxu0
    %v730 = vadd.f32 %v470, %v729
    %731 = vmatmul.f32.gmra.mxu0 %v71
    %v732 = vpop.f32.mrf.mxu0
    %v733 = vadd.f32 %v473, %v732
    %734 = vmatmul.f32.gmra.mxu0 %v72
    %v735 = vpop.f32.mrf.mxu0
    %v736 = vadd.f32 %v476, %v735
    %737 = vmatmul.f32.gmra.mxu0 %v73
    %v738 = vpop.f32.mrf.mxu0
    %v739 = vadd.f32 %v479, %v738
    %740 = vmatmul.f32.gmra.mxu0 %v74
    %v741 = vpop.f32.mrf.mxu0
    %v742 = vadd.f32 %v482, %v741
    %743 = vmatmul.f32.gmra.mxu0 %v75
    %v744 = vpop.f32.mrf.mxu0
    %v745 = vadd.f32 %v485, %v744
    %746 = vmatmul.f32.gmra.mxu0 %v76
    %v747 = vpop.f32.mrf.mxu0
    %v748 = vadd.f32 %v488, %v747
    %749 = vmatmul.f32.gmra.mxu0 %v77
    %v750 = vpop.f32.mrf.mxu0
    %v751 = vadd.f32 %v491, %v750
    %752 = vmatmul.f32.gmra.mxu0 %v78
    %v753 = vpop.f32.mrf.mxu0
    %v754 = vadd.f32 %v494, %v753
    %755 = vmatmul.f32.gmra.mxu0 %v79
    %v756 = vpop.f32.mrf.mxu0
    %v757 = vadd.f32 %v497, %v756
    %758 = vmatmul.f32.gmra.mxu0 %v80
    %v759 = vpop.f32.mrf.mxu0
    %v760 = vadd.f32 %v500, %v759
    %761 = vdwg.mxu0
    %v762 = vld [vmem:[%s3] sm:$0xf]
    %v764 = vperm.slane %v762, 0
    %v765 = vperm.slane %v762, 1
    %v766 = vperm.slane %v762, 2
    %v767 = vperm.slane %v762, 3
    %v772 = vadd.f32 %v520, %v764
    %v773 = vadd.f32 %v585, %v765
    %v774 = vadd.f32 %v650, %v766
    %v775 = vadd.f32 %v715, %v767
    %v776 = vadd.f32 %v523, %v764
    %v777 = vadd.f32 %v588, %v765
    %v778 = vadd.f32 %v653, %v766
    %v779 = vadd.f32 %v718, %v767
    %v780 = vadd.f32 %v526, %v764
    %v781 = vadd.f32 %v591, %v765
    %v782 = vadd.f32 %v656, %v766
    %v783 = vadd.f32 %v721, %v767
    %v784 = vadd.f32 %v529, %v764
    %v785 = vadd.f32 %v594, %v765
    %v786 = vadd.f32 %v659, %v766
    %v787 = vadd.f32 %v724, %v767
    %v788 = vadd.f32 %v532, %v764
    %v789 = vadd.f32 %v597, %v765
    %v790 = vadd.f32 %v662, %v766
    %v791 = vadd.f32 %v727, %v767
    %v792 = vadd.f32 %v535, %v764
    %v793 = vadd.f32 %v600, %v765
    %v794 = vadd.f32 %v665, %v766
    %v795 = vadd.f32 %v730, %v767
    %v796 = vadd.f32 %v538, %v764
    %v797 = vadd.f32 %v603, %v765
    %v798 = vadd.f32 %v668, %v766
    %v799 = vadd.f32 %v733, %v767
    %v800 = vadd.f32 %v541, %v764
    %v801 = vadd.f32 %v606, %v765
    %v802 = vadd.f32 %v671, %v766
    %v803 = vadd.f32 %v736, %v767
    %v804 = vadd.f32 %v544, %v764
    %v805 = vadd.f32 %v609, %v765
    %v806 = vadd.f32 %v674, %v766
    %v807 = vadd.f32 %v739, %v767
    %v808 = vadd.f32 %v547, %v764
    %v809 = vadd.f32 %v612, %v765
    %v810 = vadd.f32 %v677, %v766
    %v811 = vadd.f32 %v742, %v767
    %v812 = vadd.f32 %v550, %v764
    %v813 = vadd.f32 %v615, %v765
    %v814 = vadd.f32 %v680, %v766
    %v815 = vadd.f32 %v745, %v767
    %v816 = vadd.f32 %v553, %v764
    %v817 = vadd.f32 %v618, %v765
    %v818 = vadd.f32 %v683, %v766
    %v819 = vadd.f32 %v748, %v767
    %v820 = vadd.f32 %v556, %v764
    %v821 = vadd.f32 %v621, %v765
    %v822 = vadd.f32 %v686, %v766
    %v823 = vadd.f32 %v751, %v767
    %v824 = vadd.f32 %v559, %v764
    %v825 = vadd.f32 %v624, %v765
    %v826 = vadd.f32 %v689, %v766
    %v827 = vadd.f32 %v754, %v767
    %v828 = vadd.f32 %v562, %v764
    %v829 = vadd.f32 %v627, %v765
    %v830 = vadd.f32 %v692, %v766
    %v831 = vadd.f32 %v757, %v767
    %v832 = vadd.f32 %v565, %v764
    %v833 = vadd.f32 %v630, %v765
    %v834 = vadd.f32 %v695, %v766
    %v835 = vadd.f32 %v760, %v767
    %v836 = vpack.c.bf16 %v773, %v772
    %v837 = vpack.c.bf16 %v775, %v774
    %v838 = vpack.c.bf16 %v777, %v776
    %v839 = vpack.c.bf16 %v779, %v778
    %v840 = vpack.c.bf16 %v781, %v780
    %v841 = vpack.c.bf16 %v783, %v782
    %v842 = vpack.c.bf16 %v785, %v784
    %v843 = vpack.c.bf16 %v787, %v786
    %v844 = vpack.c.bf16 %v789, %v788
    %v845 = vpack.c.bf16 %v791, %v790
    %v846 = vpack.c.bf16 %v793, %v792
    %v847 = vpack.c.bf16 %v795, %v794
    %v848 = vpack.c.bf16 %v797, %v796
    %v849 = vpack.c.bf16 %v799, %v798
    %v850 = vpack.c.bf16 %v801, %v800
    %v851 = vpack.c.bf16 %v803, %v802
    %v852 = vpack.c.bf16 %v805, %v804
    %v853 = vpack.c.bf16 %v807, %v806
    %v854 = vpack.c.bf16 %v809, %v808
    %v855 = vpack.c.bf16 %v811, %v810
    %v856 = vpack.c.bf16 %v813, %v812
    %v857 = vpack.c.bf16 %v815, %v814
    %v858 = vpack.c.bf16 %v817, %v816
    %v859 = vpack.c.bf16 %v819, %v818
    %v860 = vpack.c.bf16 %v821, %v820
    %v861 = vpack.c.bf16 %v823, %v822
    %v862 = vpack.c.bf16 %v825, %v824
    %v863 = vpack.c.bf16 %v827, %v826
    %v864 = vpack.c.bf16 %v829, %v828
    %v865 = vpack.c.bf16 %v831, %v830
    %v866 = vpack.c.bf16 %v833, %v832
    %v867 = vpack.c.bf16 %v835, %v834
    %868 = vst [vmem:[%s4] sm:$0xff] %v836
    %869 = vst [vmem:[%s4 + $0x8] sm:$0xff] %v837
    %870 = vst [vmem:[%s4 + $0x10] sm:$0xff] %v838
    %871 = vst [vmem:[%s4 + $0x18] sm:$0xff] %v839
    %872 = vst [vmem:[%s4 + $0x20] sm:$0xff] %v840
    %873 = vst [vmem:[%s4 + $0x28] sm:$0xff] %v841
    %874 = vst [vmem:[%s4 + $0x30] sm:$0xff] %v842
    %875 = vst [vmem:[%s4 + $0x38] sm:$0xff] %v843
    %876 = vst [vmem:[%s4 + $0x40] sm:$0xff] %v844
    %877 = vst [vmem:[%s4 + $0x48] sm:$0xff] %v845
    %878 = vst [vmem:[%s4 + $0x50] sm:$0xff] %v846
    %879 = vst [vmem:[%s4 + $0x58] sm:$0xff] %v847
    %880 = vst [vmem:[%s4 + $0x60] sm:$0xff] %v848
    %881 = vst [vmem:[%s4 + $0x68] sm:$0xff] %v849
    %882 = vst [vmem:[%s4 + $0x70] sm:$0xff] %v850
    %883 = vst [vmem:[%s4 + $0x78] sm:$0xff] %v851
    %884 = vst [vmem:[%s4 + $0x80] sm:$0xff] %v852
    %885 = vst [vmem:[%s4 + $0x88] sm:$0xff] %v853
    %886 = vst [vmem:[%s4 + $0x90] sm:$0xff] %v854
    %887 = vst [vmem:[%s4 + $0x98] sm:$0xff] %v855
    %888 = vst [vmem:[%s4 + $0xa0] sm:$0xff] %v856
    %889 = vst [vmem:[%s4 + $0xa8] sm:$0xff] %v857
    %890 = vst [vmem:[%s4 + $0xb0] sm:$0xff] %v858
    %891 = vst [vmem:[%s4 + $0xb8] sm:$0xff] %v859
    %892 = vst [vmem:[%s4 + $0xc0] sm:$0xff] %v860
    %893 = vst [vmem:[%s4 + $0xc8] sm:$0xff] %v861
    %894 = vst [vmem:[%s4 + $0xd0] sm:$0xff] %v862
    %895 = vst [vmem:[%s4 + $0xd8] sm:$0xff] %v863
    %896 = vst [vmem:[%s4 + $0xe0] sm:$0xff] %v864
    %897 = vst [vmem:[%s4 + $0xe8] sm:$0xff] %v865
    %898 = vst [vmem:[%s4 + $0xf0] sm:$0xff] %v866
    %899 = vst [vmem:[%s4 + $0xf8] sm:$0xff] %v867
    %s900 = scalar_lea.vmem [#allocation2], 512
    %v901 = vld [vmem:[%s900] sm:$0xff]
    %v902 = vld [vmem:[%s900 + $0x8] sm:$0xff]
    %v903 = vld [vmem:[%s900 + $0x10] sm:$0xff]
    %v904 = vld [vmem:[%s900 + $0x18] sm:$0xff]
    %v905 = vld [vmem:[%s900 + $0x20] sm:$0xff]
    %v906 = vld [vmem:[%s900 + $0x28] sm:$0xff]
    %v907 = vld [vmem:[%s900 + $0x30] sm:$0xff]
    %v908 = vld [vmem:[%s900 + $0x38] sm:$0xff]
    %v909 = vld [vmem:[%s900 + $0x40] sm:$0xff]
    %v910 = vld [vmem:[%s900 + $0x48] sm:$0xff]
    %v911 = vld [vmem:[%s900 + $0x50] sm:$0xff]
    %v912 = vld [vmem:[%s900 + $0x58] sm:$0xff]
    %v913 = vld [vmem:[%s900 + $0x60] sm:$0xff]
    %v914 = vld [vmem:[%s900 + $0x68] sm:$0xff]
    %v915 = vld [vmem:[%s900 + $0x70] sm:$0xff]
    %v916 = vld [vmem:[%s900 + $0x78] sm:$0xff]
    %v917 = vld [vmem:[%s900 + $0x80] sm:$0xff]
    %v918 = vld [vmem:[%s900 + $0x88] sm:$0xff]
    %v919 = vld [vmem:[%s900 + $0x90] sm:$0xff]
    %v920 = vld [vmem:[%s900 + $0x98] sm:$0xff]
    %v921 = vld [vmem:[%s900 + $0xa0] sm:$0xff]
    %v922 = vld [vmem:[%s900 + $0xa8] sm:$0xff]
    %v923 = vld [vmem:[%s900 + $0xb0] sm:$0xff]
    %v924 = vld [vmem:[%s900 + $0xb8] sm:$0xff]
    %v925 = vld [vmem:[%s900 + $0xc0] sm:$0xff]
    %v926 = vld [vmem:[%s900 + $0xc8] sm:$0xff]
    %v927 = vld [vmem:[%s900 + $0xd0] sm:$0xff]
    %v928 = vld [vmem:[%s900 + $0xd8] sm:$0xff]
    %v929 = vld [vmem:[%s900 + $0xe0] sm:$0xff]
    %v930 = vld [vmem:[%s900 + $0xe8] sm:$0xff]
    %v931 = vld [vmem:[%s900 + $0xf0] sm:$0xff]
    %v932 = vld [vmem:[%s900 + $0xf8] sm:$0xff]
    %v933 = vld [vmem:[%s900 + $0x100] sm:$0xff]
    %v934 = vld [vmem:[%s900 + $0x108] sm:$0xff]
    %v935 = vld [vmem:[%s900 + $0x110] sm:$0xff]
    %v936 = vld [vmem:[%s900 + $0x118] sm:$0xff]
    %v937 = vld [vmem:[%s900 + $0x120] sm:$0xff]
    %v938 = vld [vmem:[%s900 + $0x128] sm:$0xff]
    %v939 = vld [vmem:[%s900 + $0x130] sm:$0xff]
    %v940 = vld [vmem:[%s900 + $0x138] sm:$0xff]
    %v941 = vld [vmem:[%s900 + $0x140] sm:$0xff]
    %v942 = vld [vmem:[%s900 + $0x148] sm:$0xff]
    %v943 = vld [vmem:[%s900 + $0x150] sm:$0xff]
    %v944 = vld [vmem:[%s900 + $0x158] sm:$0xff]
    %v945 = vld [vmem:[%s900 + $0x160] sm:$0xff]
    %v946 = vld [vmem:[%s900 + $0x168] sm:$0xff]
    %v947 = vld [vmem:[%s900 + $0x170] sm:$0xff]
    %v948 = vld [vmem:[%s900 + $0x178] sm:$0xff]
    %v949 = vld [vmem:[%s900 + $0x180] sm:$0xff]
    %v950 = vld [vmem:[%s900 + $0x188] sm:$0xff]
    %v951 = vld [vmem:[%s900 + $0x190] sm:$0xff]
    %v952 = vld [vmem:[%s900 + $0x198] sm:$0xff]
    %v953 = vld [vmem:[%s900 + $0x1a0] sm:$0xff]
    %v954 = vld [vmem:[%s900 + $0x1a8] sm:$0xff]
    %v955 = vld [vmem:[%s900 + $0x1b0] sm:$0xff]
    %v956 = vld [vmem:[%s900 + $0x1b8] sm:$0xff]
    %v957 = vld [vmem:[%s900 + $0x1c0] sm:$0xff]
    %v958 = vld [vmem:[%s900 + $0x1c8] sm:$0xff]
    %v959 = vld [vmem:[%s900 + $0x1d0] sm:$0xff]
    %v960 = vld [vmem:[%s900 + $0x1d8] sm:$0xff]
    %v961 = vld [vmem:[%s900 + $0x1e0] sm:$0xff]
    %v962 = vld [vmem:[%s900 + $0x1e8] sm:$0xff]
    %v963 = vld [vmem:[%s900 + $0x1f0] sm:$0xff]
    %v964 = vld [vmem:[%s900 + $0x1f8] sm:$0xff]
    %s965 = scalar_lea.vmem [#allocation4], 512
    %v966 = vld [vmem:[%s965] sm:$0xff]
    %v967 = vld [vmem:[%s965 + $0x8] sm:$0xff]
    %v968 = vld [vmem:[%s965 + $0x10] sm:$0xff]
    %v969 = vld [vmem:[%s965 + $0x18] sm:$0xff]
    %v970 = vld [vmem:[%s965 + $0x20] sm:$0xff]
    %v971 = vld [vmem:[%s965 + $0x28] sm:$0xff]
    %v972 = vld [vmem:[%s965 + $0x30] sm:$0xff]
    %v973 = vld [vmem:[%s965 + $0x38] sm:$0xff]
    %v974 = vld [vmem:[%s965 + $0x40] sm:$0xff]
    %v975 = vld [vmem:[%s965 + $0x48] sm:$0xff]
    %v976 = vld [vmem:[%s965 + $0x50] sm:$0xff]
    %v977 = vld [vmem:[%s965 + $0x58] sm:$0xff]
    %v978 = vld [vmem:[%s965 + $0x60] sm:$0xff]
    %v979 = vld [vmem:[%s965 + $0x68] sm:$0xff]
    %v980 = vld [vmem:[%s965 + $0x70] sm:$0xff]
    %v981 = vld [vmem:[%s965 + $0x78] sm:$0xff]
    %v982 = vld [vmem:[%s965 + $0x80] sm:$0xff]
    %v983 = vld [vmem:[%s965 + $0x88] sm:$0xff]
    %v984 = vld [vmem:[%s965 + $0x90] sm:$0xff]
    %v985 = vld [vmem:[%s965 + $0x98] sm:$0xff]
    %v986 = vld [vmem:[%s965 + $0xa0] sm:$0xff]
    %v987 = vld [vmem:[%s965 + $0xa8] sm:$0xff]
    %v988 = vld [vmem:[%s965 + $0xb0] sm:$0xff]
    %v989 = vld [vmem:[%s965 + $0xb8] sm:$0xff]
    %v990 = vld [vmem:[%s965 + $0xc0] sm:$0xff]
    %v991 = vld [vmem:[%s965 + $0xc8] sm:$0xff]
    %v992 = vld [vmem:[%s965 + $0xd0] sm:$0xff]
    %v993 = vld [vmem:[%s965 + $0xd8] sm:$0xff]
    %v994 = vld [vmem:[%s965 + $0xe0] sm:$0xff]
    %v995 = vld [vmem:[%s965 + $0xe8] sm:$0xff]
    %v996 = vld [vmem:[%s965 + $0xf0] sm:$0xff]
    %v997 = vld [vmem:[%s965 + $0xf8] sm:$0xff]
    %v998 = vld [vmem:[%s965 + $0x100] sm:$0xff]
    %v999 = vld [vmem:[%s965 + $0x108] sm:$0xff]
    %v1000 = vld [vmem:[%s965 + $0x110] sm:$0xff]
    %v1001 = vld [vmem:[%s965 + $0x118] sm:$0xff]
    %v1002 = vld [vmem:[%s965 + $0x120] sm:$0xff]
    %v1003 = vld [vmem:[%s965 + $0x128] sm:$0xff]
    %v1004 = vld [vmem:[%s965 + $0x130] sm:$0xff]
    %v1005 = vld [vmem:[%s965 + $0x138] sm:$0xff]
    %v1006 = vld [vmem:[%s965 + $0x140] sm:$0xff]
    %v1007 = vld [vmem:[%s965 + $0x148] sm:$0xff]
    %v1008 = vld [vmem:[%s965 + $0x150] sm:$0xff]
    %v1009 = vld [vmem:[%s965 + $0x158] sm:$0xff]
    %v1010 = vld [vmem:[%s965 + $0x160] sm:$0xff]
    %v1011 = vld [vmem:[%s965 + $0x168] sm:$0xff]
    %v1012 = vld [vmem:[%s965 + $0x170] sm:$0xff]
    %v1013 = vld [vmem:[%s965 + $0x178] sm:$0xff]
    %v1014 = vld [vmem:[%s965 + $0x180] sm:$0xff]
    %v1015 = vld [vmem:[%s965 + $0x188] sm:$0xff]
    %v1016 = vld [vmem:[%s965 + $0x190] sm:$0xff]
    %v1017 = vld [vmem:[%s965 + $0x198] sm:$0xff]
    %v1018 = vld [vmem:[%s965 + $0x1a0] sm:$0xff]
    %v1019 = vld [vmem:[%s965 + $0x1a8] sm:$0xff]
    %v1020 = vld [vmem:[%s965 + $0x1b0] sm:$0xff]
    %v1021 = vld [vmem:[%s965 + $0x1b8] sm:$0xff]
    %v1022 = vld [vmem:[%s965 + $0x1c0] sm:$0xff]
    %v1023 = vld [vmem:[%s965 + $0x1c8] sm:$0xff]
    %v1024 = vld [vmem:[%s965 + $0x1d0] sm:$0xff]
    %v1025 = vld [vmem:[%s965 + $0x1d8] sm:$0xff]
    %v1026 = vld [vmem:[%s965 + $0x1e0] sm:$0xff]
    %v1027 = vld [vmem:[%s965 + $0x1e8] sm:$0xff]
    %v1028 = vld [vmem:[%s965 + $0x1f0] sm:$0xff]
    %v1029 = vld [vmem:[%s965 + $0x1f8] sm:$0xff]
    %1030 = vmatpush.msra.mxu0 %v1026
    %1031 = vmatpush.msra.mxu0 %v1022
    %1032 = vmatpush.msra.mxu0 %v1018
    %1033 = vmatpush.msra.mxu0 %v1014
    %1034 = vmatpush.msra.mxu0 %v1010
    %1035 = vmatpush.msra.mxu0 %v1006
    %1036 = vmatpush.msra.mxu0 %v1002
    %1037 = vmatpush.msra.mxu0 %v998
    %1038 = vmatpush.msra.mxu0 %v994
    %1039 = vmatpush.msra.mxu0 %v990
    %1040 = vmatpush.msra.mxu0 %v986
    %1041 = vmatpush.msra.mxu0 %v982
    %1042 = vmatpush.msra.mxu0 %v978
    %1043 = vmatpush.msra.mxu0 %v974
    %1044 = vmatpush.msra.mxu0 %v970
    %1045 = vmatpush.msra.mxu0 %v966
    %1046 = vmatmul.f32.gmra.mxu0 %v98
    %v1047 = vpop.f32.mrf.mxu0
    %v1048 = vadd.f32 0.0, %v1047
    %1049 = vmatmul.f32.gmra.mxu0 %v99
    %v1050 = vpop.f32.mrf.mxu0
    %v1051 = vadd.f32 0.0, %v1050
    %1052 = vmatmul.f32.gmra.mxu0 %v100
    %v1053 = vpop.f32.mrf.mxu0
    %v1054 = vadd.f32 0.0, %v1053
    %1055 = vmatmul.f32.gmra.mxu0 %v101
    %v1056 = vpop.f32.mrf.mxu0
    %v1057 = vadd.f32 0.0, %v1056
    %1058 = vmatmul.f32.gmra.mxu0 %v102
    %v1059 = vpop.f32.mrf.mxu0
    %v1060 = vadd.f32 0.0, %v1059
    %1061 = vmatmul.f32.gmra.mxu0 %v103
    %v1062 = vpop.f32.mrf.mxu0
    %v1063 = vadd.f32 0.0, %v1062
    %1064 = vmatmul.f32.gmra.mxu0 %v104
    %v1065 = vpop.f32.mrf.mxu0
    %v1066 = vadd.f32 0.0, %v1065
    %1067 = vmatmul.f32.gmra.mxu0 %v105
    %v1068 = vpop.f32.mrf.mxu0
    %v1069 = vadd.f32 0.0, %v1068
    %1070 = vmatmul.f32.gmra.mxu0 %v106
    %v1071 = vpop.f32.mrf.mxu0
    %v1072 = vadd.f32 0.0, %v1071
    %1073 = vmatmul.f32.gmra.mxu0 %v107
    %v1074 = vpop.f32.mrf.mxu0
    %v1075 = vadd.f32 0.0, %v1074
    %1076 = vmatmul.f32.gmra.mxu0 %v108
    %v1077 = vpop.f32.mrf.mxu0
    %v1078 = vadd.f32 0.0, %v1077
    %1079 = vmatmul.f32.gmra.mxu0 %v109
    %v1080 = vpop.f32.mrf.mxu0
    %v1081 = vadd.f32 0.0, %v1080
    %1082 = vmatmul.f32.gmra.mxu0 %v110
    %v1083 = vpop.f32.mrf.mxu0
    %v1084 = vadd.f32 0.0, %v1083
    %1085 = vmatmul.f32.gmra.mxu0 %v111
    %v1086 = vpop.f32.mrf.mxu0
    %v1087 = vadd.f32 0.0, %v1086
    %1088 = vmatmul.f32.gmra.mxu0 %v112
    %v1089 = vpop.f32.mrf.mxu0
    %v1090 = vadd.f32 0.0, %v1089
    %1091 = vmatmul.f32.gmra.mxu0 %v113
    %v1092 = vpop.f32.mrf.mxu0
    %v1093 = vadd.f32 0.0, %v1092
    %1094 = vdwg.mxu0
    %1095 = vmatpush.msra.mxu0 %v1027
    %1096 = vmatpush.msra.mxu0 %v1023
    %1097 = vmatpush.msra.mxu0 %v1019
    %1098 = vmatpush.msra.mxu0 %v1015
    %1099 = vmatpush.msra.mxu0 %v1011
    %1100 = vmatpush.msra.mxu0 %v1007
    %1101 = vmatpush.msra.mxu0 %v1003
    %1102 = vmatpush.msra.mxu0 %v999
    %1103 = vmatpush.msra.mxu0 %v995
    %1104 = vmatpush.msra.mxu0 %v991
    %1105 = vmatpush.msra.mxu0 %v987
    %1106 = vmatpush.msra.mxu0 %v983
    %1107 = vmatpush.msra.mxu0 %v979
    %1108 = vmatpush.msra.mxu0 %v975
    %1109 = vmatpush.msra.mxu0 %v971
    %1110 = vmatpush.msra.mxu0 %v967
    %1111 = vmatmul.f32.gmra.mxu0 %v98
    %v1112 = vpop.f32.mrf.mxu0
    %v1113 = vadd.f32 0.0, %v1112
    %1114 = vmatmul.f32.gmra.mxu0 %v99
    %v1115 = vpop.f32.mrf.mxu0
    %v1116 = vadd.f32 0.0, %v1115
    %1117 = vmatmul.f32.gmra.mxu0 %v100
    %v1118 = vpop.f32.mrf.mxu0
    %v1119 = vadd.f32 0.0, %v1118
    %1120 = vmatmul.f32.gmra.mxu0 %v101
    %v1121 = vpop.f32.mrf.mxu0
    %v1122 = vadd.f32 0.0, %v1121
    %1123 = vmatmul.f32.gmra.mxu0 %v102
    %v1124 = vpop.f32.mrf.mxu0
    %v1125 = vadd.f32 0.0, %v1124
    %1126 = vmatmul.f32.gmra.mxu0 %v103
    %v1127 = vpop.f32.mrf.mxu0
    %v1128 = vadd.f32 0.0, %v1127
    %1129 = vmatmul.f32.gmra.mxu0 %v104
    %v1130 = vpop.f32.mrf.mxu0
    %v1131 = vadd.f32 0.0, %v1130
    %1132 = vmatmul.f32.gmra.mxu0 %v105
    %v1133 = vpop.f32.mrf.mxu0
    %v1134 = vadd.f32 0.0, %v1133
    %1135 = vmatmul.f32.gmra.mxu0 %v106
    %v1136 = vpop.f32.mrf.mxu0
    %v1137 = vadd.f32 0.0, %v1136
    %1138 = vmatmul.f32.gmra.mxu0 %v107
    %v1139 = vpop.f32.mrf.mxu0
    %v1140 = vadd.f32 0.0, %v1139
    %1141 = vmatmul.f32.gmra.mxu0 %v108
    %v1142 = vpop.f32.mrf.mxu0
    %v1143 = vadd.f32 0.0, %v1142
    %1144 = vmatmul.f32.gmra.mxu0 %v109
    %v1145 = vpop.f32.mrf.mxu0
    %v1146 = vadd.f32 0.0, %v1145
    %1147 = vmatmul.f32.gmra.mxu0 %v110
    %v1148 = vpop.f32.mrf.mxu0
    %v1149 = vadd.f32 0.0, %v1148
    %1150 = vmatmul.f32.gmra.mxu0 %v111
    %v1151 = vpop.f32.mrf.mxu0
    %v1152 = vadd.f32 0.0, %v1151
    %1153 = vmatmul.f32.gmra.mxu0 %v112
    %v1154 = vpop.f32.mrf.mxu0
    %v1155 = vadd.f32 0.0, %v1154
    %1156 = vmatmul.f32.gmra.mxu0 %v113
    %v1157 = vpop.f32.mrf.mxu0
    %v1158 = vadd.f32 0.0, %v1157
    %1159 = vdwg.mxu0
    %1160 = vmatpush.msra.mxu0 %v1028
    %1161 = vmatpush.msra.mxu0 %v1024
    %1162 = vmatpush.msra.mxu0 %v1020
    %1163 = vmatpush.msra.mxu0 %v1016
    %1164 = vmatpush.msra.mxu0 %v1012
    %1165 = vmatpush.msra.mxu0 %v1008
    %1166 = vmatpush.msra.mxu0 %v1004
    %1167 = vmatpush.msra.mxu0 %v1000
    %1168 = vmatpush.msra.mxu0 %v996
    %1169 = vmatpush.msra.mxu0 %v992
    %1170 = vmatpush.msra.mxu0 %v988
    %1171 = vmatpush.msra.mxu0 %v984
    %1172 = vmatpush.msra.mxu0 %v980
    %1173 = vmatpush.msra.mxu0 %v976
    %1174 = vmatpush.msra.mxu0 %v972
    %1175 = vmatpush.msra.mxu0 %v968
    %1176 = vmatmul.f32.gmra.mxu0 %v98
    %v1177 = vpop.f32.mrf.mxu0
    %v1178 = vadd.f32 0.0, %v1177
    %1179 = vmatmul.f32.gmra.mxu0 %v99
    %v1180 = vpop.f32.mrf.mxu0
    %v1181 = vadd.f32 0.0, %v1180
    %1182 = vmatmul.f32.gmra.mxu0 %v100
    %v1183 = vpop.f32.mrf.mxu0
    %v1184 = vadd.f32 0.0, %v1183
    %1185 = vmatmul.f32.gmra.mxu0 %v101
    %v1186 = vpop.f32.mrf.mxu0
    %v1187 = vadd.f32 0.0, %v1186
    %1188 = vmatmul.f32.gmra.mxu0 %v102
    %v1189 = vpop.f32.mrf.mxu0
    %v1190 = vadd.f32 0.0, %v1189
    %1191 = vmatmul.f32.gmra.mxu0 %v103
    %v1192 = vpop.f32.mrf.mxu0
    %v1193 = vadd.f32 0.0, %v1192
    %1194 = vmatmul.f32.gmra.mxu0 %v104
    %v1195 = vpop.f32.mrf.mxu0
    %v1196 = vadd.f32 0.0, %v1195
    %1197 = vmatmul.f32.gmra.mxu0 %v105
    %v1198 = vpop.f32.mrf.mxu0
    %v1199 = vadd.f32 0.0, %v1198
    %1200 = vmatmul.f32.gmra.mxu0 %v106
    %v1201 = vpop.f32.mrf.mxu0
    %v1202 = vadd.f32 0.0, %v1201
    %1203 = vmatmul.f32.gmra.mxu0 %v107
    %v1204 = vpop.f32.mrf.mxu0
    %v1205 = vadd.f32 0.0, %v1204
    %1206 = vmatmul.f32.gmra.mxu0 %v108
    %v1207 = vpop.f32.mrf.mxu0
    %v1208 = vadd.f32 0.0, %v1207
    %1209 = vmatmul.f32.gmra.mxu0 %v109
    %v1210 = vpop.f32.mrf.mxu0
    %v1211 = vadd.f32 0.0, %v1210
    %1212 = vmatmul.f32.gmra.mxu0 %v110
    %v1213 = vpop.f32.mrf.mxu0
    %v1214 = vadd.f32 0.0, %v1213
    %1215 = vmatmul.f32.gmra.mxu0 %v111
    %v1216 = vpop.f32.mrf.mxu0
    %v1217 = vadd.f32 0.0, %v1216
    %1218 = vmatmul.f32.gmra.mxu0 %v112
    %v1219 = vpop.f32.mrf.mxu0
    %v1220 = vadd.f32 0.0, %v1219
    %1221 = vmatmul.f32.gmra.mxu0 %v113
    %v1222 = vpop.f32.mrf.mxu0
    %v1223 = vadd.f32 0.0, %v1222
    %1224 = vdwg.mxu0
    %1225 = vmatpush.msra.mxu0 %v1029
    %1226 = vmatpush.msra.mxu0 %v1025
    %1227 = vmatpush.msra.mxu0 %v1021
    %1228 = vmatpush.msra.mxu0 %v1017
    %1229 = vmatpush.msra.mxu0 %v1013
    %1230 = vmatpush.msra.mxu0 %v1009
    %1231 = vmatpush.msra.mxu0 %v1005
    %1232 = vmatpush.msra.mxu0 %v1001
    %1233 = vmatpush.msra.mxu0 %v997
    %1234 = vmatpush.msra.mxu0 %v993
    %1235 = vmatpush.msra.mxu0 %v989
    %1236 = vmatpush.msra.mxu0 %v985
    %1237 = vmatpush.msra.mxu0 %v981
    %1238 = vmatpush.msra.mxu0 %v977
    %1239 = vmatpush.msra.mxu0 %v973
    %1240 = vmatpush.msra.mxu0 %v969
    %1241 = vmatmul.f32.gmra.mxu0 %v98
    %v1242 = vpop.f32.mrf.mxu0
    %v1243 = vadd.f32 0.0, %v1242
    %1244 = vmatmul.f32.gmra.mxu0 %v99
    %v1245 = vpop.f32.mrf.mxu0
    %v1246 = vadd.f32 0.0, %v1245
    %1247 = vmatmul.f32.gmra.mxu0 %v100
    %v1248 = vpop.f32.mrf.mxu0
    %v1249 = vadd.f32 0.0, %v1248
    %1250 = vmatmul.f32.gmra.mxu0 %v101
    %v1251 = vpop.f32.mrf.mxu0
    %v1252 = vadd.f32 0.0, %v1251
    %1253 = vmatmul.f32.gmra.mxu0 %v102
    %v1254 = vpop.f32.mrf.mxu0
    %v1255 = vadd.f32 0.0, %v1254
    %1256 = vmatmul.f32.gmra.mxu0 %v103
    %v1257 = vpop.f32.mrf.mxu0
    %v1258 = vadd.f32 0.0, %v1257
    %1259 = vmatmul.f32.gmra.mxu0 %v104
    %v1260 = vpop.f32.mrf.mxu0
    %v1261 = vadd.f32 0.0, %v1260
    %1262 = vmatmul.f32.gmra.mxu0 %v105
    %v1263 = vpop.f32.mrf.mxu0
    %v1264 = vadd.f32 0.0, %v1263
    %1265 = vmatmul.f32.gmra.mxu0 %v106
    %v1266 = vpop.f32.mrf.mxu0
    %v1267 = vadd.f32 0.0, %v1266
    %1268 = vmatmul.f32.gmra.mxu0 %v107
    %v1269 = vpop.f32.mrf.mxu0
    %v1270 = vadd.f32 0.0, %v1269
    %1271 = vmatmul.f32.gmra.mxu0 %v108
    %v1272 = vpop.f32.mrf.mxu0
    %v1273 = vadd.f32 0.0, %v1272
    %1274 = vmatmul.f32.gmra.mxu0 %v109
    %v1275 = vpop.f32.mrf.mxu0
    %v1276 = vadd.f32 0.0, %v1275
    %1277 = vmatmul.f32.gmra.mxu0 %v110
    %v1278 = vpop.f32.mrf.mxu0
    %v1279 = vadd.f32 0.0, %v1278
    %1280 = vmatmul.f32.gmra.mxu0 %v111
    %v1281 = vpop.f32.mrf.mxu0
    %v1282 = vadd.f32 0.0, %v1281
    %1283 = vmatmul.f32.gmra.mxu0 %v112
    %v1284 = vpop.f32.mrf.mxu0
    %v1285 = vadd.f32 0.0, %v1284
    %1286 = vmatmul.f32.gmra.mxu0 %v113
    %v1287 = vpop.f32.mrf.mxu0
    %v1288 = vadd.f32 0.0, %v1287
    %1289 = vdwg.mxu0
    %1290 = vmatpush.msra.mxu0 %v961
    %1291 = vmatpush.msra.mxu0 %v957
    %1292 = vmatpush.msra.mxu0 %v953
    %1293 = vmatpush.msra.mxu0 %v949
    %1294 = vmatpush.msra.mxu0 %v945
    %1295 = vmatpush.msra.mxu0 %v941
    %1296 = vmatpush.msra.mxu0 %v937
    %1297 = vmatpush.msra.mxu0 %v933
    %1298 = vmatpush.msra.mxu0 %v929
    %1299 = vmatpush.msra.mxu0 %v925
    %1300 = vmatpush.msra.mxu0 %v921
    %1301 = vmatpush.msra.mxu0 %v917
    %1302 = vmatpush.msra.mxu0 %v913
    %1303 = vmatpush.msra.mxu0 %v909
    %1304 = vmatpush.msra.mxu0 %v905
    %1305 = vmatpush.msra.mxu0 %v901
    %1306 = vmatmul.f32.gmra.mxu0 %v65
    %v1307 = vpop.f32.mrf.mxu0
    %v1308 = vadd.f32 %v1048, %v1307
    %1309 = vmatmul.f32.gmra.mxu0 %v66
    %v1310 = vpop.f32.mrf.mxu0
    %v1311 = vadd.f32 %v1051, %v1310
    %1312 = vmatmul.f32.gmra.mxu0 %v67
    %v1313 = vpop.f32.mrf.mxu0
    %v1314 = vadd.f32 %v1054, %v1313
    %1315 = vmatmul.f32.gmra.mxu0 %v68
    %v1316 = vpop.f32.mrf.mxu0
    %v1317 = vadd.f32 %v1057, %v1316
    %1318 = vmatmul.f32.gmra.mxu0 %v69
    %v1319 = vpop.f32.mrf.mxu0
    %v1320 = vadd.f32 %v1060, %v1319
    %1321 = vmatmul.f32.gmra.mxu0 %v70
    %v1322 = vpop.f32.mrf.mxu0
    %v1323 = vadd.f32 %v1063, %v1322
    %1324 = vmatmul.f32.gmra.mxu0 %v71
    %v1325 = vpop.f32.mrf.mxu0
    %v1326 = vadd.f32 %v1066, %v1325
    %1327 = vmatmul.f32.gmra.mxu0 %v72
    %v1328 = vpop.f32.mrf.mxu0
    %v1329 = vadd.f32 %v1069, %v1328
    %1330 = vmatmul.f32.gmra.mxu0 %v73
    %v1331 = vpop.f32.mrf.mxu0
    %v1332 = vadd.f32 %v1072, %v1331
    %1333 = vmatmul.f32.gmra.mxu0 %v74
    %v1334 = vpop.f32.mrf.mxu0
    %v1335 = vadd.f32 %v1075, %v1334
    %1336 = vmatmul.f32.gmra.mxu0 %v75
    %v1337 = vpop.f32.mrf.mxu0
    %v1338 = vadd.f32 %v1078, %v1337
    %1339 = vmatmul.f32.gmra.mxu0 %v76
    %v1340 = vpop.f32.mrf.mxu0
    %v1341 = vadd.f32 %v1081, %v1340
    %1342 = vmatmul.f32.gmra.mxu0 %v77
    %v1343 = vpop.f32.mrf.mxu0
    %v1344 = vadd.f32 %v1084, %v1343
    %1345 = vmatmul.f32.gmra.mxu0 %v78
    %v1346 = vpop.f32.mrf.mxu0
    %v1347 = vadd.f32 %v1087, %v1346
    %1348 = vmatmul.f32.gmra.mxu0 %v79
    %v1349 = vpop.f32.mrf.mxu0
    %v1350 = vadd.f32 %v1090, %v1349
    %1351 = vmatmul.f32.gmra.mxu0 %v80
    %v1352 = vpop.f32.mrf.mxu0
    %v1353 = vadd.f32 %v1093, %v1352
    %1354 = vdwg.mxu0
    %1355 = vmatpush.msra.mxu0 %v962
    %1356 = vmatpush.msra.mxu0 %v958
    %1357 = vmatpush.msra.mxu0 %v954
    %1358 = vmatpush.msra.mxu0 %v950
    %1359 = vmatpush.msra.mxu0 %v946
    %1360 = vmatpush.msra.mxu0 %v942
    %1361 = vmatpush.msra.mxu0 %v938
    %1362 = vmatpush.msra.mxu0 %v934
    %1363 = vmatpush.msra.mxu0 %v930
    %1364 = vmatpush.msra.mxu0 %v926
    %1365 = vmatpush.msra.mxu0 %v922
    %1366 = vmatpush.msra.mxu0 %v918
    %1367 = vmatpush.msra.mxu0 %v914
    %1368 = vmatpush.msra.mxu0 %v910
    %1369 = vmatpush.msra.mxu0 %v906
    %1370 = vmatpush.msra.mxu0 %v902
    %1371 = vmatmul.f32.gmra.mxu0 %v65
    %v1372 = vpop.f32.mrf.mxu0
    %v1373 = vadd.f32 %v1113, %v1372
    %1374 = vmatmul.f32.gmra.mxu0 %v66
    %v1375 = vpop.f32.mrf.mxu0
    %v1376 = vadd.f32 %v1116, %v1375
    %1377 = vmatmul.f32.gmra.mxu0 %v67
    %v1378 = vpop.f32.mrf.mxu0
    %v1379 = vadd.f32 %v1119, %v1378
    %1380 = vmatmul.f32.gmra.mxu0 %v68
    %v1381 = vpop.f32.mrf.mxu0
    %v1382 = vadd.f32 %v1122, %v1381
    %1383 = vmatmul.f32.gmra.mxu0 %v69
    %v1384 = vpop.f32.mrf.mxu0
    %v1385 = vadd.f32 %v1125, %v1384
    %1386 = vmatmul.f32.gmra.mxu0 %v70
    %v1387 = vpop.f32.mrf.mxu0
    %v1388 = vadd.f32 %v1128, %v1387
    %1389 = vmatmul.f32.gmra.mxu0 %v71
    %v1390 = vpop.f32.mrf.mxu0
    %v1391 = vadd.f32 %v1131, %v1390
    %1392 = vmatmul.f32.gmra.mxu0 %v72
    %v1393 = vpop.f32.mrf.mxu0
    %v1394 = vadd.f32 %v1134, %v1393
    %1395 = vmatmul.f32.gmra.mxu0 %v73
    %v1396 = vpop.f32.mrf.mxu0
    %v1397 = vadd.f32 %v1137, %v1396
    %1398 = vmatmul.f32.gmra.mxu0 %v74
    %v1399 = vpop.f32.mrf.mxu0
    %v1400 = vadd.f32 %v1140, %v1399
    %1401 = vmatmul.f32.gmra.mxu0 %v75
    %v1402 = vpop.f32.mrf.mxu0
    %v1403 = vadd.f32 %v1143, %v1402
    %1404 = vmatmul.f32.gmra.mxu0 %v76
    %v1405 = vpop.f32.mrf.mxu0
    %v1406 = vadd.f32 %v1146, %v1405
    %1407 = vmatmul.f32.gmra.mxu0 %v77
    %v1408 = vpop.f32.mrf.mxu0
    %v1409 = vadd.f32 %v1149, %v1408
    %1410 = vmatmul.f32.gmra.mxu0 %v78
    %v1411 = vpop.f32.mrf.mxu0
    %v1412 = vadd.f32 %v1152, %v1411
    %1413 = vmatmul.f32.gmra.mxu0 %v79
    %v1414 = vpop.f32.mrf.mxu0
    %v1415 = vadd.f32 %v1155, %v1414
    %1416 = vmatmul.f32.gmra.mxu0 %v80
    %v1417 = vpop.f32.mrf.mxu0
    %v1418 = vadd.f32 %v1158, %v1417
    %1419 = vdwg.mxu0
    %1420 = vmatpush.msra.mxu0 %v963
    %1421 = vmatpush.msra.mxu0 %v959
    %1422 = vmatpush.msra.mxu0 %v955
    %1423 = vmatpush.msra.mxu0 %v951
    %1424 = vmatpush.msra.mxu0 %v947
    %1425 = vmatpush.msra.mxu0 %v943
    %1426 = vmatpush.msra.mxu0 %v939
    %1427 = vmatpush.msra.mxu0 %v935
    %1428 = vmatpush.msra.mxu0 %v931
    %1429 = vmatpush.msra.mxu0 %v927
    %1430 = vmatpush.msra.mxu0 %v923
    %1431 = vmatpush.msra.mxu0 %v919
    %1432 = vmatpush.msra.mxu0 %v915
    %1433 = vmatpush.msra.mxu0 %v911
    %1434 = vmatpush.msra.mxu0 %v907
    %1435 = vmatpush.msra.mxu0 %v903
    %1436 = vmatmul.f32.gmra.mxu0 %v65
    %v1437 = vpop.f32.mrf.mxu0
    %v1438 = vadd.f32 %v1178, %v1437
    %1439 = vmatmul.f32.gmra.mxu0 %v66
    %v1440 = vpop.f32.mrf.mxu0
    %v1441 = vadd.f32 %v1181, %v1440
    %1442 = vmatmul.f32.gmra.mxu0 %v67
    %v1443 = vpop.f32.mrf.mxu0
    %v1444 = vadd.f32 %v1184, %v1443
    %1445 = vmatmul.f32.gmra.mxu0 %v68
    %v1446 = vpop.f32.mrf.mxu0
    %v1447 = vadd.f32 %v1187, %v1446
    %1448 = vmatmul.f32.gmra.mxu0 %v69
    %v1449 = vpop.f32.mrf.mxu0
    %v1450 = vadd.f32 %v1190, %v1449
    %1451 = vmatmul.f32.gmra.mxu0 %v70
    %v1452 = vpop.f32.mrf.mxu0
    %v1453 = vadd.f32 %v1193, %v1452
    %1454 = vmatmul.f32.gmra.mxu0 %v71
    %v1455 = vpop.f32.mrf.mxu0
    %v1456 = vadd.f32 %v1196, %v1455
    %1457 = vmatmul.f32.gmra.mxu0 %v72
    %v1458 = vpop.f32.mrf.mxu0
    %v1459 = vadd.f32 %v1199, %v1458
    %1460 = vmatmul.f32.gmra.mxu0 %v73
    %v1461 = vpop.f32.mrf.mxu0
    %v1462 = vadd.f32 %v1202, %v1461
    %1463 = vmatmul.f32.gmra.mxu0 %v74
    %v1464 = vpop.f32.mrf.mxu0
    %v1465 = vadd.f32 %v1205, %v1464
    %1466 = vmatmul.f32.gmra.mxu0 %v75
    %v1467 = vpop.f32.mrf.mxu0
    %v1468 = vadd.f32 %v1208, %v1467
    %1469 = vmatmul.f32.gmra.mxu0 %v76
    %v1470 = vpop.f32.mrf.mxu0
    %v1471 = vadd.f32 %v1211, %v1470
    %1472 = vmatmul.f32.gmra.mxu0 %v77
    %v1473 = vpop.f32.mrf.mxu0
    %v1474 = vadd.f32 %v1214, %v1473
    %1475 = vmatmul.f32.gmra.mxu0 %v78
    %v1476 = vpop.f32.mrf.mxu0
    %v1477 = vadd.f32 %v1217, %v1476
    %1478 = vmatmul.f32.gmra.mxu0 %v79
    %v1479 = vpop.f32.mrf.mxu0
    %v1480 = vadd.f32 %v1220, %v1479
    %1481 = vmatmul.f32.gmra.mxu0 %v80
    %v1482 = vpop.f32.mrf.mxu0
    %v1483 = vadd.f32 %v1223, %v1482
    %1484 = vdwg.mxu0
    %1485 = vmatpush.msra.mxu0 %v964
    %1486 = vmatpush.msra.mxu0 %v960
    %1487 = vmatpush.msra.mxu0 %v956
    %1488 = vmatpush.msra.mxu0 %v952
    %1489 = vmatpush.msra.mxu0 %v948
    %1490 = vmatpush.msra.mxu0 %v944
    %1491 = vmatpush.msra.mxu0 %v940
    %1492 = vmatpush.msra.mxu0 %v936
    %1493 = vmatpush.msra.mxu0 %v932
    %1494 = vmatpush.msra.mxu0 %v928
    %1495 = vmatpush.msra.mxu0 %v924
    %1496 = vmatpush.msra.mxu0 %v920
    %1497 = vmatpush.msra.mxu0 %v916
    %1498 = vmatpush.msra.mxu0 %v912
    %1499 = vmatpush.msra.mxu0 %v908
    %1500 = vmatpush.msra.mxu0 %v904
    %1501 = vmatmul.f32.gmra.mxu0 %v65
    %v1502 = vpop.f32.mrf.mxu0
    %v1503 = vadd.f32 %v1243, %v1502
    %1504 = vmatmul.f32.gmra.mxu0 %v66
    %v1505 = vpop.f32.mrf.mxu0
    %v1506 = vadd.f32 %v1246, %v1505
    %1507 = vmatmul.f32.gmra.mxu0 %v67
    %v1508 = vpop.f32.mrf.mxu0
    %v1509 = vadd.f32 %v1249, %v1508
    %1510 = vmatmul.f32.gmra.mxu0 %v68
    %v1511 = vpop.f32.mrf.mxu0
    %v1512 = vadd.f32 %v1252, %v1511
    %1513 = vmatmul.f32.gmra.mxu0 %v69
    %v1514 = vpop.f32.mrf.mxu0
    %v1515 = vadd.f32 %v1255, %v1514
    %1516 = vmatmul.f32.gmra.mxu0 %v70
    %v1517 = vpop.f32.mrf.mxu0
    %v1518 = vadd.f32 %v1258, %v1517
    %1519 = vmatmul.f32.gmra.mxu0 %v71
    %v1520 = vpop.f32.mrf.mxu0
    %v1521 = vadd.f32 %v1261, %v1520
    %1522 = vmatmul.f32.gmra.mxu0 %v72
    %v1523 = vpop.f32.mrf.mxu0
    %v1524 = vadd.f32 %v1264, %v1523
    %1525 = vmatmul.f32.gmra.mxu0 %v73
    %v1526 = vpop.f32.mrf.mxu0
    %v1527 = vadd.f32 %v1267, %v1526
    %1528 = vmatmul.f32.gmra.mxu0 %v74
    %v1529 = vpop.f32.mrf.mxu0
    %v1530 = vadd.f32 %v1270, %v1529
    %1531 = vmatmul.f32.gmra.mxu0 %v75
    %v1532 = vpop.f32.mrf.mxu0
    %v1533 = vadd.f32 %v1273, %v1532
    %1534 = vmatmul.f32.gmra.mxu0 %v76
    %v1535 = vpop.f32.mrf.mxu0
    %v1536 = vadd.f32 %v1276, %v1535
    %1537 = vmatmul.f32.gmra.mxu0 %v77
    %v1538 = vpop.f32.mrf.mxu0
    %v1539 = vadd.f32 %v1279, %v1538
    %1540 = vmatmul.f32.gmra.mxu0 %v78
    %v1541 = vpop.f32.mrf.mxu0
    %v1542 = vadd.f32 %v1282, %v1541
    %1543 = vmatmul.f32.gmra.mxu0 %v79
    %v1544 = vpop.f32.mrf.mxu0
    %v1545 = vadd.f32 %v1285, %v1544
    %1546 = vmatmul.f32.gmra.mxu0 %v80
    %v1547 = vpop.f32.mrf.mxu0
    %v1548 = vadd.f32 %v1288, %v1547
    %1549 = vdwg.mxu0
    %s1550 = scalar_lea.vmem %s3, 4
    %v1551 = vld [vmem:[%s1550] sm:$0xf]
    %v1553 = vperm.slane %v1551, 0
    %v1554 = vperm.slane %v1551, 1
    %v1555 = vperm.slane %v1551, 2
    %v1556 = vperm.slane %v1551, 3
    %v1561 = vadd.f32 %v1308, %v1553
    %v1562 = vadd.f32 %v1373, %v1554
    %v1563 = vadd.f32 %v1438, %v1555
    %v1564 = vadd.f32 %v1503, %v1556
    %v1565 = vadd.f32 %v1311, %v1553
    %v1566 = vadd.f32 %v1376, %v1554
    %v1567 = vadd.f32 %v1441, %v1555
    %v1568 = vadd.f32 %v1506, %v1556
    %v1569 = vadd.f32 %v1314, %v1553
    %v1570 = vadd.f32 %v1379, %v1554
    %v1571 = vadd.f32 %v1444, %v1555
    %v1572 = vadd.f32 %v1509, %v1556
    %v1573 = vadd.f32 %v1317, %v1553
    %v1574 = vadd.f32 %v1382, %v1554
    %v1575 = vadd.f32 %v1447, %v1555
    %v1576 = vadd.f32 %v1512, %v1556
    %v1577 = vadd.f32 %v1320, %v1553
    %v1578 = vadd.f32 %v1385, %v1554
    %v1579 = vadd.f32 %v1450, %v1555
    %v1580 = vadd.f32 %v1515, %v1556
    %v1581 = vadd.f32 %v1323, %v1553
    %v1582 = vadd.f32 %v1388, %v1554
    %v1583 = vadd.f32 %v1453, %v1555
    %v1584 = vadd.f32 %v1518, %v1556
    %v1585 = vadd.f32 %v1326, %v1553
    %v1586 = vadd.f32 %v1391, %v1554
    %v1587 = vadd.f32 %v1456, %v1555
    %v1588 = vadd.f32 %v1521, %v1556
    %v1589 = vadd.f32 %v1329, %v1553
    %v1590 = vadd.f32 %v1394, %v1554
    %v1591 = vadd.f32 %v1459, %v1555
    %v1592 = vadd.f32 %v1524, %v1556
    %v1593 = vadd.f32 %v1332, %v1553
    %v1594 = vadd.f32 %v1397, %v1554
    %v1595 = vadd.f32 %v1462, %v1555
    %v1596 = vadd.f32 %v1527, %v1556
    %v1597 = vadd.f32 %v1335, %v1553
    %v1598 = vadd.f32 %v1400, %v1554
    %v1599 = vadd.f32 %v1465, %v1555
    %v1600 = vadd.f32 %v1530, %v1556
    %v1601 = vadd.f32 %v1338, %v1553
    %v1602 = vadd.f32 %v1403, %v1554
    %v1603 = vadd.f32 %v1468, %v1555
    %v1604 = vadd.f32 %v1533, %v1556
    %v1605 = vadd.f32 %v1341, %v1553
    %v1606 = vadd.f32 %v1406, %v1554
    %v1607 = vadd.f32 %v1471, %v1555
    %v1608 = vadd.f32 %v1536, %v1556
    %v1609 = vadd.f32 %v1344, %v1553
    %v1610 = vadd.f32 %v1409, %v1554
    %v1611 = vadd.f32 %v1474, %v1555
    %v1612 = vadd.f32 %v1539, %v1556
    %v1613 = vadd.f32 %v1347, %v1553
    %v1614 = vadd.f32 %v1412, %v1554
    %v1615 = vadd.f32 %v1477, %v1555
    %v1616 = vadd.f32 %v1542, %v1556
    %v1617 = vadd.f32 %v1350, %v1553
    %v1618 = vadd.f32 %v1415, %v1554
    %v1619 = vadd.f32 %v1480, %v1555
    %v1620 = vadd.f32 %v1545, %v1556
    %v1621 = vadd.f32 %v1353, %v1553
    %v1622 = vadd.f32 %v1418, %v1554
    %v1623 = vadd.f32 %v1483, %v1555
    %v1624 = vadd.f32 %v1548, %v1556
    %v1625 = vpack.c.bf16 %v1562, %v1561
    %v1626 = vpack.c.bf16 %v1564, %v1563
    %v1627 = vpack.c.bf16 %v1566, %v1565
    %v1628 = vpack.c.bf16 %v1568, %v1567
    %v1629 = vpack.c.bf16 %v1570, %v1569
    %v1630 = vpack.c.bf16 %v1572, %v1571
    %v1631 = vpack.c.bf16 %v1574, %v1573
    %v1632 = vpack.c.bf16 %v1576, %v1575
    %v1633 = vpack.c.bf16 %v1578, %v1577
    %v1634 = vpack.c.bf16 %v1580, %v1579
    %v1635 = vpack.c.bf16 %v1582, %v1581
    %v1636 = vpack.c.bf16 %v1584, %v1583
    %v1637 = vpack.c.bf16 %v1586, %v1585
    %v1638 = vpack.c.bf16 %v1588, %v1587
    %v1639 = vpack.c.bf16 %v1590, %v1589
    %v1640 = vpack.c.bf16 %v1592, %v1591
    %v1641 = vpack.c.bf16 %v1594, %v1593
    %v1642 = vpack.c.bf16 %v1596, %v1595
    %v1643 = vpack.c.bf16 %v1598, %v1597
    %v1644 = vpack.c.bf16 %v1600, %v1599
    %v1645 = vpack.c.bf16 %v1602, %v1601
    %v1646 = vpack.c.bf16 %v1604, %v1603
    %v1647 = vpack.c.bf16 %v1606, %v1605
    %v1648 = vpack.c.bf16 %v1608, %v1607
    %v1649 = vpack.c.bf16 %v1610, %v1609
    %v1650 = vpack.c.bf16 %v1612, %v1611
    %v1651 = vpack.c.bf16 %v1614, %v1613
    %v1652 = vpack.c.bf16 %v1616, %v1615
    %v1653 = vpack.c.bf16 %v1618, %v1617
    %v1654 = vpack.c.bf16 %v1620, %v1619
    %v1655 = vpack.c.bf16 %v1622, %v1621
    %v1656 = vpack.c.bf16 %v1624, %v1623
    %s1657 = scalar_lea.vmem %s4, 256
    %1658 = vst [vmem:[%s1657] sm:$0xff] %v1625
    %1659 = vst [vmem:[%s1657 + $0x8] sm:$0xff] %v1626
    %1660 = vst [vmem:[%s1657 + $0x10] sm:$0xff] %v1627
    %1661 = vst [vmem:[%s1657 + $0x18] sm:$0xff] %v1628
    %1662 = vst [vmem:[%s1657 + $0x20] sm:$0xff] %v1629
    %1663 = vst [vmem:[%s1657 + $0x28] sm:$0xff] %v1630
    %1664 = vst [vmem:[%s1657 + $0x30] sm:$0xff] %v1631
    %1665 = vst [vmem:[%s1657 + $0x38] sm:$0xff] %v1632
    %1666 = vst [vmem:[%s1657 + $0x40] sm:$0xff] %v1633
    %1667 = vst [vmem:[%s1657 + $0x48] sm:$0xff] %v1634
    %1668 = vst [vmem:[%s1657 + $0x50] sm:$0xff] %v1635
    %1669 = vst [vmem:[%s1657 + $0x58] sm:$0xff] %v1636
    %1670 = vst [vmem:[%s1657 + $0x60] sm:$0xff] %v1637
    %1671 = vst [vmem:[%s1657 + $0x68] sm:$0xff] %v1638
    %1672 = vst [vmem:[%s1657 + $0x70] sm:$0xff] %v1639
    %1673 = vst [vmem:[%s1657 + $0x78] sm:$0xff] %v1640
    %1674 = vst [vmem:[%s1657 + $0x80] sm:$0xff] %v1641
    %1675 = vst [vmem:[%s1657 + $0x88] sm:$0xff] %v1642
    %1676 = vst [vmem:[%s1657 + $0x90] sm:$0xff] %v1643
    %1677 = vst [vmem:[%s1657 + $0x98] sm:$0xff] %v1644
    %1678 = vst [vmem:[%s1657 + $0xa0] sm:$0xff] %v1645
    %1679 = vst [vmem:[%s1657 + $0xa8] sm:$0xff] %v1646
    %1680 = vst [vmem:[%s1657 + $0xb0] sm:$0xff] %v1647
    %1681 = vst [vmem:[%s1657 + $0xb8] sm:$0xff] %v1648
    %1682 = vst [vmem:[%s1657 + $0xc0] sm:$0xff] %v1649
    %1683 = vst [vmem:[%s1657 + $0xc8] sm:$0xff] %v1650
    %1684 = vst [vmem:[%s1657 + $0xd0] sm:$0xff] %v1651
    %1685 = vst [vmem:[%s1657 + $0xd8] sm:$0xff] %v1652
    %1686 = vst [vmem:[%s1657 + $0xe0] sm:$0xff] %v1653
    %1687 = vst [vmem:[%s1657 + $0xe8] sm:$0xff] %v1654
    %1688 = vst [vmem:[%s1657 + $0xf0] sm:$0xff] %v1655
    %1689 = vst [vmem:[%s1657 + $0xf8] sm:$0xff] %v1656
    // Predicated region
    $region26: #{model_forward.13} parent=1 // pred_check
      _
    $region27: #{model_forward.13} parent=1 // pred_check_branch
      %1691 = sbr.rel (0) target = $region29
    $region28: #{model_forward.13} parent=1 // pred_region
      _
    $region29: #{model_forward.13} parent=1 // pred_fallthru
      _
    // Predicated region
    $region30: #{model_forward.13} parent=1 // pred_check
      _
    $region31: #{model_forward.13} parent=1 // pred_check_branch
      %1693 = sbr.rel (0) target = $region33
    $region32: #{model_forward.13} parent=1 // pred_region
      _
    $region33: #{model_forward.13} parent=1 // pred_fallthru
      _
    %1694 = vsyncpa [#allocation3], 1
    %1695 = vsyncpa [#allocation5], 1

// kernel: model_forward.12
$region0: #{model_forward.12}
  #allocation0 [shape = 'u32[]', space=smem, size = 0x4, offset = 0x4, fixed_abs, tag = 'smem constant byte address 0x4 - core index']
  #allocation1 [shape = 'u32[72,128]{1,0:T(1,128)}', space=vmem, size = 0x9000, scoped, tag = 'internal scratch']
  #allocation2 [shape = 'f32[8,128]{1,0:T(8,128)}', space=vmem, size = 0x1000, scoped, tag = 'scratch operand']
  #allocation3 [shape = 'f32[8,128]{1,0:T(8,128)}', space=vmem, size = 0x1000, scoped, tag = 'scratch operand']
  %s0 = inlined_call_operand.vmem [shape: s32[8,1], index: 0, kind: input, shape index: {}]
  %s1 = inlined_call_operand.vmem [shape: bf16[2,16,8,512], index: 1, kind: input, shape index: {}]
  %s2 = inlined_call_operand.hbm [shape: f32[2,128,512], index: 2, kind: input, shape index: {}]
  %s3 = inlined_call_operand.vmem [shape: bf16[2,16,8,128], index: 3, kind: output, shape index: {}]
  %s4 = sld [smem:[#allocation0]]
  $region53: #{model_forward.12} parent=0
    _
  %s6 = ssub.s32 1, %s4
  %s7 = scalar_select 0, %s6, %s4
  $region1: #{model_forward.12} parent=0
    #allocation4 [shape = 'u8[524288]{0}', space=vmem, size = 0x80000, scoped, tag = 'input window, operand 2']
    #allocation5 [shape = 's32[2]{0}', space=sflag, size = 0x8, scoped, tag = 'scoped memory for model_forward.12']
    %8 = vsyncpa [#allocation5], 0
    %s9 = scalar_lea.sflag [#allocation5], 1
    %10 = vsyncpa %s9, 0
    loop: start=0, step=1, limit=4
    $region2: #{model_forward.12} parent=1 // loop_pre_header
      _
    $region3: #{model_forward.12} parent=1 // loop_header
      %s12 = sphi 0, %s16
      %p13 = scmp.ge.s32.totalorder %s12, 4
      %s19 = sphi 0, %s31
      %s20 = sphi 0, %s27
      %s21 = sphi 0, %s19
      %s22 = sphi 0, %s20
      %s23 = sphi 0, %s21
      %s24 = sphi 0, %s22
      %s32 = sphi 0, %s32
      %s34 = sphi 0, %s32
      %s35 = sphi 0, %s34
      %s49 = sphi 0, %s35
      %s65 = sphi 0, %s67
      %s68 = sphi 0, %s65
      %s69 = sphi 0, %s68
      %s85 = sphi 0, %s69
      %s91 = sphi 0, %s93
      %s94 = sphi 0, %s91
      %s95 = sphi 0, %s94
      %s111 = sphi 0, %s95
      %s127 = sphi 0, %s129
      %s130 = sphi 0, %s127
      %s131 = sphi 0, %s130
      %s147 = sphi 0, %s131
    $region4: #{model_forward.12} parent=1 // loop_header_branch
      %15 = sbr.rel (%p13) target = $region8
    $region5: #{model_forward.12} parent=1 // loop_body
      %s17 = ssub.s32 %s12, 1
      %s18 = ssub.s32 %s12, 2
      %s25 = sadd.s32 1, %s20
      %p26 = scmp.ge.s32.totalorder %s25, 1
      %s27 = scalar_select %p26, 0, %s25
      %s28 = sadd.s32 1, %s19
      %s29 = scalar_select %p26, %s28, %s19
      %p30 = scmp.ge.s32.totalorder %s29, 2
      %s31 = scalar_select %p30, 0, %s29
      %s33 = sadd.s32 %s32, 1
      %p36 = scmp.eq.s32.totalorder %s12, 1
      %p37 = scmp.ne.s32.totalorder %s32, %s34
      %p38 = scmp.eq.s32.totalorder %s12, 0
      %p39 = por %p37, %p38
      %p40 = scmp.ne.s32.totalorder %s32, %s34
      %p41 = scmp.eq.s32.totalorder %s17, 1
      %p42 = por %p40, %p41
      %p43 = scmp.ne.s32.totalorder %s34, %s35
      %p44 = scmp.eq.s32.totalorder %s17, 0
      %p45 = por %p43, %p44
      %p46 = scmp.ne.s32.totalorder %s34, %s35
      %p47 = scmp.eq.s32.totalorder %s18, 1
      %p48 = por %p46, %p47
      %p50 = scmp.ne.s32.totalorder %s35, %s49
      %p51 = scmp.eq.s32.totalorder %s18, 0
      %p52 = por %p50, %p51
      %s53 = smul.u32 %s20, 2
      %s54 = ssub.s32 0, %s53
      %s55 = smul.u32 %s19, %s54
      %s56 = sadd.s32 %s20, %s55
      %s57 = smul.u32 %s27, 2
      %s58 = ssub.s32 0, %s57
      %s59 = smul.u32 %s31, %s58
      %s60 = sadd.s32 %s27, %s59
      %s61 = ssub.s32 %s19, %s31
      %s62 = ssub.s32 %s56, %s60
      %s63 = sor.u32 %s61, %s62
      %p64 = scmp.eq.s32.totalorder %s63, 0
      %s66 = sadd.s32 %s65, 1
      %s67 = scalar_select %p64, %s65, %s66
      %p70 = pneg %p64
      %p71 = scmp.eq.s32.totalorder %s12, 1
      %p72 = por %p70, %p71
      %p73 = scmp.ne.s32.totalorder %s65, %s68
      %p74 = scmp.eq.s32.totalorder %s12, 0
      %p75 = por %p73, %p74
      %p76 = scmp.ne.s32.totalorder %s65, %s68
      %p77 = scmp.eq.s32.totalorder %s17, 1
      %p78 = por %p76, %p77
      %p79 = scmp.ne.s32.totalorder %s68, %s69
      %p80 = scmp.eq.s32.totalorder %s17, 0
      %p81 = por %p79, %p80
      %p82 = scmp.ne.s32.totalorder %s68, %s69
      %p83 = scmp.eq.s32.totalorder %s18, 1
      %p84 = por %p82, %p83
      %p86 = scmp.ne.s32.totalorder %s69, %s85
      %p87 = scmp.eq.s32.totalorder %s18, 0
      %p88 = por %p86, %p87
      %s89 = ssub.s32 %s19, %s31
      %p90 = scmp.eq.s32.totalorder %s89, 0
      %s92 = sadd.s32 %s91, 1
      %s93 = scalar_select %p90, %s91, %s92
      %p96 = pneg %p90
      %p97 = scmp.eq.s32.totalorder %s12, 1
      %p98 = por %p96, %p97
      %p99 = scmp.ne.s32.totalorder %s91, %s94
      %p100 = scmp.eq.s32.totalorder %s12, 0
      %p101 = por %p99, %p100
      %p102 = scmp.ne.s32.totalorder %s91, %s94
      %p103 = scmp.eq.s32.totalorder %s17, 1
      %p104 = por %p102, %p103
      %p105 = scmp.ne.s32.totalorder %s94, %s95
      %p106 = scmp.eq.s32.totalorder %s17, 0
      %p107 = por %p105, %p106
      %p108 = scmp.ne.s32.totalorder %s94, %s95
      %p109 = scmp.eq.s32.totalorder %s18, 1
      %p110 = por %p108, %p109
      %p112 = scmp.ne.s32.totalorder %s95, %s111
      %p113 = scmp.eq.s32.totalorder %s18, 0
      %p114 = por %p112, %p113
      %s115 = smul.u32 %s20, 2
      %s116 = ssub.s32 0, %s115
      %s117 = smul.u32 %s19, %s116
      %s118 = sadd.s32 %s20, %s117
      %s119 = smul.u32 %s27, 2
      %s120 = ssub.s32 0, %s119
      %s121 = smul.u32 %s31, %s120
      %s122 = sadd.s32 %s27, %s121
      %s123 = ssub.s32 %s19, %s31
      %s124 = ssub.s32 %s118, %s122
      %s125 = sor.u32 %s123, %s124
      %p126 = scmp.eq.s32.totalorder %s125, 0
      %s128 = sadd.s32 %s127, 1
      %s129 = scalar_select %p126, %s127, %s128
      %p132 = pneg %p126
      %p133 = scmp.eq.s32.totalorder %s12, 1
      %p134 = por %p132, %p133
      %p135 = scmp.ne.s32.totalorder %s127, %s130
      %p136 = scmp.eq.s32.totalorder %s12, 0
      %p137 = por %p135, %p136
      %p138 = scmp.ne.s32.totalorder %s127, %s130
      %p139 = scmp.eq.s32.totalorder %s17, 1
      %p140 = por %p138, %p139
      %p141 = scmp.ne.s32.totalorder %s130, %s131
      %p142 = scmp.eq.s32.totalorder %s17, 0
      %p143 = por %p141, %p142
      %p144 = scmp.ne.s32.totalorder %s130, %s131
      %p145 = scmp.eq.s32.totalorder %s18, 1
      %p146 = por %p144, %p145
      %p148 = scmp.ne.s32.totalorder %s131, %s147
      %p149 = scmp.eq.s32.totalorder %s18, 0
      %p150 = por %p148, %p149
      %p151 = scmp.le.s32.totalorder 1, %s12
      %p152 = scmp.lt.s32.totalorder %s12, 3
      %p153 = pnand %p151, %p152
      %p154 = pneg %p153
      // Predicated region
      $region9: #{model_forward.12} parent=5 // pred_check
        _
      $region10: #{model_forward.12} parent=5 // pred_check_branch
        %156 = sbr.rel (%p153) target = $region12
      $region11: #{model_forward.12} parent=5 // pred_region
        %s157 = ssub.s32 %s12, 1
        // Predicated region
        $region13: #{model_forward.12} parent=11 // pred_check
          %p158 = pneg %p45
        $region14: #{model_forward.12} parent=11 // pred_check_branch
          %160 = sbr.rel (%p158) target = $region16
        $region15: #{model_forward.12} parent=11 // pred_region
          _
        $region16: #{model_forward.12} parent=11 // pred_fallthru
          _
      $region12: #{model_forward.12} parent=5 // pred_fallthru
        _
      %p161 = scmp.lt.s32.totalorder %s12, 2
      // Predicated region
      $region17: #{model_forward.12} parent=5 // pred_check
        %p162 = pneg %p161
      $region18: #{model_forward.12} parent=5 // pred_check_branch
        %164 = sbr.rel (%p162) target = $region20
      $region19: #{model_forward.12} parent=5 // pred_region
        // Predicated region
        $region21: #{model_forward.12} parent=19 // pred_check
          %p165 = pneg %p75
        $region22: #{model_forward.12} parent=19 // pred_check_branch
          %167 = sbr.rel (%p165) target = $region24
        $region23: #{model_forward.12} parent=19 // pred_region
          %s168 = smul.u32 %s20, 2
          %s169 = ssub.s32 0, %s168
          %s170 = smul.u32 %s19, %s169
          %s171 = sadd.s32 %s20, %s170
          %s172 = smul.u32 16, %s171
          %p173 = scmp.lt.s32.totalorder %s19, 1
          %s174 = scalar_select %p173, %s19, 1
          %p175 = scmp.lt.s32.totalorder %s172, 15
          %s176 = scalar_select %p175, %s172, 15
          %s177 = smul.addr %s176, 4
          %s178 = smul.addr %s174, 64
          %s179 = sadd.s32 %s177, %s178
          %s180 = smul.addr %s179, 4
          %s181 = scalar_lea.vmem %s1, %s180
          %s182 = smul.u32 %s20, 2
          %s183 = ssub.s32 0, %s182
          %s184 = smul.u32 %s19, %s183
          %s185 = sadd.s32 %s20, %s184
          %s186 = smul.u32 16, %s185
        $region24: #{model_forward.12} parent=19 // pred_fallthru
          _
        // Predicated region
        $region25: #{model_forward.12} parent=19 // pred_check
          %p187 = pneg %p101
        $region26: #{model_forward.12} parent=19 // pred_check_branch
          %189 = sbr.rel (%p187) target = $region28
        $region27: #{model_forward.12} parent=19 // pred_region
          %s190 = sand.u32 %s91, 1
          %s191 = scalar_lea.sflag [#allocation5], %s190
          %s192 = sand.u32 %s91, 1
          %s193 = smul.addr %s192, 512
          %s194 = scalar_lea.vmem [#allocation4], %s193
          %196 = vsyncadd %s191, 0
          %s197 = smul.addr %s19, 64
          %s198 = smul.addr %s197, 8
          %s199 = scalar_lea.hbm %s2, %s198
          %s200 = sshll.u32 %s199, 4
          %s201 = int_to_ptr.hbm [resolvable:$true] %s200
          %s202 = sshll.u32 %s194, 4
          %s203 = int_to_ptr.vmem [resolvable:$true] %s202
          %208 = dma.hbm_to_vmem [thread:$0]  %s201, 8192, %s203, %s191, 512, 512, 32
        $region28: #{model_forward.12} parent=19 // pred_fallthru
          _
      $region20: #{model_forward.12} parent=5 // pred_fallthru
        _
      %p209 = scmp.le.s32.totalorder 1, %s12
      %p210 = scmp.lt.s32.totalorder %s12, 3
      %p211 = pnand %p209, %p210
      %p212 = pneg %p211
      // Predicated region
      $region29: #{model_forward.12} parent=5 // pred_check
        _
      $region30: #{model_forward.12} parent=5 // pred_check_branch
        %214 = sbr.rel (%p211) target = $region32
      $region31: #{model_forward.12} parent=5 // pred_region
        %s215 = ssub.s32 %s12, 1
        %s216 = sand.u32 %s94, 1
        %s217 = scalar_lea.sflag [#allocation5], %s216
        %s218 = sand.u32 %s94, 1
        %s219 = smul.addr %s218, 512
        %s220 = scalar_lea.vmem [#allocation4], %s219
        // Predicated region
        $region33: #{model_forward.12} parent=31 // pred_check
          %p221 = pneg %p107
        $region34: #{model_forward.12} parent=31 // pred_check_branch
          %223 = sbr.rel (%p221) target = $region36
        $region35: #{model_forward.12} parent=31 // pred_region
          %225 = dma.done %s217, 8192
        $region36: #{model_forward.12} parent=31 // pred_fallthru
          _
        %p226 = pneg %p45
        %p227 = pneg %p42
        %s228 = smul.u32 %s22, 2
        %s229 = ssub.s32 0, %s228
        %s230 = smul.u32 %s21, %s229
        %s231 = sadd.s32 %s22, %s230
        %s232 = smul.u32 16, %s231
        %p233 = scmp.lt.s32.totalorder %s21, 1
        %s234 = scalar_select %p233, %s21, 1
        %p235 = scmp.lt.s32.totalorder %s232, 15
        %s236 = scalar_select %p235, %s232, 15
        %s237 = smul.addr %s236, 4
        %s238 = smul.addr %s234, 64
        %s239 = sadd.s32 %s237, %s238
        %s240 = smul.addr %s239, 4
        %s241 = scalar_lea.vmem %s1, %s240
        %p242 = pneg %p81
        %p243 = pneg %p78
        %s244 = sand.u32 %s94, 1
        %s245 = scalar_lea.sflag [#allocation5], %s244
        %s246 = sand.u32 %s94, 1
        %s247 = smul.addr %s246, 512
        %s248 = scalar_lea.vmem [#allocation4], %s247
        %p249 = pneg %p107
        %p250 = pneg %p104
        %p251 = pneg %p143
        %p252 = pneg %p140
        %s253 = smul.u32 %s22, 2
        %s254 = ssub.s32 0, %s253
        %s255 = smul.u32 %s21, %s254
        %s256 = sadd.s32 %s22, %s255
        %s257 = smul.u32 16, %s256
        %p258 = scmp.lt.s32.totalorder %s21, 1
        %s259 = scalar_select %p258, %s21, 1
        %p260 = scmp.lt.s32.totalorder %s257, 15
        %s261 = scalar_select %p260, %s257, 15
        %s262 = smul.addr %s259, 16
        %s263 = sadd.s32 %s261, %s262
        %s264 = smul.addr %s263, 4
        %s265 = scalar_lea.vmem %s3, %s264
        %s266 = smul.u32 %s22, 2
        %s267 = ssub.s32 0, %s266
        %s268 = smul.u32 %s21, %s267
        %s269 = sadd.s32 %s22, %s268
        %s270 = smul.u32 16, %s269
        %p271 = scmp.lt.s32.totalorder %s21, 1
        %s272 = scalar_select %p271, %s21, 1
        %p273 = scmp.lt.s32.totalorder %s270, 15
        %s274 = scalar_select %p273, %s270, 15
        %s275 = smul.addr %s274, 4
        %s276 = smul.addr %s272, 64
        %s277 = sadd.s32 %s275, %s276
        %s278 = smul.addr %s277, 4
        %s279 = scalar_lea.vmem %s1, %s278
        %s280 = smul.u32 %s22, 2
        %s281 = ssub.s32 0, %s280
        %s282 = smul.u32 %s21, %s281
        %s283 = sadd.s32 %s22, %s282
        %s284 = smul.u32 16, %s283
        %s285 = smul.u32 %s22, 2
        %s286 = ssub.s32 0, %s285
        %s287 = smul.u32 %s21, %s286
        %s288 = sadd.s32 %s22, %s287
        %s289 = smul.u32 16, %s288
        %p290 = scmp.lt.s32.totalorder %s21, 1
        %s291 = scalar_select %p290, %s21, 1
        %p292 = scmp.lt.s32.totalorder %s289, 15
        %s293 = scalar_select %p292, %s289, 15
        %s294 = smul.addr %s291, 16
        %s295 = sadd.s32 %s293, %s294
        %s296 = smul.addr %s295, 4
        %s297 = scalar_lea.vmem %s3, %s296
        %s298 = smul.u32 %s22, 2
        %s299 = ssub.s32 0, %s298
        %s300 = smul.u32 %s21, %s299
        %s301 = sadd.s32 %s22, %s300
        %s302 = smul.u32 16, %s301
        %p303 = scmp.eq.s32.totalorder %s22, 0
        // Predicated region
        $region37: #{model_forward.12} parent=31 // pred_check
          %p304 = pneg %p303
        $region38: #{model_forward.12} parent=31 // pred_check_branch
          %306 = sbr.rel (%p304) target = $region40
        $region39: #{model_forward.12} parent=31 // pred_region
          %307 = vst [vmem:[#allocation2] sm:$0xff] 0.0
          %308 = vst [vmem:[#allocation3] sm:$0xff] 0.0
        $region40: #{model_forward.12} parent=31 // pred_fallthru
          _
        %s309 = smul.u32 %s22, 2
        %s310 = ssub.s32 0, %s309
        %s311 = smul.u32 %s21, %s310
        %s312 = sadd.s32 %s22, %s311
        %v313 = vld [vmem:[%s0] sm:$0xff]
        %v314 = vld [vmem:[%s220] sm:$0xff]
        %v315 = vld [vmem:[%s220 + $0x8] sm:$0xff]
        %v316 = vld [vmem:[%s220 + $0x10] sm:$0xff]
        %v317 = vld [vmem:[%s220 + $0x18] sm:$0xff]
        %v318 = vld [vmem:[%s220 + $0x20] sm:$0xff]
        %v319 = vld [vmem:[%s220 + $0x28] sm:$0xff]
        %v320 = vld [vmem:[%s220 + $0x30] sm:$0xff]
        %v321 = vld [vmem:[%s220 + $0x38] sm:$0xff]
        %v322 = vld [vmem:[%s220 + $0x40] sm:$0xff]
        %v323 = vld [vmem:[%s220 + $0x48] sm:$0xff]
        %v324 = vld [vmem:[%s220 + $0x50] sm:$0xff]
        %v325 = vld [vmem:[%s220 + $0x58] sm:$0xff]
        %v326 = vld [vmem:[%s220 + $0x60] sm:$0xff]
        %v327 = vld [vmem:[%s220 + $0x68] sm:$0xff]
        %v328 = vld [vmem:[%s220 + $0x70] sm:$0xff]
        %v329 = vld [vmem:[%s220 + $0x78] sm:$0xff]
        %v330 = vld [vmem:[%s220 + $0x80] sm:$0xff]
        %v331 = vld [vmem:[%s220 + $0x88] sm:$0xff]
        %v332 = vld [vmem:[%s220 + $0x90] sm:$0xff]
        %v333 = vld [vmem:[%s220 + $0x98] sm:$0xff]
        %v334 = vld [vmem:[%s220 + $0xa0] sm:$0xff]
        %v335 = vld [vmem:[%s220 + $0xa8] sm:$0xff]
        %v336 = vld [vmem:[%s220 + $0xb0] sm:$0xff]
        %v337 = vld [vmem:[%s220 + $0xb8] sm:$0xff]
        %v338 = vld [vmem:[%s220 + $0xc0] sm:$0xff]
        %v339 = vld [vmem:[%s220 + $0xc8] sm:$0xff]
        %v340 = vld [vmem:[%s220 + $0xd0] sm:$0xff]
        %v341 = vld [vmem:[%s220 + $0xd8] sm:$0xff]
        %v342 = vld [vmem:[%s220 + $0xe0] sm:$0xff]
        %v343 = vld [vmem:[%s220 + $0xe8] sm:$0xff]
        %v344 = vld [vmem:[%s220 + $0xf0] sm:$0xff]
        %v345 = vld [vmem:[%s220 + $0xf8] sm:$0xff]
        %v346 = vld [vmem:[%s220 + $0x100] sm:$0xff]
        %v347 = vld [vmem:[%s220 + $0x108] sm:$0xff]
        %v348 = vld [vmem:[%s220 + $0x110] sm:$0xff]
        %v349 = vld [vmem:[%s220 + $0x118] sm:$0xff]
        %v350 = vld [vmem:[%s220 + $0x120] sm:$0xff]
        %v351 = vld [vmem:[%s220 + $0x128] sm:$0xff]
        %v352 = vld [vmem:[%s220 + $0x130] sm:$0xff]
        %v353 = vld [vmem:[%s220 + $0x138] sm:$0xff]
        %v354 = vld [vmem:[%s220 + $0x140] sm:$0xff]
        %v355 = vld [vmem:[%s220 + $0x148] sm:$0xff]
        %v356 = vld [vmem:[%s220 + $0x150] sm:$0xff]
        %v357 = vld [vmem:[%s220 + $0x158] sm:$0xff]
        %v358 = vld [vmem:[%s220 + $0x160] sm:$0xff]
        %v359 = vld [vmem:[%s220 + $0x168] sm:$0xff]
        %v360 = vld [vmem:[%s220 + $0x170] sm:$0xff]
        %v361 = vld [vmem:[%s220 + $0x178] sm:$0xff]
        %v362 = vld [vmem:[%s220 + $0x180] sm:$0xff]
        %v363 = vld [vmem:[%s220 + $0x188] sm:$0xff]
        %v364 = vld [vmem:[%s220 + $0x190] sm:$0xff]
        %v365 = vld [vmem:[%s220 + $0x198] sm:$0xff]
        %v366 = vld [vmem:[%s220 + $0x1a0] sm:$0xff]
        %v367 = vld [vmem:[%s220 + $0x1a8] sm:$0xff]
        %v368 = vld [vmem:[%s220 + $0x1b0] sm:$0xff]
        %v369 = vld [vmem:[%s220 + $0x1b8] sm:$0xff]
        %v370 = vld [vmem:[%s220 + $0x1c0] sm:$0xff]
        %v371 = vld [vmem:[%s220 + $0x1c8] sm:$0xff]
        %v372 = vld [vmem:[%s220 + $0x1d0] sm:$0xff]
        %v373 = vld [vmem:[%s220 + $0x1d8] sm:$0xff]
        %v374 = vld [vmem:[%s220 + $0x1e0] sm:$0xff]
        %v375 = vld [vmem:[%s220 + $0x1e8] sm:$0xff]
        %v376 = vld [vmem:[%s220 + $0x1f0] sm:$0xff]
        %v377 = vld [vmem:[%s220 + $0x1f8] sm:$0xff]
        %s378 = smul.u32 %s21, 15
        %s379 = smul.u32 %s312, 16
        %s380 = sadd.s32 %s379, %s378
        %s381 = smul.u32 %s378, 4
        %s382 = smul.addr %s381, 4
        %s383 = scalar_lea.vmem %s279, %s382
        %v384 = vld [vmem:[%s383] sm:$0xff]
        %v385 = vld [vmem:[%s383 + $0x8] sm:$0xff]
        %v386 = vunpack.c.l.bf16 %v384
        %v387 = vunpack.c.h.bf16 %v384
        %v388 = vunpack.c.l.bf16 %v385
        %v389 = vunpack.c.h.bf16 %v385
        %v390 = vld [vmem:[#allocation2] sm:$0xff]
        %391 = vmatpush.msra.mxu0 %v374
        %392 = vmatpush.msra.mxu0 %v370
        %393 = vmatpush.msra.mxu0 %v366
        %394 = vmatpush.msra.mxu0 %v362
        %395 = vmatpush.msra.mxu0 %v358
        %396 = vmatpush.msra.mxu0 %v354
        %397 = vmatpush.msra.mxu0 %v350
        %398 = vmatpush.msra.mxu0 %v346
        %399 = vmatpush.msra.mxu0 %v342
        %400 = vmatpush.msra.mxu0 %v338
        %401 = vmatpush.msra.mxu0 %v334
        %402 = vmatpush.msra.mxu0 %v330
        %403 = vmatpush.msra.mxu0 %v326
        %404 = vmatpush.msra.mxu0 %v322
        %405 = vmatpush.msra.mxu0 %v318
        %406 = vmatpush.msra.mxu0 %v314
        %407 = vmatmul.f32.gmra.mxu0 %v390
        %v408 = vpop.f32.mrf.mxu0
        %v409 = vadd.f32 0.0, %v408
        %410 = vdwg.mxu0
        %411 = vmatpush.msra.mxu0 %v375
        %412 = vmatpush.msra.mxu0 %v371
        %413 = vmatpush.msra.mxu0 %v367
        %414 = vmatpush.msra.mxu0 %v363
        %415 = vmatpush.msra.mxu0 %v359
        %416 = vmatpush.msra.mxu0 %v355
        %417 = vmatpush.msra.mxu0 %v351
        %418 = vmatpush.msra.mxu0 %v347
        %419 = vmatpush.msra.mxu0 %v343
        %420 = vmatpush.msra.mxu0 %v339
        %421 = vmatpush.msra.mxu0 %v335
        %422 = vmatpush.msra.mxu0 %v331
        %423 = vmatpush.msra.mxu0 %v327
        %424 = vmatpush.msra.mxu0 %v323
        %425 = vmatpush.msra.mxu0 %v319
        %426 = vmatpush.msra.mxu0 %v315
        %427 = vmatmul.f32.gmra.mxu0 %v390
        %v428 = vpop.f32.mrf.mxu0
        %v429 = vadd.f32 0.0, %v428
        %430 = vdwg.mxu0
        %431 = vmatpush.msra.mxu0 %v376
        %432 = vmatpush.msra.mxu0 %v372
        %433 = vmatpush.msra.mxu0 %v368
        %434 = vmatpush.msra.mxu0 %v364
        %435 = vmatpush.msra.mxu0 %v360
        %436 = vmatpush.msra.mxu0 %v356
        %437 = vmatpush.msra.mxu0 %v352
        %438 = vmatpush.msra.mxu0 %v348
        %439 = vmatpush.msra.mxu0 %v344
        %440 = vmatpush.msra.mxu0 %v340
        %441 = vmatpush.msra.mxu0 %v336
        %442 = vmatpush.msra.mxu0 %v332
        %443 = vmatpush.msra.mxu0 %v328
        %444 = vmatpush.msra.mxu0 %v324
        %445 = vmatpush.msra.mxu0 %v320
        %446 = vmatpush.msra.mxu0 %v316
        %447 = vmatmul.f32.gmra.mxu0 %v390
        %v448 = vpop.f32.mrf.mxu0
        %v449 = vadd.f32 0.0, %v448
        %450 = vdwg.mxu0
        %451 = vmatpush.msra.mxu0 %v377
        %452 = vmatpush.msra.mxu0 %v373
        %453 = vmatpush.msra.mxu0 %v369
        %454 = vmatpush.msra.mxu0 %v365
        %455 = vmatpush.msra.mxu0 %v361
        %456 = vmatpush.msra.mxu0 %v357
        %457 = vmatpush.msra.mxu0 %v353
        %458 = vmatpush.msra.mxu0 %v349
        %459 = vmatpush.msra.mxu0 %v345
        %460 = vmatpush.msra.mxu0 %v341
        %461 = vmatpush.msra.mxu0 %v337
        %462 = vmatpush.msra.mxu0 %v333
        %463 = vmatpush.msra.mxu0 %v329
        %464 = vmatpush.msra.mxu0 %v325
        %465 = vmatpush.msra.mxu0 %v321
        %466 = vmatpush.msra.mxu0 %v317
        %467 = vmatmul.f32.gmra.mxu0 %v390
        %v468 = vpop.f32.mrf.mxu0
        %v469 = vadd.f32 0.0, %v468
        %470 = vdwg.mxu0
        %v471 = vadd.f32 %v386, %v409
        %v472 = vadd.f32 %v387, %v429
        %v473 = vadd.f32 %v388, %v449
        %v474 = vadd.f32 %v389, %v469
        %v475 = vxor.u32 %v471, 2147483648
        %v476 = vmul.f32 %v475, 1.442695
        %v477 = vpow.pop %v476
        %v478 = vadd.f32 %v477, 1.0
        %v479 = vrcp.pop %v478
        %v480 = vmul.f32 %v478, %v479
        %v481 = vsub.f32 1.0, %v480
        %v482 = vmul.f32 %v479, %v481
        %v483 = vadd.f32 %v479, %v482
        %vm484 = vweird.f32 %v478
        %vm485 = vweird.f32 %v479
        %vm486 = vmor %vm484, %vm485
        %v487 = vsel %vm486, %v479, %v483
        %v488 = vand.u32 2147483647, %v478
        %vm489 = vcmp.eq.f32.partialorder %v488, 8.507059e+37
        %v490 = vand.u32 %v478, 2147483648
        %v491 = vor.u32 1.1754944e-38, %v490
        %v492 = vsel %vm489, %v491, %v487
        %v493 = vmul.f32 1.0, %v492
        %v494 = vxor.u32 %v472, 2147483648
        %v495 = vmul.f32 %v494, 1.442695
        %v496 = vpow.pop %v495
        %v497 = vadd.f32 %v496, 1.0
        %v498 = vrcp.pop %v497
        %v499 = vmul.f32 %v497, %v498
        %v500 = vsub.f32 1.0, %v499
        %v501 = vmul.f32 %v498, %v500
        %v502 = vadd.f32 %v498, %v501
        %vm503 = vweird.f32 %v497
        %vm504 = vweird.f32 %v498
        %vm505 = vmor %vm503, %vm504
        %v506 = vsel %vm505, %v498, %v502
        %v507 = vand.u32 2147483647, %v497
        %vm508 = vcmp.eq.f32.partialorder %v507, 8.507059e+37
        %v509 = vand.u32 %v497, 2147483648
        %v510 = vor.u32 1.1754944e-38, %v509
        %v511 = vsel %vm508, %v510, %v506
        %v512 = vmul.f32 1.0, %v511
        %v513 = vtanh.pop %v473
        %v514 = vxor.u32 %v474, 2147483648
        %v515 = vmul.f32 %v514, 1.442695
        %v516 = vpow.pop %v515
        %v517 = vadd.f32 %v516, 1.0
        %v518 = vrcp.pop %v517
        %v519 = vmul.f32 %v517, %v518
        %v520 = vsub.f32 1.0, %v519
        %v521 = vmul.f32 %v518, %v520
        %v522 = vadd.f32 %v518, %v521
        %vm523 = vweird.f32 %v517
        %vm524 = vweird.f32 %v518
        %vm525 = vmor %vm523, %vm524
        %v526 = vsel %vm525, %v518, %v522
        %v527 = vand.u32 2147483647, %v517
        %vm528 = vcmp.eq.f32.partialorder %v527, 8.507059e+37
        %v529 = vand.u32 %v517, 2147483648
        %v530 = vor.u32 1.1754944e-38, %v529
        %v531 = vsel %vm528, %v530, %v526
        %v532 = vmul.f32 1.0, %v531
        %v533 = vstv %s380
        %vm534 = vcmp.lt.s32.totalorder %v533, %v313
        %v535 = vsel %vm534, 1, 0
        %v536 = vcvt.s32.f32 %v535
        %v537 = vld [vmem:[#allocation3] sm:$0xff]
        %v538 = vmul.f32 %v512, %v537
        %v539 = vmul.f32 %v493, %v513
        %v540 = vadd.f32 %v538, %v539
        %542 = vset.pattern.permute.xlu0 0
        %543 = vperm.xlu0 %542, %v536
        %v544 = vpop.permute.xlu0 %543
        %v546 = vmul.f32 %v540, %v544
        %v547 = vtanh.pop %v546
        %v548 = vmul.f32 %v532, %v547
        %v549 = vmul.f32 %v548, %v544
        %550 = vst [vmem:[#allocation3] sm:$0xff] %v546
        %551 = vst [vmem:[#allocation2] sm:$0xff] %v549
        %v552 = vpack.c.bf16 %v549, %v549
        %s553 = smul.addr %s378, 4
        %s554 = scalar_lea.vmem %s297, %s553
        %555 = vst [vmem:[%s554] sm:$0xf] %v552
        %s556 = smul.u32 %s21, 13
        %s557 = sadd.s32 %s556, 1
        %s558 = sadd.s32 %s379, %s557
        %s559 = smul.u32 %s557, 4
        %s560 = smul.addr %s559, 4
        %s561 = scalar_lea.vmem %s279, %s560
        %v562 = vld [vmem:[%s561] sm:$0xff]
        %v563 = vld [vmem:[%s561 + $0x8] sm:$0xff]
        %v564 = vunpack.c.l.bf16 %v562
        %v565 = vunpack.c.h.bf16 %v562
        %v566 = vunpack.c.l.bf16 %v563
        %v567 = vunpack.c.h.bf16 %v563
        %v568 = vld [vmem:[#allocation2] sm:$0xff]
        %569 = vmatpush.msra.mxu0 %v374
        %570 = vmatpush.msra.mxu0 %v370
        %571 = vmatpush.msra.mxu0 %v366
        %572 = vmatpush.msra.mxu0 %v362
        %573 = vmatpush.msra.mxu0 %v358
        %574 = vmatpush.msra.mxu0 %v354
        %575 = vmatpush.msra.mxu0 %v350
        %576 = vmatpush.msra.mxu0 %v346
        %577 = vmatpush.msra.mxu0 %v342
        %578 = vmatpush.msra.mxu0 %v338
        %579 = vmatpush.msra.mxu0 %v334
        %580 = vmatpush.msra.mxu0 %v330
        %581 = vmatpush.msra.mxu0 %v326
        %582 = vmatpush.msra.mxu0 %v322
        %583 = vmatpush.msra.mxu0 %v318
        %584 = vmatpush.msra.mxu0 %v314
        %585 = vmatmul.f32.gmra.mxu0 %v568
        %v586 = vpop.f32.mrf.mxu0
        %v587 = vadd.f32 0.0, %v586
        %588 = vdwg.mxu0
        %589 = vmatpush.msra.mxu0 %v375
        %590 = vmatpush.msra.mxu0 %v371
        %591 = vmatpush.msra.mxu0 %v367
        %592 = vmatpush.msra.mxu0 %v363
        %593 = vmatpush.msra.mxu0 %v359
        %594 = vmatpush.msra.mxu0 %v355
        %595 = vmatpush.msra.mxu0 %v351
        %596 = vmatpush.msra.mxu0 %v347
        %597 = vmatpush.msra.mxu0 %v343
        %598 = vmatpush.msra.mxu0 %v339
        %599 = vmatpush.msra.mxu0 %v335
        %600 = vmatpush.msra.mxu0 %v331
        %601 = vmatpush.msra.mxu0 %v327
        %602 = vmatpush.msra.mxu0 %v323
        %603 = vmatpush.msra.mxu0 %v319
        %604 = vmatpush.msra.mxu0 %v315
        %605 = vmatmul.f32.gmra.mxu0 %v568
        %v606 = vpop.f32.mrf.mxu0
        %v607 = vadd.f32 0.0, %v606
        %608 = vdwg.mxu0
        %609 = vmatpush.msra.mxu0 %v376
        %610 = vmatpush.msra.mxu0 %v372
        %611 = vmatpush.msra.mxu0 %v368
        %612 = vmatpush.msra.mxu0 %v364
        %613 = vmatpush.msra.mxu0 %v360
        %614 = vmatpush.msra.mxu0 %v356
        %615 = vmatpush.msra.mxu0 %v352
        %616 = vmatpush.msra.mxu0 %v348
        %617 = vmatpush.msra.mxu0 %v344
        %618 = vmatpush.msra.mxu0 %v340
        %619 = vmatpush.msra.mxu0 %v336
        %620 = vmatpush.msra.mxu0 %v332
        %621 = vmatpush.msra.mxu0 %v328
        %622 = vmatpush.msra.mxu0 %v324
        %623 = vmatpush.msra.mxu0 %v320
        %624 = vmatpush.msra.mxu0 %v316
        %625 = vmatmul.f32.gmra.mxu0 %v568
        %v626 = vpop.f32.mrf.mxu0
        %v627 = vadd.f32 0.0, %v626
        %628 = vdwg.mxu0
        %629 = vmatpush.msra.mxu0 %v377
        %630 = vmatpush.msra.mxu0 %v373
        %631 = vmatpush.msra.mxu0 %v369
        %632 = vmatpush.msra.mxu0 %v365
        %633 = vmatpush.msra.mxu0 %v361
        %634 = vmatpush.msra.mxu0 %v357
        %635 = vmatpush.msra.mxu0 %v353
        %636 = vmatpush.msra.mxu0 %v349
        %637 = vmatpush.msra.mxu0 %v345
        %638 = vmatpush.msra.mxu0 %v341
        %639 = vmatpush.msra.mxu0 %v337
        %640 = vmatpush.msra.mxu0 %v333
        %641 = vmatpush.msra.mxu0 %v329
        %642 = vmatpush.msra.mxu0 %v325
        %643 = vmatpush.msra.mxu0 %v321
        %644 = vmatpush.msra.mxu0 %v317
        %645 = vmatmul.f32.gmra.mxu0 %v568
        %v646 = vpop.f32.mrf.mxu0
        %v647 = vadd.f32 0.0, %v646
        %648 = vdwg.mxu0
        %v649 = vadd.f32 %v564, %v587
        %v650 = vadd.f32 %v565, %v607
        %v651 = vadd.f32 %v566, %v627
        %v652 = vadd.f32 %v567, %v647
        %v653 = vxor.u32 %v649, 2147483648
        %v654 = vmul.f32 %v653, 1.442695
        %v655 = vpow.pop %v654
        %v656 = vadd.f32 %v655, 1.0
        %v657 = vrcp.pop %v656
        %v658 = vmul.f32 %v656, %v657
        %v659 = vsub.f32 1.0, %v658
        %v660 = vmul.f32 %v657, %v659
        %v661 = vadd.f32 %v657, %v660
        %vm662 = vweird.f32 %v656
        %vm663 = vweird.f32 %v657
        %vm664 = vmor %vm662, %vm663
        %v665 = vsel %vm664, %v657, %v661
        %v666 = vand.u32 2147483647, %v656
        %vm667 = vcmp.eq.f32.partialorder %v666, 8.507059e+37
        %v668 = vand.u32 %v656, 2147483648
        %v669 = vor.u32 1.1754944e-38, %v668
        %v670 = vsel %vm667, %v669, %v665
        %v671 = vmul.f32 1.0, %v670
        %v672 = vxor.u32 %v650, 2147483648
        %v673 = vmul.f32 %v672, 1.442695
        %v674 = vpow.pop %v673
        %v675 = vadd.f32 %v674, 1.0
        %v676 = vrcp.pop %v675
        %v677 = vmul.f32 %v675, %v676
        %v678 = vsub.f32 1.0, %v677
        %v679 = vmul.f32 %v676, %v678
        %v680 = vadd.f32 %v676, %v679
        %vm681 = vweird.f32 %v675
        %vm682 = vweird.f32 %v676
        %vm683 = vmor %vm681, %vm682
        %v684 = vsel %vm683, %v676, %v680
        %v685 = vand.u32 2147483647, %v675
        %vm686 = vcmp.eq.f32.partialorder %v685, 8.507059e+37
        %v687 = vand.u32 %v675, 2147483648
        %v688 = vor.u32 1.1754944e-38, %v687
        %v689 = vsel %vm686, %v688, %v684
        %v690 = vmul.f32 1.0, %v689
        %v691 = vtanh.pop %v651
        %v692 = vxor.u32 %v652, 2147483648
        %v693 = vmul.f32 %v692, 1.442695
        %v694 = vpow.pop %v693
        %v695 = vadd.f32 %v694, 1.0
        %v696 = vrcp.pop %v695
        %v697 = vmul.f32 %v695, %v696
        %v698 = vsub.f32 1.0, %v697
        %v699 = vmul.f32 %v696, %v698
        %v700 = vadd.f32 %v696, %v699
        %vm701 = vweird.f32 %v695
        %vm702 = vweird.f32 %v696
        %vm703 = vmor %vm701, %vm702
        %v704 = vsel %vm703, %v696, %v700
        %v705 = vand.u32 2147483647, %v695
        %vm706 = vcmp.eq.f32.partialorder %v705, 8.507059e+37
        %v707 = vand.u32 %v695, 2147483648
        %v708 = vor.u32 1.1754944e-38, %v707
        %v709 = vsel %vm706, %v708, %v704
        %v710 = vmul.f32 1.0, %v709
        %v711 = vstv %s558
        %vm712 = vcmp.lt.s32.totalorder %v711, %v313
        %v713 = vsel %vm712, 1, 0
        %v714 = vcvt.s32.f32 %v713
        %v715 = vld [vmem:[#allocation3] sm:$0xff]
        %v716 = vmul.f32 %v690, %v715
        %v717 = vmul.f32 %v671, %v691
        %v718 = vadd.f32 %v716, %v717
        %720 = vset.pattern.permute.xlu0 0
        %721 = vperm.xlu0 %720, %v714
        %v722 = vpop.permute.xlu0 %721
        %v724 = vmul.f32 %v718, %v722
        %v725 = vtanh.pop %v724
        %v726 = vmul.f32 %v710, %v725
        %v727 = vmul.f32 %v726, %v722
        %728 = vst [vmem:[#allocation3] sm:$0xff] %v724
        %729 = vst [vmem:[#allocation2] sm:$0xff] %v727
        %v730 = vpack.c.bf16 %v727, %v727
        %s731 = smul.addr %s557, 4
        %s732 = scalar_lea.vmem %s297, %s731
        %733 = vst [vmem:[%s732] sm:$0xf] %v730
        %s734 = smul.u32 %s21, 11
        %s735 = sadd.s32 %s734, 2
        %s736 = sadd.s32 %s379, %s735
        %s737 = smul.u32 %s735, 4
        %s738 = smul.addr %s737, 4
        %s739 = scalar_lea.vmem %s279, %s738
        %v740 = vld [vmem:[%s739] sm:$0xff]
        %v741 = vld [vmem:[%s739 + $0x8] sm:$0xff]
        %v742 = vunpack.c.l.bf16 %v740
        %v743 = vunpack.c.h.bf16 %v740
        %v744 = vunpack.c.l.bf16 %v741
        %v745 = vunpack.c.h.bf16 %v741
        %v746 = vld [vmem:[#allocation2] sm:$0xff]
        %747 = vmatpush.msra.mxu0 %v374
        %748 = vmatpush.msra.mxu0 %v370
        %749 = vmatpush.msra.mxu0 %v366
        %750 = vmatpush.msra.mxu0 %v362
        %751 = vmatpush.msra.mxu0 %v358
        %752 = vmatpush.msra.mxu0 %v354
        %753 = vmatpush.msra.mxu0 %v350
        %754 = vmatpush.msra.mxu0 %v346
        %755 = vmatpush.msra.mxu0 %v342
        %756 = vmatpush.msra.mxu0 %v338
        %757 = vmatpush.msra.mxu0 %v334
        %758 = vmatpush.msra.mxu0 %v330
        %759 = vmatpush.msra.mxu0 %v326
        %760 = vmatpush.msra.mxu0 %v322
        %761 = vmatpush.msra.mxu0 %v318
        %762 = vmatpush.msra.mxu0 %v314
        %763 = vmatmul.f32.gmra.mxu0 %v746
        %v764 = vpop.f32.mrf.mxu0
        %v765 = vadd.f32 0.0, %v764
        %766 = vdwg.mxu0
        %767 = vmatpush.msra.mxu0 %v375
        %768 = vmatpush.msra.mxu0 %v371
        %769 = vmatpush.msra.mxu0 %v367
        %770 = vmatpush.msra.mxu0 %v363
        %771 = vmatpush.msra.mxu0 %v359
        %772 = vmatpush.msra.mxu0 %v355
        %773 = vmatpush.msra.mxu0 %v351
        %774 = vmatpush.msra.mxu0 %v347
        %775 = vmatpush.msra.mxu0 %v343
        %776 = vmatpush.msra.mxu0 %v339
        %777 = vmatpush.msra.mxu0 %v335
        %778 = vmatpush.msra.mxu0 %v331
        %779 = vmatpush.msra.mxu0 %v327
        %780 = vmatpush.msra.mxu0 %v323
        %781 = vmatpush.msra.mxu0 %v319
        %782 = vmatpush.msra.mxu0 %v315
        %783 = vmatmul.f32.gmra.mxu0 %v746
        %v784 = vpop.f32.mrf.mxu0
        %v785 = vadd.f32 0.0, %v784
        %786 = vdwg.mxu0
        %787 = vmatpush.msra.mxu0 %v376
        %788 = vmatpush.msra.mxu0 %v372
        %789 = vmatpush.msra.mxu0 %v368
        %790 = vmatpush.msra.mxu0 %v364
        %791 = vmatpush.msra.mxu0 %v360
        %792 = vmatpush.msra.mxu0 %v356
        %793 = vmatpush.msra.mxu0 %v352
        %794 = vmatpush.msra.mxu0 %v348
        %795 = vmatpush.msra.mxu0 %v344
        %796 = vmatpush.msra.mxu0 %v340
        %797 = vmatpush.msra.mxu0 %v336
        %798 = vmatpush.msra.mxu0 %v332
        %799 = vmatpush.msra.mxu0 %v328
        %800 = vmatpush.msra.mxu0 %v324
        %801 = vmatpush.msra.mxu0 %v320
        %802 = vmatpush.msra.mxu0 %v316
        %803 = vmatmul.f32.gmra.mxu0 %v746
        %v804 = vpop.f32.mrf.mxu0
        %v805 = vadd.f32 0.0, %v804
        %806 = vdwg.mxu0
        %807 = vmatpush.msra.mxu0 %v377
        %808 = vmatpush.msra.mxu0 %v373
        %809 = vmatpush.msra.mxu0 %v369
        %810 = vmatpush.msra.mxu0 %v365
        %811 = vmatpush.msra.mxu0 %v361
        %812 = vmatpush.msra.mxu0 %v357
        %813 = vmatpush.msra.mxu0 %v353
        %814 = vmatpush.msra.mxu0 %v349
        %815 = vmatpush.msra.mxu0 %v345
        %816 = vmatpush.msra.mxu0 %v341
        %817 = vmatpush.msra.mxu0 %v337
        %818 = vmatpush.msra.mxu0 %v333
        %819 = vmatpush.msra.mxu0 %v329
        %820 = vmatpush.msra.mxu0 %v325
        %821 = vmatpush.msra.mxu0 %v321
        %822 = vmatpush.msra.mxu0 %v317
        %823 = vmatmul.f32.gmra.mxu0 %v746
        %v824 = vpop.f32.mrf.mxu0
        %v825 = vadd.f32 0.0, %v824
        %826 = vdwg.mxu0
        %v827 = vadd.f32 %v742, %v765
        %v828 = vadd.f32 %v743, %v785
        %v829 = vadd.f32 %v744, %v805
        %v830 = vadd.f32 %v745, %v825
        %v831 = vxor.u32 %v827, 2147483648
        %v832 = vmul.f32 %v831, 1.442695
        %v833 = vpow.pop %v832
        %v834 = vadd.f32 %v833, 1.0
        %v835 = vrcp.pop %v834
        %v836 = vmul.f32 %v834, %v835
        %v837 = vsub.f32 1.0, %v836
        %v838 = vmul.f32 %v835, %v837
        %v839 = vadd.f32 %v835, %v838
        %vm840 = vweird.f32 %v834
        %vm841 = vweird.f32 %v835
        %vm842 = vmor %vm840, %vm841
        %v843 = vsel %vm842, %v835, %v839
        %v844 = vand.u32 2147483647, %v834
        %vm845 = vcmp.eq.f32.partialorder %v844, 8.507059e+37
        %v846 = vand.u32 %v834, 2147483648
        %v847 = vor.u32 1.1754944e-38, %v846
        %v848 = vsel %vm845, %v847, %v843
        %v849 = vmul.f32 1.0, %v848
        %v850 = vxor.u32 %v828, 2147483648
        %v851 = vmul.f32 %v850, 1.442695
        %v852 = vpow.pop %v851
        %v853 = vadd.f32 %v852, 1.0
        %v854 = vrcp.pop %v853
        %v855 = vmul.f32 %v853, %v854
        %v856 = vsub.f32 1.0, %v855
        %v857 = vmul.f32 %v854, %v856
        %v858 = vadd.f32 %v854, %v857
        %vm859 = vweird.f32 %v853
        %vm860 = vweird.f32 %v854
        %vm861 = vmor %vm859, %vm860
        %v862 = vsel %vm861, %v854, %v858
        %v863 = vand.u32 2147483647, %v853
        %vm864 = vcmp.eq.f32.partialorder %v863, 8.507059e+37
        %v865 = vand.u32 %v853, 2147483648
        %v866 = vor.u32 1.1754944e-38, %v865
        %v867 = vsel %vm864, %v866, %v862
        %v868 = vmul.f32 1.0, %v867
        %v869 = vtanh.pop %v829
        %v870 = vxor.u32 %v830, 2147483648
        %v871 = vmul.f32 %v870, 1.442695
        %v872 = vpow.pop %v871
        %v873 = vadd.f32 %v872, 1.0
        %v874 = vrcp.pop %v873
        %v875 = vmul.f32 %v873, %v874
        %v876 = vsub.f32 1.0, %v875
        %v877 = vmul.f32 %v874, %v876
        %v878 = vadd.f32 %v874, %v877
        %vm879 = vweird.f32 %v873
        %vm880 = vweird.f32 %v874
        %vm881 = vmor %vm879, %vm880
        %v882 = vsel %vm881, %v874, %v878
        %v883 = vand.u32 2147483647, %v873
        %vm884 = vcmp.eq.f32.partialorder %v883, 8.507059e+37
        %v885 = vand.u32 %v873, 2147483648
        %v886 = vor.u32 1.1754944e-38, %v885
        %v887 = vsel %vm884, %v886, %v882
        %v888 = vmul.f32 1.0, %v887
        %v889 = vstv %s736
        %vm890 = vcmp.lt.s32.totalorder %v889, %v313
        %v891 = vsel %vm890, 1, 0
        %v892 = vcvt.s32.f32 %v891
        %v893 = vld [vmem:[#allocation3] sm:$0xff]
        %v894 = vmul.f32 %v868, %v893
        %v895 = vmul.f32 %v849, %v869
        %v896 = vadd.f32 %v894, %v895
        %898 = vset.pattern.permute.xlu0 0
        %899 = vperm.xlu0 %898, %v892
        %v900 = vpop.permute.xlu0 %899
        %v902 = vmul.f32 %v896, %v900
        %v903 = vtanh.pop %v902
        %v904 = vmul.f32 %v888, %v903
        %v905 = vmul.f32 %v904, %v900
        %906 = vst [vmem:[#allocation3] sm:$0xff] %v902
        %907 = vst [vmem:[#allocation2] sm:$0xff] %v905
        %v908 = vpack.c.bf16 %v905, %v905
        %s909 = smul.addr %s735, 4
        %s910 = scalar_lea.vmem %s297, %s909
        %911 = vst [vmem:[%s910] sm:$0xf] %v908
        %s912 = smul.u32 %s21, 9
        %s913 = sadd.s32 %s912, 3
        %s914 = sadd.s32 %s379, %s913
        %s915 = smul.u32 %s913, 4
        %s916 = smul.addr %s915, 4
        %s917 = scalar_lea.vmem %s279, %s916
        %v918 = vld [vmem:[%s917] sm:$0xff]
        %v919 = vld [vmem:[%s917 + $0x8] sm:$0xff]
        %v920 = vunpack.c.l.bf16 %v918
        %v921 = vunpack.c.h.bf16 %v918
        %v922 = vunpack.c.l.bf16 %v919
        %v923 = vunpack.c.h.bf16 %v919
        %v924 = vld [vmem:[#allocation2] sm:$0xff]
        %925 = vmatpush.msra.mxu0 %v374
        %926 = vmatpush.msra.mxu0 %v370
        %927 = vmatpush.msra.mxu0 %v366
        %928 = vmatpush.msra.mxu0 %v362
        %929 = vmatpush.msra.mxu0 %v358
        %930 = vmatpush.msra.mxu0 %v354
        %931 = vmatpush.msra.mxu0 %v350
        %932 = vmatpush.msra.mxu0 %v346
        %933 = vmatpush.msra.mxu0 %v342
        %934 = vmatpush.msra.mxu0 %v338
        %935 = vmatpush.msra.mxu0 %v334
        %936 = vmatpush.msra.mxu0 %v330
        %937 = vmatpush.msra.mxu0 %v326
        %938 = vmatpush.msra.mxu0 %v322
        %939 = vmatpush.msra.mxu0 %v318
        %940 = vmatpush.msra.mxu0 %v314
        %941 = vmatmul.f32.gmra.mxu0 %v924
        %v942 = vpop.f32.mrf.mxu0
        %v943 = vadd.f32 0.0, %v942
        %944 = vdwg.mxu0
        %945 = vmatpush.msra.mxu0 %v375
        %946 = vmatpush.msra.mxu0 %v371
        %947 = vmatpush.msra.mxu0 %v367
        %948 = vmatpush.msra.mxu0 %v363
        %949 = vmatpush.msra.mxu0 %v359
        %950 = vmatpush.msra.mxu0 %v355
        %951 = vmatpush.msra.mxu0 %v351
        %952 = vmatpush.msra.mxu0 %v347
        %953 = vmatpush.msra.mxu0 %v343
        %954 = vmatpush.msra.mxu0 %v339
        %955 = vmatpush.msra.mxu0 %v335
        %956 = vmatpush.msra.mxu0 %v331
        %957 = vmatpush.msra.mxu0 %v327
        %958 = vmatpush.msra.mxu0 %v323
        %959 = vmatpush.msra.mxu0 %v319
        %960 = vmatpush.msra.mxu0 %v315
        %961 = vmatmul.f32.gmra.mxu0 %v924
        %v962 = vpop.f32.mrf.mxu0
        %v963 = vadd.f32 0.0, %v962
        %964 = vdwg.mxu0
        %965 = vmatpush.msra.mxu0 %v376
        %966 = vmatpush.msra.mxu0 %v372
        %967 = vmatpush.msra.mxu0 %v368
        %968 = vmatpush.msra.mxu0 %v364
        %969 = vmatpush.msra.mxu0 %v360
        %970 = vmatpush.msra.mxu0 %v356
        %971 = vmatpush.msra.mxu0 %v352
        %972 = vmatpush.msra.mxu0 %v348
        %973 = vmatpush.msra.mxu0 %v344
        %974 = vmatpush.msra.mxu0 %v340
        %975 = vmatpush.msra.mxu0 %v336
        %976 = vmatpush.msra.mxu0 %v332
        %977 = vmatpush.msra.mxu0 %v328
        %978 = vmatpush.msra.mxu0 %v324
        %979 = vmatpush.msra.mxu0 %v320
        %980 = vmatpush.msra.mxu0 %v316
        %981 = vmatmul.f32.gmra.mxu0 %v924
        %v982 = vpop.f32.mrf.mxu0
        %v983 = vadd.f32 0.0, %v982
        %984 = vdwg.mxu0
        %985 = vmatpush.msra.mxu0 %v377
        %986 = vmatpush.msra.mxu0 %v373
        %987 = vmatpush.msra.mxu0 %v369
        %988 = vmatpush.msra.mxu0 %v365
        %989 = vmatpush.msra.mxu0 %v361
        %990 = vmatpush.msra.mxu0 %v357
        %991 = vmatpush.msra.mxu0 %v353
        %992 = vmatpush.msra.mxu0 %v349
        %993 = vmatpush.msra.mxu0 %v345
        %994 = vmatpush.msra.mxu0 %v341
        %995 = vmatpush.msra.mxu0 %v337
        %996 = vmatpush.msra.mxu0 %v333
        %997 = vmatpush.msra.mxu0 %v329
        %998 = vmatpush.msra.mxu0 %v325
        %999 = vmatpush.msra.mxu0 %v321
        %1000 = vmatpush.msra.mxu0 %v317
        %1001 = vmatmul.f32.gmra.mxu0 %v924
        %v1002 = vpop.f32.mrf.mxu0
        %v1003 = vadd.f32 0.0, %v1002
        %1004 = vdwg.mxu0
        %v1005 = vadd.f32 %v920, %v943
        %v1006 = vadd.f32 %v921, %v963
        %v1007 = vadd.f32 %v922, %v983
        %v1008 = vadd.f32 %v923, %v1003
        %v1009 = vxor.u32 %v1005, 2147483648
        %v1010 = vmul.f32 %v1009, 1.442695
        %v1011 = vpow.pop %v1010
        %v1012 = vadd.f32 %v1011, 1.0
        %v1013 = vrcp.pop %v1012
        %v1014 = vmul.f32 %v1012, %v1013
        %v1015 = vsub.f32 1.0, %v1014
        %v1016 = vmul.f32 %v1013, %v1015
        %v1017 = vadd.f32 %v1013, %v1016
        %vm1018 = vweird.f32 %v1012
        %vm1019 = vweird.f32 %v1013
        %vm1020 = vmor %vm1018, %vm1019
        %v1021 = vsel %vm1020, %v1013, %v1017
        %v1022 = vand.u32 2147483647, %v1012
        %vm1023 = vcmp.eq.f32.partialorder %v1022, 8.507059e+37
        %v1024 = vand.u32 %v1012, 2147483648
        %v1025 = vor.u32 1.1754944e-38, %v1024
        %v1026 = vsel %vm1023, %v1025, %v1021
        %v1027 = vmul.f32 1.0, %v1026
        %v1028 = vxor.u32 %v1006, 2147483648
        %v1029 = vmul.f32 %v1028, 1.442695
        %v1030 = vpow.pop %v1029
        %v1031 = vadd.f32 %v1030, 1.0
        %v1032 = vrcp.pop %v1031
        %v1033 = vmul.f32 %v1031, %v1032
        %v1034 = vsub.f32 1.0, %v1033
        %v1035 = vmul.f32 %v1032, %v1034
        %v1036 = vadd.f32 %v1032, %v1035
        %vm1037 = vweird.f32 %v1031
        %vm1038 = vweird.f32 %v1032
        %vm1039 = vmor %vm1037, %vm1038
        %v1040 = vsel %vm1039, %v1032, %v1036
        %v1041 = vand.u32 2147483647, %v1031
        %vm1042 = vcmp.eq.f32.partialorder %v1041, 8.507059e+37
        %v1043 = vand.u32 %v1031, 2147483648
        %v1044 = vor.u32 1.1754944e-38, %v1043
        %v1045 = vsel %vm1042, %v1044, %v1040
        %v1046 = vmul.f32 1.0, %v1045
        %v1047 = vtanh.pop %v1007
        %v1048 = vxor.u32 %v1008, 2147483648
        %v1049 = vmul.f32 %v1048, 1.442695
        %v1050 = vpow.pop %v1049
        %v1051 = vadd.f32 %v1050, 1.0
        %v1052 = vrcp.pop %v1051
        %v1053 = vmul.f32 %v1051, %v1052
        %v1054 = vsub.f32 1.0, %v1053
        %v1055 = vmul.f32 %v1052, %v1054
        %v1056 = vadd.f32 %v1052, %v1055
        %vm1057 = vweird.f32 %v1051
        %vm1058 = vweird.f32 %v1052
        %vm1059 = vmor %vm1057, %vm1058
        %v1060 = vsel %vm1059, %v1052, %v1056
        %v1061 = vand.u32 2147483647, %v1051
        %vm1062 = vcmp.eq.f32.partialorder %v1061, 8.507059e+37
        %v1063 = vand.u32 %v1051, 2147483648
        %v1064 = vor.u32 1.1754944e-38, %v1063
        %v1065 = vsel %vm1062, %v1064, %v1060
        %v1066 = vmul.f32 1.0, %v1065
        %v1067 = vstv %s914
        %vm1068 = vcmp.lt.s32.totalorder %v1067, %v313
        %v1069 = vsel %vm1068, 1, 0
        %v1070 = vcvt.s32.f32 %v1069
        %v1071 = vld [vmem:[#allocation3] sm:$0xff]
        %v1072 = vmul.f32 %v1046, %v1071
        %v1073 = vmul.f32 %v1027, %v1047
        %v1074 = vadd.f32 %v1072, %v1073
        %1076 = vset.pattern.permute.xlu0 0
        %1077 = vperm.xlu0 %1076, %v1070
        %v1078 = vpop.permute.xlu0 %1077
        %v1080 = vmul.f32 %v1074, %v1078
        %v1081 = vtanh.pop %v1080
        %v1082 = vmul.f32 %v1066, %v1081
        %v1083 = vmul.f32 %v1082, %v1078
        %1084 = vst [vmem:[#allocation3] sm:$0xff] %v1080
        %1085 = vst [vmem:[#allocation2] sm:$0xff] %v1083
        %v1086 = vpack.c.bf16 %v1083, %v1083
        %s1087 = smul.addr %s913, 4
        %s1088 = scalar_lea.vmem %s297, %s1087
        %1089 = vst [vmem:[%s1088] sm:$0xf] %v1086
        %s1090 = smul.u32 %s21, 7
        %s1091 = sadd.s32 %s1090, 4
        %s1092 = sadd.s32 %s379, %s1091
        %s1093 = smul.u32 %s1091, 4
        %s1094 = smul.addr %s1093, 4
        %s1095 = scalar_lea.vmem %s279, %s1094
        %v1096 = vld [vmem:[%s1095] sm:$0xff]
        %v1097 = vld [vmem:[%s1095 + $0x8] sm:$0xff]
        %v1098 = vunpack.c.l.bf16 %v1096
        %v1099 = vunpack.c.h.bf16 %v1096
        %v1100 = vunpack.c.l.bf16 %v1097
        %v1101 = vunpack.c.h.bf16 %v1097
        %v1102 = vld [vmem:[#allocation2] sm:$0xff]
        %1103 = vmatpush.msra.mxu0 %v374
        %1104 = vmatpush.msra.mxu0 %v370
        %1105 = vmatpush.msra.mxu0 %v366
        %1106 = vmatpush.msra.mxu0 %v362
        %1107 = vmatpush.msra.mxu0 %v358
        %1108 = vmatpush.msra.mxu0 %v354
        %1109 = vmatpush.msra.mxu0 %v350
        %1110 = vmatpush.msra.mxu0 %v346
        %1111 = vmatpush.msra.mxu0 %v342
        %1112 = vmatpush.msra.mxu0 %v338
        %1113 = vmatpush.msra.mxu0 %v334
        %1114 = vmatpush.msra.mxu0 %v330
        %1115 = vmatpush.msra.mxu0 %v326
        %1116 = vmatpush.msra.mxu0 %v322
        %1117 = vmatpush.msra.mxu0 %v318
        %1118 = vmatpush.msra.mxu0 %v314
        %1119 = vmatmul.f32.gmra.mxu0 %v1102
        %v1120 = vpop.f32.mrf.mxu0
        %v1121 = vadd.f32 0.0, %v1120
        %1122 = vdwg.mxu0
        %1123 = vmatpush.msra.mxu0 %v375
        %1124 = vmatpush.msra.mxu0 %v371
        %1125 = vmatpush.msra.mxu0 %v367
        %1126 = vmatpush.msra.mxu0 %v363
        %1127 = vmatpush.msra.mxu0 %v359
        %1128 = vmatpush.msra.mxu0 %v355
        %1129 = vmatpush.msra.mxu0 %v351
        %1130 = vmatpush.msra.mxu0 %v347
        %1131 = vmatpush.msra.mxu0 %v343
        %1132 = vmatpush.msra.mxu0 %v339
        %1133 = vmatpush.msra.mxu0 %v335
        %1134 = vmatpush.msra.mxu0 %v331
        %1135 = vmatpush.msra.mxu0 %v327
        %1136 = vmatpush.msra.mxu0 %v323
        %1137 = vmatpush.msra.mxu0 %v319
        %1138 = vmatpush.msra.mxu0 %v315
        %1139 = vmatmul.f32.gmra.mxu0 %v1102
        %v1140 = vpop.f32.mrf.mxu0
        %v1141 = vadd.f32 0.0, %v1140
        %1142 = vdwg.mxu0
        %1143 = vmatpush.msra.mxu0 %v376
        %1144 = vmatpush.msra.mxu0 %v372
        %1145 = vmatpush.msra.mxu0 %v368
        %1146 = vmatpush.msra.mxu0 %v364
        %1147 = vmatpush.msra.mxu0 %v360
        %1148 = vmatpush.msra.mxu0 %v356
        %1149 = vmatpush.msra.mxu0 %v352
        %1150 = vmatpush.msra.mxu0 %v348
        %1151 = vmatpush.msra.mxu0 %v344
        %1152 = vmatpush.msra.mxu0 %v340
        %1153 = vmatpush.msra.mxu0 %v336
        %1154 = vmatpush.msra.mxu0 %v332
        %1155 = vmatpush.msra.mxu0 %v328
        %1156 = vmatpush.msra.mxu0 %v324
        %1157 = vmatpush.msra.mxu0 %v320
        %1158 = vmatpush.msra.mxu0 %v316
        %1159 = vmatmul.f32.gmra.mxu0 %v1102
        %v1160 = vpop.f32.mrf.mxu0
        %v1161 = vadd.f32 0.0, %v1160
        %1162 = vdwg.mxu0
        %1163 = vmatpush.msra.mxu0 %v377
        %1164 = vmatpush.msra.mxu0 %v373
        %1165 = vmatpush.msra.mxu0 %v369
        %1166 = vmatpush.msra.mxu0 %v365
        %1167 = vmatpush.msra.mxu0 %v361
        %1168 = vmatpush.msra.mxu0 %v357
        %1169 = vmatpush.msra.mxu0 %v353
        %1170 = vmatpush.msra.mxu0 %v349
        %1171 = vmatpush.msra.mxu0 %v345
        %1172 = vmatpush.msra.mxu0 %v341
        %1173 = vmatpush.msra.mxu0 %v337
        %1174 = vmatpush.msra.mxu0 %v333
        %1175 = vmatpush.msra.mxu0 %v329
        %1176 = vmatpush.msra.mxu0 %v325
        %1177 = vmatpush.msra.mxu0 %v321
        %1178 = vmatpush.msra.mxu0 %v317
        %1179 = vmatmul.f32.gmra.mxu0 %v1102
        %v1180 = vpop.f32.mrf.mxu0
        %v1181 = vadd.f32 0.0, %v1180
        %1182 = vdwg.mxu0
        %v1183 = vadd.f32 %v1098, %v1121
        %v1184 = vadd.f32 %v1099, %v1141
        %v1185 = vadd.f32 %v1100, %v1161
        %v1186 = vadd.f32 %v1101, %v1181
        %v1187 = vxor.u32 %v1183, 2147483648
        %v1188 = vmul.f32 %v1187, 1.442695
        %v1189 = vpow.pop %v1188
        %v1190 = vadd.f32 %v1189, 1.0
        %v1191 = vrcp.pop %v1190
        %v1192 = vmul.f32 %v1190, %v1191
        %v1193 = vsub.f32 1.0, %v1192
        %v1194 = vmul.f32 %v1191, %v1193
        %v1195 = vadd.f32 %v1191, %v1194
        %vm1196 = vweird.f32 %v1190
        %vm1197 = vweird.f32 %v1191
        %vm1198 = vmor %vm1196, %vm1197
        %v1199 = vsel %vm1198, %v1191, %v1195
        %v1200 = vand.u32 2147483647, %v1190
        %vm1201 = vcmp.eq.f32.partialorder %v1200, 8.507059e+37
        %v1202 = vand.u32 %v1190, 2147483648
        %v1203 = vor.u32 1.1754944e-38, %v1202
        %v1204 = vsel %vm1201, %v1203, %v1199
        %v1205 = vmul.f32 1.0, %v1204
        %v1206 = vxor.u32 %v1184, 2147483648
        %v1207 = vmul.f32 %v1206, 1.442695
        %v1208 = vpow.pop %v1207
        %v1209 = vadd.f32 %v1208, 1.0
        %v1210 = vrcp.pop %v1209
        %v1211 = vmul.f32 %v1209, %v1210
        %v1212 = vsub.f32 1.0, %v1211
        %v1213 = vmul.f32 %v1210, %v1212
        %v1214 = vadd.f32 %v1210, %v1213
        %vm1215 = vweird.f32 %v1209
        %vm1216 = vweird.f32 %v1210
        %vm1217 = vmor %vm1215, %vm1216
        %v1218 = vsel %vm1217, %v1210, %v1214
        %v1219 = vand.u32 2147483647, %v1209
        %vm1220 = vcmp.eq.f32.partialorder %v1219, 8.507059e+37
        %v1221 = vand.u32 %v1209, 2147483648
        %v1222 = vor.u32 1.1754944e-38, %v1221
        %v1223 = vsel %vm1220, %v1222, %v1218
        %v1224 = vmul.f32 1.0, %v1223
        %v1225 = vtanh.pop %v1185
        %v1226 = vxor.u32 %v1186, 2147483648
        %v1227 = vmul.f32 %v1226, 1.442695
        %v1228 = vpow.pop %v1227
        %v1229 = vadd.f32 %v1228, 1.0
        %v1230 = vrcp.pop %v1229
        %v1231 = vmul.f32 %v1229, %v1230
        %v1232 = vsub.f32 1.0, %v1231
        %v1233 = vmul.f32 %v1230, %v1232
        %v1234 = vadd.f32 %v1230, %v1233
        %vm1235 = vweird.f32 %v1229
        %vm1236 = vweird.f32 %v1230
        %vm1237 = vmor %vm1235, %vm1236
        %v1238 = vsel %vm1237, %v1230, %v1234
        %v1239 = vand.u32 2147483647, %v1229
        %vm1240 = vcmp.eq.f32.partialorder %v1239, 8.507059e+37
        %v1241 = vand.u32 %v1229, 2147483648
        %v1242 = vor.u32 1.1754944e-38, %v1241
        %v1243 = vsel %vm1240, %v1242, %v1238
        %v1244 = vmul.f32 1.0, %v1243
        %v1245 = vstv %s1092
        %vm1246 = vcmp.lt.s32.totalorder %v1245, %v313
        %v1247 = vsel %vm1246, 1, 0
        %v1248 = vcvt.s32.f32 %v1247
        %v1249 = vld [vmem:[#allocation3] sm:$0xff]
        %v1250 = vmul.f32 %v1224, %v1249
        %v1251 = vmul.f32 %v1205, %v1225
        %v1252 = vadd.f32 %v1250, %v1251
        %1254 = vset.pattern.permute.xlu0 0
        %1255 = vperm.xlu0 %1254, %v1248
        %v1256 = vpop.permute.xlu0 %1255
        %v1258 = vmul.f32 %v1252, %v1256
        %v1259 = vtanh.pop %v1258
        %v1260 = vmul.f32 %v1244, %v1259
        %v1261 = vmul.f32 %v1260, %v1256
        %1262 = vst [vmem:[#allocation3] sm:$0xff] %v1258
        %1263 = vst [vmem:[#allocation2] sm:$0xff] %v1261
        %v1264 = vpack.c.bf16 %v1261, %v1261
        %s1265 = smul.addr %s1091, 4
        %s1266 = scalar_lea.vmem %s297, %s1265
        %1267 = vst [vmem:[%s1266] sm:$0xf] %v1264
        %s1268 = smul.u32 %s21, 5
        %s1269 = sadd.s32 %s1268, 5
        %s1270 = sadd.s32 %s379, %s1269
        %s1271 = smul.u32 %s1269, 4
        %s1272 = smul.addr %s1271, 4
        %s1273 = scalar_lea.vmem %s279, %s1272
        %v1274 = vld [vmem:[%s1273] sm:$0xff]
        %v1275 = vld [vmem:[%s1273 + $0x8] sm:$0xff]
        %v1276 = vunpack.c.l.bf16 %v1274
        %v1277 = vunpack.c.h.bf16 %v1274
        %v1278 = vunpack.c.l.bf16 %v1275
        %v1279 = vunpack.c.h.bf16 %v1275
        %v1280 = vld [vmem:[#allocation2] sm:$0xff]
        %1281 = vmatpush.msra.mxu0 %v374
        %1282 = vmatpush.msra.mxu0 %v370
        %1283 = vmatpush.msra.mxu0 %v366
        %1284 = vmatpush.msra.mxu0 %v362
        %1285 = vmatpush.msra.mxu0 %v358
        %1286 = vmatpush.msra.mxu0 %v354
        %1287 = vmatpush.msra.mxu0 %v350
        %1288 = vmatpush.msra.mxu0 %v346
        %1289 = vmatpush.msra.mxu0 %v342
        %1290 = vmatpush.msra.mxu0 %v338
        %1291 = vmatpush.msra.mxu0 %v334
        %1292 = vmatpush.msra.mxu0 %v330
        %1293 = vmatpush.msra.mxu0 %v326
        %1294 = vmatpush.msra.mxu0 %v322
        %1295 = vmatpush.msra.mxu0 %v318
        %1296 = vmatpush.msra.mxu0 %v314
        %1297 = vmatmul.f32.gmra.mxu0 %v1280
        %v1298 = vpop.f32.mrf.mxu0
        %v1299 = vadd.f32 0.0, %v1298
        %1300 = vdwg.mxu0
        %1301 = vmatpush.msra.mxu0 %v375
        %1302 = vmatpush.msra.mxu0 %v371
        %1303 = vmatpush.msra.mxu0 %v367
        %1304 = vmatpush.msra.mxu0 %v363
        %1305 = vmatpush.msra.mxu0 %v359
        %1306 = vmatpush.msra.mxu0 %v355
        %1307 = vmatpush.msra.mxu0 %v351
        %1308 = vmatpush.msra.mxu0 %v347
        %1309 = vmatpush.msra.mxu0 %v343
        %1310 = vmatpush.msra.mxu0 %v339
        %1311 = vmatpush.msra.mxu0 %v335
        %1312 = vmatpush.msra.mxu0 %v331
        %1313 = vmatpush.msra.mxu0 %v327
        %1314 = vmatpush.msra.mxu0 %v323
        %1315 = vmatpush.msra.mxu0 %v319
        %1316 = vmatpush.msra.mxu0 %v315
        %1317 = vmatmul.f32.gmra.mxu0 %v1280
        %v1318 = vpop.f32.mrf.mxu0
        %v1319 = vadd.f32 0.0, %v1318
        %1320 = vdwg.mxu0
        %1321 = vmatpush.msra.mxu0 %v376
        %1322 = vmatpush.msra.mxu0 %v372
        %1323 = vmatpush.msra.mxu0 %v368
        %1324 = vmatpush.msra.mxu0 %v364
        %1325 = vmatpush.msra.mxu0 %v360
        %1326 = vmatpush.msra.mxu0 %v356
        %1327 = vmatpush.msra.mxu0 %v352
        %1328 = vmatpush.msra.mxu0 %v348
        %1329 = vmatpush.msra.mxu0 %v344
        %1330 = vmatpush.msra.mxu0 %v340
        %1331 = vmatpush.msra.mxu0 %v336
        %1332 = vmatpush.msra.mxu0 %v332
        %1333 = vmatpush.msra.mxu0 %v328
        %1334 = vmatpush.msra.mxu0 %v324
        %1335 = vmatpush.msra.mxu0 %v320
        %1336 = vmatpush.msra.mxu0 %v316
        %1337 = vmatmul.f32.gmra.mxu0 %v1280
        %v1338 = vpop.f32.mrf.mxu0
        %v1339 = vadd.f32 0.0, %v1338
        %1340 = vdwg.mxu0
        %1341 = vmatpush.msra.mxu0 %v377
        %1342 = vmatpush.msra.mxu0 %v373
        %1343 = vmatpush.msra.mxu0 %v369
        %1344 = vmatpush.msra.mxu0 %v365
        %1345 = vmatpush.msra.mxu0 %v361
        %1346 = vmatpush.msra.mxu0 %v357
        %1347 = vmatpush.msra.mxu0 %v353
        %1348 = vmatpush.msra.mxu0 %v349
        %1349 = vmatpush.msra.mxu0 %v345
        %1350 = vmatpush.msra.mxu0 %v341
        %1351 = vmatpush.msra.mxu0 %v337
        %1352 = vmatpush.msra.mxu0 %v333
        %1353 = vmatpush.msra.mxu0 %v329
        %1354 = vmatpush.msra.mxu0 %v325
        %1355 = vmatpush.msra.mxu0 %v321
        %1356 = vmatpush.msra.mxu0 %v317
        %1357 = vmatmul.f32.gmra.mxu0 %v1280
        %v1358 = vpop.f32.mrf.mxu0
        %v1359 = vadd.f32 0.0, %v1358
        %1360 = vdwg.mxu0
        %v1361 = vadd.f32 %v1276, %v1299
        %v1362 = vadd.f32 %v1277, %v1319
        %v1363 = vadd.f32 %v1278, %v1339
        %v1364 = vadd.f32 %v1279, %v1359
        %v1365 = vxor.u32 %v1361, 2147483648
        %v1366 = vmul.f32 %v1365, 1.442695
        %v1367 = vpow.pop %v1366
        %v1368 = vadd.f32 %v1367, 1.0
        %v1369 = vrcp.pop %v1368
        %v1370 = vmul.f32 %v1368, %v1369
        %v1371 = vsub.f32 1.0, %v1370
        %v1372 = vmul.f32 %v1369, %v1371
        %v1373 = vadd.f32 %v1369, %v1372
        %vm1374 = vweird.f32 %v1368
        %vm1375 = vweird.f32 %v1369
        %vm1376 = vmor %vm1374, %vm1375
        %v1377 = vsel %vm1376, %v1369, %v1373
        %v1378 = vand.u32 2147483647, %v1368
        %vm1379 = vcmp.eq.f32.partialorder %v1378, 8.507059e+37
        %v1380 = vand.u32 %v1368, 2147483648
        %v1381 = vor.u32 1.1754944e-38, %v1380
        %v1382 = vsel %vm1379, %v1381, %v1377
        %v1383 = vmul.f32 1.0, %v1382
        %v1384 = vxor.u32 %v1362, 2147483648
        %v1385 = vmul.f32 %v1384, 1.442695
        %v1386 = vpow.pop %v1385
        %v1387 = vadd.f32 %v1386, 1.0
        %v1388 = vrcp.pop %v1387
        %v1389 = vmul.f32 %v1387, %v1388
        %v1390 = vsub.f32 1.0, %v1389
        %v1391 = vmul.f32 %v1388, %v1390
        %v1392 = vadd.f32 %v1388, %v1391
        %vm1393 = vweird.f32 %v1387
        %vm1394 = vweird.f32 %v1388
        %vm1395 = vmor %vm1393, %vm1394
        %v1396 = vsel %vm1395, %v1388, %v1392
        %v1397 = vand.u32 2147483647, %v1387
        %vm1398 = vcmp.eq.f32.partialorder %v1397, 8.507059e+37
        %v1399 = vand.u32 %v1387, 2147483648
        %v1400 = vor.u32 1.1754944e-38, %v1399
        %v1401 = vsel %vm1398, %v1400, %v1396
        %v1402 = vmul.f32 1.0, %v1401
        %v1403 = vtanh.pop %v1363
        %v1404 = vxor.u32 %v1364, 2147483648
        %v1405 = vmul.f32 %v1404, 1.442695
        %v1406 = vpow.pop %v1405
        %v1407 = vadd.f32 %v1406, 1.0
        %v1408 = vrcp.pop %v1407
        %v1409 = vmul.f32 %v1407, %v1408
        %v1410 = vsub.f32 1.0, %v1409
        %v1411 = vmul.f32 %v1408, %v1410
        %v1412 = vadd.f32 %v1408, %v1411
        %vm1413 = vweird.f32 %v1407
        %vm1414 = vweird.f32 %v1408
        %vm1415 = vmor %vm1413, %vm1414
        %v1416 = vsel %vm1415, %v1408, %v1412
        %v1417 = vand.u32 2147483647, %v1407
        %vm1418 = vcmp.eq.f32.partialorder %v1417, 8.507059e+37
        %v1419 = vand.u32 %v1407, 2147483648
        %v1420 = vor.u32 1.1754944e-38, %v1419
        %v1421 = vsel %vm1418, %v1420, %v1416
        %v1422 = vmul.f32 1.0, %v1421
        %v1423 = vstv %s1270
        %vm1424 = vcmp.lt.s32.totalorder %v1423, %v313
        %v1425 = vsel %vm1424, 1, 0
        %v1426 = vcvt.s32.f32 %v1425
        %v1427 = vld [vmem:[#allocation3] sm:$0xff]
        %v1428 = vmul.f32 %v1402, %v1427
        %v1429 = vmul.f32 %v1383, %v1403
        %v1430 = vadd.f32 %v1428, %v1429
        %1432 = vset.pattern.permute.xlu0 0
        %1433 = vperm.xlu0 %1432, %v1426
        %v1434 = vpop.permute.xlu0 %1433
        %v1436 = vmul.f32 %v1430, %v1434
        %v1437 = vtanh.pop %v1436
        %v1438 = vmul.f32 %v1422, %v1437
        %v1439 = vmul.f32 %v1438, %v1434
        %1440 = vst [vmem:[#allocation3] sm:$0xff] %v1436
        %1441 = vst [vmem:[#allocation2] sm:$0xff] %v1439
        %v1442 = vpack.c.bf16 %v1439, %v1439
        %s1443 = smul.addr %s1269, 4
        %s1444 = scalar_lea.vmem %s297, %s1443
        %1445 = vst [vmem:[%s1444] sm:$0xf] %v1442
        %s1446 = smul.u32 %s21, 3
        %s1447 = sadd.s32 %s1446, 6
        %s1448 = sadd.s32 %s379, %s1447
        %s1449 = smul.u32 %s1447, 4
        %s1450 = smul.addr %s1449, 4
        %s1451 = scalar_lea.vmem %s279, %s1450
        %v1452 = vld [vmem:[%s1451] sm:$0xff]
        %v1453 = vld [vmem:[%s1451 + $0x8] sm:$0xff]
        %v1454 = vunpack.c.l.bf16 %v1452
        %v1455 = vunpack.c.h.bf16 %v1452
        %v1456 = vunpack.c.l.bf16 %v1453
        %v1457 = vunpack.c.h.bf16 %v1453
        %v1458 = vld [vmem:[#allocation2] sm:$0xff]
        %1459 = vmatpush.msra.mxu0 %v374
        %1460 = vmatpush.msra.mxu0 %v370
        %1461 = vmatpush.msra.mxu0 %v366
        %1462 = vmatpush.msra.mxu0 %v362
        %1463 = vmatpush.msra.mxu0 %v358
        %1464 = vmatpush.msra.mxu0 %v354
        %1465 = vmatpush.msra.mxu0 %v350
        %1466 = vmatpush.msra.mxu0 %v346
        %1467 = vmatpush.msra.mxu0 %v342
        %1468 = vmatpush.msra.mxu0 %v338
        %1469 = vmatpush.msra.mxu0 %v334
        %1470 = vmatpush.msra.mxu0 %v330
        %1471 = vmatpush.msra.mxu0 %v326
        %1472 = vmatpush.msra.mxu0 %v322
        %1473 = vmatpush.msra.mxu0 %v318
        %1474 = vmatpush.msra.mxu0 %v314
        %1475 = vmatmul.f32.gmra.mxu0 %v1458
        %v1476 = vpop.f32.mrf.mxu0
        %v1477 = vadd.f32 0.0, %v1476
        %1478 = vdwg.mxu0
        %1479 = vmatpush.msra.mxu0 %v375
        %1480 = vmatpush.msra.mxu0 %v371
        %1481 = vmatpush.msra.mxu0 %v367
        %1482 = vmatpush.msra.mxu0 %v363
        %1483 = vmatpush.msra.mxu0 %v359
        %1484 = vmatpush.msra.mxu0 %v355
        %1485 = vmatpush.msra.mxu0 %v351
        %1486 = vmatpush.msra.mxu0 %v347
        %1487 = vmatpush.msra.mxu0 %v343
        %1488 = vmatpush.msra.mxu0 %v339
        %1489 = vmatpush.msra.mxu0 %v335
        %1490 = vmatpush.msra.mxu0 %v331
        %1491 = vmatpush.msra.mxu0 %v327
        %1492 = vmatpush.msra.mxu0 %v323
        %1493 = vmatpush.msra.mxu0 %v319
        %1494 = vmatpush.msra.mxu0 %v315
        %1495 = vmatmul.f32.gmra.mxu0 %v1458
        %v1496 = vpop.f32.mrf.mxu0
        %v1497 = vadd.f32 0.0, %v1496
        %1498 = vdwg.mxu0
        %1499 = vmatpush.msra.mxu0 %v376
        %1500 = vmatpush.msra.mxu0 %v372
        %1501 = vmatpush.msra.mxu0 %v368
        %1502 = vmatpush.msra.mxu0 %v364
        %1503 = vmatpush.msra.mxu0 %v360
        %1504 = vmatpush.msra.mxu0 %v356
        %1505 = vmatpush.msra.mxu0 %v352
        %1506 = vmatpush.msra.mxu0 %v348
        %1507 = vmatpush.msra.mxu0 %v344
        %1508 = vmatpush.msra.mxu0 %v340
        %1509 = vmatpush.msra.mxu0 %v336
        %1510 = vmatpush.msra.mxu0 %v332
        %1511 = vmatpush.msra.mxu0 %v328
        %1512 = vmatpush.msra.mxu0 %v324
        %1513 = vmatpush.msra.mxu0 %v320
        %1514 = vmatpush.msra.mxu0 %v316
        %1515 = vmatmul.f32.gmra.mxu0 %v1458
        %v1516 = vpop.f32.mrf.mxu0
        %v1517 = vadd.f32 0.0, %v1516
        %1518 = vdwg.mxu0
        %1519 = vmatpush.msra.mxu0 %v377
        %1520 = vmatpush.msra.mxu0 %v373
        %1521 = vmatpush.msra.mxu0 %v369
        %1522 = vmatpush.msra.mxu0 %v365
        %1523 = vmatpush.msra.mxu0 %v361
        %1524 = vmatpush.msra.mxu0 %v357
        %1525 = vmatpush.msra.mxu0 %v353
        %1526 = vmatpush.msra.mxu0 %v349
        %1527 = vmatpush.msra.mxu0 %v345
        %1528 = vmatpush.msra.mxu0 %v341
        %1529 = vmatpush.msra.mxu0 %v337
        %1530 = vmatpush.msra.mxu0 %v333
        %1531 = vmatpush.msra.mxu0 %v329
        %1532 = vmatpush.msra.mxu0 %v325
        %1533 = vmatpush.msra.mxu0 %v321
        %1534 = vmatpush.msra.mxu0 %v317
        %1535 = vmatmul.f32.gmra.mxu0 %v1458
        %v1536 = vpop.f32.mrf.mxu0
        %v1537 = vadd.f32 0.0, %v1536
        %1538 = vdwg.mxu0
        %v1539 = vadd.f32 %v1454, %v1477
        %v1540 = vadd.f32 %v1455, %v1497
        %v1541 = vadd.f32 %v1456, %v1517
        %v1542 = vadd.f32 %v1457, %v1537
        %v1543 = vxor.u32 %v1539, 2147483648
        %v1544 = vmul.f32 %v1543, 1.442695
        %v1545 = vpow.pop %v1544
        %v1546 = vadd.f32 %v1545, 1.0
        %v1547 = vrcp.pop %v1546
        %v1548 = vmul.f32 %v1546, %v1547
        %v1549 = vsub.f32 1.0, %v1548
        %v1550 = vmul.f32 %v1547, %v1549
        %v1551 = vadd.f32 %v1547, %v1550
        %vm1552 = vweird.f32 %v1546
        %vm1553 = vweird.f32 %v1547
        %vm1554 = vmor %vm1552, %vm1553
        %v1555 = vsel %vm1554, %v1547, %v1551
        %v1556 = vand.u32 2147483647, %v1546
        %vm1557 = vcmp.eq.f32.partialorder %v1556, 8.507059e+37
        %v1558 = vand.u32 %v1546, 2147483648
        %v1559 = vor.u32 1.1754944e-38, %v1558
        %v1560 = vsel %vm1557, %v1559, %v1555
        %v1561 = vmul.f32 1.0, %v1560
        %v1562 = vxor.u32 %v1540, 2147483648
        %v1563 = vmul.f32 %v1562, 1.442695
        %v1564 = vpow.pop %v1563
        %v1565 = vadd.f32 %v1564, 1.0
        %v1566 = vrcp.pop %v1565
        %v1567 = vmul.f32 %v1565, %v1566
        %v1568 = vsub.f32 1.0, %v1567
        %v1569 = vmul.f32 %v1566, %v1568
        %v1570 = vadd.f32 %v1566, %v1569
        %vm1571 = vweird.f32 %v1565
        %vm1572 = vweird.f32 %v1566
        %vm1573 = vmor %vm1571, %vm1572
        %v1574 = vsel %vm1573, %v1566, %v1570
        %v1575 = vand.u32 2147483647, %v1565
        %vm1576 = vcmp.eq.f32.partialorder %v1575, 8.507059e+37
        %v1577 = vand.u32 %v1565, 2147483648
        %v1578 = vor.u32 1.1754944e-38, %v1577
        %v1579 = vsel %vm1576, %v1578, %v1574
        %v1580 = vmul.f32 1.0, %v1579
        %v1581 = vtanh.pop %v1541
        %v1582 = vxor.u32 %v1542, 2147483648
        %v1583 = vmul.f32 %v1582, 1.442695
        %v1584 = vpow.pop %v1583
        %v1585 = vadd.f32 %v1584, 1.0
        %v1586 = vrcp.pop %v1585
        %v1587 = vmul.f32 %v1585, %v1586
        %v1588 = vsub.f32 1.0, %v1587
        %v1589 = vmul.f32 %v1586, %v1588
        %v1590 = vadd.f32 %v1586, %v1589
        %vm1591 = vweird.f32 %v1585
        %vm1592 = vweird.f32 %v1586
        %vm1593 = vmor %vm1591, %vm1592
        %v1594 = vsel %vm1593, %v1586, %v1590
        %v1595 = vand.u32 2147483647, %v1585
        %vm1596 = vcmp.eq.f32.partialorder %v1595, 8.507059e+37
        %v1597 = vand.u32 %v1585, 2147483648
        %v1598 = vor.u32 1.1754944e-38, %v1597
        %v1599 = vsel %vm1596, %v1598, %v1594
        %v1600 = vmul.f32 1.0, %v1599
        %v1601 = vstv %s1448
        %vm1602 = vcmp.lt.s32.totalorder %v1601, %v313
        %v1603 = vsel %vm1602, 1, 0
        %v1604 = vcvt.s32.f32 %v1603
        %v1605 = vld [vmem:[#allocation3] sm:$0xff]
        %v1606 = vmul.f32 %v1580, %v1605
        %v1607 = vmul.f32 %v1561, %v1581
        %v1608 = vadd.f32 %v1606, %v1607
        %1610 = vset.pattern.permute.xlu0 0
        %1611 = vperm.xlu0 %1610, %v1604
        %v1612 = vpop.permute.xlu0 %1611
        %v1614 = vmul.f32 %v1608, %v1612
        %v1615 = vtanh.pop %v1614
        %v1616 = vmul.f32 %v1600, %v1615
        %v1617 = vmul.f32 %v1616, %v1612
        %1618 = vst [vmem:[#allocation3] sm:$0xff] %v1614
        %1619 = vst [vmem:[#allocation2] sm:$0xff] %v1617
        %v1620 = vpack.c.bf16 %v1617, %v1617
        %s1621 = smul.addr %s1447, 4
        %s1622 = scalar_lea.vmem %s297, %s1621
        %1623 = vst [vmem:[%s1622] sm:$0xf] %v1620
        %s1624 = sadd.s32 %s21, 7
        %s1625 = sadd.s32 %s379, %s1624
        %s1626 = smul.u32 %s1624, 4
        %s1627 = smul.addr %s1626, 4
        %s1628 = scalar_lea.vmem %s279, %s1627
        %v1629 = vld [vmem:[%s1628] sm:$0xff]
        %v1630 = vld [vmem:[%s1628 + $0x8] sm:$0xff]
        %v1631 = vunpack.c.l.bf16 %v1629
        %v1632 = vunpack.c.h.bf16 %v1629
        %v1633 = vunpack.c.l.bf16 %v1630
        %v1634 = vunpack.c.h.bf16 %v1630
        %v1635 = vld [vmem:[#allocation2] sm:$0xff]
        %1636 = vmatpush.msra.mxu0 %v374
        %1637 = vmatpush.msra.mxu0 %v370
        %1638 = vmatpush.msra.mxu0 %v366
        %1639 = vmatpush.msra.mxu0 %v362
        %1640 = vmatpush.msra.mxu0 %v358
        %1641 = vmatpush.msra.mxu0 %v354
        %1642 = vmatpush.msra.mxu0 %v350
        %1643 = vmatpush.msra.mxu0 %v346
        %1644 = vmatpush.msra.mxu0 %v342
        %1645 = vmatpush.msra.mxu0 %v338
        %1646 = vmatpush.msra.mxu0 %v334
        %1647 = vmatpush.msra.mxu0 %v330
        %1648 = vmatpush.msra.mxu0 %v326
        %1649 = vmatpush.msra.mxu0 %v322
        %1650 = vmatpush.msra.mxu0 %v318
        %1651 = vmatpush.msra.mxu0 %v314
        %1652 = vmatmul.f32.gmra.mxu0 %v1635
        %v1653 = vpop.f32.mrf.mxu0
        %v1654 = vadd.f32 0.0, %v1653
        %1655 = vdwg.mxu0
        %1656 = vmatpush.msra.mxu0 %v375
        %1657 = vmatpush.msra.mxu0 %v371
        %1658 = vmatpush.msra.mxu0 %v367
        %1659 = vmatpush.msra.mxu0 %v363
        %1660 = vmatpush.msra.mxu0 %v359
        %1661 = vmatpush.msra.mxu0 %v355
        %1662 = vmatpush.msra.mxu0 %v351
        %1663 = vmatpush.msra.mxu0 %v347
        %1664 = vmatpush.msra.mxu0 %v343
        %1665 = vmatpush.msra.mxu0 %v339
        %1666 = vmatpush.msra.mxu0 %v335
        %1667 = vmatpush.msra.mxu0 %v331
        %1668 = vmatpush.msra.mxu0 %v327
        %1669 = vmatpush.msra.mxu0 %v323
        %1670 = vmatpush.msra.mxu0 %v319
        %1671 = vmatpush.msra.mxu0 %v315
        %1672 = vmatmul.f32.gmra.mxu0 %v1635
        %v1673 = vpop.f32.mrf.mxu0
        %v1674 = vadd.f32 0.0, %v1673
        %1675 = vdwg.mxu0
        %1676 = vmatpush.msra.mxu0 %v376
        %1677 = vmatpush.msra.mxu0 %v372
        %1678 = vmatpush.msra.mxu0 %v368
        %1679 = vmatpush.msra.mxu0 %v364
        %1680 = vmatpush.msra.mxu0 %v360
        %1681 = vmatpush.msra.mxu0 %v356
        %1682 = vmatpush.msra.mxu0 %v352
        %1683 = vmatpush.msra.mxu0 %v348
        %1684 = vmatpush.msra.mxu0 %v344
        %1685 = vmatpush.msra.mxu0 %v340
        %1686 = vmatpush.msra.mxu0 %v336
        %1687 = vmatpush.msra.mxu0 %v332
        %1688 = vmatpush.msra.mxu0 %v328
        %1689 = vmatpush.msra.mxu0 %v324
        %1690 = vmatpush.msra.mxu0 %v320
        %1691 = vmatpush.msra.mxu0 %v316
        %1692 = vmatmul.f32.gmra.mxu0 %v1635
        %v1693 = vpop.f32.mrf.mxu0
        %v1694 = vadd.f32 0.0, %v1693
        %1695 = vdwg.mxu0
        %1696 = vmatpush.msra.mxu0 %v377
        %1697 = vmatpush.msra.mxu0 %v373
        %1698 = vmatpush.msra.mxu0 %v369
        %1699 = vmatpush.msra.mxu0 %v365
        %1700 = vmatpush.msra.mxu0 %v361
        %1701 = vmatpush.msra.mxu0 %v357
        %1702 = vmatpush.msra.mxu0 %v353
        %1703 = vmatpush.msra.mxu0 %v349
        %1704 = vmatpush.msra.mxu0 %v345
        %1705 = vmatpush.msra.mxu0 %v341
        %1706 = vmatpush.msra.mxu0 %v337
        %1707 = vmatpush.msra.mxu0 %v333
        %1708 = vmatpush.msra.mxu0 %v329
        %1709 = vmatpush.msra.mxu0 %v325
        %1710 = vmatpush.msra.mxu0 %v321
        %1711 = vmatpush.msra.mxu0 %v317
        %1712 = vmatmul.f32.gmra.mxu0 %v1635
        %v1713 = vpop.f32.mrf.mxu0
        %v1714 = vadd.f32 0.0, %v1713
        %1715 = vdwg.mxu0
        %v1716 = vadd.f32 %v1631, %v1654
        %v1717 = vadd.f32 %v1632, %v1674
        %v1718 = vadd.f32 %v1633, %v1694
        %v1719 = vadd.f32 %v1634, %v1714
        %v1720 = vxor.u32 %v1716, 2147483648
        %v1721 = vmul.f32 %v1720, 1.442695
        %v1722 = vpow.pop %v1721
        %v1723 = vadd.f32 %v1722, 1.0
        %v1724 = vrcp.pop %v1723
        %v1725 = vmul.f32 %v1723, %v1724
        %v1726 = vsub.f32 1.0, %v1725
        %v1727 = vmul.f32 %v1724, %v1726
        %v1728 = vadd.f32 %v1724, %v1727
        %vm1729 = vweird.f32 %v1723
        %vm1730 = vweird.f32 %v1724
        %vm1731 = vmor %vm1729, %vm1730
        %v1732 = vsel %vm1731, %v1724, %v1728
        %v1733 = vand.u32 2147483647, %v1723
        %vm1734 = vcmp.eq.f32.partialorder %v1733, 8.507059e+37
        %v1735 = vand.u32 %v1723, 2147483648
        %v1736 = vor.u32 1.1754944e-38, %v1735
        %v1737 = vsel %vm1734, %v1736, %v1732
        %v1738 = vmul.f32 1.0, %v1737
        %v1739 = vxor.u32 %v1717, 2147483648
        %v1740 = vmul.f32 %v1739, 1.442695
        %v1741 = vpow.pop %v1740
        %v1742 = vadd.f32 %v1741, 1.0
        %v1743 = vrcp.pop %v1742
        %v1744 = vmul.f32 %v1742, %v1743
        %v1745 = vsub.f32 1.0, %v1744
        %v1746 = vmul.f32 %v1743, %v1745
        %v1747 = vadd.f32 %v1743, %v1746
        %vm1748 = vweird.f32 %v1742
        %vm1749 = vweird.f32 %v1743
        %vm1750 = vmor %vm1748, %vm1749
        %v1751 = vsel %vm1750, %v1743, %v1747
        %v1752 = vand.u32 2147483647, %v1742
        %vm1753 = vcmp.eq.f32.partialorder %v1752, 8.507059e+37
        %v1754 = vand.u32 %v1742, 2147483648
        %v1755 = vor.u32 1.1754944e-38, %v1754
        %v1756 = vsel %vm1753, %v1755, %v1751
        %v1757 = vmul.f32 1.0, %v1756
        %v1758 = vtanh.pop %v1718
        %v1759 = vxor.u32 %v1719, 2147483648
        %v1760 = vmul.f32 %v1759, 1.442695
        %v1761 = vpow.pop %v1760
        %v1762 = vadd.f32 %v1761, 1.0
        %v1763 = vrcp.pop %v1762
        %v1764 = vmul.f32 %v1762, %v1763
        %v1765 = vsub.f32 1.0, %v1764
        %v1766 = vmul.f32 %v1763, %v1765
        %v1767 = vadd.f32 %v1763, %v1766
        %vm1768 = vweird.f32 %v1762
        %vm1769 = vweird.f32 %v1763
        %vm1770 = vmor %vm1768, %vm1769
        %v1771 = vsel %vm1770, %v1763, %v1767
        %v1772 = vand.u32 2147483647, %v1762
        %vm1773 = vcmp.eq.f32.partialorder %v1772, 8.507059e+37
        %v1774 = vand.u32 %v1762, 2147483648
        %v1775 = vor.u32 1.1754944e-38, %v1774
        %v1776 = vsel %vm1773, %v1775, %v1771
        %v1777 = vmul.f32 1.0, %v1776
        %v1778 = vstv %s1625
        %vm1779 = vcmp.lt.s32.totalorder %v1778, %v313
        %v1780 = vsel %vm1779, 1, 0
        %v1781 = vcvt.s32.f32 %v1780
        %v1782 = vld [vmem:[#allocation3] sm:$0xff]
        %v1783 = vmul.f32 %v1757, %v1782
        %v1784 = vmul.f32 %v1738, %v1758
        %v1785 = vadd.f32 %v1783, %v1784
        %1787 = vset.pattern.permute.xlu0 0
        %1788 = vperm.xlu0 %1787, %v1781
        %v1789 = vpop.permute.xlu0 %1788
        %v1791 = vmul.f32 %v1785, %v1789
        %v1792 = vtanh.pop %v1791
        %v1793 = vmul.f32 %v1777, %v1792
        %v1794 = vmul.f32 %v1793, %v1789
        %1795 = vst [vmem:[#allocation3] sm:$0xff] %v1791
        %1796 = vst [vmem:[#allocation2] sm:$0xff] %v1794
        %v1797 = vpack.c.bf16 %v1794, %v1794
        %s1798 = smul.addr %s1624, 4
        %s1799 = scalar_lea.vmem %s297, %s1798
        %1800 = vst [vmem:[%s1799] sm:$0xf] %v1797
        %s1801 = ssub.s32 8, %s21
        %s1802 = sadd.s32 %s379, %s1801
        %s1803 = smul.u32 %s1801, 4
        %s1804 = smul.addr %s1803, 4
        %s1805 = scalar_lea.vmem %s279, %s1804
        %v1806 = vld [vmem:[%s1805] sm:$0xff]
        %v1807 = vld [vmem:[%s1805 + $0x8] sm:$0xff]
        %v1808 = vunpack.c.l.bf16 %v1806
        %v1809 = vunpack.c.h.bf16 %v1806
        %v1810 = vunpack.c.l.bf16 %v1807
        %v1811 = vunpack.c.h.bf16 %v1807
        %v1812 = vld [vmem:[#allocation2] sm:$0xff]
        %1813 = vmatpush.msra.mxu0 %v374
        %1814 = vmatpush.msra.mxu0 %v370
        %1815 = vmatpush.msra.mxu0 %v366
        %1816 = vmatpush.msra.mxu0 %v362
        %1817 = vmatpush.msra.mxu0 %v358
        %1818 = vmatpush.msra.mxu0 %v354
        %1819 = vmatpush.msra.mxu0 %v350
        %1820 = vmatpush.msra.mxu0 %v346
        %1821 = vmatpush.msra.mxu0 %v342
        %1822 = vmatpush.msra.mxu0 %v338
        %1823 = vmatpush.msra.mxu0 %v334
        %1824 = vmatpush.msra.mxu0 %v330
        %1825 = vmatpush.msra.mxu0 %v326
        %1826 = vmatpush.msra.mxu0 %v322
        %1827 = vmatpush.msra.mxu0 %v318
        %1828 = vmatpush.msra.mxu0 %v314
        %1829 = vmatmul.f32.gmra.mxu0 %v1812
        %v1830 = vpop.f32.mrf.mxu0
        %v1831 = vadd.f32 0.0, %v1830
        %1832 = vdwg.mxu0
        %1833 = vmatpush.msra.mxu0 %v375
        %1834 = vmatpush.msra.mxu0 %v371
        %1835 = vmatpush.msra.mxu0 %v367
        %1836 = vmatpush.msra.mxu0 %v363
        %1837 = vmatpush.msra.mxu0 %v359
        %1838 = vmatpush.msra.mxu0 %v355
        %1839 = vmatpush.msra.mxu0 %v351
        %1840 = vmatpush.msra.mxu0 %v347
        %1841 = vmatpush.msra.mxu0 %v343
        %1842 = vmatpush.msra.mxu0 %v339
        %1843 = vmatpush.msra.mxu0 %v335
        %1844 = vmatpush.msra.mxu0 %v331
        %1845 = vmatpush.msra.mxu0 %v327
        %1846 = vmatpush.msra.mxu0 %v323
        %1847 = vmatpush.msra.mxu0 %v319
        %1848 = vmatpush.msra.mxu0 %v315
        %1849 = vmatmul.f32.gmra.mxu0 %v1812
        %v1850 = vpop.f32.mrf.mxu0
        %v1851 = vadd.f32 0.0, %v1850
        %1852 = vdwg.mxu0
        %1853 = vmatpush.msra.mxu0 %v376
        %1854 = vmatpush.msra.mxu0 %v372
        %1855 = vmatpush.msra.mxu0 %v368
        %1856 = vmatpush.msra.mxu0 %v364
        %1857 = vmatpush.msra.mxu0 %v360
        %1858 = vmatpush.msra.mxu0 %v356
        %1859 = vmatpush.msra.mxu0 %v352
        %1860 = vmatpush.msra.mxu0 %v348
        %1861 = vmatpush.msra.mxu0 %v344
        %1862 = vmatpush.msra.mxu0 %v340
        %1863 = vmatpush.msra.mxu0 %v336
        %1864 = vmatpush.msra.mxu0 %v332
        %1865 = vmatpush.msra.mxu0 %v328
        %1866 = vmatpush.msra.mxu0 %v324
        %1867 = vmatpush.msra.mxu0 %v320
        %1868 = vmatpush.msra.mxu0 %v316
        %1869 = vmatmul.f32.gmra.mxu0 %v1812
        %v1870 = vpop.f32.mrf.mxu0
        %v1871 = vadd.f32 0.0, %v1870
        %1872 = vdwg.mxu0
        %1873 = vmatpush.msra.mxu0 %v377
        %1874 = vmatpush.msra.mxu0 %v373
        %1875 = vmatpush.msra.mxu0 %v369
        %1876 = vmatpush.msra.mxu0 %v365
        %1877 = vmatpush.msra.mxu0 %v361
        %1878 = vmatpush.msra.mxu0 %v357
        %1879 = vmatpush.msra.mxu0 %v353
        %1880 = vmatpush.msra.mxu0 %v349
        %1881 = vmatpush.msra.mxu0 %v345
        %1882 = vmatpush.msra.mxu0 %v341
        %1883 = vmatpush.msra.mxu0 %v337
        %1884 = vmatpush.msra.mxu0 %v333
        %1885 = vmatpush.msra.mxu0 %v329
        %1886 = vmatpush.msra.mxu0 %v325
        %1887 = vmatpush.msra.mxu0 %v321
        %1888 = vmatpush.msra.mxu0 %v317
        %1889 = vmatmul.f32.gmra.mxu0 %v1812
        %v1890 = vpop.f32.mrf.mxu0
        %v1891 = vadd.f32 0.0, %v1890
        %1892 = vdwg.mxu0
        %v1893 = vadd.f32 %v1808, %v1831
        %v1894 = vadd.f32 %v1809, %v1851
        %v1895 = vadd.f32 %v1810, %v1871
        %v1896 = vadd.f32 %v1811, %v1891
        %v1897 = vxor.u32 %v1893, 2147483648
        %v1898 = vmul.f32 %v1897, 1.442695
        %v1899 = vpow.pop %v1898
        %v1900 = vadd.f32 %v1899, 1.0
        %v1901 = vrcp.pop %v1900
        %v1902 = vmul.f32 %v1900, %v1901
        %v1903 = vsub.f32 1.0, %v1902
        %v1904 = vmul.f32 %v1901, %v1903
        %v1905 = vadd.f32 %v1901, %v1904
        %vm1906 = vweird.f32 %v1900
        %vm1907 = vweird.f32 %v1901
        %vm1908 = vmor %vm1906, %vm1907
        %v1909 = vsel %vm1908, %v1901, %v1905
        %v1910 = vand.u32 2147483647, %v1900
        %vm1911 = vcmp.eq.f32.partialorder %v1910, 8.507059e+37
        %v1912 = vand.u32 %v1900, 2147483648
        %v1913 = vor.u32 1.1754944e-38, %v1912
        %v1914 = vsel %vm1911, %v1913, %v1909
        %v1915 = vmul.f32 1.0, %v1914
        %v1916 = vxor.u32 %v1894, 2147483648
        %v1917 = vmul.f32 %v1916, 1.442695
        %v1918 = vpow.pop %v1917
        %v1919 = vadd.f32 %v1918, 1.0
        %v1920 = vrcp.pop %v1919
        %v1921 = vmul.f32 %v1919, %v1920
        %v1922 = vsub.f32 1.0, %v1921
        %v1923 = vmul.f32 %v1920, %v1922
        %v1924 = vadd.f32 %v1920, %v1923
        %vm1925 = vweird.f32 %v1919
        %vm1926 = vweird.f32 %v1920
        %vm1927 = vmor %vm1925, %vm1926
        %v1928 = vsel %vm1927, %v1920, %v1924
        %v1929 = vand.u32 2147483647, %v1919
        %vm1930 = vcmp.eq.f32.partialorder %v1929, 8.507059e+37
        %v1931 = vand.u32 %v1919, 2147483648
        %v1932 = vor.u32 1.1754944e-38, %v1931
        %v1933 = vsel %vm1930, %v1932, %v1928
        %v1934 = vmul.f32 1.0, %v1933
        %v1935 = vtanh.pop %v1895
        %v1936 = vxor.u32 %v1896, 2147483648
        %v1937 = vmul.f32 %v1936, 1.442695
        %v1938 = vpow.pop %v1937
        %v1939 = vadd.f32 %v1938, 1.0
        %v1940 = vrcp.pop %v1939
        %v1941 = vmul.f32 %v1939, %v1940
        %v1942 = vsub.f32 1.0, %v1941
        %v1943 = vmul.f32 %v1940, %v1942
        %v1944 = vadd.f32 %v1940, %v1943
        %vm1945 = vweird.f32 %v1939
        %vm1946 = vweird.f32 %v1940
        %vm1947 = vmor %vm1945, %vm1946
        %v1948 = vsel %vm1947, %v1940, %v1944
        %v1949 = vand.u32 2147483647, %v1939
        %vm1950 = vcmp.eq.f32.partialorder %v1949, 8.507059e+37
        %v1951 = vand.u32 %v1939, 2147483648
        %v1952 = vor.u32 1.1754944e-38, %v1951
        %v1953 = vsel %vm1950, %v1952, %v1948
        %v1954 = vmul.f32 1.0, %v1953
        %v1955 = vstv %s1802
        %vm1956 = vcmp.lt.s32.totalorder %v1955, %v313
        %v1957 = vsel %vm1956, 1, 0
        %v1958 = vcvt.s32.f32 %v1957
        %v1959 = vld [vmem:[#allocation3] sm:$0xff]
        %v1960 = vmul.f32 %v1934, %v1959
        %v1961 = vmul.f32 %v1915, %v1935
        %v1962 = vadd.f32 %v1960, %v1961
        %1964 = vset.pattern.permute.xlu0 0
        %1965 = vperm.xlu0 %1964, %v1958
        %v1966 = vpop.permute.xlu0 %1965
        %v1968 = vmul.f32 %v1962, %v1966
        %v1969 = vtanh.pop %v1968
        %v1970 = vmul.f32 %v1954, %v1969
        %v1971 = vmul.f32 %v1970, %v1966
        %1972 = vst [vmem:[#allocation3] sm:$0xff] %v1968
        %1973 = vst [vmem:[#allocation2] sm:$0xff] %v1971
        %v1974 = vpack.c.bf16 %v1971, %v1971
        %s1975 = smul.addr %s1801, 4
        %s1976 = scalar_lea.vmem %s297, %s1975
        %1977 = vst [vmem:[%s1976] sm:$0xf] %v1974
        %s1978 = smul.u32 %s21, 4294967293
        %s1979 = sadd.s32 %s1978, 9
        %s1980 = sadd.s32 %s379, %s1979
        %s1981 = smul.u32 %s1979, 4
        %s1982 = smul.addr %s1981, 4
        %s1983 = scalar_lea.vmem %s279, %s1982
        %v1984 = vld [vmem:[%s1983] sm:$0xff]
        %v1985 = vld [vmem:[%s1983 + $0x8] sm:$0xff]
        %v1986 = vunpack.c.l.bf16 %v1984
        %v1987 = vunpack.c.h.bf16 %v1984
        %v1988 = vunpack.c.l.bf16 %v1985
        %v1989 = vunpack.c.h.bf16 %v1985
        %v1990 = vld [vmem:[#allocation2] sm:$0xff]
        %1991 = vmatpush.msra.mxu0 %v374
        %1992 = vmatpush.msra.mxu0 %v370
        %1993 = vmatpush.msra.mxu0 %v366
        %1994 = vmatpush.msra.mxu0 %v362
        %1995 = vmatpush.msra.mxu0 %v358
        %1996 = vmatpush.msra.mxu0 %v354
        %1997 = vmatpush.msra.mxu0 %v350
        %1998 = vmatpush.msra.mxu0 %v346
        %1999 = vmatpush.msra.mxu0 %v342
        %2000 = vmatpush.msra.mxu0 %v338
        %2001 = vmatpush.msra.mxu0 %v334
        %2002 = vmatpush.msra.mxu0 %v330
        %2003 = vmatpush.msra.mxu0 %v326
        %2004 = vmatpush.msra.mxu0 %v322
        %2005 = vmatpush.msra.mxu0 %v318
        %2006 = vmatpush.msra.mxu0 %v314
        %2007 = vmatmul.f32.gmra.mxu0 %v1990
        %v2008 = vpop.f32.mrf.mxu0
        %v2009 = vadd.f32 0.0, %v2008
        %2010 = vdwg.mxu0
        %2011 = vmatpush.msra.mxu0 %v375
        %2012 = vmatpush.msra.mxu0 %v371
        %2013 = vmatpush.msra.mxu0 %v367
        %2014 = vmatpush.msra.mxu0 %v363
        %2015 = vmatpush.msra.mxu0 %v359
        %2016 = vmatpush.msra.mxu0 %v355
        %2017 = vmatpush.msra.mxu0 %v351
        %2018 = vmatpush.msra.mxu0 %v347
        %2019 = vmatpush.msra.mxu0 %v343
        %2020 = vmatpush.msra.mxu0 %v339
        %2021 = vmatpush.msra.mxu0 %v335
        %2022 = vmatpush.msra.mxu0 %v331
        %2023 = vmatpush.msra.mxu0 %v327
        %2024 = vmatpush.msra.mxu0 %v323
        %2025 = vmatpush.msra.mxu0 %v319
        %2026 = vmatpush.msra.mxu0 %v315
        %2027 = vmatmul.f32.gmra.mxu0 %v1990
        %v2028 = vpop.f32.mrf.mxu0
        %v2029 = vadd.f32 0.0, %v2028
        %2030 = vdwg.mxu0
        %2031 = vmatpush.msra.mxu0 %v376
        %2032 = vmatpush.msra.mxu0 %v372
        %2033 = vmatpush.msra.mxu0 %v368
        %2034 = vmatpush.msra.mxu0 %v364
        %2035 = vmatpush.msra.mxu0 %v360
        %2036 = vmatpush.msra.mxu0 %v356
        %2037 = vmatpush.msra.mxu0 %v352
        %2038 = vmatpush.msra.mxu0 %v348
        %2039 = vmatpush.msra.mxu0 %v344
        %2040 = vmatpush.msra.mxu0 %v340
        %2041 = vmatpush.msra.mxu0 %v336
        %2042 = vmatpush.msra.mxu0 %v332
        %2043 = vmatpush.msra.mxu0 %v328
        %2044 = vmatpush.msra.mxu0 %v324
        %2045 = vmatpush.msra.mxu0 %v320
        %2046 = vmatpush.msra.mxu0 %v316
        %2047 = vmatmul.f32.gmra.mxu0 %v1990
        %v2048 = vpop.f32.mrf.mxu0
        %v2049 = vadd.f32 0.0, %v2048
        %2050 = vdwg.mxu0
        %2051 = vmatpush.msra.mxu0 %v377
        %2052 = vmatpush.msra.mxu0 %v373
        %2053 = vmatpush.msra.mxu0 %v369
        %2054 = vmatpush.msra.mxu0 %v365
        %2055 = vmatpush.msra.mxu0 %v361
        %2056 = vmatpush.msra.mxu0 %v357
        %2057 = vmatpush.msra.mxu0 %v353
        %2058 = vmatpush.msra.mxu0 %v349
        %2059 = vmatpush.msra.mxu0 %v345
        %2060 = vmatpush.msra.mxu0 %v341
        %2061 = vmatpush.msra.mxu0 %v337
        %2062 = vmatpush.msra.mxu0 %v333
        %2063 = vmatpush.msra.mxu0 %v329
        %2064 = vmatpush.msra.mxu0 %v325
        %2065 = vmatpush.msra.mxu0 %v321
        %2066 = vmatpush.msra.mxu0 %v317
        %2067 = vmatmul.f32.gmra.mxu0 %v1990
        %v2068 = vpop.f32.mrf.mxu0
        %v2069 = vadd.f32 0.0, %v2068
        %2070 = vdwg.mxu0
        %v2071 = vadd.f32 %v1986, %v2009
        %v2072 = vadd.f32 %v1987, %v2029
        %v2073 = vadd.f32 %v1988, %v2049
        %v2074 = vadd.f32 %v1989, %v2069
        %v2075 = vxor.u32 %v2071, 2147483648
        %v2076 = vmul.f32 %v2075, 1.442695
        %v2077 = vpow.pop %v2076
        %v2078 = vadd.f32 %v2077, 1.0
        %v2079 = vrcp.pop %v2078
        %v2080 = vmul.f32 %v2078, %v2079
        %v2081 = vsub.f32 1.0, %v2080
        %v2082 = vmul.f32 %v2079, %v2081
        %v2083 = vadd.f32 %v2079, %v2082
        %vm2084 = vweird.f32 %v2078
        %vm2085 = vweird.f32 %v2079
        %vm2086 = vmor %vm2084, %vm2085
        %v2087 = vsel %vm2086, %v2079, %v2083
        %v2088 = vand.u32 2147483647, %v2078
        %vm2089 = vcmp.eq.f32.partialorder %v2088, 8.507059e+37
        %v2090 = vand.u32 %v2078, 2147483648
        %v2091 = vor.u32 1.1754944e-38, %v2090
        %v2092 = vsel %vm2089, %v2091, %v2087
        %v2093 = vmul.f32 1.0, %v2092
        %v2094 = vxor.u32 %v2072, 2147483648
        %v2095 = vmul.f32 %v2094, 1.442695
        %v2096 = vpow.pop %v2095
        %v2097 = vadd.f32 %v2096, 1.0
        %v2098 = vrcp.pop %v2097
        %v2099 = vmul.f32 %v2097, %v2098
        %v2100 = vsub.f32 1.0, %v2099
        %v2101 = vmul.f32 %v2098, %v2100
        %v2102 = vadd.f32 %v2098, %v2101
        %vm2103 = vweird.f32 %v2097
        %vm2104 = vweird.f32 %v2098
        %vm2105 = vmor %vm2103, %vm2104
        %v2106 = vsel %vm2105, %v2098, %v2102
        %v2107 = vand.u32 2147483647, %v2097
        %vm2108 = vcmp.eq.f32.partialorder %v2107, 8.507059e+37
        %v2109 = vand.u32 %v2097, 2147483648
        %v2110 = vor.u32 1.1754944e-38, %v2109
        %v2111 = vsel %vm2108, %v2110, %v2106
        %v2112 = vmul.f32 1.0, %v2111
        %v2113 = vtanh.pop %v2073
        %v2114 = vxor.u32 %v2074, 2147483648
        %v2115 = vmul.f32 %v2114, 1.442695
        %v2116 = vpow.pop %v2115
        %v2117 = vadd.f32 %v2116, 1.0
        %v2118 = vrcp.pop %v2117
        %v2119 = vmul.f32 %v2117, %v2118
        %v2120 = vsub.f32 1.0, %v2119
        %v2121 = vmul.f32 %v2118, %v2120
        %v2122 = vadd.f32 %v2118, %v2121
        %vm2123 = vweird.f32 %v2117
        %vm2124 = vweird.f32 %v2118
        %vm2125 = vmor %vm2123, %vm2124
        %v2126 = vsel %vm2125, %v2118, %v2122
        %v2127 = vand.u32 2147483647, %v2117
        %vm2128 = vcmp.eq.f32.partialorder %v2127, 8.507059e+37
        %v2129 = vand.u32 %v2117, 2147483648
        %v2130 = vor.u32 1.1754944e-38, %v2129
        %v2131 = vsel %vm2128, %v2130, %v2126
        %v2132 = vmul.f32 1.0, %v2131
        %v2133 = vstv %s1980
        %vm2134 = vcmp.lt.s32.totalorder %v2133, %v313
        %v2135 = vsel %vm2134, 1, 0
        %v2136 = vcvt.s32.f32 %v2135
        %v2137 = vld [vmem:[#allocation3] sm:$0xff]
        %v2138 = vmul.f32 %v2112, %v2137
        %v2139 = vmul.f32 %v2093, %v2113
        %v2140 = vadd.f32 %v2138, %v2139
        %2142 = vset.pattern.permute.xlu0 0
        %2143 = vperm.xlu0 %2142, %v2136
        %v2144 = vpop.permute.xlu0 %2143
        %v2146 = vmul.f32 %v2140, %v2144
        %v2147 = vtanh.pop %v2146
        %v2148 = vmul.f32 %v2132, %v2147
        %v2149 = vmul.f32 %v2148, %v2144
        %2150 = vst [vmem:[#allocation3] sm:$0xff] %v2146
        %2151 = vst [vmem:[#allocation2] sm:$0xff] %v2149
        %v2152 = vpack.c.bf16 %v2149, %v2149
        %s2153 = smul.addr %s1979, 4
        %s2154 = scalar_lea.vmem %s297, %s2153
        %2155 = vst [vmem:[%s2154] sm:$0xf] %v2152
        %s2156 = smul.u32 %s21, 4294967291
        %s2157 = sadd.s32 %s2156, 10
        %s2158 = sadd.s32 %s379, %s2157
        %s2159 = smul.u32 %s2157, 4
        %s2160 = smul.addr %s2159, 4
        %s2161 = scalar_lea.vmem %s279, %s2160
        %v2162 = vld [vmem:[%s2161] sm:$0xff]
        %v2163 = vld [vmem:[%s2161 + $0x8] sm:$0xff]
        %v2164 = vunpack.c.l.bf16 %v2162
        %v2165 = vunpack.c.h.bf16 %v2162
        %v2166 = vunpack.c.l.bf16 %v2163
        %v2167 = vunpack.c.h.bf16 %v2163
        %v2168 = vld [vmem:[#allocation2] sm:$0xff]
        %2169 = vmatpush.msra.mxu0 %v374
        %2170 = vmatpush.msra.mxu0 %v370
        %2171 = vmatpush.msra.mxu0 %v366
        %2172 = vmatpush.msra.mxu0 %v362
        %2173 = vmatpush.msra.mxu0 %v358
        %2174 = vmatpush.msra.mxu0 %v354
        %2175 = vmatpush.msra.mxu0 %v350
        %2176 = vmatpush.msra.mxu0 %v346
        %2177 = vmatpush.msra.mxu0 %v342
        %2178 = vmatpush.msra.mxu0 %v338
        %2179 = vmatpush.msra.mxu0 %v334
        %2180 = vmatpush.msra.mxu0 %v330
        %2181 = vmatpush.msra.mxu0 %v326
        %2182 = vmatpush.msra.mxu0 %v322
        %2183 = vmatpush.msra.mxu0 %v318
        %2184 = vmatpush.msra.mxu0 %v314
        %2185 = vmatmul.f32.gmra.mxu0 %v2168
        %v2186 = vpop.f32.mrf.mxu0
        %v2187 = vadd.f32 0.0, %v2186
        %2188 = vdwg.mxu0
        %2189 = vmatpush.msra.mxu0 %v375
        %2190 = vmatpush.msra.mxu0 %v371
        %2191 = vmatpush.msra.mxu0 %v367
        %2192 = vmatpush.msra.mxu0 %v363
        %2193 = vmatpush.msra.mxu0 %v359
        %2194 = vmatpush.msra.mxu0 %v355
        %2195 = vmatpush.msra.mxu0 %v351
        %2196 = vmatpush.msra.mxu0 %v347
        %2197 = vmatpush.msra.mxu0 %v343
        %2198 = vmatpush.msra.mxu0 %v339
        %2199 = vmatpush.msra.mxu0 %v335
        %2200 = vmatpush.msra.mxu0 %v331
        %2201 = vmatpush.msra.mxu0 %v327
        %2202 = vmatpush.msra.mxu0 %v323
        %2203 = vmatpush.msra.mxu0 %v319
        %2204 = vmatpush.msra.mxu0 %v315
        %2205 = vmatmul.f32.gmra.mxu0 %v2168
        %v2206 = vpop.f32.mrf.mxu0
        %v2207 = vadd.f32 0.0, %v2206
        %2208 = vdwg.mxu0
        %2209 = vmatpush.msra.mxu0 %v376
        %2210 = vmatpush.msra.mxu0 %v372
        %2211 = vmatpush.msra.mxu0 %v368
        %2212 = vmatpush.msra.mxu0 %v364
        %2213 = vmatpush.msra.mxu0 %v360
        %2214 = vmatpush.msra.mxu0 %v356
        %2215 = vmatpush.msra.mxu0 %v352
        %2216 = vmatpush.msra.mxu0 %v348
        %2217 = vmatpush.msra.mxu0 %v344
        %2218 = vmatpush.msra.mxu0 %v340
        %2219 = vmatpush.msra.mxu0 %v336
        %2220 = vmatpush.msra.mxu0 %v332
        %2221 = vmatpush.msra.mxu0 %v328
        %2222 = vmatpush.msra.mxu0 %v324
        %2223 = vmatpush.msra.mxu0 %v320
        %2224 = vmatpush.msra.mxu0 %v316
        %2225 = vmatmul.f32.gmra.mxu0 %v2168
        %v2226 = vpop.f32.mrf.mxu0
        %v2227 = vadd.f32 0.0, %v2226
        %2228 = vdwg.mxu0
        %2229 = vmatpush.msra.mxu0 %v377
        %2230 = vmatpush.msra.mxu0 %v373
        %2231 = vmatpush.msra.mxu0 %v369
        %2232 = vmatpush.msra.mxu0 %v365
        %2233 = vmatpush.msra.mxu0 %v361
        %2234 = vmatpush.msra.mxu0 %v357
        %2235 = vmatpush.msra.mxu0 %v353
        %2236 = vmatpush.msra.mxu0 %v349
        %2237 = vmatpush.msra.mxu0 %v345
        %2238 = vmatpush.msra.mxu0 %v341
        %2239 = vmatpush.msra.mxu0 %v337
        %2240 = vmatpush.msra.mxu0 %v333
        %2241 = vmatpush.msra.mxu0 %v329
        %2242 = vmatpush.msra.mxu0 %v325
        %2243 = vmatpush.msra.mxu0 %v321
        %2244 = vmatpush.msra.mxu0 %v317
        %2245 = vmatmul.f32.gmra.mxu0 %v2168
        %v2246 = vpop.f32.mrf.mxu0
        %v2247 = vadd.f32 0.0, %v2246
        %2248 = vdwg.mxu0
        %v2249 = vadd.f32 %v2164, %v2187
        %v2250 = vadd.f32 %v2165, %v2207
        %v2251 = vadd.f32 %v2166, %v2227
        %v2252 = vadd.f32 %v2167, %v2247
        %v2253 = vxor.u32 %v2249, 2147483648
        %v2254 = vmul.f32 %v2253, 1.442695
        %v2255 = vpow.pop %v2254
        %v2256 = vadd.f32 %v2255, 1.0
        %v2257 = vrcp.pop %v2256
        %v2258 = vmul.f32 %v2256, %v2257
        %v2259 = vsub.f32 1.0, %v2258
        %v2260 = vmul.f32 %v2257, %v2259
        %v2261 = vadd.f32 %v2257, %v2260
        %vm2262 = vweird.f32 %v2256
        %vm2263 = vweird.f32 %v2257
        %vm2264 = vmor %vm2262, %vm2263
        %v2265 = vsel %vm2264, %v2257, %v2261
        %v2266 = vand.u32 2147483647, %v2256
        %vm2267 = vcmp.eq.f32.partialorder %v2266, 8.507059e+37
        %v2268 = vand.u32 %v2256, 2147483648
        %v2269 = vor.u32 1.1754944e-38, %v2268
        %v2270 = vsel %vm2267, %v2269, %v2265
        %v2271 = vmul.f32 1.0, %v2270
        %v2272 = vxor.u32 %v2250, 2147483648
        %v2273 = vmul.f32 %v2272, 1.442695
        %v2274 = vpow.pop %v2273
        %v2275 = vadd.f32 %v2274, 1.0
        %v2276 = vrcp.pop %v2275
        %v2277 = vmul.f32 %v2275, %v2276
        %v2278 = vsub.f32 1.0, %v2277
        %v2279 = vmul.f32 %v2276, %v2278
        %v2280 = vadd.f32 %v2276, %v2279
        %vm2281 = vweird.f32 %v2275
        %vm2282 = vweird.f32 %v2276
        %vm2283 = vmor %vm2281, %vm2282
        %v2284 = vsel %vm2283, %v2276, %v2280
        %v2285 = vand.u32 2147483647, %v2275
        %vm2286 = vcmp.eq.f32.partialorder %v2285, 8.507059e+37
        %v2287 = vand.u32 %v2275, 2147483648
        %v2288 = vor.u32 1.1754944e-38, %v2287
        %v2289 = vsel %vm2286, %v2288, %v2284
        %v2290 = vmul.f32 1.0, %v2289
        %v2291 = vtanh.pop %v2251
        %v2292 = vxor.u32 %v2252, 2147483648
        %v2293 = vmul.f32 %v2292, 1.442695
        %v2294 = vpow.pop %v2293
        %v2295 = vadd.f32 %v2294, 1.0
        %v2296 = vrcp.pop %v2295
        %v2297 = vmul.f32 %v2295, %v2296
        %v2298 = vsub.f32 1.0, %v2297
        %v2299 = vmul.f32 %v2296, %v2298
        %v2300 = vadd.f32 %v2296, %v2299
        %vm2301 = vweird.f32 %v2295
        %vm2302 = vweird.f32 %v2296
        %vm2303 = vmor %vm2301, %vm2302
        %v2304 = vsel %vm2303, %v2296, %v2300
        %v2305 = vand.u32 2147483647, %v2295
        %vm2306 = vcmp.eq.f32.partialorder %v2305, 8.507059e+37
        %v2307 = vand.u32 %v2295, 2147483648
        %v2308 = vor.u32 1.1754944e-38, %v2307
        %v2309 = vsel %vm2306, %v2308, %v2304
        %v2310 = vmul.f32 1.0, %v2309
        %v2311 = vstv %s2158
        %vm2312 = vcmp.lt.s32.totalorder %v2311, %v313
        %v2313 = vsel %vm2312, 1, 0
        %v2314 = vcvt.s32.f32 %v2313
        %v2315 = vld [vmem:[#allocation3] sm:$0xff]
        %v2316 = vmul.f32 %v2290, %v2315
        %v2317 = vmul.f32 %v2271, %v2291
        %v2318 = vadd.f32 %v2316, %v2317
        %2320 = vset.pattern.permute.xlu0 0
        %2321 = vperm.xlu0 %2320, %v2314
        %v2322 = vpop.permute.xlu0 %2321
        %v2324 = vmul.f32 %v2318, %v2322
        %v2325 = vtanh.pop %v2324
        %v2326 = vmul.f32 %v2310, %v2325
        %v2327 = vmul.f32 %v2326, %v2322
        %2328 = vst [vmem:[#allocation3] sm:$0xff] %v2324
        %2329 = vst [vmem:[#allocation2] sm:$0xff] %v2327
        %v2330 = vpack.c.bf16 %v2327, %v2327
        %s2331 = smul.addr %s2157, 4
        %s2332 = scalar_lea.vmem %s297, %s2331
        %2333 = vst [vmem:[%s2332] sm:$0xf] %v2330
        %s2334 = smul.u32 %s21, 4294967289
        %s2335 = sadd.s32 %s2334, 11
        %s2336 = sadd.s32 %s379, %s2335
        %s2337 = smul.u32 %s2335, 4
        %s2338 = smul.addr %s2337, 4
        %s2339 = scalar_lea.vmem %s279, %s2338
        %v2340 = vld [vmem:[%s2339] sm:$0xff]
        %v2341 = vld [vmem:[%s2339 + $0x8] sm:$0xff]
        %v2342 = vunpack.c.l.bf16 %v2340
        %v2343 = vunpack.c.h.bf16 %v2340
        %v2344 = vunpack.c.l.bf16 %v2341
        %v2345 = vunpack.c.h.bf16 %v2341
        %v2346 = vld [vmem:[#allocation2] sm:$0xff]
        %2347 = vmatpush.msra.mxu0 %v374
        %2348 = vmatpush.msra.mxu0 %v370
        %2349 = vmatpush.msra.mxu0 %v366
        %2350 = vmatpush.msra.mxu0 %v362
        %2351 = vmatpush.msra.mxu0 %v358
        %2352 = vmatpush.msra.mxu0 %v354
        %2353 = vmatpush.msra.mxu0 %v350
        %2354 = vmatpush.msra.mxu0 %v346
        %2355 = vmatpush.msra.mxu0 %v342
        %2356 = vmatpush.msra.mxu0 %v338
        %2357 = vmatpush.msra.mxu0 %v334
        %2358 = vmatpush.msra.mxu0 %v330
        %2359 = vmatpush.msra.mxu0 %v326
        %2360 = vmatpush.msra.mxu0 %v322
        %2361 = vmatpush.msra.mxu0 %v318
        %2362 = vmatpush.msra.mxu0 %v314
        %2363 = vmatmul.f32.gmra.mxu0 %v2346
        %v2364 = vpop.f32.mrf.mxu0
        %v2365 = vadd.f32 0.0, %v2364
        %2366 = vdwg.mxu0
        %2367 = vmatpush.msra.mxu0 %v375
        %2368 = vmatpush.msra.mxu0 %v371
        %2369 = vmatpush.msra.mxu0 %v367
        %2370 = vmatpush.msra.mxu0 %v363
        %2371 = vmatpush.msra.mxu0 %v359
        %2372 = vmatpush.msra.mxu0 %v355
        %2373 = vmatpush.msra.mxu0 %v351
        %2374 = vmatpush.msra.mxu0 %v347
        %2375 = vmatpush.msra.mxu0 %v343
        %2376 = vmatpush.msra.mxu0 %v339
        %2377 = vmatpush.msra.mxu0 %v335
        %2378 = vmatpush.msra.mxu0 %v331
        %2379 = vmatpush.msra.mxu0 %v327
        %2380 = vmatpush.msra.mxu0 %v323
        %2381 = vmatpush.msra.mxu0 %v319
        %2382 = vmatpush.msra.mxu0 %v315
        %2383 = vmatmul.f32.gmra.mxu0 %v2346
        %v2384 = vpop.f32.mrf.mxu0
        %v2385 = vadd.f32 0.0, %v2384
        %2386 = vdwg.mxu0
        %2387 = vmatpush.msra.mxu0 %v376
        %2388 = vmatpush.msra.mxu0 %v372
        %2389 = vmatpush.msra.mxu0 %v368
        %2390 = vmatpush.msra.mxu0 %v364
        %2391 = vmatpush.msra.mxu0 %v360
        %2392 = vmatpush.msra.mxu0 %v356
        %2393 = vmatpush.msra.mxu0 %v352
        %2394 = vmatpush.msra.mxu0 %v348
        %2395 = vmatpush.msra.mxu0 %v344
        %2396 = vmatpush.msra.mxu0 %v340
        %2397 = vmatpush.msra.mxu0 %v336
        %2398 = vmatpush.msra.mxu0 %v332
        %2399 = vmatpush.msra.mxu0 %v328
        %2400 = vmatpush.msra.mxu0 %v324
        %2401 = vmatpush.msra.mxu0 %v320
        %2402 = vmatpush.msra.mxu0 %v316
        %2403 = vmatmul.f32.gmra.mxu0 %v2346
        %v2404 = vpop.f32.mrf.mxu0
        %v2405 = vadd.f32 0.0, %v2404
        %2406 = vdwg.mxu0
        %2407 = vmatpush.msra.mxu0 %v377
        %2408 = vmatpush.msra.mxu0 %v373
        %2409 = vmatpush.msra.mxu0 %v369
        %2410 = vmatpush.msra.mxu0 %v365
        %2411 = vmatpush.msra.mxu0 %v361
        %2412 = vmatpush.msra.mxu0 %v357
        %2413 = vmatpush.msra.mxu0 %v353
        %2414 = vmatpush.msra.mxu0 %v349
        %2415 = vmatpush.msra.mxu0 %v345
        %2416 = vmatpush.msra.mxu0 %v341
        %2417 = vmatpush.msra.mxu0 %v337
        %2418 = vmatpush.msra.mxu0 %v333
        %2419 = vmatpush.msra.mxu0 %v329
        %2420 = vmatpush.msra.mxu0 %v325
        %2421 = vmatpush.msra.mxu0 %v321
        %2422 = vmatpush.msra.mxu0 %v317
        %2423 = vmatmul.f32.gmra.mxu0 %v2346
        %v2424 = vpop.f32.mrf.mxu0
        %v2425 = vadd.f32 0.0, %v2424
        %2426 = vdwg.mxu0
        %v2427 = vadd.f32 %v2342, %v2365
        %v2428 = vadd.f32 %v2343, %v2385
        %v2429 = vadd.f32 %v2344, %v2405
        %v2430 = vadd.f32 %v2345, %v2425
        %v2431 = vxor.u32 %v2427, 2147483648
        %v2432 = vmul.f32 %v2431, 1.442695
        %v2433 = vpow.pop %v2432
        %v2434 = vadd.f32 %v2433, 1.0
        %v2435 = vrcp.pop %v2434
        %v2436 = vmul.f32 %v2434, %v2435
        %v2437 = vsub.f32 1.0, %v2436
        %v2438 = vmul.f32 %v2435, %v2437
        %v2439 = vadd.f32 %v2435, %v2438
        %vm2440 = vweird.f32 %v2434
        %vm2441 = vweird.f32 %v2435
        %vm2442 = vmor %vm2440, %vm2441
        %v2443 = vsel %vm2442, %v2435, %v2439
        %v2444 = vand.u32 2147483647, %v2434
        %vm2445 = vcmp.eq.f32.partialorder %v2444, 8.507059e+37
        %v2446 = vand.u32 %v2434, 2147483648
        %v2447 = vor.u32 1.1754944e-38, %v2446
        %v2448 = vsel %vm2445, %v2447, %v2443
        %v2449 = vmul.f32 1.0, %v2448
        %v2450 = vxor.u32 %v2428, 2147483648
        %v2451 = vmul.f32 %v2450, 1.442695
        %v2452 = vpow.pop %v2451
        %v2453 = vadd.f32 %v2452, 1.0
        %v2454 = vrcp.pop %v2453
        %v2455 = vmul.f32 %v2453, %v2454
        %v2456 = vsub.f32 1.0, %v2455
        %v2457 = vmul.f32 %v2454, %v2456
        %v2458 = vadd.f32 %v2454, %v2457
        %vm2459 = vweird.f32 %v2453
        %vm2460 = vweird.f32 %v2454
        %vm2461 = vmor %vm2459, %vm2460
        %v2462 = vsel %vm2461, %v2454, %v2458
        %v2463 = vand.u32 2147483647, %v2453
        %vm2464 = vcmp.eq.f32.partialorder %v2463, 8.507059e+37
        %v2465 = vand.u32 %v2453, 2147483648
        %v2466 = vor.u32 1.1754944e-38, %v2465
        %v2467 = vsel %vm2464, %v2466, %v2462
        %v2468 = vmul.f32 1.0, %v2467
        %v2469 = vtanh.pop %v2429
        %v2470 = vxor.u32 %v2430, 2147483648
        %v2471 = vmul.f32 %v2470, 1.442695
        %v2472 = vpow.pop %v2471
        %v2473 = vadd.f32 %v2472, 1.0
        %v2474 = vrcp.pop %v2473
        %v2475 = vmul.f32 %v2473, %v2474
        %v2476 = vsub.f32 1.0, %v2475
        %v2477 = vmul.f32 %v2474, %v2476
        %v2478 = vadd.f32 %v2474, %v2477
        %vm2479 = vweird.f32 %v2473
        %vm2480 = vweird.f32 %v2474
        %vm2481 = vmor %vm2479, %vm2480
        %v2482 = vsel %vm2481, %v2474, %v2478
        %v2483 = vand.u32 2147483647, %v2473
        %vm2484 = vcmp.eq.f32.partialorder %v2483, 8.507059e+37
        %v2485 = vand.u32 %v2473, 2147483648
        %v2486 = vor.u32 1.1754944e-38, %v2485
        %v2487 = vsel %vm2484, %v2486, %v2482
        %v2488 = vmul.f32 1.0, %v2487
        %v2489 = vstv %s2336
        %vm2490 = vcmp.lt.s32.totalorder %v2489, %v313
        %v2491 = vsel %vm2490, 1, 0
        %v2492 = vcvt.s32.f32 %v2491
        %v2493 = vld [vmem:[#allocation3] sm:$0xff]
        %v2494 = vmul.f32 %v2468, %v2493
        %v2495 = vmul.f32 %v2449, %v2469
        %v2496 = vadd.f32 %v2494, %v2495
        %2498 = vset.pattern.permute.xlu0 0
        %2499 = vperm.xlu0 %2498, %v2492
        %v2500 = vpop.permute.xlu0 %2499
        %v2502 = vmul.f32 %v2496, %v2500
        %v2503 = vtanh.pop %v2502
        %v2504 = vmul.f32 %v2488, %v2503
        %v2505 = vmul.f32 %v2504, %v2500
        %2506 = vst [vmem:[#allocation3] sm:$0xff] %v2502
        %2507 = vst [vmem:[#allocation2] sm:$0xff] %v2505
        %v2508 = vpack.c.bf16 %v2505, %v2505
        %s2509 = smul.addr %s2335, 4
        %s2510 = scalar_lea.vmem %s297, %s2509
        %2511 = vst [vmem:[%s2510] sm:$0xf] %v2508
        %s2512 = smul.u32 %s21, 4294967287
        %s2513 = sadd.s32 %s2512, 12
        %s2514 = sadd.s32 %s379, %s2513
        %s2515 = smul.u32 %s2513, 4
        %s2516 = smul.addr %s2515, 4
        %s2517 = scalar_lea.vmem %s279, %s2516
        %v2518 = vld [vmem:[%s2517] sm:$0xff]
        %v2519 = vld [vmem:[%s2517 + $0x8] sm:$0xff]
        %v2520 = vunpack.c.l.bf16 %v2518
        %v2521 = vunpack.c.h.bf16 %v2518
        %v2522 = vunpack.c.l.bf16 %v2519
        %v2523 = vunpack.c.h.bf16 %v2519
        %v2524 = vld [vmem:[#allocation2] sm:$0xff]
        %2525 = vmatpush.msra.mxu0 %v374
        %2526 = vmatpush.msra.mxu0 %v370
        %2527 = vmatpush.msra.mxu0 %v366
        %2528 = vmatpush.msra.mxu0 %v362
        %2529 = vmatpush.msra.mxu0 %v358
        %2530 = vmatpush.msra.mxu0 %v354
        %2531 = vmatpush.msra.mxu0 %v350
        %2532 = vmatpush.msra.mxu0 %v346
        %2533 = vmatpush.msra.mxu0 %v342
        %2534 = vmatpush.msra.mxu0 %v338
        %2535 = vmatpush.msra.mxu0 %v334
        %2536 = vmatpush.msra.mxu0 %v330
        %2537 = vmatpush.msra.mxu0 %v326
        %2538 = vmatpush.msra.mxu0 %v322
        %2539 = vmatpush.msra.mxu0 %v318
        %2540 = vmatpush.msra.mxu0 %v314
        %2541 = vmatmul.f32.gmra.mxu0 %v2524
        %v2542 = vpop.f32.mrf.mxu0
        %v2543 = vadd.f32 0.0, %v2542
        %2544 = vdwg.mxu0
        %2545 = vmatpush.msra.mxu0 %v375
        %2546 = vmatpush.msra.mxu0 %v371
        %2547 = vmatpush.msra.mxu0 %v367
        %2548 = vmatpush.msra.mxu0 %v363
        %2549 = vmatpush.msra.mxu0 %v359
        %2550 = vmatpush.msra.mxu0 %v355
        %2551 = vmatpush.msra.mxu0 %v351
        %2552 = vmatpush.msra.mxu0 %v347
        %2553 = vmatpush.msra.mxu0 %v343
        %2554 = vmatpush.msra.mxu0 %v339
        %2555 = vmatpush.msra.mxu0 %v335
        %2556 = vmatpush.msra.mxu0 %v331
        %2557 = vmatpush.msra.mxu0 %v327
        %2558 = vmatpush.msra.mxu0 %v323
        %2559 = vmatpush.msra.mxu0 %v319
        %2560 = vmatpush.msra.mxu0 %v315
        %2561 = vmatmul.f32.gmra.mxu0 %v2524
        %v2562 = vpop.f32.mrf.mxu0
        %v2563 = vadd.f32 0.0, %v2562
        %2564 = vdwg.mxu0
        %2565 = vmatpush.msra.mxu0 %v376
        %2566 = vmatpush.msra.mxu0 %v372
        %2567 = vmatpush.msra.mxu0 %v368
        %2568 = vmatpush.msra.mxu0 %v364
        %2569 = vmatpush.msra.mxu0 %v360
        %2570 = vmatpush.msra.mxu0 %v356
        %2571 = vmatpush.msra.mxu0 %v352
        %2572 = vmatpush.msra.mxu0 %v348
        %2573 = vmatpush.msra.mxu0 %v344
        %2574 = vmatpush.msra.mxu0 %v340
        %2575 = vmatpush.msra.mxu0 %v336
        %2576 = vmatpush.msra.mxu0 %v332
        %2577 = vmatpush.msra.mxu0 %v328
        %2578 = vmatpush.msra.mxu0 %v324
        %2579 = vmatpush.msra.mxu0 %v320
        %2580 = vmatpush.msra.mxu0 %v316
        %2581 = vmatmul.f32.gmra.mxu0 %v2524
        %v2582 = vpop.f32.mrf.mxu0
        %v2583 = vadd.f32 0.0, %v2582
        %2584 = vdwg.mxu0
        %2585 = vmatpush.msra.mxu0 %v377
        %2586 = vmatpush.msra.mxu0 %v373
        %2587 = vmatpush.msra.mxu0 %v369
        %2588 = vmatpush.msra.mxu0 %v365
        %2589 = vmatpush.msra.mxu0 %v361
        %2590 = vmatpush.msra.mxu0 %v357
        %2591 = vmatpush.msra.mxu0 %v353
        %2592 = vmatpush.msra.mxu0 %v349
        %2593 = vmatpush.msra.mxu0 %v345
        %2594 = vmatpush.msra.mxu0 %v341
        %2595 = vmatpush.msra.mxu0 %v337
        %2596 = vmatpush.msra.mxu0 %v333
        %2597 = vmatpush.msra.mxu0 %v329
        %2598 = vmatpush.msra.mxu0 %v325
        %2599 = vmatpush.msra.mxu0 %v321
        %2600 = vmatpush.msra.mxu0 %v317
        %2601 = vmatmul.f32.gmra.mxu0 %v2524
        %v2602 = vpop.f32.mrf.mxu0
        %v2603 = vadd.f32 0.0, %v2602
        %2604 = vdwg.mxu0
        %v2605 = vadd.f32 %v2520, %v2543
        %v2606 = vadd.f32 %v2521, %v2563
        %v2607 = vadd.f32 %v2522, %v2583
        %v2608 = vadd.f32 %v2523, %v2603
        %v2609 = vxor.u32 %v2605, 2147483648
        %v2610 = vmul.f32 %v2609, 1.442695
        %v2611 = vpow.pop %v2610
        %v2612 = vadd.f32 %v2611, 1.0
        %v2613 = vrcp.pop %v2612
        %v2614 = vmul.f32 %v2612, %v2613
        %v2615 = vsub.f32 1.0, %v2614
        %v2616 = vmul.f32 %v2613, %v2615
        %v2617 = vadd.f32 %v2613, %v2616
        %vm2618 = vweird.f32 %v2612
        %vm2619 = vweird.f32 %v2613
        %vm2620 = vmor %vm2618, %vm2619
        %v2621 = vsel %vm2620, %v2613, %v2617
        %v2622 = vand.u32 2147483647, %v2612
        %vm2623 = vcmp.eq.f32.partialorder %v2622, 8.507059e+37
        %v2624 = vand.u32 %v2612, 2147483648
        %v2625 = vor.u32 1.1754944e-38, %v2624
        %v2626 = vsel %vm2623, %v2625, %v2621
        %v2627 = vmul.f32 1.0, %v2626
        %v2628 = vxor.u32 %v2606, 2147483648
        %v2629 = vmul.f32 %v2628, 1.442695
        %v2630 = vpow.pop %v2629
        %v2631 = vadd.f32 %v2630, 1.0
        %v2632 = vrcp.pop %v2631
        %v2633 = vmul.f32 %v2631, %v2632
        %v2634 = vsub.f32 1.0, %v2633
        %v2635 = vmul.f32 %v2632, %v2634
        %v2636 = vadd.f32 %v2632, %v2635
        %vm2637 = vweird.f32 %v2631
        %vm2638 = vweird.f32 %v2632
        %vm2639 = vmor %vm2637, %vm2638
        %v2640 = vsel %vm2639, %v2632, %v2636
        %v2641 = vand.u32 2147483647, %v2631
        %vm2642 = vcmp.eq.f32.partialorder %v2641, 8.507059e+37
        %v2643 = vand.u32 %v2631, 2147483648
        %v2644 = vor.u32 1.1754944e-38, %v2643
        %v2645 = vsel %vm2642, %v2644, %v2640
        %v2646 = vmul.f32 1.0, %v2645
        %v2647 = vtanh.pop %v2607
        %v2648 = vxor.u32 %v2608, 2147483648
        %v2649 = vmul.f32 %v2648, 1.442695
        %v2650 = vpow.pop %v2649
        %v2651 = vadd.f32 %v2650, 1.0
        %v2652 = vrcp.pop %v2651
        %v2653 = vmul.f32 %v2651, %v2652
        %v2654 = vsub.f32 1.0, %v2653
        %v2655 = vmul.f32 %v2652, %v2654
        %v2656 = vadd.f32 %v2652, %v2655
        %vm2657 = vweird.f32 %v2651
        %vm2658 = vweird.f32 %v2652
        %vm2659 = vmor %vm2657, %vm2658
        %v2660 = vsel %vm2659, %v2652, %v2656
        %v2661 = vand.u32 2147483647, %v2651
        %vm2662 = vcmp.eq.f32.partialorder %v2661, 8.507059e+37
        %v2663 = vand.u32 %v2651, 2147483648
        %v2664 = vor.u32 1.1754944e-38, %v2663
        %v2665 = vsel %vm2662, %v2664, %v2660
        %v2666 = vmul.f32 1.0, %v2665
        %v2667 = vstv %s2514
        %vm2668 = vcmp.lt.s32.totalorder %v2667, %v313
        %v2669 = vsel %vm2668, 1, 0
        %v2670 = vcvt.s32.f32 %v2669
        %v2671 = vld [vmem:[#allocation3] sm:$0xff]
        %v2672 = vmul.f32 %v2646, %v2671
        %v2673 = vmul.f32 %v2627, %v2647
        %v2674 = vadd.f32 %v2672, %v2673
        %2676 = vset.pattern.permute.xlu0 0
        %2677 = vperm.xlu0 %2676, %v2670
        %v2678 = vpop.permute.xlu0 %2677
        %v2680 = vmul.f32 %v2674, %v2678
        %v2681 = vtanh.pop %v2680
        %v2682 = vmul.f32 %v2666, %v2681
        %v2683 = vmul.f32 %v2682, %v2678
        %2684 = vst [vmem:[#allocation3] sm:$0xff] %v2680
        %2685 = vst [vmem:[#allocation2] sm:$0xff] %v2683
        %v2686 = vpack.c.bf16 %v2683, %v2683
        %s2687 = smul.addr %s2513, 4
        %s2688 = scalar_lea.vmem %s297, %s2687
        %2689 = vst [vmem:[%s2688] sm:$0xf] %v2686
        %s2690 = smul.u32 %s21, 4294967285
        %s2691 = sadd.s32 %s2690, 13
        %s2692 = sadd.s32 %s379, %s2691
        %s2693 = smul.u32 %s2691, 4
        %s2694 = smul.addr %s2693, 4
        %s2695 = scalar_lea.vmem %s279, %s2694
        %v2696 = vld [vmem:[%s2695] sm:$0xff]
        %v2697 = vld [vmem:[%s2695 + $0x8] sm:$0xff]
        %v2698 = vunpack.c.l.bf16 %v2696
        %v2699 = vunpack.c.h.bf16 %v2696
        %v2700 = vunpack.c.l.bf16 %v2697
        %v2701 = vunpack.c.h.bf16 %v2697
        %v2702 = vld [vmem:[#allocation2] sm:$0xff]
        %2703 = vmatpush.msra.mxu0 %v374
        %2704 = vmatpush.msra.mxu0 %v370
        %2705 = vmatpush.msra.mxu0 %v366
        %2706 = vmatpush.msra.mxu0 %v362
        %2707 = vmatpush.msra.mxu0 %v358
        %2708 = vmatpush.msra.mxu0 %v354
        %2709 = vmatpush.msra.mxu0 %v350
        %2710 = vmatpush.msra.mxu0 %v346
        %2711 = vmatpush.msra.mxu0 %v342
        %2712 = vmatpush.msra.mxu0 %v338
        %2713 = vmatpush.msra.mxu0 %v334
        %2714 = vmatpush.msra.mxu0 %v330
        %2715 = vmatpush.msra.mxu0 %v326
        %2716 = vmatpush.msra.mxu0 %v322
        %2717 = vmatpush.msra.mxu0 %v318
        %2718 = vmatpush.msra.mxu0 %v314
        %2719 = vmatmul.f32.gmra.mxu0 %v2702
        %v2720 = vpop.f32.mrf.mxu0
        %v2721 = vadd.f32 0.0, %v2720
        %2722 = vdwg.mxu0
        %2723 = vmatpush.msra.mxu0 %v375
        %2724 = vmatpush.msra.mxu0 %v371
        %2725 = vmatpush.msra.mxu0 %v367
        %2726 = vmatpush.msra.mxu0 %v363
        %2727 = vmatpush.msra.mxu0 %v359
        %2728 = vmatpush.msra.mxu0 %v355
        %2729 = vmatpush.msra.mxu0 %v351
        %2730 = vmatpush.msra.mxu0 %v347
        %2731 = vmatpush.msra.mxu0 %v343
        %2732 = vmatpush.msra.mxu0 %v339
        %2733 = vmatpush.msra.mxu0 %v335
        %2734 = vmatpush.msra.mxu0 %v331
        %2735 = vmatpush.msra.mxu0 %v327
        %2736 = vmatpush.msra.mxu0 %v323
        %2737 = vmatpush.msra.mxu0 %v319
        %2738 = vmatpush.msra.mxu0 %v315
        %2739 = vmatmul.f32.gmra.mxu0 %v2702
        %v2740 = vpop.f32.mrf.mxu0
        %v2741 = vadd.f32 0.0, %v2740
        %2742 = vdwg.mxu0
        %2743 = vmatpush.msra.mxu0 %v376
        %2744 = vmatpush.msra.mxu0 %v372
        %2745 = vmatpush.msra.mxu0 %v368
        %2746 = vmatpush.msra.mxu0 %v364
        %2747 = vmatpush.msra.mxu0 %v360
        %2748 = vmatpush.msra.mxu0 %v356
        %2749 = vmatpush.msra.mxu0 %v352
        %2750 = vmatpush.msra.mxu0 %v348
        %2751 = vmatpush.msra.mxu0 %v344
        %2752 = vmatpush.msra.mxu0 %v340
        %2753 = vmatpush.msra.mxu0 %v336
        %2754 = vmatpush.msra.mxu0 %v332
        %2755 = vmatpush.msra.mxu0 %v328
        %2756 = vmatpush.msra.mxu0 %v324
        %2757 = vmatpush.msra.mxu0 %v320
        %2758 = vmatpush.msra.mxu0 %v316
        %2759 = vmatmul.f32.gmra.mxu0 %v2702
        %v2760 = vpop.f32.mrf.mxu0
        %v2761 = vadd.f32 0.0, %v2760
        %2762 = vdwg.mxu0
        %2763 = vmatpush.msra.mxu0 %v377
        %2764 = vmatpush.msra.mxu0 %v373
        %2765 = vmatpush.msra.mxu0 %v369
        %2766 = vmatpush.msra.mxu0 %v365
        %2767 = vmatpush.msra.mxu0 %v361
        %2768 = vmatpush.msra.mxu0 %v357
        %2769 = vmatpush.msra.mxu0 %v353
        %2770 = vmatpush.msra.mxu0 %v349
        %2771 = vmatpush.msra.mxu0 %v345
        %2772 = vmatpush.msra.mxu0 %v341
        %2773 = vmatpush.msra.mxu0 %v337
        %2774 = vmatpush.msra.mxu0 %v333
        %2775 = vmatpush.msra.mxu0 %v329
        %2776 = vmatpush.msra.mxu0 %v325
        %2777 = vmatpush.msra.mxu0 %v321
        %2778 = vmatpush.msra.mxu0 %v317
        %2779 = vmatmul.f32.gmra.mxu0 %v2702
        %v2780 = vpop.f32.mrf.mxu0
        %v2781 = vadd.f32 0.0, %v2780
        %2782 = vdwg.mxu0
        %v2783 = vadd.f32 %v2698, %v2721
        %v2784 = vadd.f32 %v2699, %v2741
        %v2785 = vadd.f32 %v2700, %v2761
        %v2786 = vadd.f32 %v2701, %v2781
        %v2787 = vxor.u32 %v2783, 2147483648
        %v2788 = vmul.f32 %v2787, 1.442695
        %v2789 = vpow.pop %v2788
        %v2790 = vadd.f32 %v2789, 1.0
        %v2791 = vrcp.pop %v2790
        %v2792 = vmul.f32 %v2790, %v2791
        %v2793 = vsub.f32 1.0, %v2792
        %v2794 = vmul.f32 %v2791, %v2793
        %v2795 = vadd.f32 %v2791, %v2794
        %vm2796 = vweird.f32 %v2790
        %vm2797 = vweird.f32 %v2791
        %vm2798 = vmor %vm2796, %vm2797
        %v2799 = vsel %vm2798, %v2791, %v2795
        %v2800 = vand.u32 2147483647, %v2790
        %vm2801 = vcmp.eq.f32.partialorder %v2800, 8.507059e+37
        %v2802 = vand.u32 %v2790, 2147483648
        %v2803 = vor.u32 1.1754944e-38, %v2802
        %v2804 = vsel %vm2801, %v2803, %v2799
        %v2805 = vmul.f32 1.0, %v2804
        %v2806 = vxor.u32 %v2784, 2147483648
        %v2807 = vmul.f32 %v2806, 1.442695
        %v2808 = vpow.pop %v2807
        %v2809 = vadd.f32 %v2808, 1.0
        %v2810 = vrcp.pop %v2809
        %v2811 = vmul.f32 %v2809, %v2810
        %v2812 = vsub.f32 1.0, %v2811
        %v2813 = vmul.f32 %v2810, %v2812
        %v2814 = vadd.f32 %v2810, %v2813
        %vm2815 = vweird.f32 %v2809
        %vm2816 = vweird.f32 %v2810
        %vm2817 = vmor %vm2815, %vm2816
        %v2818 = vsel %vm2817, %v2810, %v2814
        %v2819 = vand.u32 2147483647, %v2809
        %vm2820 = vcmp.eq.f32.partialorder %v2819, 8.507059e+37
        %v2821 = vand.u32 %v2809, 2147483648
        %v2822 = vor.u32 1.1754944e-38, %v2821
        %v2823 = vsel %vm2820, %v2822, %v2818
        %v2824 = vmul.f32 1.0, %v2823
        %v2825 = vtanh.pop %v2785
        %v2826 = vxor.u32 %v2786, 2147483648
        %v2827 = vmul.f32 %v2826, 1.442695
        %v2828 = vpow.pop %v2827
        %v2829 = vadd.f32 %v2828, 1.0
        %v2830 = vrcp.pop %v2829
        %v2831 = vmul.f32 %v2829, %v2830
        %v2832 = vsub.f32 1.0, %v2831
        %v2833 = vmul.f32 %v2830, %v2832
        %v2834 = vadd.f32 %v2830, %v2833
        %vm2835 = vweird.f32 %v2829
        %vm2836 = vweird.f32 %v2830
        %vm2837 = vmor %vm2835, %vm2836
        %v2838 = vsel %vm2837, %v2830, %v2834
        %v2839 = vand.u32 2147483647, %v2829
        %vm2840 = vcmp.eq.f32.partialorder %v2839, 8.507059e+37
        %v2841 = vand.u32 %v2829, 2147483648
        %v2842 = vor.u32 1.1754944e-38, %v2841
        %v2843 = vsel %vm2840, %v2842, %v2838
        %v2844 = vmul.f32 1.0, %v2843
        %v2845 = vstv %s2692
        %vm2846 = vcmp.lt.s32.totalorder %v2845, %v313
        %v2847 = vsel %vm2846, 1, 0
        %v2848 = vcvt.s32.f32 %v2847
        %v2849 = vld [vmem:[#allocation3] sm:$0xff]
        %v2850 = vmul.f32 %v2824, %v2849
        %v2851 = vmul.f32 %v2805, %v2825
        %v2852 = vadd.f32 %v2850, %v2851
        %2854 = vset.pattern.permute.xlu0 0
        %2855 = vperm.xlu0 %2854, %v2848
        %v2856 = vpop.permute.xlu0 %2855
        %v2858 = vmul.f32 %v2852, %v2856
        %v2859 = vtanh.pop %v2858
        %v2860 = vmul.f32 %v2844, %v2859
        %v2861 = vmul.f32 %v2860, %v2856
        %2862 = vst [vmem:[#allocation3] sm:$0xff] %v2858
        %2863 = vst [vmem:[#allocation2] sm:$0xff] %v2861
        %v2864 = vpack.c.bf16 %v2861, %v2861
        %s2865 = smul.addr %s2691, 4
        %s2866 = scalar_lea.vmem %s297, %s2865
        %2867 = vst [vmem:[%s2866] sm:$0xf] %v2864
        %s2868 = smul.u32 %s21, 4294967283
        %s2869 = sadd.s32 %s2868, 14
        %s2870 = sadd.s32 %s379, %s2869
        %s2871 = smul.u32 %s2869, 4
        %s2872 = smul.addr %s2871, 4
        %s2873 = scalar_lea.vmem %s279, %s2872
        %v2874 = vld [vmem:[%s2873] sm:$0xff]
        %v2875 = vld [vmem:[%s2873 + $0x8] sm:$0xff]
        %v2876 = vunpack.c.l.bf16 %v2874
        %v2877 = vunpack.c.h.bf16 %v2874
        %v2878 = vunpack.c.l.bf16 %v2875
        %v2879 = vunpack.c.h.bf16 %v2875
        %v2880 = vld [vmem:[#allocation2] sm:$0xff]
        %2881 = vmatpush.msra.mxu0 %v374
        %2882 = vmatpush.msra.mxu0 %v370
        %2883 = vmatpush.msra.mxu0 %v366
        %2884 = vmatpush.msra.mxu0 %v362
        %2885 = vmatpush.msra.mxu0 %v358
        %2886 = vmatpush.msra.mxu0 %v354
        %2887 = vmatpush.msra.mxu0 %v350
        %2888 = vmatpush.msra.mxu0 %v346
        %2889 = vmatpush.msra.mxu0 %v342
        %2890 = vmatpush.msra.mxu0 %v338
        %2891 = vmatpush.msra.mxu0 %v334
        %2892 = vmatpush.msra.mxu0 %v330
        %2893 = vmatpush.msra.mxu0 %v326
        %2894 = vmatpush.msra.mxu0 %v322
        %2895 = vmatpush.msra.mxu0 %v318
        %2896 = vmatpush.msra.mxu0 %v314
        %2897 = vmatmul.f32.gmra.mxu0 %v2880
        %v2898 = vpop.f32.mrf.mxu0
        %v2899 = vadd.f32 0.0, %v2898
        %2900 = vdwg.mxu0
        %2901 = vmatpush.msra.mxu0 %v375
        %2902 = vmatpush.msra.mxu0 %v371
        %2903 = vmatpush.msra.mxu0 %v367
        %2904 = vmatpush.msra.mxu0 %v363
        %2905 = vmatpush.msra.mxu0 %v359
        %2906 = vmatpush.msra.mxu0 %v355
        %2907 = vmatpush.msra.mxu0 %v351
        %2908 = vmatpush.msra.mxu0 %v347
        %2909 = vmatpush.msra.mxu0 %v343
        %2910 = vmatpush.msra.mxu0 %v339
        %2911 = vmatpush.msra.mxu0 %v335
        %2912 = vmatpush.msra.mxu0 %v331
        %2913 = vmatpush.msra.mxu0 %v327
        %2914 = vmatpush.msra.mxu0 %v323
        %2915 = vmatpush.msra.mxu0 %v319
        %2916 = vmatpush.msra.mxu0 %v315
        %2917 = vmatmul.f32.gmra.mxu0 %v2880
        %v2918 = vpop.f32.mrf.mxu0
        %v2919 = vadd.f32 0.0, %v2918
        %2920 = vdwg.mxu0
        %2921 = vmatpush.msra.mxu0 %v376
        %2922 = vmatpush.msra.mxu0 %v372
        %2923 = vmatpush.msra.mxu0 %v368
        %2924 = vmatpush.msra.mxu0 %v364
        %2925 = vmatpush.msra.mxu0 %v360
        %2926 = vmatpush.msra.mxu0 %v356
        %2927 = vmatpush.msra.mxu0 %v352
        %2928 = vmatpush.msra.mxu0 %v348
        %2929 = vmatpush.msra.mxu0 %v344
        %2930 = vmatpush.msra.mxu0 %v340
        %2931 = vmatpush.msra.mxu0 %v336
        %2932 = vmatpush.msra.mxu0 %v332
        %2933 = vmatpush.msra.mxu0 %v328
        %2934 = vmatpush.msra.mxu0 %v324
        %2935 = vmatpush.msra.mxu0 %v320
        %2936 = vmatpush.msra.mxu0 %v316
        %2937 = vmatmul.f32.gmra.mxu0 %v2880
        %v2938 = vpop.f32.mrf.mxu0
        %v2939 = vadd.f32 0.0, %v2938
        %2940 = vdwg.mxu0
        %2941 = vmatpush.msra.mxu0 %v377
        %2942 = vmatpush.msra.mxu0 %v373
        %2943 = vmatpush.msra.mxu0 %v369
        %2944 = vmatpush.msra.mxu0 %v365
        %2945 = vmatpush.msra.mxu0 %v361
        %2946 = vmatpush.msra.mxu0 %v357
        %2947 = vmatpush.msra.mxu0 %v353
        %2948 = vmatpush.msra.mxu0 %v349
        %2949 = vmatpush.msra.mxu0 %v345
        %2950 = vmatpush.msra.mxu0 %v341
        %2951 = vmatpush.msra.mxu0 %v337
        %2952 = vmatpush.msra.mxu0 %v333
        %2953 = vmatpush.msra.mxu0 %v329
        %2954 = vmatpush.msra.mxu0 %v325
        %2955 = vmatpush.msra.mxu0 %v321
        %2956 = vmatpush.msra.mxu0 %v317
        %2957 = vmatmul.f32.gmra.mxu0 %v2880
        %v2958 = vpop.f32.mrf.mxu0
        %v2959 = vadd.f32 0.0, %v2958
        %2960 = vdwg.mxu0
        %v2961 = vadd.f32 %v2876, %v2899
        %v2962 = vadd.f32 %v2877, %v2919
        %v2963 = vadd.f32 %v2878, %v2939
        %v2964 = vadd.f32 %v2879, %v2959
        %v2965 = vxor.u32 %v2961, 2147483648
        %v2966 = vmul.f32 %v2965, 1.442695
        %v2967 = vpow.pop %v2966
        %v2968 = vadd.f32 %v2967, 1.0
        %v2969 = vrcp.pop %v2968
        %v2970 = vmul.f32 %v2968, %v2969
        %v2971 = vsub.f32 1.0, %v2970
        %v2972 = vmul.f32 %v2969, %v2971
        %v2973 = vadd.f32 %v2969, %v2972
        %vm2974 = vweird.f32 %v2968
        %vm2975 = vweird.f32 %v2969
        %vm2976 = vmor %vm2974, %vm2975
        %v2977 = vsel %vm2976, %v2969, %v2973
        %v2978 = vand.u32 2147483647, %v2968
        %vm2979 = vcmp.eq.f32.partialorder %v2978, 8.507059e+37
        %v2980 = vand.u32 %v2968, 2147483648
        %v2981 = vor.u32 1.1754944e-38, %v2980
        %v2982 = vsel %vm2979, %v2981, %v2977
        %v2983 = vmul.f32 1.0, %v2982
        %v2984 = vxor.u32 %v2962, 2147483648
        %v2985 = vmul.f32 %v2984, 1.442695
        %v2986 = vpow.pop %v2985
        %v2987 = vadd.f32 %v2986, 1.0
        %v2988 = vrcp.pop %v2987
        %v2989 = vmul.f32 %v2987, %v2988
        %v2990 = vsub.f32 1.0, %v2989
        %v2991 = vmul.f32 %v2988, %v2990
        %v2992 = vadd.f32 %v2988, %v2991
        %vm2993 = vweird.f32 %v2987
        %vm2994 = vweird.f32 %v2988
        %vm2995 = vmor %vm2993, %vm2994
        %v2996 = vsel %vm2995, %v2988, %v2992
        %v2997 = vand.u32 2147483647, %v2987
        %vm2998 = vcmp.eq.f32.partialorder %v2997, 8.507059e+37
        %v2999 = vand.u32 %v2987, 2147483648
        %v3000 = vor.u32 1.1754944e-38, %v2999
        %v3001 = vsel %vm2998, %v3000, %v2996
        %v3002 = vmul.f32 1.0, %v3001
        %v3003 = vtanh.pop %v2963
        %v3004 = vxor.u32 %v2964, 2147483648
        %v3005 = vmul.f32 %v3004, 1.442695
        %v3006 = vpow.pop %v3005
        %v3007 = vadd.f32 %v3006, 1.0
        %v3008 = vrcp.pop %v3007
        %v3009 = vmul.f32 %v3007, %v3008
        %v3010 = vsub.f32 1.0, %v3009
        %v3011 = vmul.f32 %v3008, %v3010
        %v3012 = vadd.f32 %v3008, %v3011
        %vm3013 = vweird.f32 %v3007
        %vm3014 = vweird.f32 %v3008
        %vm3015 = vmor %vm3013, %vm3014
        %v3016 = vsel %vm3015, %v3008, %v3012
        %v3017 = vand.u32 2147483647, %v3007
        %vm3018 = vcmp.eq.f32.partialorder %v3017, 8.507059e+37
        %v3019 = vand.u32 %v3007, 2147483648
        %v3020 = vor.u32 1.1754944e-38, %v3019
        %v3021 = vsel %vm3018, %v3020, %v3016
        %v3022 = vmul.f32 1.0, %v3021
        %v3023 = vstv %s2870
        %vm3024 = vcmp.lt.s32.totalorder %v3023, %v313
        %v3025 = vsel %vm3024, 1, 0
        %v3026 = vcvt.s32.f32 %v3025
        %v3027 = vld [vmem:[#allocation3] sm:$0xff]
        %v3028 = vmul.f32 %v3002, %v3027
        %v3029 = vmul.f32 %v2983, %v3003
        %v3030 = vadd.f32 %v3028, %v3029
        %3032 = vset.pattern.permute.xlu0 0
        %3033 = vperm.xlu0 %3032, %v3026
        %v3034 = vpop.permute.xlu0 %3033
        %v3036 = vmul.f32 %v3030, %v3034
        %v3037 = vtanh.pop %v3036
        %v3038 = vmul.f32 %v3022, %v3037
        %v3039 = vmul.f32 %v3038, %v3034
        %3040 = vst [vmem:[#allocation3] sm:$0xff] %v3036
        %3041 = vst [vmem:[#allocation2] sm:$0xff] %v3039
        %v3042 = vpack.c.bf16 %v3039, %v3039
        %s3043 = smul.addr %s2869, 4
        %s3044 = scalar_lea.vmem %s297, %s3043
        %3045 = vst [vmem:[%s3044] sm:$0xf] %v3042
        %s3046 = smul.u32 %s21, 4294967281
        %s3047 = sadd.s32 %s3046, 15
        %s3048 = sadd.s32 %s379, %s3047
        %s3049 = smul.u32 %s3047, 4
        %s3050 = smul.addr %s3049, 4
        %s3051 = scalar_lea.vmem %s279, %s3050
        %v3052 = vld [vmem:[%s3051] sm:$0xff]
        %v3053 = vld [vmem:[%s3051 + $0x8] sm:$0xff]
        %v3054 = vunpack.c.l.bf16 %v3052
        %v3055 = vunpack.c.h.bf16 %v3052
        %v3056 = vunpack.c.l.bf16 %v3053
        %v3057 = vunpack.c.h.bf16 %v3053
        %v3058 = vld [vmem:[#allocation2] sm:$0xff]
        %3059 = vmatpush.msra.mxu0 %v374
        %3060 = vmatpush.msra.mxu0 %v370
        %3061 = vmatpush.msra.mxu0 %v366
        %3062 = vmatpush.msra.mxu0 %v362
        %3063 = vmatpush.msra.mxu0 %v358
        %3064 = vmatpush.msra.mxu0 %v354
        %3065 = vmatpush.msra.mxu0 %v350
        %3066 = vmatpush.msra.mxu0 %v346
        %3067 = vmatpush.msra.mxu0 %v342
        %3068 = vmatpush.msra.mxu0 %v338
        %3069 = vmatpush.msra.mxu0 %v334
        %3070 = vmatpush.msra.mxu0 %v330
        %3071 = vmatpush.msra.mxu0 %v326
        %3072 = vmatpush.msra.mxu0 %v322
        %3073 = vmatpush.msra.mxu0 %v318
        %3074 = vmatpush.msra.mxu0 %v314
        %3075 = vmatmul.f32.gmra.mxu0 %v3058
        %v3076 = vpop.f32.mrf.mxu0
        %v3077 = vadd.f32 0.0, %v3076
        %3078 = vdwg.mxu0
        %3079 = vmatpush.msra.mxu0 %v375
        %3080 = vmatpush.msra.mxu0 %v371
        %3081 = vmatpush.msra.mxu0 %v367
        %3082 = vmatpush.msra.mxu0 %v363
        %3083 = vmatpush.msra.mxu0 %v359
        %3084 = vmatpush.msra.mxu0 %v355
        %3085 = vmatpush.msra.mxu0 %v351
        %3086 = vmatpush.msra.mxu0 %v347
        %3087 = vmatpush.msra.mxu0 %v343
        %3088 = vmatpush.msra.mxu0 %v339
        %3089 = vmatpush.msra.mxu0 %v335
        %3090 = vmatpush.msra.mxu0 %v331
        %3091 = vmatpush.msra.mxu0 %v327
        %3092 = vmatpush.msra.mxu0 %v323
        %3093 = vmatpush.msra.mxu0 %v319
        %3094 = vmatpush.msra.mxu0 %v315
        %3095 = vmatmul.f32.gmra.mxu0 %v3058
        %v3096 = vpop.f32.mrf.mxu0
        %v3097 = vadd.f32 0.0, %v3096
        %3098 = vdwg.mxu0
        %3099 = vmatpush.msra.mxu0 %v376
        %3100 = vmatpush.msra.mxu0 %v372
        %3101 = vmatpush.msra.mxu0 %v368
        %3102 = vmatpush.msra.mxu0 %v364
        %3103 = vmatpush.msra.mxu0 %v360
        %3104 = vmatpush.msra.mxu0 %v356
        %3105 = vmatpush.msra.mxu0 %v352
        %3106 = vmatpush.msra.mxu0 %v348
        %3107 = vmatpush.msra.mxu0 %v344
        %3108 = vmatpush.msra.mxu0 %v340
        %3109 = vmatpush.msra.mxu0 %v336
        %3110 = vmatpush.msra.mxu0 %v332
        %3111 = vmatpush.msra.mxu0 %v328
        %3112 = vmatpush.msra.mxu0 %v324
        %3113 = vmatpush.msra.mxu0 %v320
        %3114 = vmatpush.msra.mxu0 %v316
        %3115 = vmatmul.f32.gmra.mxu0 %v3058
        %v3116 = vpop.f32.mrf.mxu0
        %v3117 = vadd.f32 0.0, %v3116
        %3118 = vdwg.mxu0
        %3119 = vmatpush.msra.mxu0 %v377
        %3120 = vmatpush.msra.mxu0 %v373
        %3121 = vmatpush.msra.mxu0 %v369
        %3122 = vmatpush.msra.mxu0 %v365
        %3123 = vmatpush.msra.mxu0 %v361
        %3124 = vmatpush.msra.mxu0 %v357
        %3125 = vmatpush.msra.mxu0 %v353
        %3126 = vmatpush.msra.mxu0 %v349
        %3127 = vmatpush.msra.mxu0 %v345
        %3128 = vmatpush.msra.mxu0 %v341
        %3129 = vmatpush.msra.mxu0 %v337
        %3130 = vmatpush.msra.mxu0 %v333
        %3131 = vmatpush.msra.mxu0 %v329
        %3132 = vmatpush.msra.mxu0 %v325
        %3133 = vmatpush.msra.mxu0 %v321
        %3134 = vmatpush.msra.mxu0 %v317
        %3135 = vmatmul.f32.gmra.mxu0 %v3058
        %v3136 = vpop.f32.mrf.mxu0
        %v3137 = vadd.f32 0.0, %v3136
        %3138 = vdwg.mxu0
        %v3139 = vadd.f32 %v3054, %v3077
        %v3140 = vadd.f32 %v3055, %v3097
        %v3141 = vadd.f32 %v3056, %v3117
        %v3142 = vadd.f32 %v3057, %v3137
        %v3143 = vxor.u32 %v3139, 2147483648
        %v3144 = vmul.f32 %v3143, 1.442695
        %v3145 = vpow.pop %v3144
        %v3146 = vadd.f32 %v3145, 1.0
        %v3147 = vrcp.pop %v3146
        %v3148 = vmul.f32 %v3146, %v3147
        %v3149 = vsub.f32 1.0, %v3148
        %v3150 = vmul.f32 %v3147, %v3149
        %v3151 = vadd.f32 %v3147, %v3150
        %vm3152 = vweird.f32 %v3146
        %vm3153 = vweird.f32 %v3147
        %vm3154 = vmor %vm3152, %vm3153
        %v3155 = vsel %vm3154, %v3147, %v3151
        %v3156 = vand.u32 2147483647, %v3146
        %vm3157 = vcmp.eq.f32.partialorder %v3156, 8.507059e+37
        %v3158 = vand.u32 %v3146, 2147483648
        %v3159 = vor.u32 1.1754944e-38, %v3158
        %v3160 = vsel %vm3157, %v3159, %v3155
        %v3161 = vmul.f32 1.0, %v3160
        %v3162 = vxor.u32 %v3140, 2147483648
        %v3163 = vmul.f32 %v3162, 1.442695
        %v3164 = vpow.pop %v3163
        %v3165 = vadd.f32 %v3164, 1.0
        %v3166 = vrcp.pop %v3165
        %v3167 = vmul.f32 %v3165, %v3166
        %v3168 = vsub.f32 1.0, %v3167
        %v3169 = vmul.f32 %v3166, %v3168
        %v3170 = vadd.f32 %v3166, %v3169
        %vm3171 = vweird.f32 %v3165
        %vm3172 = vweird.f32 %v3166
        %vm3173 = vmor %vm3171, %vm3172
        %v3174 = vsel %vm3173, %v3166, %v3170
        %v3175 = vand.u32 2147483647, %v3165
        %vm3176 = vcmp.eq.f32.partialorder %v3175, 8.507059e+37
        %v3177 = vand.u32 %v3165, 2147483648
        %v3178 = vor.u32 1.1754944e-38, %v3177
        %v3179 = vsel %vm3176, %v3178, %v3174
        %v3180 = vmul.f32 1.0, %v3179
        %v3181 = vtanh.pop %v3141
        %v3182 = vxor.u32 %v3142, 2147483648
        %v3183 = vmul.f32 %v3182, 1.442695
        %v3184 = vpow.pop %v3183
        %v3185 = vadd.f32 %v3184, 1.0
        %v3186 = vrcp.pop %v3185
        %v3187 = vmul.f32 %v3185, %v3186
        %v3188 = vsub.f32 1.0, %v3187
        %v3189 = vmul.f32 %v3186, %v3188
        %v3190 = vadd.f32 %v3186, %v3189
        %vm3191 = vweird.f32 %v3185
        %vm3192 = vweird.f32 %v3186
        %vm3193 = vmor %vm3191, %vm3192
        %v3194 = vsel %vm3193, %v3186, %v3190
        %v3195 = vand.u32 2147483647, %v3185
        %vm3196 = vcmp.eq.f32.partialorder %v3195, 8.507059e+37
        %v3197 = vand.u32 %v3185, 2147483648
        %v3198 = vor.u32 1.1754944e-38, %v3197
        %v3199 = vsel %vm3196, %v3198, %v3194
        %v3200 = vmul.f32 1.0, %v3199
        %v3201 = vstv %s3048
        %vm3202 = vcmp.lt.s32.totalorder %v3201, %v313
        %v3203 = vsel %vm3202, 1, 0
        %v3204 = vcvt.s32.f32 %v3203
        %v3205 = vld [vmem:[#allocation3] sm:$0xff]
        %v3206 = vmul.f32 %v3180, %v3205
        %v3207 = vmul.f32 %v3161, %v3181
        %v3208 = vadd.f32 %v3206, %v3207
        %3210 = vset.pattern.permute.xlu0 0
        %3211 = vperm.xlu0 %3210, %v3204
        %v3212 = vpop.permute.xlu0 %3211
        %v3214 = vmul.f32 %v3208, %v3212
        %v3215 = vtanh.pop %v3214
        %v3216 = vmul.f32 %v3200, %v3215
        %v3217 = vmul.f32 %v3216, %v3212
        %3218 = vst [vmem:[#allocation3] sm:$0xff] %v3214
        %3219 = vst [vmem:[#allocation2] sm:$0xff] %v3217
        %v3220 = vpack.c.bf16 %v3217, %v3217
        %s3221 = smul.addr %s3047, 4
        %s3222 = scalar_lea.vmem %s297, %s3221
        %3223 = vst [vmem:[%s3222] sm:$0xf] %v3220
        %s3224 = smul.u32 %s22, 2
        %s3225 = ssub.s32 0, %s3224
        %s3226 = smul.u32 %s21, %s3225
        %s3227 = sadd.s32 %s22, %s3226
        %s3228 = smul.u32 16, %s3227
        %p3229 = scmp.lt.s32.totalorder %s21, 1
        %s3230 = scalar_select %p3229, %s21, 1
        %p3231 = scmp.lt.s32.totalorder %s3228, 15
        %s3232 = scalar_select %p3231, %s3228, 15
        %s3233 = smul.addr %s3230, 16
        %s3234 = sadd.s32 %s3232, %s3233
        %s3235 = smul.addr %s3234, 4
        %s3236 = scalar_lea.vmem %s3, %s3235
        // Predicated region
        $region41: #{model_forward.12} parent=31 // pred_check
          %p3237 = pneg %p140
        $region42: #{model_forward.12} parent=31 // pred_check_branch
          %3239 = sbr.rel (%p3237) target = $region44
        $region43: #{model_forward.12} parent=31 // pred_region
          %s3240 = smul.u32 %s22, 2
          %s3241 = ssub.s32 0, %s3240
          %s3242 = smul.u32 %s21, %s3241
          %s3243 = sadd.s32 %s22, %s3242
          %s3244 = smul.u32 16, %s3243
        $region44: #{model_forward.12} parent=31 // pred_fallthru
          _
      $region32: #{model_forward.12} parent=5 // pred_fallthru
        _
      %p3245 = scmp.le.s32.totalorder 2, %s12
      // Predicated region
      $region45: #{model_forward.12} parent=5 // pred_check
        %p3246 = pneg %p3245
      $region46: #{model_forward.12} parent=5 // pred_check_branch
        %3248 = sbr.rel (%p3246) target = $region48
      $region47: #{model_forward.12} parent=5 // pred_region
        %s3249 = ssub.s32 %s12, 2
        // Predicated region
        $region49: #{model_forward.12} parent=47 // pred_check
          %p3250 = pneg %p146
        $region50: #{model_forward.12} parent=47 // pred_check_branch
          %3252 = sbr.rel (%p3250) target = $region52
        $region51: #{model_forward.12} parent=47 // pred_region
          %s3253 = smul.u32 %s24, 2
          %s3254 = ssub.s32 0, %s3253
          %s3255 = smul.u32 %s23, %s3254
          %s3256 = sadd.s32 %s24, %s3255
          %s3257 = smul.u32 16, %s3256
          %p3258 = scmp.lt.s32.totalorder %s23, 1
          %s3259 = scalar_select %p3258, %s23, 1
          %p3260 = scmp.lt.s32.totalorder %s3257, 15
          %s3261 = scalar_select %p3260, %s3257, 15
          %s3262 = smul.addr %s3259, 16
          %s3263 = sadd.s32 %s3261, %s3262
          %s3264 = smul.addr %s3263, 4
          %s3265 = scalar_lea.vmem %s3, %s3264
        $region52: #{model_forward.12} parent=47 // pred_fallthru
          _
      $region48: #{model_forward.12} parent=5 // pred_fallthru
        _
    $region6: #{model_forward.12} parent=1 // loop_footer
      %s16 = sadd.s32 1, %s12
    $region7: #{model_forward.12} parent=1 // loop_footer_branch
      %11 = sbr.rel target = $region3
    $region8: #{model_forward.12} parent=1 // loop_exit
      _
    %3266 = vsyncpa [#allocation5], 1
    %s3267 = scalar_lea.sflag [#allocation5], 1
    %3268 = vsyncpa %s3267, 1

</llo_original>
